<compile_context>
chip_gen: v7x
topology: tpu7x:2x2x1
jax: 0.10.0
libtpu: 0.0.40
codegen_flags: <defaults>
</compile_context>

<pallas_src>
import functools

import jax
import jax.numpy as jnp
from jax import lax
from jax.experimental import pallas as pl
from jax.experimental.pallas import tpu as pltpu


# ----------------------------------------------------------------------------
# Pallas kernel: integrates x'(t) = f(theta, x(t)) over all `time_steps`
# evaluation points in a single grid step.  The eval-time loop and the RK4
# substep loop both run inside the kernel; the state is a fori_loop carry.
# ----------------------------------------------------------------------------
def _ode_traj_kernel(u_ref, w1_ref, wb_ref, bb_ref, w3_ref,   # inputs (VMEM)
                     traj_ref,                                # output (time_steps, B, D)
                     *, T, time_steps, n_sub):
    B = u_ref.shape[0]
    H3 = w1_ref.shape[1]

    # --- hoisted: load weights once, cast MXU operands to bf16, pre-broadcast
    w1 = w1_ref[...].astype(jnp.bfloat16)              # (D, 3H)
    w3 = w3_ref[...].astype(jnp.bfloat16)              # (3H, D)
    wb = jnp.broadcast_to(wb_ref[...], (B, H3))        # (B, 3H) f32
    bb = jnp.broadcast_to(bb_ref[...], (B, H3))        # (B, 3H) f32

    def f(t, x):
        # tanh(x @ W1_packed + t * wb + bb) @ W3_blockdiag
        # bf16 MXU operands, f32 accumulate; VPU math stays f32.
        pre = (jnp.dot(x.astype(jnp.bfloat16), w1,
                       preferred_element_type=jnp.float32)
               + t * wb + bb)
        h = jnp.tanh(pre)
        return jnp.dot(h.astype(jnp.bfloat16), w3,
                       preferred_element_type=jnp.float32)

    dt_eval = jnp.float32(T / (time_steps - 1))
    dt = dt_eval / jnp.float32(n_sub)

    x0 = u_ref[...].astype(jnp.float32)
    traj_ref[0] = x0                                    # eval point 0 = initial condition

    def eval_step(i, x):
        t0 = jnp.asarray(i - 1, jnp.float32) * dt_eval

        def rk4_body(s, xs):
            t = t0 + jnp.asarray(s, jnp.float32) * dt
            k1 = f(t, xs)
            k2 = f(t + 0.5 * dt, xs + 0.5 * dt * k1)
            k3 = f(t + 0.5 * dt, xs + 0.5 * dt * k2)
            k4 = f(t + dt, xs + dt * k3)
            return xs + (dt / 6.0) * (k1 + 2.0 * k2 + 2.0 * k3 + k4)

        # n_sub is small and fixed -> full unroll for scheduler visibility.
        x_new = lax.fori_loop(0, n_sub, rk4_body, x, unroll=True)
        traj_ref[i] = x_new
        return x_new

    lax.fori_loop(1, time_steps, eval_step, x0)


# ----------------------------------------------------------------------------
# Parameter construction (deterministic, mirrors Dynamics.__init__ shapes).
# ----------------------------------------------------------------------------
def init_params(key, data_dim=3, hidden_dim=32):
    """data_dim (= input_dim since augment_dim=0) must be 3, as implied by
    Dynamics.forward's use of x[:, :2] with Linear(input_dim - 1, hidden)."""
    assert data_dim == 3
    H, D = hidden_dim, data_dim
    ks = jax.random.split(key, 9)

    def xavier(k, shape):  # shape = (out_features, in_features), torch convention
        fan_out, fan_in = shape
        std = (2.0 / (fan_in + fan_out)) ** 0.5
        return std * jax.random.normal(k, shape, dtype=jnp.float32)

    fc1_1 = xavier(ks[0], (H, D - 1))
    fc1_2 = xavier(ks[1], (H, D - 1))
    fc1_3 = xavier(ks[2], (H, D))
    b_w_1 = xavier(ks[3], (H, 1))
    b_w_2 = xavier(ks[4], (H, 1))
    b_w_3 = xavier(ks[5], (H, 1))
    b_b_1 = jnp.zeros((H,), jnp.float32)   # nn.init.zeros_ on biases
    b_b_2 = jnp.zeros((H,), jnp.float32)
    b_b_3 = jnp.zeros((H,), jnp.float32)
    fc3_1 = xavier(ks[6], (1, H))
    fc3_2 = xavier(ks[7], (1, H))
    fc3_3 = xavier(ks[8], (1, H))

    # Pack: x[:, :2] @ fc1_k.T  ==  x @ [[fc1_k.T], [0]]  (zero row for x[:, 2]).
    w1 = jnp.zeros((D, 3 * H), jnp.float32)
    w1 = w1.at[:D - 1, 0:H].set(fc1_1.T)
    w1 = w1.at[:D - 1, H:2 * H].set(fc1_2.T)
    w1 = w1.at[:, 2 * H:3 * H].set(fc1_3.T)

    wb = jnp.concatenate([b_w_1[:, 0], b_w_2[:, 0], b_w_3[:, 0]])[None, :]  # (1, 3H)
    bb = jnp.concatenate([b_b_1, b_b_2, b_b_3])[None, :]                    # (1, 3H)

    # Block-diagonal read-out: column k only sees branch k's hidden block.
    w3 = jnp.zeros((3 * H, D), jnp.float32)
    w3 = w3.at[0:H, 0].set(fc3_1[0])
    w3 = w3.at[H:2 * H, 1].set(fc3_2[0])
    w3 = w3.at[2 * H:3 * H, 2].set(fc3_3[0])

    return {"w1": w1, "wb": wb, "bb": bb, "w3": w3}


# ----------------------------------------------------------------------------
# Wrapper: NeuralODE.forward(u) -> (features, traj)
# ----------------------------------------------------------------------------
def neural_ode_forward(u, params, *, T=10.0, time_steps=10, n_sub=20):
    B, D = u.shape
    H3 = params["w1"].shape[1]

    kernel = functools.partial(_ode_traj_kernel, T=T, time_steps=time_steps,
                               n_sub=n_sub)

    full_traj = pl.pallas_call(
        kernel,
        out_shape=jax.ShapeDtypeStruct((time_steps, B, D), jnp.float32),
        grid_spec=pltpu.PrefetchScalarGridSpec(
            num_scalar_prefetch=0,
            grid=(1,),                                   # single grid step (grid collapsed)
            in_specs=[
                pl.BlockSpec((B, D), lambda i: (0, 0)),      # u
                pl.BlockSpec((D, H3), lambda i: (0, 0)),     # packed fc1 weights
                pl.BlockSpec((1, H3), lambda i: (0, 0)),     # packed b_time weights
                pl.BlockSpec((1, H3), lambda i: (0, 0)),     # packed b_time biases
                pl.BlockSpec((H3, D), lambda i: (0, 0)),     # packed fc3 weights
            ],
            out_specs=pl.BlockSpec((time_steps, B, D), lambda i: (0, 0, 0)),
        ),
        compiler_params=pltpu.CompilerParams(dimension_semantics=("arbitrary",)),
    )(u, params["w1"], params["wb"], params["bb"], params["w3"])

    features = full_traj[-1]     # Semiflow.forward: state at t = T
    traj = full_traj[1:]         # Semiflow.trajectory: linspace points, out[1:]
    return features, traj


# ----------------------------------------------------------------------------
# Pure-JAX reference (same fixed-step RK4, same bf16-operand/f32-accumulate
# MXU numerics as the kernel) for a correctness check.
# ----------------------------------------------------------------------------
def _dynamics_ref(t, x, p):
    w1 = p["w1"].astype(jnp.bfloat16)
    w3 = p["w3"].astype(jnp.bfloat16)
    pre = (jnp.dot(x.astype(jnp.bfloat16), w1, preferred_element_type=jnp.float32)
           + t * p["wb"] + p["bb"])
    h = jnp.tanh(pre)
    return jnp.dot(h.astype(jnp.bfloat16), w3, preferred_element_type=jnp.float32)


def _reference_traj(u, p, T, time_steps, n_sub):
    dt_eval = T / (time_steps - 1)
    dt = dt_eval / n_sub
    states = [u]
    x = u
    for i in range(1, time_steps):
        t0 = (i - 1) * dt_eval
        for s in range(n_sub):
            t = t0 + s * dt
            k1 = _dynamics_ref(t, x, p)
            k2 = _dynamics_ref(t + 0.5 * dt, x + 0.5 * dt * k1, p)
            k3 = _dynamics_ref(t + 0.5 * dt, x + 0.5 * dt * k2, p)
            k4 = _dynamics_ref(t + dt, x + dt * k3, p)
            x = x + (dt / 6.0) * (k1 + 2.0 * k2 + 2.0 * k3 + k4)
        states.append(x)
    return jnp.stack(states)


if __name__ == "__main__":
    key = jax.random.PRNGKey(0)
    k_param, k_data = jax.random.split(key)

    data_dim, hidden_dim, batch = 3, 32, 8
    T, time_steps, n_sub = 10.0, 10, 20

    params = init_params(k_param, data_dim=data_dim, hidden_dim=hidden_dim)
    u = jax.random.normal(k_data, (batch, data_dim), dtype=jnp.float32)

    features, traj = neural_ode_forward(u, params, T=T, time_steps=time_steps,
                                        n_sub=n_sub)
    features = jax.block_until_ready(features)
    traj = jax.block_until_ready(traj)

    assert features.shape == (batch, data_dim)
    assert traj.shape == (time_steps - 1, batch, data_dim)

    ref = _reference_traj(u, params, T, time_steps, n_sub)
    assert jnp.allclose(features, ref[-1], rtol=2e-3, atol=2e-3)
    assert jnp.allclose(traj, ref[1:], rtol=2e-3, atol=2e-3)

    print("KERNEL_OK")
</pallas_src>

<mosaic_0001>
module attributes {stable_mosaic.version = 11 : i64} {
  func.func @_ode_traj_kernel(%arg0: i32, %arg1: memref<8x3xf32, #tpu.memory_space<vmem>>, %arg2: memref<3x96xf32, #tpu.memory_space<vmem>>, %arg3: memref<1x96xf32, #tpu.memory_space<vmem>>, %arg4: memref<1x96xf32, #tpu.memory_space<vmem>>, %arg5: memref<96x3xf32, #tpu.memory_space<vmem>>, %arg6: memref<10x8x3xf32, #tpu.memory_space<vmem>>) attributes {dimension_semantics = [#tpu.dimension_semantics<arbitrary>], iteration_bounds = array<i64: 1>, scalar_prefetch = 0 : i64, scratch_operands = 0 : i64, tpu.core_type = #tpu.core_type<tc>, window_params = [{pipeline_mode = #tpu.pipeline_mode<synchronous>, transform_indices = @transform_0, window_bounds = array<i64: 8, 3>}, {pipeline_mode = #tpu.pipeline_mode<synchronous>, transform_indices = @transform_1, window_bounds = array<i64: 3, 96>}, {pipeline_mode = #tpu.pipeline_mode<synchronous>, transform_indices = @transform_2, window_bounds = array<i64: 1, 96>}, {pipeline_mode = #tpu.pipeline_mode<synchronous>, transform_indices = @transform_3, window_bounds = array<i64: 1, 96>}, {pipeline_mode = #tpu.pipeline_mode<synchronous>, transform_indices = @transform_4, window_bounds = array<i64: 96, 3>}, {pipeline_mode = #tpu.pipeline_mode<synchronous>, transform_indices = @transform_5, window_bounds = array<i64: 10, 8, 3>}]} {
    %c0 = arith.constant 0 : index
    %c0_0 = arith.constant 0 : index
    %0 = vector.load %arg2[%c0, %c0_0] : memref<3x96xf32, #tpu.memory_space<vmem>>, vector<3x96xf32>
    %1 = arith.truncf %0 : vector<3x96xf32> to vector<3x96xbf16>
    %c0_1 = arith.constant 0 : index
    %c0_2 = arith.constant 0 : index
    %2 = vector.load %arg5[%c0_1, %c0_2] : memref<96x3xf32, #tpu.memory_space<vmem>>, vector<96x3xf32>
    %3 = arith.truncf %2 : vector<96x3xf32> to vector<96x3xbf16>
    %c0_3 = arith.constant 0 : index
    %c0_4 = arith.constant 0 : index
    %4 = vector.load %arg3[%c0_3, %c0_4] : memref<1x96xf32, #tpu.memory_space<vmem>>, vector<1x96xf32>
    %5 = vector.shape_cast %4 : vector<1x96xf32> to vector<1x96xf32>
    %6 = vector.broadcast %5 : vector<1x96xf32> to vector<8x96xf32>
    %c0_5 = arith.constant 0 : index
    %c0_6 = arith.constant 0 : index
    %7 = vector.load %arg4[%c0_5, %c0_6] : memref<1x96xf32, #tpu.memory_space<vmem>>, vector<1x96xf32>
    %8 = vector.shape_cast %7 : vector<1x96xf32> to vector<1x96xf32>
    %9 = vector.broadcast %8 : vector<1x96xf32> to vector<8x96xf32>
    %cst = arith.constant 1.11111116 : f32
    %cst_7 = arith.constant 2.000000e+01 : f32
    %10 = arith.divf %cst, %cst_7 : f32
    %c0_8 = arith.constant 0 : index
    %c0_9 = arith.constant 0 : index
    %11 = vector.load %arg1[%c0_8, %c0_9] : memref<8x3xf32, #tpu.memory_space<vmem>>, vector<8x3xf32>
    %c0_10 = arith.constant 0 : index
    %c0_11 = arith.constant 0 : index
    %c0_12 = arith.constant 0 : index
    %12 = vector.load %arg6[%c0_10, %c0_11, %c0_12] : memref<10x8x3xf32, #tpu.memory_space<vmem>>, vector<1x8x3xf32>
    %13 = vector.shape_cast %12 : vector<1x8x3xf32> to vector<8x3xf32>
    %14 = vector.shape_cast %11 : vector<8x3xf32> to vector<1x8x3xf32>
    tpu.vector_store %arg6[%c0_10, %c0_11, %c0_12], %14 {strides = array<i32>} : memref<10x8x3xf32, #tpu.memory_space<vmem>>, vector<1x8x3xf32>,
    %cst_13 = arith.constant 1.11111116 : f32
    %c1_i32 = arith.constant 1 : i32
    %c9_i32 = arith.constant 9 : i32
    %15 = arith.addi %c1_i32, %c9_i32 : i32
    %c1_i32_14 = arith.constant 1 : i32
    %16 = scf.for %arg7 = %c1_i32 to %15 step %c1_i32_14 iter_args(%arg8 = %11) -> (vector<8x3xf32>)  : i32 {
      %c1_i32_16 = arith.constant 1 : i32
      %17 = arith.subi %arg7, %c1_i32_16 : i32
      %18 = arith.sitofp %17 : i32 to f32
      %19 = arith.mulf %18, %cst_13 : f32
      %c0_i32 = arith.constant 0 : i32
      %20 = arith.sitofp %c0_i32 : i32 to f32
      %21 = arith.mulf %20, %10 : f32
      %22 = arith.addf %19, %21 : f32
      %23 = arith.truncf %arg8 : vector<8x3xf32> to vector<8x3xbf16>
      %cst_17 = arith.constant dense<0.000000e+00> : vector<8x96xf32>
      %24 = tpu.matmul %23, %1, %cst_17 {dimension_numbers = #tpu.dot_dimension_numbers<[1], [0], [0], [1], [0, 0, 1, 1], [], []>} : vector<8x3xbf16>, vector<3x96xbf16>, vector<8x96xf32> -> vector<8x96xf32>
      %25 = vector.broadcast %22 : f32 to vector<8x96xf32>
      %26 = arith.mulf %25, %6 : vector<8x96xf32>
      %27 = arith.addf %24, %26 : vector<8x96xf32>
      %28 = arith.addf %27, %9 : vector<8x96xf32>
      %29 = math.tanh %28 : vector<8x96xf32>
      %30 = arith.truncf %29 : vector<8x96xf32> to vector<8x96xbf16>
      %cst_18 = arith.constant dense<0.000000e+00> : vector<8x3xf32>
      %31 = tpu.matmul %30, %3, %cst_18 {dimension_numbers = #tpu.dot_dimension_numbers<[1], [0], [0], [1], [0, 0, 1, 1], [], []>} : vector<8x96xbf16>, vector<96x3xbf16>, vector<8x3xf32> -> vector<8x3xf32>
      %cst_19 = arith.constant 5.000000e-01 : f32
      %32 = arith.mulf %cst_19, %10 : f32
      %33 = arith.addf %22, %32 : f32
      %cst_20 = arith.constant 5.000000e-01 : f32
      %34 = arith.mulf %cst_20, %10 : f32
      %35 = vector.broadcast %34 : f32 to vector<8x3xf32>
      %36 = arith.mulf %35, %31 : vector<8x3xf32>
      %37 = arith.addf %arg8, %36 : vector<8x3xf32>
      %38 = arith.truncf %37 : vector<8x3xf32> to vector<8x3xbf16>
      %cst_21 = arith.constant dense<0.000000e+00> : vector<8x96xf32>
      %39 = tpu.matmul %38, %1, %cst_21 {dimension_numbers = #tpu.dot_dimension_numbers<[1], [0], [0], [1], [0, 0, 1, 1], [], []>} : vector<8x3xbf16>, vector<3x96xbf16>, vector<8x96xf32> -> vector<8x96xf32>
      %40 = vector.broadcast %33 : f32 to vector<8x96xf32>
      %41 = arith.mulf %40, %6 : vector<8x96xf32>
      %42 = arith.addf %39, %41 : vector<8x96xf32>
      %43 = arith.addf %42, %9 : vector<8x96xf32>
      %44 = math.tanh %43 : vector<8x96xf32>
      %45 = arith.truncf %44 : vector<8x96xf32> to vector<8x96xbf16>
      %cst_22 = arith.constant dense<0.000000e+00> : vector<8x3xf32>
      %46 = tpu.matmul %45, %3, %cst_22 {dimension_numbers = #tpu.dot_dimension_numbers<[1], [0], [0], [1], [0, 0, 1, 1], [], []>} : vector<8x96xbf16>, vector<96x3xbf16>, vector<8x3xf32> -> vector<8x3xf32>
      %cst_23 = arith.constant 5.000000e-01 : f32
      %47 = arith.mulf %cst_23, %10 : f32
      %48 = arith.addf %22, %47 : f32
      %cst_24 = arith.constant 5.000000e-01 : f32
      %49 = arith.mulf %cst_24, %10 : f32
      %50 = vector.broadcast %49 : f32 to vector<8x3xf32>
      %51 = arith.mulf %50, %46 : vector<8x3xf32>
      %52 = arith.addf %arg8, %51 : vector<8x3xf32>
      %53 = arith.truncf %52 : vector<8x3xf32> to vector<8x3xbf16>
      %cst_25 = arith.constant dense<0.000000e+00> : vector<8x96xf32>
      %54 = tpu.matmul %53, %1, %cst_25 {dimension_numbers = #tpu.dot_dimension_numbers<[1], [0], [0], [1], [0, 0, 1, 1], [], []>} : vector<8x3xbf16>, vector<3x96xbf16>, vector<8x96xf32> -> vector<8x96xf32>
      %55 = vector.broadcast %48 : f32 to vector<8x96xf32>
      %56 = arith.mulf %55, %6 : vector<8x96xf32>
      %57 = arith.addf %54, %56 : vector<8x96xf32>
      %58 = arith.addf %57, %9 : vector<8x96xf32>
      %59 = math.tanh %58 : vector<8x96xf32>
      %60 = arith.truncf %59 : vector<8x96xf32> to vector<8x96xbf16>
      %cst_26 = arith.constant dense<0.000000e+00> : vector<8x3xf32>
      %61 = tpu.matmul %60, %3, %cst_26 {dimension_numbers = #tpu.dot_dimension_numbers<[1], [0], [0], [1], [0, 0, 1, 1], [], []>} : vector<8x96xbf16>, vector<96x3xbf16>, vector<8x3xf32> -> vector<8x3xf32>
      %62 = arith.addf %22, %10 : f32
      %63 = vector.broadcast %10 : f32 to vector<8x3xf32>
      %64 = arith.mulf %63, %61 : vector<8x3xf32>
      %65 = arith.addf %arg8, %64 : vector<8x3xf32>
      %66 = arith.truncf %65 : vector<8x3xf32> to vector<8x3xbf16>
      %cst_27 = arith.constant dense<0.000000e+00> : vector<8x96xf32>
      %67 = tpu.matmul %66, %1, %cst_27 {dimension_numbers = #tpu.dot_dimension_numbers<[1], [0], [0], [1], [0, 0, 1, 1], [], []>} : vector<8x3xbf16>, vector<3x96xbf16>, vector<8x96xf32> -> vector<8x96xf32>
      %68 = vector.broadcast %62 : f32 to vector<8x96xf32>
      %69 = arith.mulf %68, %6 : vector<8x96xf32>
      %70 = arith.addf %67, %69 : vector<8x96xf32>
      %71 = arith.addf %70, %9 : vector<8x96xf32>
      %72 = math.tanh %71 : vector<8x96xf32>
      %73 = arith.truncf %72 : vector<8x96xf32> to vector<8x96xbf16>
      %cst_28 = arith.constant dense<0.000000e+00> : vector<8x3xf32>
      %74 = tpu.matmul %73, %3, %cst_28 {dimension_numbers = #tpu.dot_dimension_numbers<[1], [0], [0], [1], [0, 0, 1, 1], [], []>} : vector<8x96xbf16>, vector<96x3xbf16>, vector<8x3xf32> -> vector<8x3xf32>
      %cst_29 = arith.constant 6.000000e+00 : f32
      %75 = arith.divf %10, %cst_29 : f32
      %cst_30 = arith.constant 2.000000e+00 : f32
      %76 = vector.broadcast %cst_30 : f32 to vector<8x3xf32>
      %77 = arith.mulf %76, %46 : vector<8x3xf32>
      %78 = arith.addf %31, %77 : vector<8x3xf32>
      %cst_31 = arith.constant 2.000000e+00 : f32
      %79 = vector.broadcast %cst_31 : f32 to vector<8x3xf32>
      %80 = arith.mulf %79, %61 : vector<8x3xf32>
      %81 = arith.addf %78, %80 : vector<8x3xf32>
      %82 = arith.addf %81, %74 : vector<8x3xf32>
      %83 = vector.broadcast %75 : f32 to vector<8x3xf32>
      %84 = arith.mulf %83, %82 : vector<8x3xf32>
      %85 = arith.addf %arg8, %84 : vector<8x3xf32>
      %c1_i32_32 = arith.constant 1 : i32
      %86 = arith.sitofp %c1_i32_32 : i32 to f32
      %87 = arith.mulf %86, %10 : f32
      %88 = arith.addf %19, %87 : f32
      %89 = arith.truncf %85 : vector<8x3xf32> to vector<8x3xbf16>
      %cst_33 = arith.constant dense<0.000000e+00> : vector<8x96xf32>
      %90 = tpu.matmul %89, %1, %cst_33 {dimension_numbers = #tpu.dot_dimension_numbers<[1], [0], [0], [1], [0, 0, 1, 1], [], []>} : vector<8x3xbf16>, vector<3x96xbf16>, vector<8x96xf32> -> vector<8x96xf32>
      %91 = vector.broadcast %88 : f32 to vector<8x96xf32>
      %92 = arith.mulf %91, %6 : vector<8x96xf32>
      %93 = arith.addf %90, %92 : vector<8x96xf32>
      %94 = arith.addf %93, %9 : vector<8x96xf32>
      %95 = math.tanh %94 : vector<8x96xf32>
      %96 = arith.truncf %95 : vector<8x96xf32> to vector<8x96xbf16>
      %cst_34 = arith.constant dense<0.000000e+00> : vector<8x3xf32>
      %97 = tpu.matmul %96, %3, %cst_34 {dimension_numbers = #tpu.dot_dimension_numbers<[1], [0], [0], [1], [0, 0, 1, 1], [], []>} : vector<8x96xbf16>, vector<96x3xbf16>, vector<8x3xf32> -> vector<8x3xf32>
      %cst_35 = arith.constant 5.000000e-01 : f32
      %98 = arith.mulf %cst_35, %10 : f32
      %99 = arith.addf %88, %98 : f32
      %cst_36 = arith.constant 5.000000e-01 : f32
      %100 = arith.mulf %cst_36, %10 : f32
      %101 = vector.broadcast %100 : f32 to vector<8x3xf32>
      %102 = arith.mulf %101, %97 : vector<8x3xf32>
      %103 = arith.addf %85, %102 : vector<8x3xf32>
      %104 = arith.truncf %103 : vector<8x3xf32> to vector<8x3xbf16>
      %cst_37 = arith.constant dense<0.000000e+00> : vector<8x96xf32>
      %105 = tpu.matmul %104, %1, %cst_37 {dimension_numbers = #tpu.dot_dimension_numbers<[1], [0], [0], [1], [0, 0, 1, 1], [], []>} : vector<8x3xbf16>, vector<3x96xbf16>, vector<8x96xf32> -> vector<8x96xf32>
      %106 = vector.broadcast %99 : f32 to vector<8x96xf32>
      %107 = arith.mulf %106, %6 : vector<8x96xf32>
      %108 = arith.addf %105, %107 : vector<8x96xf32>
      %109 = arith.addf %108, %9 : vector<8x96xf32>
      %110 = math.tanh %109 : vector<8x96xf32>
      %111 = arith.truncf %110 : vector<8x96xf32> to vector<8x96xbf16>
      %cst_38 = arith.constant dense<0.000000e+00> : vector<8x3xf32>
      %112 = tpu.matmul %111, %3, %cst_38 {dimension_numbers = #tpu.dot_dimension_numbers<[1], [0], [0], [1], [0, 0, 1, 1], [], []>} : vector<8x96xbf16>, vector<96x3xbf16>, vector<8x3xf32> -> vector<8x3xf32>
      %cst_39 = arith.constant 5.000000e-01 : f32
      %113 = arith.mulf %cst_39, %10 : f32
      %114 = arith.addf %88, %113 : f32
      %cst_40 = arith.constant 5.000000e-01 : f32
      %115 = arith.mulf %cst_40, %10 : f32
      %116 = vector.broadcast %115 : f32 to vector<8x3xf32>
      %117 = arith.mulf %116, %112 : vector<8x3xf32>
      %118 = arith.addf %85, %117 : vector<8x3xf32>
      %119 = arith.truncf %118 : vector<8x3xf32> to vector<8x3xbf16>
      %cst_41 = arith.constant dense<0.000000e+00> : vector<8x96xf32>
      %120 = tpu.matmul %119, %1, %cst_41 {dimension_numbers = #tpu.dot_dimension_numbers<[1], [0], [0], [1], [0, 0, 1, 1], [], []>} : vector<8x3xbf16>, vector<3x96xbf16>, vector<8x96xf32> -> vector<8x96xf32>
      %121 = vector.broadcast %114 : f32 to vector<8x96xf32>
      %122 = arith.mulf %121, %6 : vector<8x96xf32>
      %123 = arith.addf %120, %122 : vector<8x96xf32>
      %124 = arith.addf %123, %9 : vector<8x96xf32>
      %125 = math.tanh %124 : vector<8x96xf32>
      %126 = arith.truncf %125 : vector<8x96xf32> to vector<8x96xbf16>
      %cst_42 = arith.constant dense<0.000000e+00> : vector<8x3xf32>
      %127 = tpu.matmul %126, %3, %cst_42 {dimension_numbers = #tpu.dot_dimension_numbers<[1], [0], [0], [1], [0, 0, 1, 1], [], []>} : vector<8x96xbf16>, vector<96x3xbf16>, vector<8x3xf32> -> vector<8x3xf32>
      %128 = arith.addf %88, %10 : f32
      %129 = vector.broadcast %10 : f32 to vector<8x3xf32>
      %130 = arith.mulf %129, %127 : vector<8x3xf32>
      %131 = arith.addf %85, %130 : vector<8x3xf32>
      %132 = arith.truncf %131 : vector<8x3xf32> to vector<8x3xbf16>
      %cst_43 = arith.constant dense<0.000000e+00> : vector<8x96xf32>
      %133 = tpu.matmul %132, %1, %cst_43 {dimension_numbers = #tpu.dot_dimension_numbers<[1], [0], [0], [1], [0, 0, 1, 1], [], []>} : vector<8x3xbf16>, vector<3x96xbf16>, vector<8x96xf32> -> vector<8x96xf32>
      %134 = vector.broadcast %128 : f32 to vector<8x96xf32>
      %135 = arith.mulf %134, %6 : vector<8x96xf32>
      %136 = arith.addf %133, %135 : vector<8x96xf32>
      %137 = arith.addf %136, %9 : vector<8x96xf32>
      %138 = math.tanh %137 : vector<8x96xf32>
      %139 = arith.truncf %138 : vector<8x96xf32> to vector<8x96xbf16>
      %cst_44 = arith.constant dense<0.000000e+00> : vector<8x3xf32>
      %140 = tpu.matmul %139, %3, %cst_44 {dimension_numbers = #tpu.dot_dimension_numbers<[1], [0], [0], [1], [0, 0, 1, 1], [], []>} : vector<8x96xbf16>, vector<96x3xbf16>, vector<8x3xf32> -> vector<8x3xf32>
      %cst_45 = arith.constant 6.000000e+00 : f32
      %141 = arith.divf %10, %cst_45 : f32
      %cst_46 = arith.constant 2.000000e+00 : f32
      %142 = vector.broadcast %cst_46 : f32 to vector<8x3xf32>
      %143 = arith.mulf %142, %112 : vector<8x3xf32>
      %144 = arith.addf %97, %143 : vector<8x3xf32>
      %cst_47 = arith.constant 2.000000e+00 : f32
      %145 = vector.broadcast %cst_47 : f32 to vector<8x3xf32>
      %146 = arith.mulf %145, %127 : vector<8x3xf32>
      %147 = arith.addf %144, %146 : vector<8x3xf32>
      %148 = arith.addf %147, %140 : vector<8x3xf32>
      %149 = vector.broadcast %141 : f32 to vector<8x3xf32>
      %150 = arith.mulf %149, %148 : vector<8x3xf32>
      %151 = arith.addf %85, %150 : vector<8x3xf32>
      %c2_i32 = arith.constant 2 : i32
      %152 = arith.sitofp %c2_i32 : i32 to f32
      %153 = arith.mulf %152, %10 : f32
      %154 = arith.addf %19, %153 : f32
      %155 = arith.truncf %151 : vector<8x3xf32> to vector<8x3xbf16>
      %cst_48 = arith.constant dense<0.000000e+00> : vector<8x96xf32>
      %156 = tpu.matmul %155, %1, %cst_48 {dimension_numbers = #tpu.dot_dimension_numbers<[1], [0], [0], [1], [0, 0, 1, 1], [], []>} : vector<8x3xbf16>, vector<3x96xbf16>, vector<8x96xf32> -> vector<8x96xf32>
      %157 = vector.broadcast %154 : f32 to vector<8x96xf32>
      %158 = arith.mulf %157, %6 : vector<8x96xf32>
      %159 = arith.addf %156, %158 : vector<8x96xf32>
      %160 = arith.addf %159, %9 : vector<8x96xf32>
      %161 = math.tanh %160 : vector<8x96xf32>
      %162 = arith.truncf %161 : vector<8x96xf32> to vector<8x96xbf16>
      %cst_49 = arith.constant dense<0.000000e+00> : vector<8x3xf32>
      %163 = tpu.matmul %162, %3, %cst_49 {dimension_numbers = #tpu.dot_dimension_numbers<[1], [0], [0], [1], [0, 0, 1, 1], [], []>} : vector<8x96xbf16>, vector<96x3xbf16>, vector<8x3xf32> -> vector<8x3xf32>
      %cst_50 = arith.constant 5.000000e-01 : f32
      %164 = arith.mulf %cst_50, %10 : f32
      %165 = arith.addf %154, %164 : f32
      %cst_51 = arith.constant 5.000000e-01 : f32
      %166 = arith.mulf %cst_51, %10 : f32
      %167 = vector.broadcast %166 : f32 to vector<8x3xf32>
      %168 = arith.mulf %167, %163 : vector<8x3xf32>
      %169 = arith.addf %151, %168 : vector<8x3xf32>
      %170 = arith.truncf %169 : vector<8x3xf32> to vector<8x3xbf16>
      %cst_52 = arith.constant dense<0.000000e+00> : vector<8x96xf32>
      %171 = tpu.matmul %170, %1, %cst_52 {dimension_numbers = #tpu.dot_dimension_numbers<[1], [0], [0], [1], [0, 0, 1, 1], [], []>} : vector<8x3xbf16>, vector<3x96xbf16>, vector<8x96xf32> -> vector<8x96xf32>
      %172 = vector.broadcast %165 : f32 to vector<8x96xf32>
      %173 = arith.mulf %172, %6 : vector<8x96xf32>
      %174 = arith.addf %171, %173 : vector<8x96xf32>
      %175 = arith.addf %174, %9 : vector<8x96xf32>
      %176 = math.tanh %175 : vector<8x96xf32>
      %177 = arith.truncf %176 : vector<8x96xf32> to vector<8x96xbf16>
      %cst_53 = arith.constant dense<0.000000e+00> : vector<8x3xf32>
      %178 = tpu.matmul %177, %3, %cst_53 {dimension_numbers = #tpu.dot_dimension_numbers<[1], [0], [0], [1], [0, 0, 1, 1], [], []>} : vector<8x96xbf16>, vector<96x3xbf16>, vector<8x3xf32> -> vector<8x3xf32>
      %cst_54 = arith.constant 5.000000e-01 : f32
      %179 = arith.mulf %cst_54, %10 : f32
      %180 = arith.addf %154, %179 : f32
      %cst_55 = arith.constant 5.000000e-01 : f32
      %181 = arith.mulf %cst_55, %10 : f32
      %182 = vector.broadcast %181 : f32 to vector<8x3xf32>
      %183 = arith.mulf %182, %178 : vector<8x3xf32>
      %184 = arith.addf %151, %183 : vector<8x3xf32>
      %185 = arith.truncf %184 : vector<8x3xf32> to vector<8x3xbf16>
      %cst_56 = arith.constant dense<0.000000e+00> : vector<8x96xf32>
      %186 = tpu.matmul %185, %1, %cst_56 {dimension_numbers = #tpu.dot_dimension_numbers<[1], [0], [0], [1], [0, 0, 1, 1], [], []>} : vector<8x3xbf16>, vector<3x96xbf16>, vector<8x96xf32> -> vector<8x96xf32>
      %187 = vector.broadcast %180 : f32 to vector<8x96xf32>
      %188 = arith.mulf %187, %6 : vector<8x96xf32>
      %189 = arith.addf %186, %188 : vector<8x96xf32>
      %190 = arith.addf %189, %9 : vector<8x96xf32>
      %191 = math.tanh %190 : vector<8x96xf32>
      %192 = arith.truncf %191 : vector<8x96xf32> to vector<8x96xbf16>
      %cst_57 = arith.constant dense<0.000000e+00> : vector<8x3xf32>
      %193 = tpu.matmul %192, %3, %cst_57 {dimension_numbers = #tpu.dot_dimension_numbers<[1], [0], [0], [1], [0, 0, 1, 1], [], []>} : vector<8x96xbf16>, vector<96x3xbf16>, vector<8x3xf32> -> vector<8x3xf32>
      %194 = arith.addf %154, %10 : f32
      %195 = vector.broadcast %10 : f32 to vector<8x3xf32>
      %196 = arith.mulf %195, %193 : vector<8x3xf32>
      %197 = arith.addf %151, %196 : vector<8x3xf32>
      %198 = arith.truncf %197 : vector<8x3xf32> to vector<8x3xbf16>
      %cst_58 = arith.constant dense<0.000000e+00> : vector<8x96xf32>
      %199 = tpu.matmul %198, %1, %cst_58 {dimension_numbers = #tpu.dot_dimension_numbers<[1], [0], [0], [1], [0, 0, 1, 1], [], []>} : vector<8x3xbf16>, vector<3x96xbf16>, vector<8x96xf32> -> vector<8x96xf32>
      %200 = vector.broadcast %194 : f32 to vector<8x96xf32>
      %201 = arith.mulf %200, %6 : vector<8x96xf32>
      %202 = arith.addf %199, %201 : vector<8x96xf32>
      %203 = arith.addf %202, %9 : vector<8x96xf32>
      %204 = math.tanh %203 : vector<8x96xf32>
      %205 = arith.truncf %204 : vector<8x96xf32> to vector<8x96xbf16>
      %cst_59 = arith.constant dense<0.000000e+00> : vector<8x3xf32>
      %206 = tpu.matmul %205, %3, %cst_59 {dimension_numbers = #tpu.dot_dimension_numbers<[1], [0], [0], [1], [0, 0, 1, 1], [], []>} : vector<8x96xbf16>, vector<96x3xbf16>, vector<8x3xf32> -> vector<8x3xf32>
      %cst_60 = arith.constant 6.000000e+00 : f32
      %207 = arith.divf %10, %cst_60 : f32
      %cst_61 = arith.constant 2.000000e+00 : f32
      %208 = vector.broadcast %cst_61 : f32 to vector<8x3xf32>
      %209 = arith.mulf %208, %178 : vector<8x3xf32>
      %210 = arith.addf %163, %209 : vector<8x3xf32>
      %cst_62 = arith.constant 2.000000e+00 : f32
      %211 = vector.broadcast %cst_62 : f32 to vector<8x3xf32>
      %212 = arith.mulf %211, %193 : vector<8x3xf32>
      %213 = arith.addf %210, %212 : vector<8x3xf32>
      %214 = arith.addf %213, %206 : vector<8x3xf32>
      %215 = vector.broadcast %207 : f32 to vector<8x3xf32>
      %216 = arith.mulf %215, %214 : vector<8x3xf32>
      %217 = arith.addf %151, %216 : vector<8x3xf32>
      %c3_i32 = arith.constant 3 : i32
      %218 = arith.sitofp %c3_i32 : i32 to f32
      %219 = arith.mulf %218, %10 : f32
      %220 = arith.addf %19, %219 : f32
      %221 = arith.truncf %217 : vector<8x3xf32> to vector<8x3xbf16>
      %cst_63 = arith.constant dense<0.000000e+00> : vector<8x96xf32>
      %222 = tpu.matmul %221, %1, %cst_63 {dimension_numbers = #tpu.dot_dimension_numbers<[1], [0], [0], [1], [0, 0, 1, 1], [], []>} : vector<8x3xbf16>, vector<3x96xbf16>, vector<8x96xf32> -> vector<8x96xf32>
      %223 = vector.broadcast %220 : f32 to vector<8x96xf32>
      %224 = arith.mulf %223, %6 : vector<8x96xf32>
      %225 = arith.addf %222, %224 : vector<8x96xf32>
      %226 = arith.addf %225, %9 : vector<8x96xf32>
      %227 = math.tanh %226 : vector<8x96xf32>
      %228 = arith.truncf %227 : vector<8x96xf32> to vector<8x96xbf16>
      %cst_64 = arith.constant dense<0.000000e+00> : vector<8x3xf32>
      %229 = tpu.matmul %228, %3, %cst_64 {dimension_numbers = #tpu.dot_dimension_numbers<[1], [0], [0], [1], [0, 0, 1, 1], [], []>} : vector<8x96xbf16>, vector<96x3xbf16>, vector<8x3xf32> -> vector<8x3xf32>
      %cst_65 = arith.constant 5.000000e-01 : f32
      %230 = arith.mulf %cst_65, %10 : f32
      %231 = arith.addf %220, %230 : f32
      %cst_66 = arith.constant 5.000000e-01 : f32
      %232 = arith.mulf %cst_66, %10 : f32
      %233 = vector.broadcast %232 : f32 to vector<8x3xf32>
      %234 = arith.mulf %233, %229 : vector<8x3xf32>
      %235 = arith.addf %217, %234 : vector<8x3xf32>
      %236 = arith.truncf %235 : vector<8x3xf32> to vector<8x3xbf16>
      %cst_67 = arith.constant dense<0.000000e+00> : vector<8x96xf32>
      %237 = tpu.matmul %236, %1, %cst_67 {dimension_numbers = #tpu.dot_dimension_numbers<[1], [0], [0], [1], [0, 0, 1, 1], [], []>} : vector<8x3xbf16>, vector<3x96xbf16>, vector<8x96xf32> -> vector<8x96xf32>
      %238 = vector.broadcast %231 : f32 to vector<8x96xf32>
      %239 = arith.mulf %238, %6 : vector<8x96xf32>
      %240 = arith.addf %237, %239 : vector<8x96xf32>
      %241 = arith.addf %240, %9 : vector<8x96xf32>
      %242 = math.tanh %241 : vector<8x96xf32>
      %243 = arith.truncf %242 : vector<8x96xf32> to vector<8x96xbf16>
      %cst_68 = arith.constant dense<0.000000e+00> : vector<8x3xf32>
      %244 = tpu.matmul %243, %3, %cst_68 {dimension_numbers = #tpu.dot_dimension_numbers<[1], [0], [0], [1], [0, 0, 1, 1], [], []>} : vector<8x96xbf16>, vector<96x3xbf16>, vector<8x3xf32> -> vector<8x3xf32>
      %cst_69 = arith.constant 5.000000e-01 : f32
      %245 = arith.mulf %cst_69, %10 : f32
      %246 = arith.addf %220, %245 : f32
      %cst_70 = arith.constant 5.000000e-01 : f32
      %247 = arith.mulf %cst_70, %10 : f32
      %248 = vector.broadcast %247 : f32 to vector<8x3xf32>
      %249 = arith.mulf %248, %244 : vector<8x3xf32>
      %250 = arith.addf %217, %249 : vector<8x3xf32>
      %251 = arith.truncf %250 : vector<8x3xf32> to vector<8x3xbf16>
      %cst_71 = arith.constant dense<0.000000e+00> : vector<8x96xf32>
      %252 = tpu.matmul %251, %1, %cst_71 {dimension_numbers = #tpu.dot_dimension_numbers<[1], [0], [0], [1], [0, 0, 1, 1], [], []>} : vector<8x3xbf16>, vector<3x96xbf16>, vector<8x96xf32> -> vector<8x96xf32>
      %253 = vector.broadcast %246 : f32 to vector<8x96xf32>
      %254 = arith.mulf %253, %6 : vector<8x96xf32>
      %255 = arith.addf %252, %254 : vector<8x96xf32>
      %256 = arith.addf %255, %9 : vector<8x96xf32>
      %257 = math.tanh %256 : vector<8x96xf32>
      %258 = arith.truncf %257 : vector<8x96xf32> to vector<8x96xbf16>
      %cst_72 = arith.constant dense<0.000000e+00> : vector<8x3xf32>
      %259 = tpu.matmul %258, %3, %cst_72 {dimension_numbers = #tpu.dot_dimension_numbers<[1], [0], [0], [1], [0, 0, 1, 1], [], []>} : vector<8x96xbf16>, vector<96x3xbf16>, vector<8x3xf32> -> vector<8x3xf32>
      %260 = arith.addf %220, %10 : f32
      %261 = vector.broadcast %10 : f32 to vector<8x3xf32>
      %262 = arith.mulf %261, %259 : vector<8x3xf32>
      %263 = arith.addf %217, %262 : vector<8x3xf32>
      %264 = arith.truncf %263 : vector<8x3xf32> to vector<8x3xbf16>
      %cst_73 = arith.constant dense<0.000000e+00> : vector<8x96xf32>
      %265 = tpu.matmul %264, %1, %cst_73 {dimension_numbers = #tpu.dot_dimension_numbers<[1], [0], [0], [1], [0, 0, 1, 1], [], []>} : vector<8x3xbf16>, vector<3x96xbf16>, vector<8x96xf32> -> vector<8x96xf32>
      %266 = vector.broadcast %260 : f32 to vector<8x96xf32>
      %267 = arith.mulf %266, %6 : vector<8x96xf32>
      %268 = arith.addf %265, %267 : vector<8x96xf32>
      %269 = arith.addf %268, %9 : vector<8x96xf32>
      %270 = math.tanh %269 : vector<8x96xf32>
      %271 = arith.truncf %270 : vector<8x96xf32> to vector<8x96xbf16>
      %cst_74 = arith.constant dense<0.000000e+00> : vector<8x3xf32>
      %272 = tpu.matmul %271, %3, %cst_74 {dimension_numbers = #tpu.dot_dimension_numbers<[1], [0], [0], [1], [0, 0, 1, 1], [], []>} : vector<8x96xbf16>, vector<96x3xbf16>, vector<8x3xf32> -> vector<8x3xf32>
      %cst_75 = arith.constant 6.000000e+00 : f32
      %273 = arith.divf %10, %cst_75 : f32
      %cst_76 = arith.constant 2.000000e+00 : f32
      %274 = vector.broadcast %cst_76 : f32 to vector<8x3xf32>
      %275 = arith.mulf %274, %244 : vector<8x3xf32>
      %276 = arith.addf %229, %275 : vector<8x3xf32>
      %cst_77 = arith.constant 2.000000e+00 : f32
      %277 = vector.broadcast %cst_77 : f32 to vector<8x3xf32>
      %278 = arith.mulf %277, %259 : vector<8x3xf32>
      %279 = arith.addf %276, %278 : vector<8x3xf32>
      %280 = arith.addf %279, %272 : vector<8x3xf32>
      %281 = vector.broadcast %273 : f32 to vector<8x3xf32>
      %282 = arith.mulf %281, %280 : vector<8x3xf32>
      %283 = arith.addf %217, %282 : vector<8x3xf32>
      %c4_i32 = arith.constant 4 : i32
      %284 = arith.sitofp %c4_i32 : i32 to f32
      %285 = arith.mulf %284, %10 : f32
      %286 = arith.addf %19, %285 : f32
      %287 = arith.truncf %283 : vector<8x3xf32> to vector<8x3xbf16>
      %cst_78 = arith.constant dense<0.000000e+00> : vector<8x96xf32>
      %288 = tpu.matmul %287, %1, %cst_78 {dimension_numbers = #tpu.dot_dimension_numbers<[1], [0], [0], [1], [0, 0, 1, 1], [], []>} : vector<8x3xbf16>, vector<3x96xbf16>, vector<8x96xf32> -> vector<8x96xf32>
      %289 = vector.broadcast %286 : f32 to vector<8x96xf32>
      %290 = arith.mulf %289, %6 : vector<8x96xf32>
      %291 = arith.addf %288, %290 : vector<8x96xf32>
      %292 = arith.addf %291, %9 : vector<8x96xf32>
      %293 = math.tanh %292 : vector<8x96xf32>
      %294 = arith.truncf %293 : vector<8x96xf32> to vector<8x96xbf16>
      %cst_79 = arith.constant dense<0.000000e+00> : vector<8x3xf32>
      %295 = tpu.matmul %294, %3, %cst_79 {dimension_numbers = #tpu.dot_dimension_numbers<[1], [0], [0], [1], [0, 0, 1, 1], [], []>} : vector<8x96xbf16>, vector<96x3xbf16>, vector<8x3xf32> -> vector<8x3xf32>
      %cst_80 = arith.constant 5.000000e-01 : f32
      %296 = arith.mulf %cst_80, %10 : f32
      %297 = arith.addf %286, %296 : f32
      %cst_81 = arith.constant 5.000000e-01 : f32
      %298 = arith.mulf %cst_81, %10 : f32
      %299 = vector.broadcast %298 : f32 to vector<8x3xf32>
      %300 = arith.mulf %299, %295 : vector<8x3xf32>
      %301 = arith.addf %283, %300 : vector<8x3xf32>
      %302 = arith.truncf %301 : vector<8x3xf32> to vector<8x3xbf16>
      %cst_82 = arith.constant dense<0.000000e+00> : vector<8x96xf32>
      %303 = tpu.matmul %302, %1, %cst_82 {dimension_numbers = #tpu.dot_dimension_numbers<[1], [0], [0], [1], [0, 0, 1, 1], [], []>} : vector<8x3xbf16>, vector<3x96xbf16>, vector<8x96xf32> -> vector<8x96xf32>
      %304 = vector.broadcast %297 : f32 to vector<8x96xf32>
      %305 = arith.mulf %304, %6 : vector<8x96xf32>
      %306 = arith.addf %303, %305 : vector<8x96xf32>
      %307 = arith.addf %306, %9 : vector<8x96xf32>
      %308 = math.tanh %307 : vector<8x96xf32>
      %309 = arith.truncf %308 : vector<8x96xf32> to vector<8x96xbf16>
      %cst_83 = arith.constant dense<0.000000e+00> : vector<8x3xf32>
      %310 = tpu.matmul %309, %3, %cst_83 {dimension_numbers = #tpu.dot_dimension_numbers<[1], [0], [0], [1], [0, 0, 1, 1], [], []>} : vector<8x96xbf16>, vector<96x3xbf16>, vector<8x3xf32> -> vector<8x3xf32>
      %cst_84 = arith.constant 5.000000e-01 : f32
      %311 = arith.mulf %cst_84, %10 : f32
      %312 = arith.addf %286, %311 : f32
      %cst_85 = arith.constant 5.000000e-01 : f32
      %313 = arith.mulf %cst_85, %10 : f32
      %314 = vector.broadcast %313 : f32 to vector<8x3xf32>
      %315 = arith.mulf %314, %310 : vector<8x3xf32>
      %316 = arith.addf %283, %315 : vector<8x3xf32>
      %317 = arith.truncf %316 : vector<8x3xf32> to vector<8x3xbf16>
      %cst_86 = arith.constant dense<0.000000e+00> : vector<8x96xf32>
      %318 = tpu.matmul %317, %1, %cst_86 {dimension_numbers = #tpu.dot_dimension_numbers<[1], [0], [0], [1], [0, 0, 1, 1], [], []>} : vector<8x3xbf16>, vector<3x96xbf16>, vector<8x96xf32> -> vector<8x96xf32>
      %319 = vector.broadcast %312 : f32 to vector<8x96xf32>
      %320 = arith.mulf %319, %6 : vector<8x96xf32>
      %321 = arith.addf %318, %320 : vector<8x96xf32>
      %322 = arith.addf %321, %9 : vector<8x96xf32>
      %323 = math.tanh %322 : vector<8x96xf32>
      %324 = arith.truncf %323 : vector<8x96xf32> to vector<8x96xbf16>
      %cst_87 = arith.constant dense<0.000000e+00> : vector<8x3xf32>
      %325 = tpu.matmul %324, %3, %cst_87 {dimension_numbers = #tpu.dot_dimension_numbers<[1], [0], [0], [1], [0, 0, 1, 1], [], []>} : vector<8x96xbf16>, vector<96x3xbf16>, vector<8x3xf32> -> vector<8x3xf32>
      %326 = arith.addf %286, %10 : f32
      %327 = vector.broadcast %10 : f32 to vector<8x3xf32>
      %328 = arith.mulf %327, %325 : vector<8x3xf32>
      %329 = arith.addf %283, %328 : vector<8x3xf32>
      %330 = arith.truncf %329 : vector<8x3xf32> to vector<8x3xbf16>
      %cst_88 = arith.constant dense<0.000000e+00> : vector<8x96xf32>
      %331 = tpu.matmul %330, %1, %cst_88 {dimension_numbers = #tpu.dot_dimension_numbers<[1], [0], [0], [1], [0, 0, 1, 1], [], []>} : vector<8x3xbf16>, vector<3x96xbf16>, vector<8x96xf32> -> vector<8x96xf32>
      %332 = vector.broadcast %326 : f32 to vector<8x96xf32>
      %333 = arith.mulf %332, %6 : vector<8x96xf32>
      %334 = arith.addf %331, %333 : vector<8x96xf32>
      %335 = arith.addf %334, %9 : vector<8x96xf32>
      %336 = math.tanh %335 : vector<8x96xf32>
      %337 = arith.truncf %336 : vector<8x96xf32> to vector<8x96xbf16>
      %cst_89 = arith.constant dense<0.000000e+00> : vector<8x3xf32>
      %338 = tpu.matmul %337, %3, %cst_89 {dimension_numbers = #tpu.dot_dimension_numbers<[1], [0], [0], [1], [0, 0, 1, 1], [], []>} : vector<8x96xbf16>, vector<96x3xbf16>, vector<8x3xf32> -> vector<8x3xf32>
      %cst_90 = arith.constant 6.000000e+00 : f32
      %339 = arith.divf %10, %cst_90 : f32
      %cst_91 = arith.constant 2.000000e+00 : f32
      %340 = vector.broadcast %cst_91 : f32 to vector<8x3xf32>
      %341 = arith.mulf %340, %310 : vector<8x3xf32>
      %342 = arith.addf %295, %341 : vector<8x3xf32>
      %cst_92 = arith.constant 2.000000e+00 : f32
      %343 = vector.broadcast %cst_92 : f32 to vector<8x3xf32>
      %344 = arith.mulf %343, %325 : vector<8x3xf32>
      %345 = arith.addf %342, %344 : vector<8x3xf32>
      %346 = arith.addf %345, %338 : vector<8x3xf32>
      %347 = vector.broadcast %339 : f32 to vector<8x3xf32>
      %348 = arith.mulf %347, %346 : vector<8x3xf32>
      %349 = arith.addf %283, %348 : vector<8x3xf32>
      %c5_i32 = arith.constant 5 : i32
      %350 = arith.sitofp %c5_i32 : i32 to f32
      %351 = arith.mulf %350, %10 : f32
      %352 = arith.addf %19, %351 : f32
      %353 = arith.truncf %349 : vector<8x3xf32> to vector<8x3xbf16>
      %cst_93 = arith.constant dense<0.000000e+00> : vector<8x96xf32>
      %354 = tpu.matmul %353, %1, %cst_93 {dimension_numbers = #tpu.dot_dimension_numbers<[1], [0], [0], [1], [0, 0, 1, 1], [], []>} : vector<8x3xbf16>, vector<3x96xbf16>, vector<8x96xf32> -> vector<8x96xf32>
      %355 = vector.broadcast %352 : f32 to vector<8x96xf32>
      %356 = arith.mulf %355, %6 : vector<8x96xf32>
      %357 = arith.addf %354, %356 : vector<8x96xf32>
      %358 = arith.addf %357, %9 : vector<8x96xf32>
      %359 = math.tanh %358 : vector<8x96xf32>
      %360 = arith.truncf %359 : vector<8x96xf32> to vector<8x96xbf16>
      %cst_94 = arith.constant dense<0.000000e+00> : vector<8x3xf32>
      %361 = tpu.matmul %360, %3, %cst_94 {dimension_numbers = #tpu.dot_dimension_numbers<[1], [0], [0], [1], [0, 0, 1, 1], [], []>} : vector<8x96xbf16>, vector<96x3xbf16>, vector<8x3xf32> -> vector<8x3xf32>
      %cst_95 = arith.constant 5.000000e-01 : f32
      %362 = arith.mulf %cst_95, %10 : f32
      %363 = arith.addf %352, %362 : f32
      %cst_96 = arith.constant 5.000000e-01 : f32
      %364 = arith.mulf %cst_96, %10 : f32
      %365 = vector.broadcast %364 : f32 to vector<8x3xf32>
      %366 = arith.mulf %365, %361 : vector<8x3xf32>
      %367 = arith.addf %349, %366 : vector<8x3xf32>
      %368 = arith.truncf %367 : vector<8x3xf32> to vector<8x3xbf16>
      %cst_97 = arith.constant dense<0.000000e+00> : vector<8x96xf32>
      %369 = tpu.matmul %368, %1, %cst_97 {dimension_numbers = #tpu.dot_dimension_numbers<[1], [0], [0], [1], [0, 0, 1, 1], [], []>} : vector<8x3xbf16>, vector<3x96xbf16>, vector<8x96xf32> -> vector<8x96xf32>
      %370 = vector.broadcast %363 : f32 to vector<8x96xf32>
      %371 = arith.mulf %370, %6 : vector<8x96xf32>
      %372 = arith.addf %369, %371 : vector<8x96xf32>
      %373 = arith.addf %372, %9 : vector<8x96xf32>
      %374 = math.tanh %373 : vector<8x96xf32>
      %375 = arith.truncf %374 : vector<8x96xf32> to vector<8x96xbf16>
      %cst_98 = arith.constant dense<0.000000e+00> : vector<8x3xf32>
      %376 = tpu.matmul %375, %3, %cst_98 {dimension_numbers = #tpu.dot_dimension_numbers<[1], [0], [0], [1], [0, 0, 1, 1], [], []>} : vector<8x96xbf16>, vector<96x3xbf16>, vector<8x3xf32> -> vector<8x3xf32>
      %cst_99 = arith.constant 5.000000e-01 : f32
      %377 = arith.mulf %cst_99, %10 : f32
      %378 = arith.addf %352, %377 : f32
      %cst_100 = arith.constant 5.000000e-01 : f32
      %379 = arith.mulf %cst_100, %10 : f32
      %380 = vector.broadcast %379 : f32 to vector<8x3xf32>
      %381 = arith.mulf %380, %376 : vector<8x3xf32>
      %382 = arith.addf %349, %381 : vector<8x3xf32>
      %383 = arith.truncf %382 : vector<8x3xf32> to vector<8x3xbf16>
      %cst_101 = arith.constant dense<0.000000e+00> : vector<8x96xf32>
      %384 = tpu.matmul %383, %1, %cst_101 {dimension_numbers = #tpu.dot_dimension_numbers<[1], [0], [0], [1], [0, 0, 1, 1], [], []>} : vector<8x3xbf16>, vector<3x96xbf16>, vector<8x96xf32> -> vector<8x96xf32>
      %385 = vector.broadcast %378 : f32 to vector<8x96xf32>
      %386 = arith.mulf %385, %6 : vector<8x96xf32>
      %387 = arith.addf %384, %386 : vector<8x96xf32>
      %388 = arith.addf %387, %9 : vector<8x96xf32>
      %389 = math.tanh %388 : vector<8x96xf32>
      %390 = arith.truncf %389 : vector<8x96xf32> to vector<8x96xbf16>
      %cst_102 = arith.constant dense<0.000000e+00> : vector<8x3xf32>
      %391 = tpu.matmul %390, %3, %cst_102 {dimension_numbers = #tpu.dot_dimension_numbers<[1], [0], [0], [1], [0, 0, 1, 1], [], []>} : vector<8x96xbf16>, vector<96x3xbf16>, vector<8x3xf32> -> vector<8x3xf32>
      %392 = arith.addf %352, %10 : f32
      %393 = vector.broadcast %10 : f32 to vector<8x3xf32>
      %394 = arith.mulf %393, %391 : vector<8x3xf32>
      %395 = arith.addf %349, %394 : vector<8x3xf32>
      %396 = arith.truncf %395 : vector<8x3xf32> to vector<8x3xbf16>
      %cst_103 = arith.constant dense<0.000000e+00> : vector<8x96xf32>
      %397 = tpu.matmul %396, %1, %cst_103 {dimension_numbers = #tpu.dot_dimension_numbers<[1], [0], [0], [1], [0, 0, 1, 1], [], []>} : vector<8x3xbf16>, vector<3x96xbf16>, vector<8x96xf32> -> vector<8x96xf32>
      %398 = vector.broadcast %392 : f32 to vector<8x96xf32>
      %399 = arith.mulf %398, %6 : vector<8x96xf32>
      %400 = arith.addf %397, %399 : vector<8x96xf32>
      %401 = arith.addf %400, %9 : vector<8x96xf32>
      %402 = math.tanh %401 : vector<8x96xf32>
      %403 = arith.truncf %402 : vector<8x96xf32> to vector<8x96xbf16>
      %cst_104 = arith.constant dense<0.000000e+00> : vector<8x3xf32>
      %404 = tpu.matmul %403, %3, %cst_104 {dimension_numbers = #tpu.dot_dimension_numbers<[1], [0], [0], [1], [0, 0, 1, 1], [], []>} : vector<8x96xbf16>, vector<96x3xbf16>, vector<8x3xf32> -> vector<8x3xf32>
      %cst_105 = arith.constant 6.000000e+00 : f32
      %405 = arith.divf %10, %cst_105 : f32
      %cst_106 = arith.constant 2.000000e+00 : f32
      %406 = vector.broadcast %cst_106 : f32 to vector<8x3xf32>
      %407 = arith.mulf %406, %376 : vector<8x3xf32>
      %408 = arith.addf %361, %407 : vector<8x3xf32>
      %cst_107 = arith.constant 2.000000e+00 : f32
      %409 = vector.broadcast %cst_107 : f32 to vector<8x3xf32>
      %410 = arith.mulf %409, %391 : vector<8x3xf32>
      %411 = arith.addf %408, %410 : vector<8x3xf32>
      %412 = arith.addf %411, %404 : vector<8x3xf32>
      %413 = vector.broadcast %405 : f32 to vector<8x3xf32>
      %414 = arith.mulf %413, %412 : vector<8x3xf32>
      %415 = arith.addf %349, %414 : vector<8x3xf32>
      %c6_i32 = arith.constant 6 : i32
      %416 = arith.sitofp %c6_i32 : i32 to f32
      %417 = arith.mulf %416, %10 : f32
      %418 = arith.addf %19, %417 : f32
      %419 = arith.truncf %415 : vector<8x3xf32> to vector<8x3xbf16>
      %cst_108 = arith.constant dense<0.000000e+00> : vector<8x96xf32>
      %420 = tpu.matmul %419, %1, %cst_108 {dimension_numbers = #tpu.dot_dimension_numbers<[1], [0], [0], [1], [0, 0, 1, 1], [], []>} : vector<8x3xbf16>, vector<3x96xbf16>, vector<8x96xf32> -> vector<8x96xf32>
      %421 = vector.broadcast %418 : f32 to vector<8x96xf32>
      %422 = arith.mulf %421, %6 : vector<8x96xf32>
      %423 = arith.addf %420, %422 : vector<8x96xf32>
      %424 = arith.addf %423, %9 : vector<8x96xf32>
      %425 = math.tanh %424 : vector<8x96xf32>
      %426 = arith.truncf %425 : vector<8x96xf32> to vector<8x96xbf16>
      %cst_109 = arith.constant dense<0.000000e+00> : vector<8x3xf32>
      %427 = tpu.matmul %426, %3, %cst_109 {dimension_numbers = #tpu.dot_dimension_numbers<[1], [0], [0], [1], [0, 0, 1, 1], [], []>} : vector<8x96xbf16>, vector<96x3xbf16>, vector<8x3xf32> -> vector<8x3xf32>
      %cst_110 = arith.constant 5.000000e-01 : f32
      %428 = arith.mulf %cst_110, %10 : f32
      %429 = arith.addf %418, %428 : f32
      %cst_111 = arith.constant 5.000000e-01 : f32
      %430 = arith.mulf %cst_111, %10 : f32
      %431 = vector.broadcast %430 : f32 to vector<8x3xf32>
      %432 = arith.mulf %431, %427 : vector<8x3xf32>
      %433 = arith.addf %415, %432 : vector<8x3xf32>
      %434 = arith.truncf %433 : vector<8x3xf32> to vector<8x3xbf16>
      %cst_112 = arith.constant dense<0.000000e+00> : vector<8x96xf32>
      %435 = tpu.matmul %434, %1, %cst_112 {dimension_numbers = #tpu.dot_dimension_numbers<[1], [0], [0], [1], [0, 0, 1, 1], [], []>} : vector<8x3xbf16>, vector<3x96xbf16>, vector<8x96xf32> -> vector<8x96xf32>
      %436 = vector.broadcast %429 : f32 to vector<8x96xf32>
      %437 = arith.mulf %436, %6 : vector<8x96xf32>
      %438 = arith.addf %435, %437 : vector<8x96xf32>
      %439 = arith.addf %438, %9 : vector<8x96xf32>
      %440 = math.tanh %439 : vector<8x96xf32>
      %441 = arith.truncf %440 : vector<8x96xf32> to vector<8x96xbf16>
      %cst_113 = arith.constant dense<0.000000e+00> : vector<8x3xf32>
      %442 = tpu.matmul %441, %3, %cst_113 {dimension_numbers = #tpu.dot_dimension_numbers<[1], [0], [0], [1], [0, 0, 1, 1], [], []>} : vector<8x96xbf16>, vector<96x3xbf16>, vector<8x3xf32> -> vector<8x3xf32>
      %cst_114 = arith.constant 5.000000e-01 : f32
      %443 = arith.mulf %cst_114, %10 : f32
      %444 = arith.addf %418, %443 : f32
      %cst_115 = arith.constant 5.000000e-01 : f32
      %445 = arith.mulf %cst_115, %10 : f32
      %446 = vector.broadcast %445 : f32 to vector<8x3xf32>
      %447 = arith.mulf %446, %442 : vector<8x3xf32>
      %448 = arith.addf %415, %447 : vector<8x3xf32>
      %449 = arith.truncf %448 : vector<8x3xf32> to vector<8x3xbf16>
      %cst_116 = arith.constant dense<0.000000e+00> : vector<8x96xf32>
      %450 = tpu.matmul %449, %1, %cst_116 {dimension_numbers = #tpu.dot_dimension_numbers<[1], [0], [0], [1], [0, 0, 1, 1], [], []>} : vector<8x3xbf16>, vector<3x96xbf16>, vector<8x96xf32> -> vector<8x96xf32>
      %451 = vector.broadcast %444 : f32 to vector<8x96xf32>
      %452 = arith.mulf %451, %6 : vector<8x96xf32>
      %453 = arith.addf %450, %452 : vector<8x96xf32>
      %454 = arith.addf %453, %9 : vector<8x96xf32>
      %455 = math.tanh %454 : vector<8x96xf32>
      %456 = arith.truncf %455 : vector<8x96xf32> to vector<8x96xbf16>
      %cst_117 = arith.constant dense<0.000000e+00> : vector<8x3xf32>
      %457 = tpu.matmul %456, %3, %cst_117 {dimension_numbers = #tpu.dot_dimension_numbers<[1], [0], [0], [1], [0, 0, 1, 1], [], []>} : vector<8x96xbf16>, vector<96x3xbf16>, vector<8x3xf32> -> vector<8x3xf32>
      %458 = arith.addf %418, %10 : f32
      %459 = vector.broadcast %10 : f32 to vector<8x3xf32>
      %460 = arith.mulf %459, %457 : vector<8x3xf32>
      %461 = arith.addf %415, %460 : vector<8x3xf32>
      %462 = arith.truncf %461 : vector<8x3xf32> to vector<8x3xbf16>
      %cst_118 = arith.constant dense<0.000000e+00> : vector<8x96xf32>
      %463 = tpu.matmul %462, %1, %cst_118 {dimension_numbers = #tpu.dot_dimension_numbers<[1], [0], [0], [1], [0, 0, 1, 1], [], []>} : vector<8x3xbf16>, vector<3x96xbf16>, vector<8x96xf32> -> vector<8x96xf32>
      %464 = vector.broadcast %458 : f32 to vector<8x96xf32>
      %465 = arith.mulf %464, %6 : vector<8x96xf32>
      %466 = arith.addf %463, %465 : vector<8x96xf32>
      %467 = arith.addf %466, %9 : vector<8x96xf32>
      %468 = math.tanh %467 : vector<8x96xf32>
      %469 = arith.truncf %468 : vector<8x96xf32> to vector<8x96xbf16>
      %cst_119 = arith.constant dense<0.000000e+00> : vector<8x3xf32>
      %470 = tpu.matmul %469, %3, %cst_119 {dimension_numbers = #tpu.dot_dimension_numbers<[1], [0], [0], [1], [0, 0, 1, 1], [], []>} : vector<8x96xbf16>, vector<96x3xbf16>, vector<8x3xf32> -> vector<8x3xf32>
      %cst_120 = arith.constant 6.000000e+00 : f32
      %471 = arith.divf %10, %cst_120 : f32
      %cst_121 = arith.constant 2.000000e+00 : f32
      %472 = vector.broadcast %cst_121 : f32 to vector<8x3xf32>
      %473 = arith.mulf %472, %442 : vector<8x3xf32>
      %474 = arith.addf %427, %473 : vector<8x3xf32>
      %cst_122 = arith.constant 2.000000e+00 : f32
      %475 = vector.broadcast %cst_122 : f32 to vector<8x3xf32>
      %476 = arith.mulf %475, %457 : vector<8x3xf32>
      %477 = arith.addf %474, %476 : vector<8x3xf32>
      %478 = arith.addf %477, %470 : vector<8x3xf32>
      %479 = vector.broadcast %471 : f32 to vector<8x3xf32>
      %480 = arith.mulf %479, %478 : vector<8x3xf32>
      %481 = arith.addf %415, %480 : vector<8x3xf32>
      %c7_i32 = arith.constant 7 : i32
      %482 = arith.sitofp %c7_i32 : i32 to f32
      %483 = arith.mulf %482, %10 : f32
      %484 = arith.addf %19, %483 : f32
      %485 = arith.truncf %481 : vector<8x3xf32> to vector<8x3xbf16>
      %cst_123 = arith.constant dense<0.000000e+00> : vector<8x96xf32>
      %486 = tpu.matmul %485, %1, %cst_123 {dimension_numbers = #tpu.dot_dimension_numbers<[1], [0], [0], [1], [0, 0, 1, 1], [], []>} : vector<8x3xbf16>, vector<3x96xbf16>, vector<8x96xf32> -> vector<8x96xf32>
      %487 = vector.broadcast %484 : f32 to vector<8x96xf32>
      %488 = arith.mulf %487, %6 : vector<8x96xf32>
      %489 = arith.addf %486, %488 : vector<8x96xf32>
      %490 = arith.addf %489, %9 : vector<8x96xf32>
      %491 = math.tanh %490 : vector<8x96xf32>
      %492 = arith.truncf %491 : vector<8x96xf32> to vector<8x96xbf16>
      %cst_124 = arith.constant dense<0.000000e+00> : vector<8x3xf32>
      %493 = tpu.matmul %492, %3, %cst_124 {dimension_numbers = #tpu.dot_dimension_numbers<[1], [0], [0], [1], [0, 0, 1, 1], [], []>} : vector<8x96xbf16>, vector<96x3xbf16>, vector<8x3xf32> -> vector<8x3xf32>
      %cst_125 = arith.constant 5.000000e-01 : f32
      %494 = arith.mulf %cst_125, %10 : f32
      %495 = arith.addf %484, %494 : f32
      %cst_126 = arith.constant 5.000000e-01 : f32
      %496 = arith.mulf %cst_126, %10 : f32
      %497 = vector.broadcast %496 : f32 to vector<8x3xf32>
      %498 = arith.mulf %497, %493 : vector<8x3xf32>
      %499 = arith.addf %481, %498 : vector<8x3xf32>
      %500 = arith.truncf %499 : vector<8x3xf32> to vector<8x3xbf16>
      %cst_127 = arith.constant dense<0.000000e+00> : vector<8x96xf32>
      %501 = tpu.matmul %500, %1, %cst_127 {dimension_numbers = #tpu.dot_dimension_numbers<[1], [0], [0], [1], [0, 0, 1, 1], [], []>} : vector<8x3xbf16>, vector<3x96xbf16>, vector<8x96xf32> -> vector<8x96xf32>
      %502 = vector.broadcast %495 : f32 to vector<8x96xf32>
      %503 = arith.mulf %502, %6 : vector<8x96xf32>
      %504 = arith.addf %501, %503 : vector<8x96xf32>
      %505 = arith.addf %504, %9 : vector<8x96xf32>
      %506 = math.tanh %505 : vector<8x96xf32>
      %507 = arith.truncf %506 : vector<8x96xf32> to vector<8x96xbf16>
      %cst_128 = arith.constant dense<0.000000e+00> : vector<8x3xf32>
      %508 = tpu.matmul %507, %3, %cst_128 {dimension_numbers = #tpu.dot_dimension_numbers<[1], [0], [0], [1], [0, 0, 1, 1], [], []>} : vector<8x96xbf16>, vector<96x3xbf16>, vector<8x3xf32> -> vector<8x3xf32>
      %cst_129 = arith.constant 5.000000e-01 : f32
      %509 = arith.mulf %cst_129, %10 : f32
      %510 = arith.addf %484, %509 : f32
      %cst_130 = arith.constant 5.000000e-01 : f32
      %511 = arith.mulf %cst_130, %10 : f32
      %512 = vector.broadcast %511 : f32 to vector<8x3xf32>
      %513 = arith.mulf %512, %508 : vector<8x3xf32>
      %514 = arith.addf %481, %513 : vector<8x3xf32>
      %515 = arith.truncf %514 : vector<8x3xf32> to vector<8x3xbf16>
      %cst_131 = arith.constant dense<0.000000e+00> : vector<8x96xf32>
      %516 = tpu.matmul %515, %1, %cst_131 {dimension_numbers = #tpu.dot_dimension_numbers<[1], [0], [0], [1], [0, 0, 1, 1], [], []>} : vector<8x3xbf16>, vector<3x96xbf16>, vector<8x96xf32> -> vector<8x96xf32>
      %517 = vector.broadcast %510 : f32 to vector<8x96xf32>
      %518 = arith.mulf %517, %6 : vector<8x96xf32>
      %519 = arith.addf %516, %518 : vector<8x96xf32>
      %520 = arith.addf %519, %9 : vector<8x96xf32>
      %521 = math.tanh %520 : vector<8x96xf32>
      %522 = arith.truncf %521 : vector<8x96xf32> to vector<8x96xbf16>
      %cst_132 = arith.constant dense<0.000000e+00> : vector<8x3xf32>
      %523 = tpu.matmul %522, %3, %cst_132 {dimension_numbers = #tpu.dot_dimension_numbers<[1], [0], [0], [1], [0, 0, 1, 1], [], []>} : vector<8x96xbf16>, vector<96x3xbf16>, vector<8x3xf32> -> vector<8x3xf32>
      %524 = arith.addf %484, %10 : f32
      %525 = vector.broadcast %10 : f32 to vector<8x3xf32>
      %526 = arith.mulf %525, %523 : vector<8x3xf32>
      %527 = arith.addf %481, %526 : vector<8x3xf32>
      %528 = arith.truncf %527 : vector<8x3xf32> to vector<8x3xbf16>
      %cst_133 = arith.constant dense<0.000000e+00> : vector<8x96xf32>
      %529 = tpu.matmul %528, %1, %cst_133 {dimension_numbers = #tpu.dot_dimension_numbers<[1], [0], [0], [1], [0, 0, 1, 1], [], []>} : vector<8x3xbf16>, vector<3x96xbf16>, vector<8x96xf32> -> vector<8x96xf32>
      %530 = vector.broadcast %524 : f32 to vector<8x96xf32>
      %531 = arith.mulf %530, %6 : vector<8x96xf32>
      %532 = arith.addf %529, %531 : vector<8x96xf32>
      %533 = arith.addf %532, %9 : vector<8x96xf32>
      %534 = math.tanh %533 : vector<8x96xf32>
      %535 = arith.truncf %534 : vector<8x96xf32> to vector<8x96xbf16>
      %cst_134 = arith.constant dense<0.000000e+00> : vector<8x3xf32>
      %536 = tpu.matmul %535, %3, %cst_134 {dimension_numbers = #tpu.dot_dimension_numbers<[1], [0], [0], [1], [0, 0, 1, 1], [], []>} : vector<8x96xbf16>, vector<96x3xbf16>, vector<8x3xf32> -> vector<8x3xf32>
      %cst_135 = arith.constant 6.000000e+00 : f32
      %537 = arith.divf %10, %cst_135 : f32
      %cst_136 = arith.constant 2.000000e+00 : f32
      %538 = vector.broadcast %cst_136 : f32 to vector<8x3xf32>
      %539 = arith.mulf %538, %508 : vector<8x3xf32>
      %540 = arith.addf %493, %539 : vector<8x3xf32>
      %cst_137 = arith.constant 2.000000e+00 : f32
      %541 = vector.broadcast %cst_137 : f32 to vector<8x3xf32>
      %542 = arith.mulf %541, %523 : vector<8x3xf32>
      %543 = arith.addf %540, %542 : vector<8x3xf32>
      %544 = arith.addf %543, %536 : vector<8x3xf32>
      %545 = vector.broadcast %537 : f32 to vector<8x3xf32>
      %546 = arith.mulf %545, %544 : vector<8x3xf32>
      %547 = arith.addf %481, %546 : vector<8x3xf32>
      %c8_i32 = arith.constant 8 : i32
      %548 = arith.sitofp %c8_i32 : i32 to f32
      %549 = arith.mulf %548, %10 : f32
      %550 = arith.addf %19, %549 : f32
      %551 = arith.truncf %547 : vector<8x3xf32> to vector<8x3xbf16>
      %cst_138 = arith.constant dense<0.000000e+00> : vector<8x96xf32>
      %552 = tpu.matmul %551, %1, %cst_138 {dimension_numbers = #tpu.dot_dimension_numbers<[1], [0], [0], [1], [0, 0, 1, 1], [], []>} : vector<8x3xbf16>, vector<3x96xbf16>, vector<8x96xf32> -> vector<8x96xf32>
      %553 = vector.broadcast %550 : f32 to vector<8x96xf32>
      %554 = arith.mulf %553, %6 : vector<8x96xf32>
      %555 = arith.addf %552, %554 : vector<8x96xf32>
      %556 = arith.addf %555, %9 : vector<8x96xf32>
      %557 = math.tanh %556 : vector<8x96xf32>
      %558 = arith.truncf %557 : vector<8x96xf32> to vector<8x96xbf16>
      %cst_139 = arith.constant dense<0.000000e+00> : vector<8x3xf32>
      %559 = tpu.matmul %558, %3, %cst_139 {dimension_numbers = #tpu.dot_dimension_numbers<[1], [0], [0], [1], [0, 0, 1, 1], [], []>} : vector<8x96xbf16>, vector<96x3xbf16>, vector<8x3xf32> -> vector<8x3xf32>
      %cst_140 = arith.constant 5.000000e-01 : f32
      %560 = arith.mulf %cst_140, %10 : f32
      %561 = arith.addf %550, %560 : f32
      %cst_141 = arith.constant 5.000000e-01 : f32
      %562 = arith.mulf %cst_141, %10 : f32
      %563 = vector.broadcast %562 : f32 to vector<8x3xf32>
      %564 = arith.mulf %563, %559 : vector<8x3xf32>
      %565 = arith.addf %547, %564 : vector<8x3xf32>
      %566 = arith.truncf %565 : vector<8x3xf32> to vector<8x3xbf16>
      %cst_142 = arith.constant dense<0.000000e+00> : vector<8x96xf32>
      %567 = tpu.matmul %566, %1, %cst_142 {dimension_numbers = #tpu.dot_dimension_numbers<[1], [0], [0], [1], [0, 0, 1, 1], [], []>} : vector<8x3xbf16>, vector<3x96xbf16>, vector<8x96xf32> -> vector<8x96xf32>
      %568 = vector.broadcast %561 : f32 to vector<8x96xf32>
      %569 = arith.mulf %568, %6 : vector<8x96xf32>
      %570 = arith.addf %567, %569 : vector<8x96xf32>
      %571 = arith.addf %570, %9 : vector<8x96xf32>
      %572 = math.tanh %571 : vector<8x96xf32>
      %573 = arith.truncf %572 : vector<8x96xf32> to vector<8x96xbf16>
      %cst_143 = arith.constant dense<0.000000e+00> : vector<8x3xf32>
      %574 = tpu.matmul %573, %3, %cst_143 {dimension_numbers = #tpu.dot_dimension_numbers<[1], [0], [0], [1], [0, 0, 1, 1], [], []>} : vector<8x96xbf16>, vector<96x3xbf16>, vector<8x3xf32> -> vector<8x3xf32>
      %cst_144 = arith.constant 5.000000e-01 : f32
      %575 = arith.mulf %cst_144, %10 : f32
      %576 = arith.addf %550, %575 : f32
      %cst_145 = arith.constant 5.000000e-01 : f32
      %577 = arith.mulf %cst_145, %10 : f32
      %578 = vector.broadcast %577 : f32 to vector<8x3xf32>
      %579 = arith.mulf %578, %574 : vector<8x3xf32>
      %580 = arith.addf %547, %579 : vector<8x3xf32>
      %581 = arith.truncf %580 : vector<8x3xf32> to vector<8x3xbf16>
      %cst_146 = arith.constant dense<0.000000e+00> : vector<8x96xf32>
      %582 = tpu.matmul %581, %1, %cst_146 {dimension_numbers = #tpu.dot_dimension_numbers<[1], [0], [0], [1], [0, 0, 1, 1], [], []>} : vector<8x3xbf16>, vector<3x96xbf16>, vector<8x96xf32> -> vector<8x96xf32>
      %583 = vector.broadcast %576 : f32 to vector<8x96xf32>
      %584 = arith.mulf %583, %6 : vector<8x96xf32>
      %585 = arith.addf %582, %584 : vector<8x96xf32>
      %586 = arith.addf %585, %9 : vector<8x96xf32>
      %587 = math.tanh %586 : vector<8x96xf32>
      %588 = arith.truncf %587 : vector<8x96xf32> to vector<8x96xbf16>
      %cst_147 = arith.constant dense<0.000000e+00> : vector<8x3xf32>
      %589 = tpu.matmul %588, %3, %cst_147 {dimension_numbers = #tpu.dot_dimension_numbers<[1], [0], [0], [1], [0, 0, 1, 1], [], []>} : vector<8x96xbf16>, vector<96x3xbf16>, vector<8x3xf32> -> vector<8x3xf32>
      %590 = arith.addf %550, %10 : f32
      %591 = vector.broadcast %10 : f32 to vector<8x3xf32>
      %592 = arith.mulf %591, %589 : vector<8x3xf32>
      %593 = arith.addf %547, %592 : vector<8x3xf32>
      %594 = arith.truncf %593 : vector<8x3xf32> to vector<8x3xbf16>
      %cst_148 = arith.constant dense<0.000000e+00> : vector<8x96xf32>
      %595 = tpu.matmul %594, %1, %cst_148 {dimension_numbers = #tpu.dot_dimension_numbers<[1], [0], [0], [1], [0, 0, 1, 1], [], []>} : vector<8x3xbf16>, vector<3x96xbf16>, vector<8x96xf32> -> vector<8x96xf32>
      %596 = vector.broadcast %590 : f32 to vector<8x96xf32>
      %597 = arith.mulf %596, %6 : vector<8x96xf32>
      %598 = arith.addf %595, %597 : vector<8x96xf32>
      %599 = arith.addf %598, %9 : vector<8x96xf32>
      %600 = math.tanh %599 : vector<8x96xf32>
      %601 = arith.truncf %600 : vector<8x96xf32> to vector<8x96xbf16>
      %cst_149 = arith.constant dense<0.000000e+00> : vector<8x3xf32>
      %602 = tpu.matmul %601, %3, %cst_149 {dimension_numbers = #tpu.dot_dimension_numbers<[1], [0], [0], [1], [0, 0, 1, 1], [], []>} : vector<8x96xbf16>, vector<96x3xbf16>, vector<8x3xf32> -> vector<8x3xf32>
      %cst_150 = arith.constant 6.000000e+00 : f32
      %603 = arith.divf %10, %cst_150 : f32
      %cst_151 = arith.constant 2.000000e+00 : f32
      %604 = vector.broadcast %cst_151 : f32 to vector<8x3xf32>
      %605 = arith.mulf %604, %574 : vector<8x3xf32>
      %606 = arith.addf %559, %605 : vector<8x3xf32>
      %cst_152 = arith.constant 2.000000e+00 : f32
      %607 = vector.broadcast %cst_152 : f32 to vector<8x3xf32>
      %608 = arith.mulf %607, %589 : vector<8x3xf32>
      %609 = arith.addf %606, %608 : vector<8x3xf32>
      %610 = arith.addf %609, %602 : vector<8x3xf32>
      %611 = vector.broadcast %603 : f32 to vector<8x3xf32>
      %612 = arith.mulf %611, %610 : vector<8x3xf32>
      %613 = arith.addf %547, %612 : vector<8x3xf32>
      %c9_i32_153 = arith.constant 9 : i32
      %614 = arith.sitofp %c9_i32_153 : i32 to f32
      %615 = arith.mulf %614, %10 : f32
      %616 = arith.addf %19, %615 : f32
      %617 = arith.truncf %613 : vector<8x3xf32> to vector<8x3xbf16>
      %cst_154 = arith.constant dense<0.000000e+00> : vector<8x96xf32>
      %618 = tpu.matmul %617, %1, %cst_154 {dimension_numbers = #tpu.dot_dimension_numbers<[1], [0], [0], [1], [0, 0, 1, 1], [], []>} : vector<8x3xbf16>, vector<3x96xbf16>, vector<8x96xf32> -> vector<8x96xf32>
      %619 = vector.broadcast %616 : f32 to vector<8x96xf32>
      %620 = arith.mulf %619, %6 : vector<8x96xf32>
      %621 = arith.addf %618, %620 : vector<8x96xf32>
      %622 = arith.addf %621, %9 : vector<8x96xf32>
      %623 = math.tanh %622 : vector<8x96xf32>
      %624 = arith.truncf %623 : vector<8x96xf32> to vector<8x96xbf16>
      %cst_155 = arith.constant dense<0.000000e+00> : vector<8x3xf32>
      %625 = tpu.matmul %624, %3, %cst_155 {dimension_numbers = #tpu.dot_dimension_numbers<[1], [0], [0], [1], [0, 0, 1, 1], [], []>} : vector<8x96xbf16>, vector<96x3xbf16>, vector<8x3xf32> -> vector<8x3xf32>
      %cst_156 = arith.constant 5.000000e-01 : f32
      %626 = arith.mulf %cst_156, %10 : f32
      %627 = arith.addf %616, %626 : f32
      %cst_157 = arith.constant 5.000000e-01 : f32
      %628 = arith.mulf %cst_157, %10 : f32
      %629 = vector.broadcast %628 : f32 to vector<8x3xf32>
      %630 = arith.mulf %629, %625 : vector<8x3xf32>
      %631 = arith.addf %613, %630 : vector<8x3xf32>
      %632 = arith.truncf %631 : vector<8x3xf32> to vector<8x3xbf16>
      %cst_158 = arith.constant dense<0.000000e+00> : vector<8x96xf32>
      %633 = tpu.matmul %632, %1, %cst_158 {dimension_numbers = #tpu.dot_dimension_numbers<[1], [0], [0], [1], [0, 0, 1, 1], [], []>} : vector<8x3xbf16>, vector<3x96xbf16>, vector<8x96xf32> -> vector<8x96xf32>
      %634 = vector.broadcast %627 : f32 to vector<8x96xf32>
      %635 = arith.mulf %634, %6 : vector<8x96xf32>
      %636 = arith.addf %633, %635 : vector<8x96xf32>
      %637 = arith.addf %636, %9 : vector<8x96xf32>
      %638 = math.tanh %637 : vector<8x96xf32>
      %639 = arith.truncf %638 : vector<8x96xf32> to vector<8x96xbf16>
      %cst_159 = arith.constant dense<0.000000e+00> : vector<8x3xf32>
      %640 = tpu.matmul %639, %3, %cst_159 {dimension_numbers = #tpu.dot_dimension_numbers<[1], [0], [0], [1], [0, 0, 1, 1], [], []>} : vector<8x96xbf16>, vector<96x3xbf16>, vector<8x3xf32> -> vector<8x3xf32>
      %cst_160 = arith.constant 5.000000e-01 : f32
      %641 = arith.mulf %cst_160, %10 : f32
      %642 = arith.addf %616, %641 : f32
      %cst_161 = arith.constant 5.000000e-01 : f32
      %643 = arith.mulf %cst_161, %10 : f32
      %644 = vector.broadcast %643 : f32 to vector<8x3xf32>
      %645 = arith.mulf %644, %640 : vector<8x3xf32>
      %646 = arith.addf %613, %645 : vector<8x3xf32>
      %647 = arith.truncf %646 : vector<8x3xf32> to vector<8x3xbf16>
      %cst_162 = arith.constant dense<0.000000e+00> : vector<8x96xf32>
      %648 = tpu.matmul %647, %1, %cst_162 {dimension_numbers = #tpu.dot_dimension_numbers<[1], [0], [0], [1], [0, 0, 1, 1], [], []>} : vector<8x3xbf16>, vector<3x96xbf16>, vector<8x96xf32> -> vector<8x96xf32>
      %649 = vector.broadcast %642 : f32 to vector<8x96xf32>
      %650 = arith.mulf %649, %6 : vector<8x96xf32>
      %651 = arith.addf %648, %650 : vector<8x96xf32>
      %652 = arith.addf %651, %9 : vector<8x96xf32>
      %653 = math.tanh %652 : vector<8x96xf32>
      %654 = arith.truncf %653 : vector<8x96xf32> to vector<8x96xbf16>
      %cst_163 = arith.constant dense<0.000000e+00> : vector<8x3xf32>
      %655 = tpu.matmul %654, %3, %cst_163 {dimension_numbers = #tpu.dot_dimension_numbers<[1], [0], [0], [1], [0, 0, 1, 1], [], []>} : vector<8x96xbf16>, vector<96x3xbf16>, vector<8x3xf32> -> vector<8x3xf32>
      %656 = arith.addf %616, %10 : f32
      %657 = vector.broadcast %10 : f32 to vector<8x3xf32>
      %658 = arith.mulf %657, %655 : vector<8x3xf32>
      %659 = arith.addf %613, %658 : vector<8x3xf32>
      %660 = arith.truncf %659 : vector<8x3xf32> to vector<8x3xbf16>
      %cst_164 = arith.constant dense<0.000000e+00> : vector<8x96xf32>
      %661 = tpu.matmul %660, %1, %cst_164 {dimension_numbers = #tpu.dot_dimension_numbers<[1], [0], [0], [1], [0, 0, 1, 1], [], []>} : vector<8x3xbf16>, vector<3x96xbf16>, vector<8x96xf32> -> vector<8x96xf32>
      %662 = vector.broadcast %656 : f32 to vector<8x96xf32>
      %663 = arith.mulf %662, %6 : vector<8x96xf32>
      %664 = arith.addf %661, %663 : vector<8x96xf32>
      %665 = arith.addf %664, %9 : vector<8x96xf32>
      %666 = math.tanh %665 : vector<8x96xf32>
      %667 = arith.truncf %666 : vector<8x96xf32> to vector<8x96xbf16>
      %cst_165 = arith.constant dense<0.000000e+00> : vector<8x3xf32>
      %668 = tpu.matmul %667, %3, %cst_165 {dimension_numbers = #tpu.dot_dimension_numbers<[1], [0], [0], [1], [0, 0, 1, 1], [], []>} : vector<8x96xbf16>, vector<96x3xbf16>, vector<8x3xf32> -> vector<8x3xf32>
      %cst_166 = arith.constant 6.000000e+00 : f32
      %669 = arith.divf %10, %cst_166 : f32
      %cst_167 = arith.constant 2.000000e+00 : f32
      %670 = vector.broadcast %cst_167 : f32 to vector<8x3xf32>
      %671 = arith.mulf %670, %640 : vector<8x3xf32>
      %672 = arith.addf %625, %671 : vector<8x3xf32>
      %cst_168 = arith.constant 2.000000e+00 : f32
      %673 = vector.broadcast %cst_168 : f32 to vector<8x3xf32>
      %674 = arith.mulf %673, %655 : vector<8x3xf32>
      %675 = arith.addf %672, %674 : vector<8x3xf32>
      %676 = arith.addf %675, %668 : vector<8x3xf32>
      %677 = vector.broadcast %669 : f32 to vector<8x3xf32>
      %678 = arith.mulf %677, %676 : vector<8x3xf32>
      %679 = arith.addf %613, %678 : vector<8x3xf32>
      %c10_i32 = arith.constant 10 : i32
      %680 = arith.sitofp %c10_i32 : i32 to f32
      %681 = arith.mulf %680, %10 : f32
      %682 = arith.addf %19, %681 : f32
      %683 = arith.truncf %679 : vector<8x3xf32> to vector<8x3xbf16>
      %cst_169 = arith.constant dense<0.000000e+00> : vector<8x96xf32>
      %684 = tpu.matmul %683, %1, %cst_169 {dimension_numbers = #tpu.dot_dimension_numbers<[1], [0], [0], [1], [0, 0, 1, 1], [], []>} : vector<8x3xbf16>, vector<3x96xbf16>, vector<8x96xf32> -> vector<8x96xf32>
      %685 = vector.broadcast %682 : f32 to vector<8x96xf32>
      %686 = arith.mulf %685, %6 : vector<8x96xf32>
      %687 = arith.addf %684, %686 : vector<8x96xf32>
      %688 = arith.addf %687, %9 : vector<8x96xf32>
      %689 = math.tanh %688 : vector<8x96xf32>
      %690 = arith.truncf %689 : vector<8x96xf32> to vector<8x96xbf16>
      %cst_170 = arith.constant dense<0.000000e+00> : vector<8x3xf32>
      %691 = tpu.matmul %690, %3, %cst_170 {dimension_numbers = #tpu.dot_dimension_numbers<[1], [0], [0], [1], [0, 0, 1, 1], [], []>} : vector<8x96xbf16>, vector<96x3xbf16>, vector<8x3xf32> -> vector<8x3xf32>
      %cst_171 = arith.constant 5.000000e-01 : f32
      %692 = arith.mulf %cst_171, %10 : f32
      %693 = arith.addf %682, %692 : f32
      %cst_172 = arith.constant 5.000000e-01 : f32
      %694 = arith.mulf %cst_172, %10 : f32
      %695 = vector.broadcast %694 : f32 to vector<8x3xf32>
      %696 = arith.mulf %695, %691 : vector<8x3xf32>
      %697 = arith.addf %679, %696 : vector<8x3xf32>
      %698 = arith.truncf %697 : vector<8x3xf32> to vector<8x3xbf16>
      %cst_173 = arith.constant dense<0.000000e+00> : vector<8x96xf32>
      %699 = tpu.matmul %698, %1, %cst_173 {dimension_numbers = #tpu.dot_dimension_numbers<[1], [0], [0], [1], [0, 0, 1, 1], [], []>} : vector<8x3xbf16>, vector<3x96xbf16>, vector<8x96xf32> -> vector<8x96xf32>
      %700 = vector.broadcast %693 : f32 to vector<8x96xf32>
      %701 = arith.mulf %700, %6 : vector<8x96xf32>
      %702 = arith.addf %699, %701 : vector<8x96xf32>
      %703 = arith.addf %702, %9 : vector<8x96xf32>
      %704 = math.tanh %703 : vector<8x96xf32>
      %705 = arith.truncf %704 : vector<8x96xf32> to vector<8x96xbf16>
      %cst_174 = arith.constant dense<0.000000e+00> : vector<8x3xf32>
      %706 = tpu.matmul %705, %3, %cst_174 {dimension_numbers = #tpu.dot_dimension_numbers<[1], [0], [0], [1], [0, 0, 1, 1], [], []>} : vector<8x96xbf16>, vector<96x3xbf16>, vector<8x3xf32> -> vector<8x3xf32>
      %cst_175 = arith.constant 5.000000e-01 : f32
      %707 = arith.mulf %cst_175, %10 : f32
      %708 = arith.addf %682, %707 : f32
      %cst_176 = arith.constant 5.000000e-01 : f32
      %709 = arith.mulf %cst_176, %10 : f32
      %710 = vector.broadcast %709 : f32 to vector<8x3xf32>
      %711 = arith.mulf %710, %706 : vector<8x3xf32>
      %712 = arith.addf %679, %711 : vector<8x3xf32>
      %713 = arith.truncf %712 : vector<8x3xf32> to vector<8x3xbf16>
      %cst_177 = arith.constant dense<0.000000e+00> : vector<8x96xf32>
      %714 = tpu.matmul %713, %1, %cst_177 {dimension_numbers = #tpu.dot_dimension_numbers<[1], [0], [0], [1], [0, 0, 1, 1], [], []>} : vector<8x3xbf16>, vector<3x96xbf16>, vector<8x96xf32> -> vector<8x96xf32>
      %715 = vector.broadcast %708 : f32 to vector<8x96xf32>
      %716 = arith.mulf %715, %6 : vector<8x96xf32>
      %717 = arith.addf %714, %716 : vector<8x96xf32>
      %718 = arith.addf %717, %9 : vector<8x96xf32>
      %719 = math.tanh %718 : vector<8x96xf32>
      %720 = arith.truncf %719 : vector<8x96xf32> to vector<8x96xbf16>
      %cst_178 = arith.constant dense<0.000000e+00> : vector<8x3xf32>
      %721 = tpu.matmul %720, %3, %cst_178 {dimension_numbers = #tpu.dot_dimension_numbers<[1], [0], [0], [1], [0, 0, 1, 1], [], []>} : vector<8x96xbf16>, vector<96x3xbf16>, vector<8x3xf32> -> vector<8x3xf32>
      %722 = arith.addf %682, %10 : f32
      %723 = vector.broadcast %10 : f32 to vector<8x3xf32>
      %724 = arith.mulf %723, %721 : vector<8x3xf32>
      %725 = arith.addf %679, %724 : vector<8x3xf32>
      %726 = arith.truncf %725 : vector<8x3xf32> to vector<8x3xbf16>
      %cst_179 = arith.constant dense<0.000000e+00> : vector<8x96xf32>
      %727 = tpu.matmul %726, %1, %cst_179 {dimension_numbers = #tpu.dot_dimension_numbers<[1], [0], [0], [1], [0, 0, 1, 1], [], []>} : vector<8x3xbf16>, vector<3x96xbf16>, vector<8x96xf32> -> vector<8x96xf32>
      %728 = vector.broadcast %722 : f32 to vector<8x96xf32>
      %729 = arith.mulf %728, %6 : vector<8x96xf32>
      %730 = arith.addf %727, %729 : vector<8x96xf32>
      %731 = arith.addf %730, %9 : vector<8x96xf32>
      %732 = math.tanh %731 : vector<8x96xf32>
      %733 = arith.truncf %732 : vector<8x96xf32> to vector<8x96xbf16>
      %cst_180 = arith.constant dense<0.000000e+00> : vector<8x3xf32>
      %734 = tpu.matmul %733, %3, %cst_180 {dimension_numbers = #tpu.dot_dimension_numbers<[1], [0], [0], [1], [0, 0, 1, 1], [], []>} : vector<8x96xbf16>, vector<96x3xbf16>, vector<8x3xf32> -> vector<8x3xf32>
      %cst_181 = arith.constant 6.000000e+00 : f32
      %735 = arith.divf %10, %cst_181 : f32
      %cst_182 = arith.constant 2.000000e+00 : f32
      %736 = vector.broadcast %cst_182 : f32 to vector<8x3xf32>
      %737 = arith.mulf %736, %706 : vector<8x3xf32>
      %738 = arith.addf %691, %737 : vector<8x3xf32>
      %cst_183 = arith.constant 2.000000e+00 : f32
      %739 = vector.broadcast %cst_183 : f32 to vector<8x3xf32>
      %740 = arith.mulf %739, %721 : vector<8x3xf32>
      %741 = arith.addf %738, %740 : vector<8x3xf32>
      %742 = arith.addf %741, %734 : vector<8x3xf32>
      %743 = vector.broadcast %735 : f32 to vector<8x3xf32>
      %744 = arith.mulf %743, %742 : vector<8x3xf32>
      %745 = arith.addf %679, %744 : vector<8x3xf32>
      %c11_i32 = arith.constant 11 : i32
      %746 = arith.sitofp %c11_i32 : i32 to f32
      %747 = arith.mulf %746, %10 : f32
      %748 = arith.addf %19, %747 : f32
      %749 = arith.truncf %745 : vector<8x3xf32> to vector<8x3xbf16>
      %cst_184 = arith.constant dense<0.000000e+00> : vector<8x96xf32>
      %750 = tpu.matmul %749, %1, %cst_184 {dimension_numbers = #tpu.dot_dimension_numbers<[1], [0], [0], [1], [0, 0, 1, 1], [], []>} : vector<8x3xbf16>, vector<3x96xbf16>, vector<8x96xf32> -> vector<8x96xf32>
      %751 = vector.broadcast %748 : f32 to vector<8x96xf32>
      %752 = arith.mulf %751, %6 : vector<8x96xf32>
      %753 = arith.addf %750, %752 : vector<8x96xf32>
      %754 = arith.addf %753, %9 : vector<8x96xf32>
      %755 = math.tanh %754 : vector<8x96xf32>
      %756 = arith.truncf %755 : vector<8x96xf32> to vector<8x96xbf16>
      %cst_185 = arith.constant dense<0.000000e+00> : vector<8x3xf32>
      %757 = tpu.matmul %756, %3, %cst_185 {dimension_numbers = #tpu.dot_dimension_numbers<[1], [0], [0], [1], [0, 0, 1, 1], [], []>} : vector<8x96xbf16>, vector<96x3xbf16>, vector<8x3xf32> -> vector<8x3xf32>
      %cst_186 = arith.constant 5.000000e-01 : f32
      %758 = arith.mulf %cst_186, %10 : f32
      %759 = arith.addf %748, %758 : f32
      %cst_187 = arith.constant 5.000000e-01 : f32
      %760 = arith.mulf %cst_187, %10 : f32
      %761 = vector.broadcast %760 : f32 to vector<8x3xf32>
      %762 = arith.mulf %761, %757 : vector<8x3xf32>
      %763 = arith.addf %745, %762 : vector<8x3xf32>
      %764 = arith.truncf %763 : vector<8x3xf32> to vector<8x3xbf16>
      %cst_188 = arith.constant dense<0.000000e+00> : vector<8x96xf32>
      %765 = tpu.matmul %764, %1, %cst_188 {dimension_numbers = #tpu.dot_dimension_numbers<[1], [0], [0], [1], [0, 0, 1, 1], [], []>} : vector<8x3xbf16>, vector<3x96xbf16>, vector<8x96xf32> -> vector<8x96xf32>
      %766 = vector.broadcast %759 : f32 to vector<8x96xf32>
      %767 = arith.mulf %766, %6 : vector<8x96xf32>
      %768 = arith.addf %765, %767 : vector<8x96xf32>
      %769 = arith.addf %768, %9 : vector<8x96xf32>
      %770 = math.tanh %769 : vector<8x96xf32>
      %771 = arith.truncf %770 : vector<8x96xf32> to vector<8x96xbf16>
      %cst_189 = arith.constant dense<0.000000e+00> : vector<8x3xf32>
      %772 = tpu.matmul %771, %3, %cst_189 {dimension_numbers = #tpu.dot_dimension_numbers<[1], [0], [0], [1], [0, 0, 1, 1], [], []>} : vector<8x96xbf16>, vector<96x3xbf16>, vector<8x3xf32> -> vector<8x3xf32>
      %cst_190 = arith.constant 5.000000e-01 : f32
      %773 = arith.mulf %cst_190, %10 : f32
      %774 = arith.addf %748, %773 : f32
      %cst_191 = arith.constant 5.000000e-01 : f32
      %775 = arith.mulf %cst_191, %10 : f32
      %776 = vector.broadcast %775 : f32 to vector<8x3xf32>
      %777 = arith.mulf %776, %772 : vector<8x3xf32>
      %778 = arith.addf %745, %777 : vector<8x3xf32>
      %779 = arith.truncf %778 : vector<8x3xf32> to vector<8x3xbf16>
      %cst_192 = arith.constant dense<0.000000e+00> : vector<8x96xf32>
      %780 = tpu.matmul %779, %1, %cst_192 {dimension_numbers = #tpu.dot_dimension_numbers<[1], [0], [0], [1], [0, 0, 1, 1], [], []>} : vector<8x3xbf16>, vector<3x96xbf16>, vector<8x96xf32> -> vector<8x96xf32>
      %781 = vector.broadcast %774 : f32 to vector<8x96xf32>
      %782 = arith.mulf %781, %6 : vector<8x96xf32>
      %783 = arith.addf %780, %782 : vector<8x96xf32>
      %784 = arith.addf %783, %9 : vector<8x96xf32>
      %785 = math.tanh %784 : vector<8x96xf32>
      %786 = arith.truncf %785 : vector<8x96xf32> to vector<8x96xbf16>
      %cst_193 = arith.constant dense<0.000000e+00> : vector<8x3xf32>
      %787 = tpu.matmul %786, %3, %cst_193 {dimension_numbers = #tpu.dot_dimension_numbers<[1], [0], [0], [1], [0, 0, 1, 1], [], []>} : vector<8x96xbf16>, vector<96x3xbf16>, vector<8x3xf32> -> vector<8x3xf32>
      %788 = arith.addf %748, %10 : f32
      %789 = vector.broadcast %10 : f32 to vector<8x3xf32>
      %790 = arith.mulf %789, %787 : vector<8x3xf32>
      %791 = arith.addf %745, %790 : vector<8x3xf32>
      %792 = arith.truncf %791 : vector<8x3xf32> to vector<8x3xbf16>
      %cst_194 = arith.constant dense<0.000000e+00> : vector<8x96xf32>
      %793 = tpu.matmul %792, %1, %cst_194 {dimension_numbers = #tpu.dot_dimension_numbers<[1], [0], [0], [1], [0, 0, 1, 1], [], []>} : vector<8x3xbf16>, vector<3x96xbf16>, vector<8x96xf32> -> vector<8x96xf32>
      %794 = vector.broadcast %788 : f32 to vector<8x96xf32>
      %795 = arith.mulf %794, %6 : vector<8x96xf32>
      %796 = arith.addf %793, %795 : vector<8x96xf32>
      %797 = arith.addf %796, %9 : vector<8x96xf32>
      %798 = math.tanh %797 : vector<8x96xf32>
      %799 = arith.truncf %798 : vector<8x96xf32> to vector<8x96xbf16>
      %cst_195 = arith.constant dense<0.000000e+00> : vector<8x3xf32>
      %800 = tpu.matmul %799, %3, %cst_195 {dimension_numbers = #tpu.dot_dimension_numbers<[1], [0], [0], [1], [0, 0, 1, 1], [], []>} : vector<8x96xbf16>, vector<96x3xbf16>, vector<8x3xf32> -> vector<8x3xf32>
      %cst_196 = arith.constant 6.000000e+00 : f32
      %801 = arith.divf %10, %cst_196 : f32
      %cst_197 = arith.constant 2.000000e+00 : f32
      %802 = vector.broadcast %cst_197 : f32 to vector<8x3xf32>
      %803 = arith.mulf %802, %772 : vector<8x3xf32>
      %804 = arith.addf %757, %803 : vector<8x3xf32>
      %cst_198 = arith.constant 2.000000e+00 : f32
      %805 = vector.broadcast %cst_198 : f32 to vector<8x3xf32>
      %806 = arith.mulf %805, %787 : vector<8x3xf32>
      %807 = arith.addf %804, %806 : vector<8x3xf32>
      %808 = arith.addf %807, %800 : vector<8x3xf32>
      %809 = vector.broadcast %801 : f32 to vector<8x3xf32>
      %810 = arith.mulf %809, %808 : vector<8x3xf32>
      %811 = arith.addf %745, %810 : vector<8x3xf32>
      %c12_i32 = arith.constant 12 : i32
      %812 = arith.sitofp %c12_i32 : i32 to f32
      %813 = arith.mulf %812, %10 : f32
      %814 = arith.addf %19, %813 : f32
      %815 = arith.truncf %811 : vector<8x3xf32> to vector<8x3xbf16>
      %cst_199 = arith.constant dense<0.000000e+00> : vector<8x96xf32>
      %816 = tpu.matmul %815, %1, %cst_199 {dimension_numbers = #tpu.dot_dimension_numbers<[1], [0], [0], [1], [0, 0, 1, 1], [], []>} : vector<8x3xbf16>, vector<3x96xbf16>, vector<8x96xf32> -> vector<8x96xf32>
      %817 = vector.broadcast %814 : f32 to vector<8x96xf32>
      %818 = arith.mulf %817, %6 : vector<8x96xf32>
      %819 = arith.addf %816, %818 : vector<8x96xf32>
      %820 = arith.addf %819, %9 : vector<8x96xf32>
      %821 = math.tanh %820 : vector<8x96xf32>
      %822 = arith.truncf %821 : vector<8x96xf32> to vector<8x96xbf16>
      %cst_200 = arith.constant dense<0.000000e+00> : vector<8x3xf32>
      %823 = tpu.matmul %822, %3, %cst_200 {dimension_numbers = #tpu.dot_dimension_numbers<[1], [0], [0], [1], [0, 0, 1, 1], [], []>} : vector<8x96xbf16>, vector<96x3xbf16>, vector<8x3xf32> -> vector<8x3xf32>
      %cst_201 = arith.constant 5.000000e-01 : f32
      %824 = arith.mulf %cst_201, %10 : f32
      %825 = arith.addf %814, %824 : f32
      %cst_202 = arith.constant 5.000000e-01 : f32
      %826 = arith.mulf %cst_202, %10 : f32
      %827 = vector.broadcast %826 : f32 to vector<8x3xf32>
      %828 = arith.mulf %827, %823 : vector<8x3xf32>
      %829 = arith.addf %811, %828 : vector<8x3xf32>
      %830 = arith.truncf %829 : vector<8x3xf32> to vector<8x3xbf16>
      %cst_203 = arith.constant dense<0.000000e+00> : vector<8x96xf32>
      %831 = tpu.matmul %830, %1, %cst_203 {dimension_numbers = #tpu.dot_dimension_numbers<[1], [0], [0], [1], [0, 0, 1, 1], [], []>} : vector<8x3xbf16>, vector<3x96xbf16>, vector<8x96xf32> -> vector<8x96xf32>
      %832 = vector.broadcast %825 : f32 to vector<8x96xf32>
      %833 = arith.mulf %832, %6 : vector<8x96xf32>
      %834 = arith.addf %831, %833 : vector<8x96xf32>
      %835 = arith.addf %834, %9 : vector<8x96xf32>
      %836 = math.tanh %835 : vector<8x96xf32>
      %837 = arith.truncf %836 : vector<8x96xf32> to vector<8x96xbf16>
      %cst_204 = arith.constant dense<0.000000e+00> : vector<8x3xf32>
      %838 = tpu.matmul %837, %3, %cst_204 {dimension_numbers = #tpu.dot_dimension_numbers<[1], [0], [0], [1], [0, 0, 1, 1], [], []>} : vector<8x96xbf16>, vector<96x3xbf16>, vector<8x3xf32> -> vector<8x3xf32>
      %cst_205 = arith.constant 5.000000e-01 : f32
      %839 = arith.mulf %cst_205, %10 : f32
      %840 = arith.addf %814, %839 : f32
      %cst_206 = arith.constant 5.000000e-01 : f32
      %841 = arith.mulf %cst_206, %10 : f32
      %842 = vector.broadcast %841 : f32 to vector<8x3xf32>
      %843 = arith.mulf %842, %838 : vector<8x3xf32>
      %844 = arith.addf %811, %843 : vector<8x3xf32>
      %845 = arith.truncf %844 : vector<8x3xf32> to vector<8x3xbf16>
      %cst_207 = arith.constant dense<0.000000e+00> : vector<8x96xf32>
      %846 = tpu.matmul %845, %1, %cst_207 {dimension_numbers = #tpu.dot_dimension_numbers<[1], [0], [0], [1], [0, 0, 1, 1], [], []>} : vector<8x3xbf16>, vector<3x96xbf16>, vector<8x96xf32> -> vector<8x96xf32>
      %847 = vector.broadcast %840 : f32 to vector<8x96xf32>
      %848 = arith.mulf %847, %6 : vector<8x96xf32>
      %849 = arith.addf %846, %848 : vector<8x96xf32>
      %850 = arith.addf %849, %9 : vector<8x96xf32>
      %851 = math.tanh %850 : vector<8x96xf32>
      %852 = arith.truncf %851 : vector<8x96xf32> to vector<8x96xbf16>
      %cst_208 = arith.constant dense<0.000000e+00> : vector<8x3xf32>
      %853 = tpu.matmul %852, %3, %cst_208 {dimension_numbers = #tpu.dot_dimension_numbers<[1], [0], [0], [1], [0, 0, 1, 1], [], []>} : vector<8x96xbf16>, vector<96x3xbf16>, vector<8x3xf32> -> vector<8x3xf32>
      %854 = arith.addf %814, %10 : f32
      %855 = vector.broadcast %10 : f32 to vector<8x3xf32>
      %856 = arith.mulf %855, %853 : vector<8x3xf32>
      %857 = arith.addf %811, %856 : vector<8x3xf32>
      %858 = arith.truncf %857 : vector<8x3xf32> to vector<8x3xbf16>
      %cst_209 = arith.constant dense<0.000000e+00> : vector<8x96xf32>
      %859 = tpu.matmul %858, %1, %cst_209 {dimension_numbers = #tpu.dot_dimension_numbers<[1], [0], [0], [1], [0, 0, 1, 1], [], []>} : vector<8x3xbf16>, vector<3x96xbf16>, vector<8x96xf32> -> vector<8x96xf32>
      %860 = vector.broadcast %854 : f32 to vector<8x96xf32>
      %861 = arith.mulf %860, %6 : vector<8x96xf32>
      %862 = arith.addf %859, %861 : vector<8x96xf32>
      %863 = arith.addf %862, %9 : vector<8x96xf32>
      %864 = math.tanh %863 : vector<8x96xf32>
      %865 = arith.truncf %864 : vector<8x96xf32> to vector<8x96xbf16>
      %cst_210 = arith.constant dense<0.000000e+00> : vector<8x3xf32>
      %866 = tpu.matmul %865, %3, %cst_210 {dimension_numbers = #tpu.dot_dimension_numbers<[1], [0], [0], [1], [0, 0, 1, 1], [], []>} : vector<8x96xbf16>, vector<96x3xbf16>, vector<8x3xf32> -> vector<8x3xf32>
      %cst_211 = arith.constant 6.000000e+00 : f32
      %867 = arith.divf %10, %cst_211 : f32
      %cst_212 = arith.constant 2.000000e+00 : f32
      %868 = vector.broadcast %cst_212 : f32 to vector<8x3xf32>
      %869 = arith.mulf %868, %838 : vector<8x3xf32>
      %870 = arith.addf %823, %869 : vector<8x3xf32>
      %cst_213 = arith.constant 2.000000e+00 : f32
      %871 = vector.broadcast %cst_213 : f32 to vector<8x3xf32>
      %872 = arith.mulf %871, %853 : vector<8x3xf32>
      %873 = arith.addf %870, %872 : vector<8x3xf32>
      %874 = arith.addf %873, %866 : vector<8x3xf32>
      %875 = vector.broadcast %867 : f32 to vector<8x3xf32>
      %876 = arith.mulf %875, %874 : vector<8x3xf32>
      %877 = arith.addf %811, %876 : vector<8x3xf32>
      %c13_i32 = arith.constant 13 : i32
      %878 = arith.sitofp %c13_i32 : i32 to f32
      %879 = arith.mulf %878, %10 : f32
      %880 = arith.addf %19, %879 : f32
      %881 = arith.truncf %877 : vector<8x3xf32> to vector<8x3xbf16>
      %cst_214 = arith.constant dense<0.000000e+00> : vector<8x96xf32>
      %882 = tpu.matmul %881, %1, %cst_214 {dimension_numbers = #tpu.dot_dimension_numbers<[1], [0], [0], [1], [0, 0, 1, 1], [], []>} : vector<8x3xbf16>, vector<3x96xbf16>, vector<8x96xf32> -> vector<8x96xf32>
      %883 = vector.broadcast %880 : f32 to vector<8x96xf32>
      %884 = arith.mulf %883, %6 : vector<8x96xf32>
      %885 = arith.addf %882, %884 : vector<8x96xf32>
      %886 = arith.addf %885, %9 : vector<8x96xf32>
      %887 = math.tanh %886 : vector<8x96xf32>
      %888 = arith.truncf %887 : vector<8x96xf32> to vector<8x96xbf16>
      %cst_215 = arith.constant dense<0.000000e+00> : vector<8x3xf32>
      %889 = tpu.matmul %888, %3, %cst_215 {dimension_numbers = #tpu.dot_dimension_numbers<[1], [0], [0], [1], [0, 0, 1, 1], [], []>} : vector<8x96xbf16>, vector<96x3xbf16>, vector<8x3xf32> -> vector<8x3xf32>
      %cst_216 = arith.constant 5.000000e-01 : f32
      %890 = arith.mulf %cst_216, %10 : f32
      %891 = arith.addf %880, %890 : f32
      %cst_217 = arith.constant 5.000000e-01 : f32
      %892 = arith.mulf %cst_217, %10 : f32
      %893 = vector.broadcast %892 : f32 to vector<8x3xf32>
      %894 = arith.mulf %893, %889 : vector<8x3xf32>
      %895 = arith.addf %877, %894 : vector<8x3xf32>
      %896 = arith.truncf %895 : vector<8x3xf32> to vector<8x3xbf16>
      %cst_218 = arith.constant dense<0.000000e+00> : vector<8x96xf32>
      %897 = tpu.matmul %896, %1, %cst_218 {dimension_numbers = #tpu.dot_dimension_numbers<[1], [0], [0], [1], [0, 0, 1, 1], [], []>} : vector<8x3xbf16>, vector<3x96xbf16>, vector<8x96xf32> -> vector<8x96xf32>
      %898 = vector.broadcast %891 : f32 to vector<8x96xf32>
      %899 = arith.mulf %898, %6 : vector<8x96xf32>
      %900 = arith.addf %897, %899 : vector<8x96xf32>
      %901 = arith.addf %900, %9 : vector<8x96xf32>
      %902 = math.tanh %901 : vector<8x96xf32>
      %903 = arith.truncf %902 : vector<8x96xf32> to vector<8x96xbf16>
      %cst_219 = arith.constant dense<0.000000e+00> : vector<8x3xf32>
      %904 = tpu.matmul %903, %3, %cst_219 {dimension_numbers = #tpu.dot_dimension_numbers<[1], [0], [0], [1], [0, 0, 1, 1], [], []>} : vector<8x96xbf16>, vector<96x3xbf16>, vector<8x3xf32> -> vector<8x3xf32>
      %cst_220 = arith.constant 5.000000e-01 : f32
      %905 = arith.mulf %cst_220, %10 : f32
      %906 = arith.addf %880, %905 : f32
      %cst_221 = arith.constant 5.000000e-01 : f32
      %907 = arith.mulf %cst_221, %10 : f32
      %908 = vector.broadcast %907 : f32 to vector<8x3xf32>
      %909 = arith.mulf %908, %904 : vector<8x3xf32>
      %910 = arith.addf %877, %909 : vector<8x3xf32>
      %911 = arith.truncf %910 : vector<8x3xf32> to vector<8x3xbf16>
      %cst_222 = arith.constant dense<0.000000e+00> : vector<8x96xf32>
      %912 = tpu.matmul %911, %1, %cst_222 {dimension_numbers = #tpu.dot_dimension_numbers<[1], [0], [0], [1], [0, 0, 1, 1], [], []>} : vector<8x3xbf16>, vector<3x96xbf16>, vector<8x96xf32> -> vector<8x96xf32>
      %913 = vector.broadcast %906 : f32 to vector<8x96xf32>
      %914 = arith.mulf %913, %6 : vector<8x96xf32>
      %915 = arith.addf %912, %914 : vector<8x96xf32>
      %916 = arith.addf %915, %9 : vector<8x96xf32>
      %917 = math.tanh %916 : vector<8x96xf32>
      %918 = arith.truncf %917 : vector<8x96xf32> to vector<8x96xbf16>
      %cst_223 = arith.constant dense<0.000000e+00> : vector<8x3xf32>
      %919 = tpu.matmul %918, %3, %cst_223 {dimension_numbers = #tpu.dot_dimension_numbers<[1], [0], [0], [1], [0, 0, 1, 1], [], []>} : vector<8x96xbf16>, vector<96x3xbf16>, vector<8x3xf32> -> vector<8x3xf32>
      %920 = arith.addf %880, %10 : f32
      %921 = vector.broadcast %10 : f32 to vector<8x3xf32>
      %922 = arith.mulf %921, %919 : vector<8x3xf32>
      %923 = arith.addf %877, %922 : vector<8x3xf32>
      %924 = arith.truncf %923 : vector<8x3xf32> to vector<8x3xbf16>
      %cst_224 = arith.constant dense<0.000000e+00> : vector<8x96xf32>
      %925 = tpu.matmul %924, %1, %cst_224 {dimension_numbers = #tpu.dot_dimension_numbers<[1], [0], [0], [1], [0, 0, 1, 1], [], []>} : vector<8x3xbf16>, vector<3x96xbf16>, vector<8x96xf32> -> vector<8x96xf32>
      %926 = vector.broadcast %920 : f32 to vector<8x96xf32>
      %927 = arith.mulf %926, %6 : vector<8x96xf32>
      %928 = arith.addf %925, %927 : vector<8x96xf32>
      %929 = arith.addf %928, %9 : vector<8x96xf32>
      %930 = math.tanh %929 : vector<8x96xf32>
      %931 = arith.truncf %930 : vector<8x96xf32> to vector<8x96xbf16>
      %cst_225 = arith.constant dense<0.000000e+00> : vector<8x3xf32>
      %932 = tpu.matmul %931, %3, %cst_225 {dimension_numbers = #tpu.dot_dimension_numbers<[1], [0], [0], [1], [0, 0, 1, 1], [], []>} : vector<8x96xbf16>, vector<96x3xbf16>, vector<8x3xf32> -> vector<8x3xf32>
      %cst_226 = arith.constant 6.000000e+00 : f32
      %933 = arith.divf %10, %cst_226 : f32
      %cst_227 = arith.constant 2.000000e+00 : f32
      %934 = vector.broadcast %cst_227 : f32 to vector<8x3xf32>
      %935 = arith.mulf %934, %904 : vector<8x3xf32>
      %936 = arith.addf %889, %935 : vector<8x3xf32>
      %cst_228 = arith.constant 2.000000e+00 : f32
      %937 = vector.broadcast %cst_228 : f32 to vector<8x3xf32>
      %938 = arith.mulf %937, %919 : vector<8x3xf32>
      %939 = arith.addf %936, %938 : vector<8x3xf32>
      %940 = arith.addf %939, %932 : vector<8x3xf32>
      %941 = vector.broadcast %933 : f32 to vector<8x3xf32>
      %942 = arith.mulf %941, %940 : vector<8x3xf32>
      %943 = arith.addf %877, %942 : vector<8x3xf32>
      %c14_i32 = arith.constant 14 : i32
      %944 = arith.sitofp %c14_i32 : i32 to f32
      %945 = arith.mulf %944, %10 : f32
      %946 = arith.addf %19, %945 : f32
      %947 = arith.truncf %943 : vector<8x3xf32> to vector<8x3xbf16>
      %cst_229 = arith.constant dense<0.000000e+00> : vector<8x96xf32>
      %948 = tpu.matmul %947, %1, %cst_229 {dimension_numbers = #tpu.dot_dimension_numbers<[1], [0], [0], [1], [0, 0, 1, 1], [], []>} : vector<8x3xbf16>, vector<3x96xbf16>, vector<8x96xf32> -> vector<8x96xf32>
      %949 = vector.broadcast %946 : f32 to vector<8x96xf32>
      %950 = arith.mulf %949, %6 : vector<8x96xf32>
      %951 = arith.addf %948, %950 : vector<8x96xf32>
      %952 = arith.addf %951, %9 : vector<8x96xf32>
      %953 = math.tanh %952 : vector<8x96xf32>
      %954 = arith.truncf %953 : vector<8x96xf32> to vector<8x96xbf16>
      %cst_230 = arith.constant dense<0.000000e+00> : vector<8x3xf32>
      %955 = tpu.matmul %954, %3, %cst_230 {dimension_numbers = #tpu.dot_dimension_numbers<[1], [0], [0], [1], [0, 0, 1, 1], [], []>} : vector<8x96xbf16>, vector<96x3xbf16>, vector<8x3xf32> -> vector<8x3xf32>
      %cst_231 = arith.constant 5.000000e-01 : f32
      %956 = arith.mulf %cst_231, %10 : f32
      %957 = arith.addf %946, %956 : f32
      %cst_232 = arith.constant 5.000000e-01 : f32
      %958 = arith.mulf %cst_232, %10 : f32
      %959 = vector.broadcast %958 : f32 to vector<8x3xf32>
      %960 = arith.mulf %959, %955 : vector<8x3xf32>
      %961 = arith.addf %943, %960 : vector<8x3xf32>
      %962 = arith.truncf %961 : vector<8x3xf32> to vector<8x3xbf16>
      %cst_233 = arith.constant dense<0.000000e+00> : vector<8x96xf32>
      %963 = tpu.matmul %962, %1, %cst_233 {dimension_numbers = #tpu.dot_dimension_numbers<[1], [0], [0], [1], [0, 0, 1, 1], [], []>} : vector<8x3xbf16>, vector<3x96xbf16>, vector<8x96xf32> -> vector<8x96xf32>
      %964 = vector.broadcast %957 : f32 to vector<8x96xf32>
      %965 = arith.mulf %964, %6 : vector<8x96xf32>
      %966 = arith.addf %963, %965 : vector<8x96xf32>
      %967 = arith.addf %966, %9 : vector<8x96xf32>
      %968 = math.tanh %967 : vector<8x96xf32>
      %969 = arith.truncf %968 : vector<8x96xf32> to vector<8x96xbf16>
      %cst_234 = arith.constant dense<0.000000e+00> : vector<8x3xf32>
      %970 = tpu.matmul %969, %3, %cst_234 {dimension_numbers = #tpu.dot_dimension_numbers<[1], [0], [0], [1], [0, 0, 1, 1], [], []>} : vector<8x96xbf16>, vector<96x3xbf16>, vector<8x3xf32> -> vector<8x3xf32>
      %cst_235 = arith.constant 5.000000e-01 : f32
      %971 = arith.mulf %cst_235, %10 : f32
      %972 = arith.addf %946, %971 : f32
      %cst_236 = arith.constant 5.000000e-01 : f32
      %973 = arith.mulf %cst_236, %10 : f32
      %974 = vector.broadcast %973 : f32 to vector<8x3xf32>
      %975 = arith.mulf %974, %970 : vector<8x3xf32>
      %976 = arith.addf %943, %975 : vector<8x3xf32>
      %977 = arith.truncf %976 : vector<8x3xf32> to vector<8x3xbf16>
      %cst_237 = arith.constant dense<0.000000e+00> : vector<8x96xf32>
      %978 = tpu.matmul %977, %1, %cst_237 {dimension_numbers = #tpu.dot_dimension_numbers<[1], [0], [0], [1], [0, 0, 1, 1], [], []>} : vector<8x3xbf16>, vector<3x96xbf16>, vector<8x96xf32> -> vector<8x96xf32>
      %979 = vector.broadcast %972 : f32 to vector<8x96xf32>
      %980 = arith.mulf %979, %6 : vector<8x96xf32>
      %981 = arith.addf %978, %980 : vector<8x96xf32>
      %982 = arith.addf %981, %9 : vector<8x96xf32>
      %983 = math.tanh %982 : vector<8x96xf32>
      %984 = arith.truncf %983 : vector<8x96xf32> to vector<8x96xbf16>
      %cst_238 = arith.constant dense<0.000000e+00> : vector<8x3xf32>
      %985 = tpu.matmul %984, %3, %cst_238 {dimension_numbers = #tpu.dot_dimension_numbers<[1], [0], [0], [1], [0, 0, 1, 1], [], []>} : vector<8x96xbf16>, vector<96x3xbf16>, vector<8x3xf32> -> vector<8x3xf32>
      %986 = arith.addf %946, %10 : f32
      %987 = vector.broadcast %10 : f32 to vector<8x3xf32>
      %988 = arith.mulf %987, %985 : vector<8x3xf32>
      %989 = arith.addf %943, %988 : vector<8x3xf32>
      %990 = arith.truncf %989 : vector<8x3xf32> to vector<8x3xbf16>
      %cst_239 = arith.constant dense<0.000000e+00> : vector<8x96xf32>
      %991 = tpu.matmul %990, %1, %cst_239 {dimension_numbers = #tpu.dot_dimension_numbers<[1], [0], [0], [1], [0, 0, 1, 1], [], []>} : vector<8x3xbf16>, vector<3x96xbf16>, vector<8x96xf32> -> vector<8x96xf32>
      %992 = vector.broadcast %986 : f32 to vector<8x96xf32>
      %993 = arith.mulf %992, %6 : vector<8x96xf32>
      %994 = arith.addf %991, %993 : vector<8x96xf32>
      %995 = arith.addf %994, %9 : vector<8x96xf32>
      %996 = math.tanh %995 : vector<8x96xf32>
      %997 = arith.truncf %996 : vector<8x96xf32> to vector<8x96xbf16>
      %cst_240 = arith.constant dense<0.000000e+00> : vector<8x3xf32>
      %998 = tpu.matmul %997, %3, %cst_240 {dimension_numbers = #tpu.dot_dimension_numbers<[1], [0], [0], [1], [0, 0, 1, 1], [], []>} : vector<8x96xbf16>, vector<96x3xbf16>, vector<8x3xf32> -> vector<8x3xf32>
      %cst_241 = arith.constant 6.000000e+00 : f32
      %999 = arith.divf %10, %cst_241 : f32
      %cst_242 = arith.constant 2.000000e+00 : f32
      %1000 = vector.broadcast %cst_242 : f32 to vector<8x3xf32>
      %1001 = arith.mulf %1000, %970 : vector<8x3xf32>
      %1002 = arith.addf %955, %1001 : vector<8x3xf32>
      %cst_243 = arith.constant 2.000000e+00 : f32
      %1003 = vector.broadcast %cst_243 : f32 to vector<8x3xf32>
      %1004 = arith.mulf %1003, %985 : vector<8x3xf32>
      %1005 = arith.addf %1002, %1004 : vector<8x3xf32>
      %1006 = arith.addf %1005, %998 : vector<8x3xf32>
      %1007 = vector.broadcast %999 : f32 to vector<8x3xf32>
      %1008 = arith.mulf %1007, %1006 : vector<8x3xf32>
      %1009 = arith.addf %943, %1008 : vector<8x3xf32>
      %c15_i32 = arith.constant 15 : i32
      %1010 = arith.sitofp %c15_i32 : i32 to f32
      %1011 = arith.mulf %1010, %10 : f32
      %1012 = arith.addf %19, %1011 : f32
      %1013 = arith.truncf %1009 : vector<8x3xf32> to vector<8x3xbf16>
      %cst_244 = arith.constant dense<0.000000e+00> : vector<8x96xf32>
      %1014 = tpu.matmul %1013, %1, %cst_244 {dimension_numbers = #tpu.dot_dimension_numbers<[1], [0], [0], [1], [0, 0, 1, 1], [], []>} : vector<8x3xbf16>, vector<3x96xbf16>, vector<8x96xf32> -> vector<8x96xf32>
      %1015 = vector.broadcast %1012 : f32 to vector<8x96xf32>
      %1016 = arith.mulf %1015, %6 : vector<8x96xf32>
      %1017 = arith.addf %1014, %1016 : vector<8x96xf32>
      %1018 = arith.addf %1017, %9 : vector<8x96xf32>
      %1019 = math.tanh %1018 : vector<8x96xf32>
      %1020 = arith.truncf %1019 : vector<8x96xf32> to vector<8x96xbf16>
      %cst_245 = arith.constant dense<0.000000e+00> : vector<8x3xf32>
      %1021 = tpu.matmul %1020, %3, %cst_245 {dimension_numbers = #tpu.dot_dimension_numbers<[1], [0], [0], [1], [0, 0, 1, 1], [], []>} : vector<8x96xbf16>, vector<96x3xbf16>, vector<8x3xf32> -> vector<8x3xf32>
      %cst_246 = arith.constant 5.000000e-01 : f32
      %1022 = arith.mulf %cst_246, %10 : f32
      %1023 = arith.addf %1012, %1022 : f32
      %cst_247 = arith.constant 5.000000e-01 : f32
      %1024 = arith.mulf %cst_247, %10 : f32
      %1025 = vector.broadcast %1024 : f32 to vector<8x3xf32>
      %1026 = arith.mulf %1025, %1021 : vector<8x3xf32>
      %1027 = arith.addf %1009, %1026 : vector<8x3xf32>
      %1028 = arith.truncf %1027 : vector<8x3xf32> to vector<8x3xbf16>
      %cst_248 = arith.constant dense<0.000000e+00> : vector<8x96xf32>
      %1029 = tpu.matmul %1028, %1, %cst_248 {dimension_numbers = #tpu.dot_dimension_numbers<[1], [0], [0], [1], [0, 0, 1, 1], [], []>} : vector<8x3xbf16>, vector<3x96xbf16>, vector<8x96xf32> -> vector<8x96xf32>
      %1030 = vector.broadcast %1023 : f32 to vector<8x96xf32>
      %1031 = arith.mulf %1030, %6 : vector<8x96xf32>
      %1032 = arith.addf %1029, %1031 : vector<8x96xf32>
      %1033 = arith.addf %1032, %9 : vector<8x96xf32>
      %1034 = math.tanh %1033 : vector<8x96xf32>
      %1035 = arith.truncf %1034 : vector<8x96xf32> to vector<8x96xbf16>
      %cst_249 = arith.constant dense<0.000000e+00> : vector<8x3xf32>
      %1036 = tpu.matmul %1035, %3, %cst_249 {dimension_numbers = #tpu.dot_dimension_numbers<[1], [0], [0], [1], [0, 0, 1, 1], [], []>} : vector<8x96xbf16>, vector<96x3xbf16>, vector<8x3xf32> -> vector<8x3xf32>
      %cst_250 = arith.constant 5.000000e-01 : f32
      %1037 = arith.mulf %cst_250, %10 : f32
      %1038 = arith.addf %1012, %1037 : f32
      %cst_251 = arith.constant 5.000000e-01 : f32
      %1039 = arith.mulf %cst_251, %10 : f32
      %1040 = vector.broadcast %1039 : f32 to vector<8x3xf32>
      %1041 = arith.mulf %1040, %1036 : vector<8x3xf32>
      %1042 = arith.addf %1009, %1041 : vector<8x3xf32>
      %1043 = arith.truncf %1042 : vector<8x3xf32> to vector<8x3xbf16>
      %cst_252 = arith.constant dense<0.000000e+00> : vector<8x96xf32>
      %1044 = tpu.matmul %1043, %1, %cst_252 {dimension_numbers = #tpu.dot_dimension_numbers<[1], [0], [0], [1], [0, 0, 1, 1], [], []>} : vector<8x3xbf16>, vector<3x96xbf16>, vector<8x96xf32> -> vector<8x96xf32>
      %1045 = vector.broadcast %1038 : f32 to vector<8x96xf32>
      %1046 = arith.mulf %1045, %6 : vector<8x96xf32>
      %1047 = arith.addf %1044, %1046 : vector<8x96xf32>
      %1048 = arith.addf %1047, %9 : vector<8x96xf32>
      %1049 = math.tanh %1048 : vector<8x96xf32>
      %1050 = arith.truncf %1049 : vector<8x96xf32> to vector<8x96xbf16>
      %cst_253 = arith.constant dense<0.000000e+00> : vector<8x3xf32>
      %1051 = tpu.matmul %1050, %3, %cst_253 {dimension_numbers = #tpu.dot_dimension_numbers<[1], [0], [0], [1], [0, 0, 1, 1], [], []>} : vector<8x96xbf16>, vector<96x3xbf16>, vector<8x3xf32> -> vector<8x3xf32>
      %1052 = arith.addf %1012, %10 : f32
      %1053 = vector.broadcast %10 : f32 to vector<8x3xf32>
      %1054 = arith.mulf %1053, %1051 : vector<8x3xf32>
      %1055 = arith.addf %1009, %1054 : vector<8x3xf32>
      %1056 = arith.truncf %1055 : vector<8x3xf32> to vector<8x3xbf16>
      %cst_254 = arith.constant dense<0.000000e+00> : vector<8x96xf32>
      %1057 = tpu.matmul %1056, %1, %cst_254 {dimension_numbers = #tpu.dot_dimension_numbers<[1], [0], [0], [1], [0, 0, 1, 1], [], []>} : vector<8x3xbf16>, vector<3x96xbf16>, vector<8x96xf32> -> vector<8x96xf32>
      %1058 = vector.broadcast %1052 : f32 to vector<8x96xf32>
      %1059 = arith.mulf %1058, %6 : vector<8x96xf32>
      %1060 = arith.addf %1057, %1059 : vector<8x96xf32>
      %1061 = arith.addf %1060, %9 : vector<8x96xf32>
      %1062 = math.tanh %1061 : vector<8x96xf32>
      %1063 = arith.truncf %1062 : vector<8x96xf32> to vector<8x96xbf16>
      %cst_255 = arith.constant dense<0.000000e+00> : vector<8x3xf32>
      %1064 = tpu.matmul %1063, %3, %cst_255 {dimension_numbers = #tpu.dot_dimension_numbers<[1], [0], [0], [1], [0, 0, 1, 1], [], []>} : vector<8x96xbf16>, vector<96x3xbf16>, vector<8x3xf32> -> vector<8x3xf32>
      %cst_256 = arith.constant 6.000000e+00 : f32
      %1065 = arith.divf %10, %cst_256 : f32
      %cst_257 = arith.constant 2.000000e+00 : f32
      %1066 = vector.broadcast %cst_257 : f32 to vector<8x3xf32>
      %1067 = arith.mulf %1066, %1036 : vector<8x3xf32>
      %1068 = arith.addf %1021, %1067 : vector<8x3xf32>
      %cst_258 = arith.constant 2.000000e+00 : f32
      %1069 = vector.broadcast %cst_258 : f32 to vector<8x3xf32>
      %1070 = arith.mulf %1069, %1051 : vector<8x3xf32>
      %1071 = arith.addf %1068, %1070 : vector<8x3xf32>
      %1072 = arith.addf %1071, %1064 : vector<8x3xf32>
      %1073 = vector.broadcast %1065 : f32 to vector<8x3xf32>
      %1074 = arith.mulf %1073, %1072 : vector<8x3xf32>
      %1075 = arith.addf %1009, %1074 : vector<8x3xf32>
      %c16_i32 = arith.constant 16 : i32
      %1076 = arith.sitofp %c16_i32 : i32 to f32
      %1077 = arith.mulf %1076, %10 : f32
      %1078 = arith.addf %19, %1077 : f32
      %1079 = arith.truncf %1075 : vector<8x3xf32> to vector<8x3xbf16>
      %cst_259 = arith.constant dense<0.000000e+00> : vector<8x96xf32>
      %1080 = tpu.matmul %1079, %1, %cst_259 {dimension_numbers = #tpu.dot_dimension_numbers<[1], [0], [0], [1], [0, 0, 1, 1], [], []>} : vector<8x3xbf16>, vector<3x96xbf16>, vector<8x96xf32> -> vector<8x96xf32>
      %1081 = vector.broadcast %1078 : f32 to vector<8x96xf32>
      %1082 = arith.mulf %1081, %6 : vector<8x96xf32>
      %1083 = arith.addf %1080, %1082 : vector<8x96xf32>
      %1084 = arith.addf %1083, %9 : vector<8x96xf32>
      %1085 = math.tanh %1084 : vector<8x96xf32>
      %1086 = arith.truncf %1085 : vector<8x96xf32> to vector<8x96xbf16>
      %cst_260 = arith.constant dense<0.000000e+00> : vector<8x3xf32>
      %1087 = tpu.matmul %1086, %3, %cst_260 {dimension_numbers = #tpu.dot_dimension_numbers<[1], [0], [0], [1], [0, 0, 1, 1], [], []>} : vector<8x96xbf16>, vector<96x3xbf16>, vector<8x3xf32> -> vector<8x3xf32>
      %cst_261 = arith.constant 5.000000e-01 : f32
      %1088 = arith.mulf %cst_261, %10 : f32
      %1089 = arith.addf %1078, %1088 : f32
      %cst_262 = arith.constant 5.000000e-01 : f32
      %1090 = arith.mulf %cst_262, %10 : f32
      %1091 = vector.broadcast %1090 : f32 to vector<8x3xf32>
      %1092 = arith.mulf %1091, %1087 : vector<8x3xf32>
      %1093 = arith.addf %1075, %1092 : vector<8x3xf32>
      %1094 = arith.truncf %1093 : vector<8x3xf32> to vector<8x3xbf16>
      %cst_263 = arith.constant dense<0.000000e+00> : vector<8x96xf32>
      %1095 = tpu.matmul %1094, %1, %cst_263 {dimension_numbers = #tpu.dot_dimension_numbers<[1], [0], [0], [1], [0, 0, 1, 1], [], []>} : vector<8x3xbf16>, vector<3x96xbf16>, vector<8x96xf32> -> vector<8x96xf32>
      %1096 = vector.broadcast %1089 : f32 to vector<8x96xf32>
      %1097 = arith.mulf %1096, %6 : vector<8x96xf32>
      %1098 = arith.addf %1095, %1097 : vector<8x96xf32>
      %1099 = arith.addf %1098, %9 : vector<8x96xf32>
      %1100 = math.tanh %1099 : vector<8x96xf32>
      %1101 = arith.truncf %1100 : vector<8x96xf32> to vector<8x96xbf16>
      %cst_264 = arith.constant dense<0.000000e+00> : vector<8x3xf32>
      %1102 = tpu.matmul %1101, %3, %cst_264 {dimension_numbers = #tpu.dot_dimension_numbers<[1], [0], [0], [1], [0, 0, 1, 1], [], []>} : vector<8x96xbf16>, vector<96x3xbf16>, vector<8x3xf32> -> vector<8x3xf32>
      %cst_265 = arith.constant 5.000000e-01 : f32
      %1103 = arith.mulf %cst_265, %10 : f32
      %1104 = arith.addf %1078, %1103 : f32
      %cst_266 = arith.constant 5.000000e-01 : f32
      %1105 = arith.mulf %cst_266, %10 : f32
      %1106 = vector.broadcast %1105 : f32 to vector<8x3xf32>
      %1107 = arith.mulf %1106, %1102 : vector<8x3xf32>
      %1108 = arith.addf %1075, %1107 : vector<8x3xf32>
      %1109 = arith.truncf %1108 : vector<8x3xf32> to vector<8x3xbf16>
      %cst_267 = arith.constant dense<0.000000e+00> : vector<8x96xf32>
      %1110 = tpu.matmul %1109, %1, %cst_267 {dimension_numbers = #tpu.dot_dimension_numbers<[1], [0], [0], [1], [0, 0, 1, 1], [], []>} : vector<8x3xbf16>, vector<3x96xbf16>, vector<8x96xf32> -> vector<8x96xf32>
      %1111 = vector.broadcast %1104 : f32 to vector<8x96xf32>
      %1112 = arith.mulf %1111, %6 : vector<8x96xf32>
      %1113 = arith.addf %1110, %1112 : vector<8x96xf32>
      %1114 = arith.addf %1113, %9 : vector<8x96xf32>
      %1115 = math.tanh %1114 : vector<8x96xf32>
      %1116 = arith.truncf %1115 : vector<8x96xf32> to vector<8x96xbf16>
      %cst_268 = arith.constant dense<0.000000e+00> : vector<8x3xf32>
      %1117 = tpu.matmul %1116, %3, %cst_268 {dimension_numbers = #tpu.dot_dimension_numbers<[1], [0], [0], [1], [0, 0, 1, 1], [], []>} : vector<8x96xbf16>, vector<96x3xbf16>, vector<8x3xf32> -> vector<8x3xf32>
      %1118 = arith.addf %1078, %10 : f32
      %1119 = vector.broadcast %10 : f32 to vector<8x3xf32>
      %1120 = arith.mulf %1119, %1117 : vector<8x3xf32>
      %1121 = arith.addf %1075, %1120 : vector<8x3xf32>
      %1122 = arith.truncf %1121 : vector<8x3xf32> to vector<8x3xbf16>
      %cst_269 = arith.constant dense<0.000000e+00> : vector<8x96xf32>
      %1123 = tpu.matmul %1122, %1, %cst_269 {dimension_numbers = #tpu.dot_dimension_numbers<[1], [0], [0], [1], [0, 0, 1, 1], [], []>} : vector<8x3xbf16>, vector<3x96xbf16>, vector<8x96xf32> -> vector<8x96xf32>
      %1124 = vector.broadcast %1118 : f32 to vector<8x96xf32>
      %1125 = arith.mulf %1124, %6 : vector<8x96xf32>
      %1126 = arith.addf %1123, %1125 : vector<8x96xf32>
      %1127 = arith.addf %1126, %9 : vector<8x96xf32>
      %1128 = math.tanh %1127 : vector<8x96xf32>
      %1129 = arith.truncf %1128 : vector<8x96xf32> to vector<8x96xbf16>
      %cst_270 = arith.constant dense<0.000000e+00> : vector<8x3xf32>
      %1130 = tpu.matmul %1129, %3, %cst_270 {dimension_numbers = #tpu.dot_dimension_numbers<[1], [0], [0], [1], [0, 0, 1, 1], [], []>} : vector<8x96xbf16>, vector<96x3xbf16>, vector<8x3xf32> -> vector<8x3xf32>
      %cst_271 = arith.constant 6.000000e+00 : f32
      %1131 = arith.divf %10, %cst_271 : f32
      %cst_272 = arith.constant 2.000000e+00 : f32
      %1132 = vector.broadcast %cst_272 : f32 to vector<8x3xf32>
      %1133 = arith.mulf %1132, %1102 : vector<8x3xf32>
      %1134 = arith.addf %1087, %1133 : vector<8x3xf32>
      %cst_273 = arith.constant 2.000000e+00 : f32
      %1135 = vector.broadcast %cst_273 : f32 to vector<8x3xf32>
      %1136 = arith.mulf %1135, %1117 : vector<8x3xf32>
      %1137 = arith.addf %1134, %1136 : vector<8x3xf32>
      %1138 = arith.addf %1137, %1130 : vector<8x3xf32>
      %1139 = vector.broadcast %1131 : f32 to vector<8x3xf32>
      %1140 = arith.mulf %1139, %1138 : vector<8x3xf32>
      %1141 = arith.addf %1075, %1140 : vector<8x3xf32>
      %c17_i32 = arith.constant 17 : i32
      %1142 = arith.sitofp %c17_i32 : i32 to f32
      %1143 = arith.mulf %1142, %10 : f32
      %1144 = arith.addf %19, %1143 : f32
      %1145 = arith.truncf %1141 : vector<8x3xf32> to vector<8x3xbf16>
      %cst_274 = arith.constant dense<0.000000e+00> : vector<8x96xf32>
      %1146 = tpu.matmul %1145, %1, %cst_274 {dimension_numbers = #tpu.dot_dimension_numbers<[1], [0], [0], [1], [0, 0, 1, 1], [], []>} : vector<8x3xbf16>, vector<3x96xbf16>, vector<8x96xf32> -> vector<8x96xf32>
      %1147 = vector.broadcast %1144 : f32 to vector<8x96xf32>
      %1148 = arith.mulf %1147, %6 : vector<8x96xf32>
      %1149 = arith.addf %1146, %1148 : vector<8x96xf32>
      %1150 = arith.addf %1149, %9 : vector<8x96xf32>
      %1151 = math.tanh %1150 : vector<8x96xf32>
      %1152 = arith.truncf %1151 : vector<8x96xf32> to vector<8x96xbf16>
      %cst_275 = arith.constant dense<0.000000e+00> : vector<8x3xf32>
      %1153 = tpu.matmul %1152, %3, %cst_275 {dimension_numbers = #tpu.dot_dimension_numbers<[1], [0], [0], [1], [0, 0, 1, 1], [], []>} : vector<8x96xbf16>, vector<96x3xbf16>, vector<8x3xf32> -> vector<8x3xf32>
      %cst_276 = arith.constant 5.000000e-01 : f32
      %1154 = arith.mulf %cst_276, %10 : f32
      %1155 = arith.addf %1144, %1154 : f32
      %cst_277 = arith.constant 5.000000e-01 : f32
      %1156 = arith.mulf %cst_277, %10 : f32
      %1157 = vector.broadcast %1156 : f32 to vector<8x3xf32>
      %1158 = arith.mulf %1157, %1153 : vector<8x3xf32>
      %1159 = arith.addf %1141, %1158 : vector<8x3xf32>
      %1160 = arith.truncf %1159 : vector<8x3xf32> to vector<8x3xbf16>
      %cst_278 = arith.constant dense<0.000000e+00> : vector<8x96xf32>
      %1161 = tpu.matmul %1160, %1, %cst_278 {dimension_numbers = #tpu.dot_dimension_numbers<[1], [0], [0], [1], [0, 0, 1, 1], [], []>} : vector<8x3xbf16>, vector<3x96xbf16>, vector<8x96xf32> -> vector<8x96xf32>
      %1162 = vector.broadcast %1155 : f32 to vector<8x96xf32>
      %1163 = arith.mulf %1162, %6 : vector<8x96xf32>
      %1164 = arith.addf %1161, %1163 : vector<8x96xf32>
      %1165 = arith.addf %1164, %9 : vector<8x96xf32>
      %1166 = math.tanh %1165 : vector<8x96xf32>
      %1167 = arith.truncf %1166 : vector<8x96xf32> to vector<8x96xbf16>
      %cst_279 = arith.constant dense<0.000000e+00> : vector<8x3xf32>
      %1168 = tpu.matmul %1167, %3, %cst_279 {dimension_numbers = #tpu.dot_dimension_numbers<[1], [0], [0], [1], [0, 0, 1, 1], [], []>} : vector<8x96xbf16>, vector<96x3xbf16>, vector<8x3xf32> -> vector<8x3xf32>
      %cst_280 = arith.constant 5.000000e-01 : f32
      %1169 = arith.mulf %cst_280, %10 : f32
      %1170 = arith.addf %1144, %1169 : f32
      %cst_281 = arith.constant 5.000000e-01 : f32
      %1171 = arith.mulf %cst_281, %10 : f32
      %1172 = vector.broadcast %1171 : f32 to vector<8x3xf32>
      %1173 = arith.mulf %1172, %1168 : vector<8x3xf32>
      %1174 = arith.addf %1141, %1173 : vector<8x3xf32>
      %1175 = arith.truncf %1174 : vector<8x3xf32> to vector<8x3xbf16>
      %cst_282 = arith.constant dense<0.000000e+00> : vector<8x96xf32>
      %1176 = tpu.matmul %1175, %1, %cst_282 {dimension_numbers = #tpu.dot_dimension_numbers<[1], [0], [0], [1], [0, 0, 1, 1], [], []>} : vector<8x3xbf16>, vector<3x96xbf16>, vector<8x96xf32> -> vector<8x96xf32>
      %1177 = vector.broadcast %1170 : f32 to vector<8x96xf32>
      %1178 = arith.mulf %1177, %6 : vector<8x96xf32>
      %1179 = arith.addf %1176, %1178 : vector<8x96xf32>
      %1180 = arith.addf %1179, %9 : vector<8x96xf32>
      %1181 = math.tanh %1180 : vector<8x96xf32>
      %1182 = arith.truncf %1181 : vector<8x96xf32> to vector<8x96xbf16>
      %cst_283 = arith.constant dense<0.000000e+00> : vector<8x3xf32>
      %1183 = tpu.matmul %1182, %3, %cst_283 {dimension_numbers = #tpu.dot_dimension_numbers<[1], [0], [0], [1], [0, 0, 1, 1], [], []>} : vector<8x96xbf16>, vector<96x3xbf16>, vector<8x3xf32> -> vector<8x3xf32>
      %1184 = arith.addf %1144, %10 : f32
      %1185 = vector.broadcast %10 : f32 to vector<8x3xf32>
      %1186 = arith.mulf %1185, %1183 : vector<8x3xf32>
      %1187 = arith.addf %1141, %1186 : vector<8x3xf32>
      %1188 = arith.truncf %1187 : vector<8x3xf32> to vector<8x3xbf16>
      %cst_284 = arith.constant dense<0.000000e+00> : vector<8x96xf32>
      %1189 = tpu.matmul %1188, %1, %cst_284 {dimension_numbers = #tpu.dot_dimension_numbers<[1], [0], [0], [1], [0, 0, 1, 1], [], []>} : vector<8x3xbf16>, vector<3x96xbf16>, vector<8x96xf32> -> vector<8x96xf32>
      %1190 = vector.broadcast %1184 : f32 to vector<8x96xf32>
      %1191 = arith.mulf %1190, %6 : vector<8x96xf32>
      %1192 = arith.addf %1189, %1191 : vector<8x96xf32>
      %1193 = arith.addf %1192, %9 : vector<8x96xf32>
      %1194 = math.tanh %1193 : vector<8x96xf32>
      %1195 = arith.truncf %1194 : vector<8x96xf32> to vector<8x96xbf16>
      %cst_285 = arith.constant dense<0.000000e+00> : vector<8x3xf32>
      %1196 = tpu.matmul %1195, %3, %cst_285 {dimension_numbers = #tpu.dot_dimension_numbers<[1], [0], [0], [1], [0, 0, 1, 1], [], []>} : vector<8x96xbf16>, vector<96x3xbf16>, vector<8x3xf32> -> vector<8x3xf32>
      %cst_286 = arith.constant 6.000000e+00 : f32
      %1197 = arith.divf %10, %cst_286 : f32
      %cst_287 = arith.constant 2.000000e+00 : f32
      %1198 = vector.broadcast %cst_287 : f32 to vector<8x3xf32>
      %1199 = arith.mulf %1198, %1168 : vector<8x3xf32>
      %1200 = arith.addf %1153, %1199 : vector<8x3xf32>
      %cst_288 = arith.constant 2.000000e+00 : f32
      %1201 = vector.broadcast %cst_288 : f32 to vector<8x3xf32>
      %1202 = arith.mulf %1201, %1183 : vector<8x3xf32>
      %1203 = arith.addf %1200, %1202 : vector<8x3xf32>
      %1204 = arith.addf %1203, %1196 : vector<8x3xf32>
      %1205 = vector.broadcast %1197 : f32 to vector<8x3xf32>
      %1206 = arith.mulf %1205, %1204 : vector<8x3xf32>
      %1207 = arith.addf %1141, %1206 : vector<8x3xf32>
      %c18_i32 = arith.constant 18 : i32
      %1208 = arith.sitofp %c18_i32 : i32 to f32
      %1209 = arith.mulf %1208, %10 : f32
      %1210 = arith.addf %19, %1209 : f32
      %1211 = arith.truncf %1207 : vector<8x3xf32> to vector<8x3xbf16>
      %cst_289 = arith.constant dense<0.000000e+00> : vector<8x96xf32>
      %1212 = tpu.matmul %1211, %1, %cst_289 {dimension_numbers = #tpu.dot_dimension_numbers<[1], [0], [0], [1], [0, 0, 1, 1], [], []>} : vector<8x3xbf16>, vector<3x96xbf16>, vector<8x96xf32> -> vector<8x96xf32>
      %1213 = vector.broadcast %1210 : f32 to vector<8x96xf32>
      %1214 = arith.mulf %1213, %6 : vector<8x96xf32>
      %1215 = arith.addf %1212, %1214 : vector<8x96xf32>
      %1216 = arith.addf %1215, %9 : vector<8x96xf32>
      %1217 = math.tanh %1216 : vector<8x96xf32>
      %1218 = arith.truncf %1217 : vector<8x96xf32> to vector<8x96xbf16>
      %cst_290 = arith.constant dense<0.000000e+00> : vector<8x3xf32>
      %1219 = tpu.matmul %1218, %3, %cst_290 {dimension_numbers = #tpu.dot_dimension_numbers<[1], [0], [0], [1], [0, 0, 1, 1], [], []>} : vector<8x96xbf16>, vector<96x3xbf16>, vector<8x3xf32> -> vector<8x3xf32>
      %cst_291 = arith.constant 5.000000e-01 : f32
      %1220 = arith.mulf %cst_291, %10 : f32
      %1221 = arith.addf %1210, %1220 : f32
      %cst_292 = arith.constant 5.000000e-01 : f32
      %1222 = arith.mulf %cst_292, %10 : f32
      %1223 = vector.broadcast %1222 : f32 to vector<8x3xf32>
      %1224 = arith.mulf %1223, %1219 : vector<8x3xf32>
      %1225 = arith.addf %1207, %1224 : vector<8x3xf32>
      %1226 = arith.truncf %1225 : vector<8x3xf32> to vector<8x3xbf16>
      %cst_293 = arith.constant dense<0.000000e+00> : vector<8x96xf32>
      %1227 = tpu.matmul %1226, %1, %cst_293 {dimension_numbers = #tpu.dot_dimension_numbers<[1], [0], [0], [1], [0, 0, 1, 1], [], []>} : vector<8x3xbf16>, vector<3x96xbf16>, vector<8x96xf32> -> vector<8x96xf32>
      %1228 = vector.broadcast %1221 : f32 to vector<8x96xf32>
      %1229 = arith.mulf %1228, %6 : vector<8x96xf32>
      %1230 = arith.addf %1227, %1229 : vector<8x96xf32>
      %1231 = arith.addf %1230, %9 : vector<8x96xf32>
      %1232 = math.tanh %1231 : vector<8x96xf32>
      %1233 = arith.truncf %1232 : vector<8x96xf32> to vector<8x96xbf16>
      %cst_294 = arith.constant dense<0.000000e+00> : vector<8x3xf32>
      %1234 = tpu.matmul %1233, %3, %cst_294 {dimension_numbers = #tpu.dot_dimension_numbers<[1], [0], [0], [1], [0, 0, 1, 1], [], []>} : vector<8x96xbf16>, vector<96x3xbf16>, vector<8x3xf32> -> vector<8x3xf32>
      %cst_295 = arith.constant 5.000000e-01 : f32
      %1235 = arith.mulf %cst_295, %10 : f32
      %1236 = arith.addf %1210, %1235 : f32
      %cst_296 = arith.constant 5.000000e-01 : f32
      %1237 = arith.mulf %cst_296, %10 : f32
      %1238 = vector.broadcast %1237 : f32 to vector<8x3xf32>
      %1239 = arith.mulf %1238, %1234 : vector<8x3xf32>
      %1240 = arith.addf %1207, %1239 : vector<8x3xf32>
      %1241 = arith.truncf %1240 : vector<8x3xf32> to vector<8x3xbf16>
      %cst_297 = arith.constant dense<0.000000e+00> : vector<8x96xf32>
      %1242 = tpu.matmul %1241, %1, %cst_297 {dimension_numbers = #tpu.dot_dimension_numbers<[1], [0], [0], [1], [0, 0, 1, 1], [], []>} : vector<8x3xbf16>, vector<3x96xbf16>, vector<8x96xf32> -> vector<8x96xf32>
      %1243 = vector.broadcast %1236 : f32 to vector<8x96xf32>
      %1244 = arith.mulf %1243, %6 : vector<8x96xf32>
      %1245 = arith.addf %1242, %1244 : vector<8x96xf32>
      %1246 = arith.addf %1245, %9 : vector<8x96xf32>
      %1247 = math.tanh %1246 : vector<8x96xf32>
      %1248 = arith.truncf %1247 : vector<8x96xf32> to vector<8x96xbf16>
      %cst_298 = arith.constant dense<0.000000e+00> : vector<8x3xf32>
      %1249 = tpu.matmul %1248, %3, %cst_298 {dimension_numbers = #tpu.dot_dimension_numbers<[1], [0], [0], [1], [0, 0, 1, 1], [], []>} : vector<8x96xbf16>, vector<96x3xbf16>, vector<8x3xf32> -> vector<8x3xf32>
      %1250 = arith.addf %1210, %10 : f32
      %1251 = vector.broadcast %10 : f32 to vector<8x3xf32>
      %1252 = arith.mulf %1251, %1249 : vector<8x3xf32>
      %1253 = arith.addf %1207, %1252 : vector<8x3xf32>
      %1254 = arith.truncf %1253 : vector<8x3xf32> to vector<8x3xbf16>
      %cst_299 = arith.constant dense<0.000000e+00> : vector<8x96xf32>
      %1255 = tpu.matmul %1254, %1, %cst_299 {dimension_numbers = #tpu.dot_dimension_numbers<[1], [0], [0], [1], [0, 0, 1, 1], [], []>} : vector<8x3xbf16>, vector<3x96xbf16>, vector<8x96xf32> -> vector<8x96xf32>
      %1256 = vector.broadcast %1250 : f32 to vector<8x96xf32>
      %1257 = arith.mulf %1256, %6 : vector<8x96xf32>
      %1258 = arith.addf %1255, %1257 : vector<8x96xf32>
      %1259 = arith.addf %1258, %9 : vector<8x96xf32>
      %1260 = math.tanh %1259 : vector<8x96xf32>
      %1261 = arith.truncf %1260 : vector<8x96xf32> to vector<8x96xbf16>
      %cst_300 = arith.constant dense<0.000000e+00> : vector<8x3xf32>
      %1262 = tpu.matmul %1261, %3, %cst_300 {dimension_numbers = #tpu.dot_dimension_numbers<[1], [0], [0], [1], [0, 0, 1, 1], [], []>} : vector<8x96xbf16>, vector<96x3xbf16>, vector<8x3xf32> -> vector<8x3xf32>
      %cst_301 = arith.constant 6.000000e+00 : f32
      %1263 = arith.divf %10, %cst_301 : f32
      %cst_302 = arith.constant 2.000000e+00 : f32
      %1264 = vector.broadcast %cst_302 : f32 to vector<8x3xf32>
      %1265 = arith.mulf %1264, %1234 : vector<8x3xf32>
      %1266 = arith.addf %1219, %1265 : vector<8x3xf32>
      %cst_303 = arith.constant 2.000000e+00 : f32
      %1267 = vector.broadcast %cst_303 : f32 to vector<8x3xf32>
      %1268 = arith.mulf %1267, %1249 : vector<8x3xf32>
      %1269 = arith.addf %1266, %1268 : vector<8x3xf32>
      %1270 = arith.addf %1269, %1262 : vector<8x3xf32>
      %1271 = vector.broadcast %1263 : f32 to vector<8x3xf32>
      %1272 = arith.mulf %1271, %1270 : vector<8x3xf32>
      %1273 = arith.addf %1207, %1272 : vector<8x3xf32>
      %c19_i32 = arith.constant 19 : i32
      %1274 = arith.sitofp %c19_i32 : i32 to f32
      %1275 = arith.mulf %1274, %10 : f32
      %1276 = arith.addf %19, %1275 : f32
      %1277 = arith.truncf %1273 : vector<8x3xf32> to vector<8x3xbf16>
      %cst_304 = arith.constant dense<0.000000e+00> : vector<8x96xf32>
      %1278 = tpu.matmul %1277, %1, %cst_304 {dimension_numbers = #tpu.dot_dimension_numbers<[1], [0], [0], [1], [0, 0, 1, 1], [], []>} : vector<8x3xbf16>, vector<3x96xbf16>, vector<8x96xf32> -> vector<8x96xf32>
      %1279 = vector.broadcast %1276 : f32 to vector<8x96xf32>
      %1280 = arith.mulf %1279, %6 : vector<8x96xf32>
      %1281 = arith.addf %1278, %1280 : vector<8x96xf32>
      %1282 = arith.addf %1281, %9 : vector<8x96xf32>
      %1283 = math.tanh %1282 : vector<8x96xf32>
      %1284 = arith.truncf %1283 : vector<8x96xf32> to vector<8x96xbf16>
      %cst_305 = arith.constant dense<0.000000e+00> : vector<8x3xf32>
      %1285 = tpu.matmul %1284, %3, %cst_305 {dimension_numbers = #tpu.dot_dimension_numbers<[1], [0], [0], [1], [0, 0, 1, 1], [], []>} : vector<8x96xbf16>, vector<96x3xbf16>, vector<8x3xf32> -> vector<8x3xf32>
      %cst_306 = arith.constant 5.000000e-01 : f32
      %1286 = arith.mulf %cst_306, %10 : f32
      %1287 = arith.addf %1276, %1286 : f32
      %cst_307 = arith.constant 5.000000e-01 : f32
      %1288 = arith.mulf %cst_307, %10 : f32
      %1289 = vector.broadcast %1288 : f32 to vector<8x3xf32>
      %1290 = arith.mulf %1289, %1285 : vector<8x3xf32>
      %1291 = arith.addf %1273, %1290 : vector<8x3xf32>
      %1292 = arith.truncf %1291 : vector<8x3xf32> to vector<8x3xbf16>
      %cst_308 = arith.constant dense<0.000000e+00> : vector<8x96xf32>
      %1293 = tpu.matmul %1292, %1, %cst_308 {dimension_numbers = #tpu.dot_dimension_numbers<[1], [0], [0], [1], [0, 0, 1, 1], [], []>} : vector<8x3xbf16>, vector<3x96xbf16>, vector<8x96xf32> -> vector<8x96xf32>
      %1294 = vector.broadcast %1287 : f32 to vector<8x96xf32>
      %1295 = arith.mulf %1294, %6 : vector<8x96xf32>
      %1296 = arith.addf %1293, %1295 : vector<8x96xf32>
      %1297 = arith.addf %1296, %9 : vector<8x96xf32>
      %1298 = math.tanh %1297 : vector<8x96xf32>
      %1299 = arith.truncf %1298 : vector<8x96xf32> to vector<8x96xbf16>
      %cst_309 = arith.constant dense<0.000000e+00> : vector<8x3xf32>
      %1300 = tpu.matmul %1299, %3, %cst_309 {dimension_numbers = #tpu.dot_dimension_numbers<[1], [0], [0], [1], [0, 0, 1, 1], [], []>} : vector<8x96xbf16>, vector<96x3xbf16>, vector<8x3xf32> -> vector<8x3xf32>
      %cst_310 = arith.constant 5.000000e-01 : f32
      %1301 = arith.mulf %cst_310, %10 : f32
      %1302 = arith.addf %1276, %1301 : f32
      %cst_311 = arith.constant 5.000000e-01 : f32
      %1303 = arith.mulf %cst_311, %10 : f32
      %1304 = vector.broadcast %1303 : f32 to vector<8x3xf32>
      %1305 = arith.mulf %1304, %1300 : vector<8x3xf32>
      %1306 = arith.addf %1273, %1305 : vector<8x3xf32>
      %1307 = arith.truncf %1306 : vector<8x3xf32> to vector<8x3xbf16>
      %cst_312 = arith.constant dense<0.000000e+00> : vector<8x96xf32>
      %1308 = tpu.matmul %1307, %1, %cst_312 {dimension_numbers = #tpu.dot_dimension_numbers<[1], [0], [0], [1], [0, 0, 1, 1], [], []>} : vector<8x3xbf16>, vector<3x96xbf16>, vector<8x96xf32> -> vector<8x96xf32>
      %1309 = vector.broadcast %1302 : f32 to vector<8x96xf32>
      %1310 = arith.mulf %1309, %6 : vector<8x96xf32>
      %1311 = arith.addf %1308, %1310 : vector<8x96xf32>
      %1312 = arith.addf %1311, %9 : vector<8x96xf32>
      %1313 = math.tanh %1312 : vector<8x96xf32>
      %1314 = arith.truncf %1313 : vector<8x96xf32> to vector<8x96xbf16>
      %cst_313 = arith.constant dense<0.000000e+00> : vector<8x3xf32>
      %1315 = tpu.matmul %1314, %3, %cst_313 {dimension_numbers = #tpu.dot_dimension_numbers<[1], [0], [0], [1], [0, 0, 1, 1], [], []>} : vector<8x96xbf16>, vector<96x3xbf16>, vector<8x3xf32> -> vector<8x3xf32>
      %1316 = arith.addf %1276, %10 : f32
      %1317 = vector.broadcast %10 : f32 to vector<8x3xf32>
      %1318 = arith.mulf %1317, %1315 : vector<8x3xf32>
      %1319 = arith.addf %1273, %1318 : vector<8x3xf32>
      %1320 = arith.truncf %1319 : vector<8x3xf32> to vector<8x3xbf16>
      %cst_314 = arith.constant dense<0.000000e+00> : vector<8x96xf32>
      %1321 = tpu.matmul %1320, %1, %cst_314 {dimension_numbers = #tpu.dot_dimension_numbers<[1], [0], [0], [1], [0, 0, 1, 1], [], []>} : vector<8x3xbf16>, vector<3x96xbf16>, vector<8x96xf32> -> vector<8x96xf32>
      %1322 = vector.broadcast %1316 : f32 to vector<8x96xf32>
      %1323 = arith.mulf %1322, %6 : vector<8x96xf32>
      %1324 = arith.addf %1321, %1323 : vector<8x96xf32>
      %1325 = arith.addf %1324, %9 : vector<8x96xf32>
      %1326 = math.tanh %1325 : vector<8x96xf32>
      %1327 = arith.truncf %1326 : vector<8x96xf32> to vector<8x96xbf16>
      %cst_315 = arith.constant dense<0.000000e+00> : vector<8x3xf32>
      %1328 = tpu.matmul %1327, %3, %cst_315 {dimension_numbers = #tpu.dot_dimension_numbers<[1], [0], [0], [1], [0, 0, 1, 1], [], []>} : vector<8x96xbf16>, vector<96x3xbf16>, vector<8x3xf32> -> vector<8x3xf32>
      %cst_316 = arith.constant 6.000000e+00 : f32
      %1329 = arith.divf %10, %cst_316 : f32
      %cst_317 = arith.constant 2.000000e+00 : f32
      %1330 = vector.broadcast %cst_317 : f32 to vector<8x3xf32>
      %1331 = arith.mulf %1330, %1300 : vector<8x3xf32>
      %1332 = arith.addf %1285, %1331 : vector<8x3xf32>
      %cst_318 = arith.constant 2.000000e+00 : f32
      %1333 = vector.broadcast %cst_318 : f32 to vector<8x3xf32>
      %1334 = arith.mulf %1333, %1315 : vector<8x3xf32>
      %1335 = arith.addf %1332, %1334 : vector<8x3xf32>
      %1336 = arith.addf %1335, %1328 : vector<8x3xf32>
      %1337 = vector.broadcast %1329 : f32 to vector<8x3xf32>
      %1338 = arith.mulf %1337, %1336 : vector<8x3xf32>
      %1339 = arith.addf %1273, %1338 : vector<8x3xf32>
      %c20_i32 = arith.constant 20 : i32
      %1340 = arith.index_cast %arg7 : i32 to index
      %c0_319 = arith.constant 0 : index
      %c0_320 = arith.constant 0 : index
      %1341 = vector.load %arg6[%1340, %c0_319, %c0_320] : memref<10x8x3xf32, #tpu.memory_space<vmem>>, vector<1x8x3xf32>
      %1342 = vector.shape_cast %1341 : vector<1x8x3xf32> to vector<8x3xf32>
      %1343 = vector.shape_cast %1339 : vector<8x3xf32> to vector<1x8x3xf32>
      tpu.vector_store %arg6[%1340, %c0_319, %c0_320], %1343 {strides = array<i32>} : memref<10x8x3xf32, #tpu.memory_space<vmem>>, vector<1x8x3xf32>,
      scf.yield %1339 : vector<8x3xf32>
    }
    %c9_i32_15 = arith.constant 9 : i32
    return
  }
  func.func @transform_0(%arg0: i32) -> (i32, i32) {
    %c0_i32 = arith.constant 0 : i32
    %c0_i32_0 = arith.constant 0 : i32
    %c0_i32_1 = arith.constant 0 : i32
    return %c0_i32, %c0_i32_0 : i32, i32
  }
  func.func @transform_1(%arg0: i32) -> (i32, i32) {
    %c0_i32 = arith.constant 0 : i32
    %c0_i32_0 = arith.constant 0 : i32
    %c0_i32_1 = arith.constant 0 : i32
    return %c0_i32, %c0_i32_0 : i32, i32
  }
  func.func @transform_2(%arg0: i32) -> (i32, i32) {
    %c0_i32 = arith.constant 0 : i32
    %c0_i32_0 = arith.constant 0 : i32
    %c0_i32_1 = arith.constant 0 : i32
    return %c0_i32, %c0_i32_0 : i32, i32
  }
  func.func @transform_3(%arg0: i32) -> (i32, i32) {
    %c0_i32 = arith.constant 0 : i32
    %c0_i32_0 = arith.constant 0 : i32
    %c0_i32_1 = arith.constant 0 : i32
    return %c0_i32, %c0_i32_0 : i32, i32
  }
  func.func @transform_4(%arg0: i32) -> (i32, i32) {
    %c0_i32 = arith.constant 0 : i32
    %c0_i32_0 = arith.constant 0 : i32
    %c0_i32_1 = arith.constant 0 : i32
    return %c0_i32, %c0_i32_0 : i32, i32
  }
  func.func @transform_5(%arg0: i32) -> (i32, i32, i32) {
    %c0_i32 = arith.constant 0 : i32
    %c0_i32_0 = arith.constant 0 : i32
    %c0_i32_1 = arith.constant 0 : i32
    %c0_i32_2 = arith.constant 0 : i32
    return %c0_i32, %c0_i32_0, %c0_i32_1 : i32, i32, i32
  }
}

</mosaic_0001>

<llo_original>
// kernel: tpu_custom_call.1
$region0: #{tpu_custom_call.1}
  #allocation0 [shape = 'u32[]', space=smem, size = 0x4, offset = 0x4, fixed_abs, tag = 'smem constant byte address 0x4 - core index']
  #allocation1 [shape = 'u32[144,128]{1,0:T(1,128)}', space=vmem, size = 0x12000, scoped, tag = 'internal scratch']
  %s0 = inlined_call_operand.vmem [shape: f32[8,3], index: 0, kind: input, shape index: {}]
  %s1 = inlined_call_operand.vmem [shape: f32[3,96], index: 1, kind: input, shape index: {}]
  %s2 = inlined_call_operand.vmem [shape: f32[1,96], index: 2, kind: input, shape index: {}]
  %s3 = inlined_call_operand.vmem [shape: f32[1,96], index: 3, kind: input, shape index: {}]
  %s4 = inlined_call_operand.vmem [shape: f32[96,3], index: 4, kind: input, shape index: {}]
  %s5 = inlined_call_operand.vmem [shape: f32[10,8,3], index: 5, kind: output, shape index: {}]
  %s6 = sld [smem:[#allocation0]]
  $region37: #{tpu_custom_call.1} parent=0
    _
  %s8 = ssub.s32 1, %s6
  %s9 = scalar_select 0, %s8, %s6
  // Predicated region
  $region2: #{tpu_custom_call.1} parent=0 // pred_check
    _
  $region3: #{tpu_custom_call.1} parent=0 // pred_check_branch
    %11 = sbr.rel (0) target = $region5
  $region4: #{tpu_custom_call.1} parent=0 // pred_region
    _
  $region5: #{tpu_custom_call.1} parent=0 // pred_fallthru
    _
  // Predicated region
  $region6: #{tpu_custom_call.1} parent=0 // pred_check
    _
  $region7: #{tpu_custom_call.1} parent=0 // pred_check_branch
    %13 = sbr.rel (0) target = $region9
  $region8: #{tpu_custom_call.1} parent=0 // pred_region
    _
  $region9: #{tpu_custom_call.1} parent=0 // pred_fallthru
    _
  // Predicated region
  $region10: #{tpu_custom_call.1} parent=0 // pred_check
    _
  $region11: #{tpu_custom_call.1} parent=0 // pred_check_branch
    %15 = sbr.rel (0) target = $region13
  $region12: #{tpu_custom_call.1} parent=0 // pred_region
    _
  $region13: #{tpu_custom_call.1} parent=0 // pred_fallthru
    _
  // Predicated region
  $region14: #{tpu_custom_call.1} parent=0 // pred_check
    _
  $region15: #{tpu_custom_call.1} parent=0 // pred_check_branch
    %17 = sbr.rel (0) target = $region17
  $region16: #{tpu_custom_call.1} parent=0 // pred_region
    _
  $region17: #{tpu_custom_call.1} parent=0 // pred_fallthru
    _
  // Predicated region
  $region18: #{tpu_custom_call.1} parent=0 // pred_check
    _
  $region19: #{tpu_custom_call.1} parent=0 // pred_check_branch
    %19 = sbr.rel (0) target = $region21
  $region20: #{tpu_custom_call.1} parent=0 // pred_region
    _
  $region21: #{tpu_custom_call.1} parent=0 // pred_fallthru
    _
  %v21 = vld [vmem:[%s1] sm:$0x7]
  %v22 = vpack.c.bf16 %v21, %v21
  %v23 = vld [vmem:[%s4] sm:$0xff]
  %v24 = vld [vmem:[%s4 + $0x8] sm:$0xff]
  %v25 = vld [vmem:[%s4 + $0x10] sm:$0xff]
  %v26 = vld [vmem:[%s4 + $0x18] sm:$0xff]
  %v27 = vld [vmem:[%s4 + $0x20] sm:$0xff]
  %v28 = vld [vmem:[%s4 + $0x28] sm:$0xff]
  %v29 = vld [vmem:[%s4 + $0x30] sm:$0xff]
  %v30 = vld [vmem:[%s4 + $0x38] sm:$0xff]
  %v31 = vld [vmem:[%s4 + $0x40] sm:$0xff]
  %v32 = vld [vmem:[%s4 + $0x48] sm:$0xff]
  %v33 = vld [vmem:[%s4 + $0x50] sm:$0xff]
  %v34 = vld [vmem:[%s4 + $0x58] sm:$0xff]
  %v35 = vpack.c.bf16 %v24, %v23
  %v36 = vpack.c.bf16 %v26, %v25
  %v37 = vpack.c.bf16 %v28, %v27
  %v38 = vpack.c.bf16 %v30, %v29
  %v39 = vpack.c.bf16 %v32, %v31
  %v40 = vpack.c.bf16 %v34, %v33
  %v41 = vld [vmem:[%s2] sm:$0x1]
  %v43 = vlaneseq
  %v44 = vshrl.u32 %v43, 7
  %v45 = vsub.s32 0, %v44
  %v46 = vrot.slane %v41, %v45
  %v48 = vld [vmem:[%s3] sm:$0x1]
  %v50 = vlaneseq
  %v51 = vshrl.u32 %v50, 7
  %v52 = vsub.s32 0, %v51
  %v53 = vrot.slane %v48, %v52
  %v55 = vld [vmem:[%s0] sm:$0xff]
  %vm56 = vcmask 23552
  %57 = vst.msk [vmem:[%s5] sm:$0xff] %vm56, %v55
  loop: start=1, step=1, limit=10
  $region22: #{tpu_custom_call.1} parent=0 // loop_pre_header
    _
  $region23: #{tpu_custom_call.1} parent=0 // loop_header
    %s59 = sphi 1, %s63
    %p60 = scmp.ge.s32.totalorder %s59, 10
    %v64 = vphi %v55, %v7715
  $region24: #{tpu_custom_call.1} parent=0 // loop_header_branch
    %62 = sbr.rel (%p60) target = $region28
  $region25: #{tpu_custom_call.1} parent=0 // loop_body
    %s65 = ssub.s32 %s59, 1
    %s66 = scvt.s32.f32 %s65
    %s67 = smul.f32 %s66, 1.1111112
    %s68 = sadd.f32 %s67, 0.0
    %v69 = vpack.c.bf16 %v64, %v64
    %v70 = vstv %s68
    %v71 = vmul.f32 %v70, %v46
    %v73 = vsel %vm56, %v69, 0
    %vm75 = vcmask 1040384
    %vm76 = vcmask 1041408
    %v77 = vsel %vm75, 4294967295, 65535
    %v78 = vsel %vm76, %v77, 0
    %v80 = vand.u32 %v22, %v78
    %82 = vmatprep.subr.bf16.mxu0 0
    %83 = vmatpush1.bf16.msra.mxu0 %v80
    %84 = vmatprep.subr.bf16.mxu0 0
    %85 = vmatpush1.bf16.msra.mxu0 0
    %86 = vmatprep.subr.bf16.mxu0 0
    %87 = vmatpush1.bf16.msra.mxu0 0
    %88 = vmatprep.subr.bf16.mxu0 0
    %89 = vmatpush1.bf16.msra.mxu0 0
    %90 = vmatprep.subr.bf16.mxu0 0
    %91 = vmatpush1.bf16.msra.mxu0 0
    %92 = vmatprep.subr.bf16.mxu0 0
    %93 = vmatpush1.bf16.msra.mxu0 0
    %94 = vmatprep.subr.bf16.mxu0 0
    %95 = vmatpush1.bf16.msra.mxu0 0
    %96 = vmatprep.subr.bf16.mxu0 0
    %97 = vmatpush1.bf16.msra.mxu0 0
    %98 = vmatprep.subr.bf16.mxu0 0
    %99 = vmatpush1.bf16.msra.mxu0 0
    %100 = vmatprep.subr.bf16.mxu0 0
    %101 = vmatpush1.bf16.msra.mxu0 0
    %102 = vmatprep.subr.bf16.mxu0 0
    %103 = vmatpush1.bf16.msra.mxu0 0
    %104 = vmatprep.subr.bf16.mxu0 0
    %105 = vmatpush1.bf16.msra.mxu0 0
    %106 = vmatprep.subr.bf16.mxu0 0
    %107 = vmatpush1.bf16.msra.mxu0 0
    %108 = vmatprep.subr.bf16.mxu0 0
    %109 = vmatpush1.bf16.msra.mxu0 0
    %110 = vmatprep.subr.bf16.mxu0 0
    %111 = vmatpush1.bf16.msra.mxu0 0
    %112 = vmatprep.subr.bf16.mxu0 0
    %113 = vmatpush1.bf16.msra.mxu0 0
    %114 = vmatprep.mubr.bf16.mxu0 0
    %115 = vmatmul.mubr.bf16.gmra.mrb[0].mxu0 %v73
    %v116 = vpop.f32.mrb[0].mxu0
    %v117 = vadd.f32 %v71, %v116
    %v118 = vpop.f32.mrb[0].mxu0
    %v119 = vpop.f32.mrb[0].mxu0
    %v120 = vpop.f32.mrb[0].mxu0
    %121 = vdwg.mxu0
    %v122 = vadd.f32 %v117, %v53
    %v123 = vtanh.pop %v122
    %v124 = vpack.c.bf16 %v123, %v123
    %vm125 = vcmask 785408
    %v127 = vsel %vm125, %v124, 0
    %129 = vmatprep.subr.bf16.mxu0 0
    %130 = vmatpush1.bf16.msra.mxu0 %v35
    %131 = vmatprep.subr.bf16.mxu0 0
    %132 = vmatpush1.bf16.msra.mxu0 %v36
    %133 = vmatprep.subr.bf16.mxu0 0
    %134 = vmatpush1.bf16.msra.mxu0 %v37
    %135 = vmatprep.subr.bf16.mxu0 0
    %136 = vmatpush1.bf16.msra.mxu0 %v38
    %137 = vmatprep.subr.bf16.mxu0 0
    %138 = vmatpush1.bf16.msra.mxu0 %v39
    %139 = vmatprep.subr.bf16.mxu0 0
    %140 = vmatpush1.bf16.msra.mxu0 %v40
    %141 = vmatprep.subr.bf16.mxu0 0
    %142 = vmatpush1.bf16.msra.mxu0 0
    %143 = vmatprep.subr.bf16.mxu0 0
    %144 = vmatpush1.bf16.msra.mxu0 0
    %145 = vmatprep.subr.bf16.mxu0 0
    %146 = vmatpush1.bf16.msra.mxu0 0
    %147 = vmatprep.subr.bf16.mxu0 0
    %148 = vmatpush1.bf16.msra.mxu0 0
    %149 = vmatprep.subr.bf16.mxu0 0
    %150 = vmatpush1.bf16.msra.mxu0 0
    %151 = vmatprep.subr.bf16.mxu0 0
    %152 = vmatpush1.bf16.msra.mxu0 0
    %153 = vmatprep.subr.bf16.mxu0 0
    %154 = vmatpush1.bf16.msra.mxu0 0
    %155 = vmatprep.subr.bf16.mxu0 0
    %156 = vmatpush1.bf16.msra.mxu0 0
    %157 = vmatprep.subr.bf16.mxu0 0
    %158 = vmatpush1.bf16.msra.mxu0 0
    %159 = vmatprep.subr.bf16.mxu0 0
    %160 = vmatpush1.bf16.msra.mxu0 0
    %161 = vmatprep.mubr.bf16.mxu0 0
    %162 = vmatmul.mubr.bf16.gmra.mrb[0].mxu0 %v127
    %v163 = vpop.f32.mrb[0].mxu0
    %v164 = vadd.f32 0.0, %v163
    %v165 = vpop.f32.mrb[0].mxu0
    %v166 = vpop.f32.mrb[0].mxu0
    %v167 = vpop.f32.mrb[0].mxu0
    %168 = vdwg.mxu0
    %s169 = sadd.f32 %s68, 0.02777778
    %v170 = vmul.f32 %v164, 0.02777778
    %v171 = vadd.f32 %v64, %v170
    %v172 = vpack.c.bf16 %v171, %v171
    %v173 = vstv %s169
    %v174 = vmul.f32 %v173, %v46
    %v176 = vsel %vm56, %v172, 0
    %178 = vmatprep.subr.bf16.mxu0 0
    %179 = vmatpush1.bf16.msra.mxu0 %v80
    %180 = vmatprep.subr.bf16.mxu0 0
    %181 = vmatpush1.bf16.msra.mxu0 0
    %182 = vmatprep.subr.bf16.mxu0 0
    %183 = vmatpush1.bf16.msra.mxu0 0
    %184 = vmatprep.subr.bf16.mxu0 0
    %185 = vmatpush1.bf16.msra.mxu0 0
    %186 = vmatprep.subr.bf16.mxu0 0
    %187 = vmatpush1.bf16.msra.mxu0 0
    %188 = vmatprep.subr.bf16.mxu0 0
    %189 = vmatpush1.bf16.msra.mxu0 0
    %190 = vmatprep.subr.bf16.mxu0 0
    %191 = vmatpush1.bf16.msra.mxu0 0
    %192 = vmatprep.subr.bf16.mxu0 0
    %193 = vmatpush1.bf16.msra.mxu0 0
    %194 = vmatprep.subr.bf16.mxu0 0
    %195 = vmatpush1.bf16.msra.mxu0 0
    %196 = vmatprep.subr.bf16.mxu0 0
    %197 = vmatpush1.bf16.msra.mxu0 0
    %198 = vmatprep.subr.bf16.mxu0 0
    %199 = vmatpush1.bf16.msra.mxu0 0
    %200 = vmatprep.subr.bf16.mxu0 0
    %201 = vmatpush1.bf16.msra.mxu0 0
    %202 = vmatprep.subr.bf16.mxu0 0
    %203 = vmatpush1.bf16.msra.mxu0 0
    %204 = vmatprep.subr.bf16.mxu0 0
    %205 = vmatpush1.bf16.msra.mxu0 0
    %206 = vmatprep.subr.bf16.mxu0 0
    %207 = vmatpush1.bf16.msra.mxu0 0
    %208 = vmatprep.subr.bf16.mxu0 0
    %209 = vmatpush1.bf16.msra.mxu0 0
    %210 = vmatprep.mubr.bf16.mxu0 0
    %211 = vmatmul.mubr.bf16.gmra.mrb[0].mxu0 %v176
    %v212 = vpop.f32.mrb[0].mxu0
    %v213 = vadd.f32 %v174, %v212
    %v214 = vpop.f32.mrb[0].mxu0
    %v215 = vpop.f32.mrb[0].mxu0
    %v216 = vpop.f32.mrb[0].mxu0
    %217 = vdwg.mxu0
    %v218 = vadd.f32 %v213, %v53
    %v219 = vtanh.pop %v218
    %v220 = vpack.c.bf16 %v219, %v219
    %v222 = vsel %vm125, %v220, 0
    %224 = vmatprep.subr.bf16.mxu0 0
    %225 = vmatpush1.bf16.msra.mxu0 %v35
    %226 = vmatprep.subr.bf16.mxu0 0
    %227 = vmatpush1.bf16.msra.mxu0 %v36
    %228 = vmatprep.subr.bf16.mxu0 0
    %229 = vmatpush1.bf16.msra.mxu0 %v37
    %230 = vmatprep.subr.bf16.mxu0 0
    %231 = vmatpush1.bf16.msra.mxu0 %v38
    %232 = vmatprep.subr.bf16.mxu0 0
    %233 = vmatpush1.bf16.msra.mxu0 %v39
    %234 = vmatprep.subr.bf16.mxu0 0
    %235 = vmatpush1.bf16.msra.mxu0 %v40
    %236 = vmatprep.subr.bf16.mxu0 0
    %237 = vmatpush1.bf16.msra.mxu0 0
    %238 = vmatprep.subr.bf16.mxu0 0
    %239 = vmatpush1.bf16.msra.mxu0 0
    %240 = vmatprep.subr.bf16.mxu0 0
    %241 = vmatpush1.bf16.msra.mxu0 0
    %242 = vmatprep.subr.bf16.mxu0 0
    %243 = vmatpush1.bf16.msra.mxu0 0
    %244 = vmatprep.subr.bf16.mxu0 0
    %245 = vmatpush1.bf16.msra.mxu0 0
    %246 = vmatprep.subr.bf16.mxu0 0
    %247 = vmatpush1.bf16.msra.mxu0 0
    %248 = vmatprep.subr.bf16.mxu0 0
    %249 = vmatpush1.bf16.msra.mxu0 0
    %250 = vmatprep.subr.bf16.mxu0 0
    %251 = vmatpush1.bf16.msra.mxu0 0
    %252 = vmatprep.subr.bf16.mxu0 0
    %253 = vmatpush1.bf16.msra.mxu0 0
    %254 = vmatprep.subr.bf16.mxu0 0
    %255 = vmatpush1.bf16.msra.mxu0 0
    %256 = vmatprep.mubr.bf16.mxu0 0
    %257 = vmatmul.mubr.bf16.gmra.mrb[0].mxu0 %v222
    %v258 = vpop.f32.mrb[0].mxu0
    %v259 = vadd.f32 0.0, %v258
    %v260 = vpop.f32.mrb[0].mxu0
    %v261 = vpop.f32.mrb[0].mxu0
    %v262 = vpop.f32.mrb[0].mxu0
    %263 = vdwg.mxu0
    %v264 = vmul.f32 %v259, 0.02777778
    %v265 = vadd.f32 %v64, %v264
    %v266 = vpack.c.bf16 %v265, %v265
    %v268 = vsel %vm56, %v266, 0
    %270 = vmatprep.subr.bf16.mxu0 0
    %271 = vmatpush1.bf16.msra.mxu0 %v80
    %272 = vmatprep.subr.bf16.mxu0 0
    %273 = vmatpush1.bf16.msra.mxu0 0
    %274 = vmatprep.subr.bf16.mxu0 0
    %275 = vmatpush1.bf16.msra.mxu0 0
    %276 = vmatprep.subr.bf16.mxu0 0
    %277 = vmatpush1.bf16.msra.mxu0 0
    %278 = vmatprep.subr.bf16.mxu0 0
    %279 = vmatpush1.bf16.msra.mxu0 0
    %280 = vmatprep.subr.bf16.mxu0 0
    %281 = vmatpush1.bf16.msra.mxu0 0
    %282 = vmatprep.subr.bf16.mxu0 0
    %283 = vmatpush1.bf16.msra.mxu0 0
    %284 = vmatprep.subr.bf16.mxu0 0
    %285 = vmatpush1.bf16.msra.mxu0 0
    %286 = vmatprep.subr.bf16.mxu0 0
    %287 = vmatpush1.bf16.msra.mxu0 0
    %288 = vmatprep.subr.bf16.mxu0 0
    %289 = vmatpush1.bf16.msra.mxu0 0
    %290 = vmatprep.subr.bf16.mxu0 0
    %291 = vmatpush1.bf16.msra.mxu0 0
    %292 = vmatprep.subr.bf16.mxu0 0
    %293 = vmatpush1.bf16.msra.mxu0 0
    %294 = vmatprep.subr.bf16.mxu0 0
    %295 = vmatpush1.bf16.msra.mxu0 0
    %296 = vmatprep.subr.bf16.mxu0 0
    %297 = vmatpush1.bf16.msra.mxu0 0
    %298 = vmatprep.subr.bf16.mxu0 0
    %299 = vmatpush1.bf16.msra.mxu0 0
    %300 = vmatprep.subr.bf16.mxu0 0
    %301 = vmatpush1.bf16.msra.mxu0 0
    %302 = vmatprep.mubr.bf16.mxu0 0
    %303 = vmatmul.mubr.bf16.gmra.mrb[0].mxu0 %v268
    %v304 = vpop.f32.mrb[0].mxu0
    %v305 = vadd.f32 %v174, %v304
    %v306 = vpop.f32.mrb[0].mxu0
    %v307 = vpop.f32.mrb[0].mxu0
    %v308 = vpop.f32.mrb[0].mxu0
    %309 = vdwg.mxu0
    %v310 = vadd.f32 %v305, %v53
    %v311 = vtanh.pop %v310
    %v312 = vpack.c.bf16 %v311, %v311
    %v314 = vsel %vm125, %v312, 0
    %316 = vmatprep.subr.bf16.mxu0 0
    %317 = vmatpush1.bf16.msra.mxu0 %v35
    %318 = vmatprep.subr.bf16.mxu0 0
    %319 = vmatpush1.bf16.msra.mxu0 %v36
    %320 = vmatprep.subr.bf16.mxu0 0
    %321 = vmatpush1.bf16.msra.mxu0 %v37
    %322 = vmatprep.subr.bf16.mxu0 0
    %323 = vmatpush1.bf16.msra.mxu0 %v38
    %324 = vmatprep.subr.bf16.mxu0 0
    %325 = vmatpush1.bf16.msra.mxu0 %v39
    %326 = vmatprep.subr.bf16.mxu0 0
    %327 = vmatpush1.bf16.msra.mxu0 %v40
    %328 = vmatprep.subr.bf16.mxu0 0
    %329 = vmatpush1.bf16.msra.mxu0 0
    %330 = vmatprep.subr.bf16.mxu0 0
    %331 = vmatpush1.bf16.msra.mxu0 0
    %332 = vmatprep.subr.bf16.mxu0 0
    %333 = vmatpush1.bf16.msra.mxu0 0
    %334 = vmatprep.subr.bf16.mxu0 0
    %335 = vmatpush1.bf16.msra.mxu0 0
    %336 = vmatprep.subr.bf16.mxu0 0
    %337 = vmatpush1.bf16.msra.mxu0 0
    %338 = vmatprep.subr.bf16.mxu0 0
    %339 = vmatpush1.bf16.msra.mxu0 0
    %340 = vmatprep.subr.bf16.mxu0 0
    %341 = vmatpush1.bf16.msra.mxu0 0
    %342 = vmatprep.subr.bf16.mxu0 0
    %343 = vmatpush1.bf16.msra.mxu0 0
    %344 = vmatprep.subr.bf16.mxu0 0
    %345 = vmatpush1.bf16.msra.mxu0 0
    %346 = vmatprep.subr.bf16.mxu0 0
    %347 = vmatpush1.bf16.msra.mxu0 0
    %348 = vmatprep.mubr.bf16.mxu0 0
    %349 = vmatmul.mubr.bf16.gmra.mrb[0].mxu0 %v314
    %v350 = vpop.f32.mrb[0].mxu0
    %v351 = vadd.f32 0.0, %v350
    %v352 = vpop.f32.mrb[0].mxu0
    %v353 = vpop.f32.mrb[0].mxu0
    %v354 = vpop.f32.mrb[0].mxu0
    %355 = vdwg.mxu0
    %s356 = sadd.f32 %s68, 0.05555556
    %v357 = vmul.f32 %v351, 0.05555556
    %v358 = vadd.f32 %v64, %v357
    %v359 = vpack.c.bf16 %v358, %v358
    %v360 = vstv %s356
    %v361 = vmul.f32 %v360, %v46
    %v363 = vsel %vm56, %v359, 0
    %365 = vmatprep.subr.bf16.mxu0 0
    %366 = vmatpush1.bf16.msra.mxu0 %v80
    %367 = vmatprep.subr.bf16.mxu0 0
    %368 = vmatpush1.bf16.msra.mxu0 0
    %369 = vmatprep.subr.bf16.mxu0 0
    %370 = vmatpush1.bf16.msra.mxu0 0
    %371 = vmatprep.subr.bf16.mxu0 0
    %372 = vmatpush1.bf16.msra.mxu0 0
    %373 = vmatprep.subr.bf16.mxu0 0
    %374 = vmatpush1.bf16.msra.mxu0 0
    %375 = vmatprep.subr.bf16.mxu0 0
    %376 = vmatpush1.bf16.msra.mxu0 0
    %377 = vmatprep.subr.bf16.mxu0 0
    %378 = vmatpush1.bf16.msra.mxu0 0
    %379 = vmatprep.subr.bf16.mxu0 0
    %380 = vmatpush1.bf16.msra.mxu0 0
    %381 = vmatprep.subr.bf16.mxu0 0
    %382 = vmatpush1.bf16.msra.mxu0 0
    %383 = vmatprep.subr.bf16.mxu0 0
    %384 = vmatpush1.bf16.msra.mxu0 0
    %385 = vmatprep.subr.bf16.mxu0 0
    %386 = vmatpush1.bf16.msra.mxu0 0
    %387 = vmatprep.subr.bf16.mxu0 0
    %388 = vmatpush1.bf16.msra.mxu0 0
    %389 = vmatprep.subr.bf16.mxu0 0
    %390 = vmatpush1.bf16.msra.mxu0 0
    %391 = vmatprep.subr.bf16.mxu0 0
    %392 = vmatpush1.bf16.msra.mxu0 0
    %393 = vmatprep.subr.bf16.mxu0 0
    %394 = vmatpush1.bf16.msra.mxu0 0
    %395 = vmatprep.subr.bf16.mxu0 0
    %396 = vmatpush1.bf16.msra.mxu0 0
    %397 = vmatprep.mubr.bf16.mxu0 0
    %398 = vmatmul.mubr.bf16.gmra.mrb[0].mxu0 %v363
    %v399 = vpop.f32.mrb[0].mxu0
    %v400 = vadd.f32 %v361, %v399
    %v401 = vpop.f32.mrb[0].mxu0
    %v402 = vpop.f32.mrb[0].mxu0
    %v403 = vpop.f32.mrb[0].mxu0
    %404 = vdwg.mxu0
    %v405 = vadd.f32 %v400, %v53
    %v406 = vtanh.pop %v405
    %v407 = vpack.c.bf16 %v406, %v406
    %v409 = vsel %vm125, %v407, 0
    %411 = vmatprep.subr.bf16.mxu0 0
    %412 = vmatpush1.bf16.msra.mxu0 %v35
    %413 = vmatprep.subr.bf16.mxu0 0
    %414 = vmatpush1.bf16.msra.mxu0 %v36
    %415 = vmatprep.subr.bf16.mxu0 0
    %416 = vmatpush1.bf16.msra.mxu0 %v37
    %417 = vmatprep.subr.bf16.mxu0 0
    %418 = vmatpush1.bf16.msra.mxu0 %v38
    %419 = vmatprep.subr.bf16.mxu0 0
    %420 = vmatpush1.bf16.msra.mxu0 %v39
    %421 = vmatprep.subr.bf16.mxu0 0
    %422 = vmatpush1.bf16.msra.mxu0 %v40
    %423 = vmatprep.subr.bf16.mxu0 0
    %424 = vmatpush1.bf16.msra.mxu0 0
    %425 = vmatprep.subr.bf16.mxu0 0
    %426 = vmatpush1.bf16.msra.mxu0 0
    %427 = vmatprep.subr.bf16.mxu0 0
    %428 = vmatpush1.bf16.msra.mxu0 0
    %429 = vmatprep.subr.bf16.mxu0 0
    %430 = vmatpush1.bf16.msra.mxu0 0
    %431 = vmatprep.subr.bf16.mxu0 0
    %432 = vmatpush1.bf16.msra.mxu0 0
    %433 = vmatprep.subr.bf16.mxu0 0
    %434 = vmatpush1.bf16.msra.mxu0 0
    %435 = vmatprep.subr.bf16.mxu0 0
    %436 = vmatpush1.bf16.msra.mxu0 0
    %437 = vmatprep.subr.bf16.mxu0 0
    %438 = vmatpush1.bf16.msra.mxu0 0
    %439 = vmatprep.subr.bf16.mxu0 0
    %440 = vmatpush1.bf16.msra.mxu0 0
    %441 = vmatprep.subr.bf16.mxu0 0
    %442 = vmatpush1.bf16.msra.mxu0 0
    %443 = vmatprep.mubr.bf16.mxu0 0
    %444 = vmatmul.mubr.bf16.gmra.mrb[0].mxu0 %v409
    %v445 = vpop.f32.mrb[0].mxu0
    %v446 = vadd.f32 0.0, %v445
    %v447 = vpop.f32.mrb[0].mxu0
    %v448 = vpop.f32.mrb[0].mxu0
    %v449 = vpop.f32.mrb[0].mxu0
    %450 = vdwg.mxu0
    %v451 = vmul.f32 %v259, 2.0
    %v452 = vadd.f32 %v164, %v451
    %v453 = vmul.f32 %v351, 2.0
    %v454 = vadd.f32 %v452, %v453
    %v455 = vadd.f32 %v454, %v446
    %v456 = vmul.f32 %v455, 0.00925926
    %v457 = vadd.f32 %v64, %v456
    %s458 = sadd.f32 %s67, 0.05555556
    %v459 = vpack.c.bf16 %v457, %v457
    %v460 = vstv %s458
    %v461 = vmul.f32 %v460, %v46
    %v463 = vsel %vm56, %v459, 0
    %465 = vmatprep.subr.bf16.mxu0 0
    %466 = vmatpush1.bf16.msra.mxu0 %v80
    %467 = vmatprep.subr.bf16.mxu0 0
    %468 = vmatpush1.bf16.msra.mxu0 0
    %469 = vmatprep.subr.bf16.mxu0 0
    %470 = vmatpush1.bf16.msra.mxu0 0
    %471 = vmatprep.subr.bf16.mxu0 0
    %472 = vmatpush1.bf16.msra.mxu0 0
    %473 = vmatprep.subr.bf16.mxu0 0
    %474 = vmatpush1.bf16.msra.mxu0 0
    %475 = vmatprep.subr.bf16.mxu0 0
    %476 = vmatpush1.bf16.msra.mxu0 0
    %477 = vmatprep.subr.bf16.mxu0 0
    %478 = vmatpush1.bf16.msra.mxu0 0
    %479 = vmatprep.subr.bf16.mxu0 0
    %480 = vmatpush1.bf16.msra.mxu0 0
    %481 = vmatprep.subr.bf16.mxu0 0
    %482 = vmatpush1.bf16.msra.mxu0 0
    %483 = vmatprep.subr.bf16.mxu0 0
    %484 = vmatpush1.bf16.msra.mxu0 0
    %485 = vmatprep.subr.bf16.mxu0 0
    %486 = vmatpush1.bf16.msra.mxu0 0
    %487 = vmatprep.subr.bf16.mxu0 0
    %488 = vmatpush1.bf16.msra.mxu0 0
    %489 = vmatprep.subr.bf16.mxu0 0
    %490 = vmatpush1.bf16.msra.mxu0 0
    %491 = vmatprep.subr.bf16.mxu0 0
    %492 = vmatpush1.bf16.msra.mxu0 0
    %493 = vmatprep.subr.bf16.mxu0 0
    %494 = vmatpush1.bf16.msra.mxu0 0
    %495 = vmatprep.subr.bf16.mxu0 0
    %496 = vmatpush1.bf16.msra.mxu0 0
    %497 = vmatprep.mubr.bf16.mxu0 0
    %498 = vmatmul.mubr.bf16.gmra.mrb[0].mxu0 %v463
    %v499 = vpop.f32.mrb[0].mxu0
    %v500 = vadd.f32 %v461, %v499
    %v501 = vpop.f32.mrb[0].mxu0
    %v502 = vpop.f32.mrb[0].mxu0
    %v503 = vpop.f32.mrb[0].mxu0
    %504 = vdwg.mxu0
    %v505 = vadd.f32 %v500, %v53
    %v506 = vtanh.pop %v505
    %v507 = vpack.c.bf16 %v506, %v506
    %v509 = vsel %vm125, %v507, 0
    %511 = vmatprep.subr.bf16.mxu0 0
    %512 = vmatpush1.bf16.msra.mxu0 %v35
    %513 = vmatprep.subr.bf16.mxu0 0
    %514 = vmatpush1.bf16.msra.mxu0 %v36
    %515 = vmatprep.subr.bf16.mxu0 0
    %516 = vmatpush1.bf16.msra.mxu0 %v37
    %517 = vmatprep.subr.bf16.mxu0 0
    %518 = vmatpush1.bf16.msra.mxu0 %v38
    %519 = vmatprep.subr.bf16.mxu0 0
    %520 = vmatpush1.bf16.msra.mxu0 %v39
    %521 = vmatprep.subr.bf16.mxu0 0
    %522 = vmatpush1.bf16.msra.mxu0 %v40
    %523 = vmatprep.subr.bf16.mxu0 0
    %524 = vmatpush1.bf16.msra.mxu0 0
    %525 = vmatprep.subr.bf16.mxu0 0
    %526 = vmatpush1.bf16.msra.mxu0 0
    %527 = vmatprep.subr.bf16.mxu0 0
    %528 = vmatpush1.bf16.msra.mxu0 0
    %529 = vmatprep.subr.bf16.mxu0 0
    %530 = vmatpush1.bf16.msra.mxu0 0
    %531 = vmatprep.subr.bf16.mxu0 0
    %532 = vmatpush1.bf16.msra.mxu0 0
    %533 = vmatprep.subr.bf16.mxu0 0
    %534 = vmatpush1.bf16.msra.mxu0 0
    %535 = vmatprep.subr.bf16.mxu0 0
    %536 = vmatpush1.bf16.msra.mxu0 0
    %537 = vmatprep.subr.bf16.mxu0 0
    %538 = vmatpush1.bf16.msra.mxu0 0
    %539 = vmatprep.subr.bf16.mxu0 0
    %540 = vmatpush1.bf16.msra.mxu0 0
    %541 = vmatprep.subr.bf16.mxu0 0
    %542 = vmatpush1.bf16.msra.mxu0 0
    %543 = vmatprep.mubr.bf16.mxu0 0
    %544 = vmatmul.mubr.bf16.gmra.mrb[0].mxu0 %v509
    %v545 = vpop.f32.mrb[0].mxu0
    %v546 = vadd.f32 0.0, %v545
    %v547 = vpop.f32.mrb[0].mxu0
    %v548 = vpop.f32.mrb[0].mxu0
    %v549 = vpop.f32.mrb[0].mxu0
    %550 = vdwg.mxu0
    %s551 = sadd.f32 %s458, 0.02777778
    %v552 = vmul.f32 %v546, 0.02777778
    %v553 = vadd.f32 %v457, %v552
    %v554 = vpack.c.bf16 %v553, %v553
    %v555 = vstv %s551
    %v556 = vmul.f32 %v555, %v46
    %v558 = vsel %vm56, %v554, 0
    %560 = vmatprep.subr.bf16.mxu0 0
    %561 = vmatpush1.bf16.msra.mxu0 %v80
    %562 = vmatprep.subr.bf16.mxu0 0
    %563 = vmatpush1.bf16.msra.mxu0 0
    %564 = vmatprep.subr.bf16.mxu0 0
    %565 = vmatpush1.bf16.msra.mxu0 0
    %566 = vmatprep.subr.bf16.mxu0 0
    %567 = vmatpush1.bf16.msra.mxu0 0
    %568 = vmatprep.subr.bf16.mxu0 0
    %569 = vmatpush1.bf16.msra.mxu0 0
    %570 = vmatprep.subr.bf16.mxu0 0
    %571 = vmatpush1.bf16.msra.mxu0 0
    %572 = vmatprep.subr.bf16.mxu0 0
    %573 = vmatpush1.bf16.msra.mxu0 0
    %574 = vmatprep.subr.bf16.mxu0 0
    %575 = vmatpush1.bf16.msra.mxu0 0
    %576 = vmatprep.subr.bf16.mxu0 0
    %577 = vmatpush1.bf16.msra.mxu0 0
    %578 = vmatprep.subr.bf16.mxu0 0
    %579 = vmatpush1.bf16.msra.mxu0 0
    %580 = vmatprep.subr.bf16.mxu0 0
    %581 = vmatpush1.bf16.msra.mxu0 0
    %582 = vmatprep.subr.bf16.mxu0 0
    %583 = vmatpush1.bf16.msra.mxu0 0
    %584 = vmatprep.subr.bf16.mxu0 0
    %585 = vmatpush1.bf16.msra.mxu0 0
    %586 = vmatprep.subr.bf16.mxu0 0
    %587 = vmatpush1.bf16.msra.mxu0 0
    %588 = vmatprep.subr.bf16.mxu0 0
    %589 = vmatpush1.bf16.msra.mxu0 0
    %590 = vmatprep.subr.bf16.mxu0 0
    %591 = vmatpush1.bf16.msra.mxu0 0
    %592 = vmatprep.mubr.bf16.mxu0 0
    %593 = vmatmul.mubr.bf16.gmra.mrb[0].mxu0 %v558
    %v594 = vpop.f32.mrb[0].mxu0
    %v595 = vadd.f32 %v556, %v594
    %v596 = vpop.f32.mrb[0].mxu0
    %v597 = vpop.f32.mrb[0].mxu0
    %v598 = vpop.f32.mrb[0].mxu0
    %599 = vdwg.mxu0
    %v600 = vadd.f32 %v595, %v53
    %v601 = vtanh.pop %v600
    %v602 = vpack.c.bf16 %v601, %v601
    %v604 = vsel %vm125, %v602, 0
    %606 = vmatprep.subr.bf16.mxu0 0
    %607 = vmatpush1.bf16.msra.mxu0 %v35
    %608 = vmatprep.subr.bf16.mxu0 0
    %609 = vmatpush1.bf16.msra.mxu0 %v36
    %610 = vmatprep.subr.bf16.mxu0 0
    %611 = vmatpush1.bf16.msra.mxu0 %v37
    %612 = vmatprep.subr.bf16.mxu0 0
    %613 = vmatpush1.bf16.msra.mxu0 %v38
    %614 = vmatprep.subr.bf16.mxu0 0
    %615 = vmatpush1.bf16.msra.mxu0 %v39
    %616 = vmatprep.subr.bf16.mxu0 0
    %617 = vmatpush1.bf16.msra.mxu0 %v40
    %618 = vmatprep.subr.bf16.mxu0 0
    %619 = vmatpush1.bf16.msra.mxu0 0
    %620 = vmatprep.subr.bf16.mxu0 0
    %621 = vmatpush1.bf16.msra.mxu0 0
    %622 = vmatprep.subr.bf16.mxu0 0
    %623 = vmatpush1.bf16.msra.mxu0 0
    %624 = vmatprep.subr.bf16.mxu0 0
    %625 = vmatpush1.bf16.msra.mxu0 0
    %626 = vmatprep.subr.bf16.mxu0 0
    %627 = vmatpush1.bf16.msra.mxu0 0
    %628 = vmatprep.subr.bf16.mxu0 0
    %629 = vmatpush1.bf16.msra.mxu0 0
    %630 = vmatprep.subr.bf16.mxu0 0
    %631 = vmatpush1.bf16.msra.mxu0 0
    %632 = vmatprep.subr.bf16.mxu0 0
    %633 = vmatpush1.bf16.msra.mxu0 0
    %634 = vmatprep.subr.bf16.mxu0 0
    %635 = vmatpush1.bf16.msra.mxu0 0
    %636 = vmatprep.subr.bf16.mxu0 0
    %637 = vmatpush1.bf16.msra.mxu0 0
    %638 = vmatprep.mubr.bf16.mxu0 0
    %639 = vmatmul.mubr.bf16.gmra.mrb[0].mxu0 %v604
    %v640 = vpop.f32.mrb[0].mxu0
    %v641 = vadd.f32 0.0, %v640
    %v642 = vpop.f32.mrb[0].mxu0
    %v643 = vpop.f32.mrb[0].mxu0
    %v644 = vpop.f32.mrb[0].mxu0
    %645 = vdwg.mxu0
    %v646 = vmul.f32 %v641, 0.02777778
    %v647 = vadd.f32 %v457, %v646
    %v648 = vpack.c.bf16 %v647, %v647
    %v650 = vsel %vm56, %v648, 0
    %652 = vmatprep.subr.bf16.mxu0 0
    %653 = vmatpush1.bf16.msra.mxu0 %v80
    %654 = vmatprep.subr.bf16.mxu0 0
    %655 = vmatpush1.bf16.msra.mxu0 0
    %656 = vmatprep.subr.bf16.mxu0 0
    %657 = vmatpush1.bf16.msra.mxu0 0
    %658 = vmatprep.subr.bf16.mxu0 0
    %659 = vmatpush1.bf16.msra.mxu0 0
    %660 = vmatprep.subr.bf16.mxu0 0
    %661 = vmatpush1.bf16.msra.mxu0 0
    %662 = vmatprep.subr.bf16.mxu0 0
    %663 = vmatpush1.bf16.msra.mxu0 0
    %664 = vmatprep.subr.bf16.mxu0 0
    %665 = vmatpush1.bf16.msra.mxu0 0
    %666 = vmatprep.subr.bf16.mxu0 0
    %667 = vmatpush1.bf16.msra.mxu0 0
    %668 = vmatprep.subr.bf16.mxu0 0
    %669 = vmatpush1.bf16.msra.mxu0 0
    %670 = vmatprep.subr.bf16.mxu0 0
    %671 = vmatpush1.bf16.msra.mxu0 0
    %672 = vmatprep.subr.bf16.mxu0 0
    %673 = vmatpush1.bf16.msra.mxu0 0
    %674 = vmatprep.subr.bf16.mxu0 0
    %675 = vmatpush1.bf16.msra.mxu0 0
    %676 = vmatprep.subr.bf16.mxu0 0
    %677 = vmatpush1.bf16.msra.mxu0 0
    %678 = vmatprep.subr.bf16.mxu0 0
    %679 = vmatpush1.bf16.msra.mxu0 0
    %680 = vmatprep.subr.bf16.mxu0 0
    %681 = vmatpush1.bf16.msra.mxu0 0
    %682 = vmatprep.subr.bf16.mxu0 0
    %683 = vmatpush1.bf16.msra.mxu0 0
    %684 = vmatprep.mubr.bf16.mxu0 0
    %685 = vmatmul.mubr.bf16.gmra.mrb[0].mxu0 %v650
    %v686 = vpop.f32.mrb[0].mxu0
    %v687 = vadd.f32 %v556, %v686
    %v688 = vpop.f32.mrb[0].mxu0
    %v689 = vpop.f32.mrb[0].mxu0
    %v690 = vpop.f32.mrb[0].mxu0
    %691 = vdwg.mxu0
    %v692 = vadd.f32 %v687, %v53
    %v693 = vtanh.pop %v692
    %v694 = vpack.c.bf16 %v693, %v693
    %v696 = vsel %vm125, %v694, 0
    %698 = vmatprep.subr.bf16.mxu0 0
    %699 = vmatpush1.bf16.msra.mxu0 %v35
    %700 = vmatprep.subr.bf16.mxu0 0
    %701 = vmatpush1.bf16.msra.mxu0 %v36
    %702 = vmatprep.subr.bf16.mxu0 0
    %703 = vmatpush1.bf16.msra.mxu0 %v37
    %704 = vmatprep.subr.bf16.mxu0 0
    %705 = vmatpush1.bf16.msra.mxu0 %v38
    %706 = vmatprep.subr.bf16.mxu0 0
    %707 = vmatpush1.bf16.msra.mxu0 %v39
    %708 = vmatprep.subr.bf16.mxu0 0
    %709 = vmatpush1.bf16.msra.mxu0 %v40
    %710 = vmatprep.subr.bf16.mxu0 0
    %711 = vmatpush1.bf16.msra.mxu0 0
    %712 = vmatprep.subr.bf16.mxu0 0
    %713 = vmatpush1.bf16.msra.mxu0 0
    %714 = vmatprep.subr.bf16.mxu0 0
    %715 = vmatpush1.bf16.msra.mxu0 0
    %716 = vmatprep.subr.bf16.mxu0 0
    %717 = vmatpush1.bf16.msra.mxu0 0
    %718 = vmatprep.subr.bf16.mxu0 0
    %719 = vmatpush1.bf16.msra.mxu0 0
    %720 = vmatprep.subr.bf16.mxu0 0
    %721 = vmatpush1.bf16.msra.mxu0 0
    %722 = vmatprep.subr.bf16.mxu0 0
    %723 = vmatpush1.bf16.msra.mxu0 0
    %724 = vmatprep.subr.bf16.mxu0 0
    %725 = vmatpush1.bf16.msra.mxu0 0
    %726 = vmatprep.subr.bf16.mxu0 0
    %727 = vmatpush1.bf16.msra.mxu0 0
    %728 = vmatprep.subr.bf16.mxu0 0
    %729 = vmatpush1.bf16.msra.mxu0 0
    %730 = vmatprep.mubr.bf16.mxu0 0
    %731 = vmatmul.mubr.bf16.gmra.mrb[0].mxu0 %v696
    %v732 = vpop.f32.mrb[0].mxu0
    %v733 = vadd.f32 0.0, %v732
    %v734 = vpop.f32.mrb[0].mxu0
    %v735 = vpop.f32.mrb[0].mxu0
    %v736 = vpop.f32.mrb[0].mxu0
    %737 = vdwg.mxu0
    %s738 = sadd.f32 %s458, 0.05555556
    %v739 = vmul.f32 %v733, 0.05555556
    %v740 = vadd.f32 %v457, %v739
    %v741 = vpack.c.bf16 %v740, %v740
    %v742 = vstv %s738
    %v743 = vmul.f32 %v742, %v46
    %v745 = vsel %vm56, %v741, 0
    %747 = vmatprep.subr.bf16.mxu0 0
    %748 = vmatpush1.bf16.msra.mxu0 %v80
    %749 = vmatprep.subr.bf16.mxu0 0
    %750 = vmatpush1.bf16.msra.mxu0 0
    %751 = vmatprep.subr.bf16.mxu0 0
    %752 = vmatpush1.bf16.msra.mxu0 0
    %753 = vmatprep.subr.bf16.mxu0 0
    %754 = vmatpush1.bf16.msra.mxu0 0
    %755 = vmatprep.subr.bf16.mxu0 0
    %756 = vmatpush1.bf16.msra.mxu0 0
    %757 = vmatprep.subr.bf16.mxu0 0
    %758 = vmatpush1.bf16.msra.mxu0 0
    %759 = vmatprep.subr.bf16.mxu0 0
    %760 = vmatpush1.bf16.msra.mxu0 0
    %761 = vmatprep.subr.bf16.mxu0 0
    %762 = vmatpush1.bf16.msra.mxu0 0
    %763 = vmatprep.subr.bf16.mxu0 0
    %764 = vmatpush1.bf16.msra.mxu0 0
    %765 = vmatprep.subr.bf16.mxu0 0
    %766 = vmatpush1.bf16.msra.mxu0 0
    %767 = vmatprep.subr.bf16.mxu0 0
    %768 = vmatpush1.bf16.msra.mxu0 0
    %769 = vmatprep.subr.bf16.mxu0 0
    %770 = vmatpush1.bf16.msra.mxu0 0
    %771 = vmatprep.subr.bf16.mxu0 0
    %772 = vmatpush1.bf16.msra.mxu0 0
    %773 = vmatprep.subr.bf16.mxu0 0
    %774 = vmatpush1.bf16.msra.mxu0 0
    %775 = vmatprep.subr.bf16.mxu0 0
    %776 = vmatpush1.bf16.msra.mxu0 0
    %777 = vmatprep.subr.bf16.mxu0 0
    %778 = vmatpush1.bf16.msra.mxu0 0
    %779 = vmatprep.mubr.bf16.mxu0 0
    %780 = vmatmul.mubr.bf16.gmra.mrb[0].mxu0 %v745
    %v781 = vpop.f32.mrb[0].mxu0
    %v782 = vadd.f32 %v743, %v781
    %v783 = vpop.f32.mrb[0].mxu0
    %v784 = vpop.f32.mrb[0].mxu0
    %v785 = vpop.f32.mrb[0].mxu0
    %786 = vdwg.mxu0
    %v787 = vadd.f32 %v782, %v53
    %v788 = vtanh.pop %v787
    %v789 = vpack.c.bf16 %v788, %v788
    %v791 = vsel %vm125, %v789, 0
    %793 = vmatprep.subr.bf16.mxu0 0
    %794 = vmatpush1.bf16.msra.mxu0 %v35
    %795 = vmatprep.subr.bf16.mxu0 0
    %796 = vmatpush1.bf16.msra.mxu0 %v36
    %797 = vmatprep.subr.bf16.mxu0 0
    %798 = vmatpush1.bf16.msra.mxu0 %v37
    %799 = vmatprep.subr.bf16.mxu0 0
    %800 = vmatpush1.bf16.msra.mxu0 %v38
    %801 = vmatprep.subr.bf16.mxu0 0
    %802 = vmatpush1.bf16.msra.mxu0 %v39
    %803 = vmatprep.subr.bf16.mxu0 0
    %804 = vmatpush1.bf16.msra.mxu0 %v40
    %805 = vmatprep.subr.bf16.mxu0 0
    %806 = vmatpush1.bf16.msra.mxu0 0
    %807 = vmatprep.subr.bf16.mxu0 0
    %808 = vmatpush1.bf16.msra.mxu0 0
    %809 = vmatprep.subr.bf16.mxu0 0
    %810 = vmatpush1.bf16.msra.mxu0 0
    %811 = vmatprep.subr.bf16.mxu0 0
    %812 = vmatpush1.bf16.msra.mxu0 0
    %813 = vmatprep.subr.bf16.mxu0 0
    %814 = vmatpush1.bf16.msra.mxu0 0
    %815 = vmatprep.subr.bf16.mxu0 0
    %816 = vmatpush1.bf16.msra.mxu0 0
    %817 = vmatprep.subr.bf16.mxu0 0
    %818 = vmatpush1.bf16.msra.mxu0 0
    %819 = vmatprep.subr.bf16.mxu0 0
    %820 = vmatpush1.bf16.msra.mxu0 0
    %821 = vmatprep.subr.bf16.mxu0 0
    %822 = vmatpush1.bf16.msra.mxu0 0
    %823 = vmatprep.subr.bf16.mxu0 0
    %824 = vmatpush1.bf16.msra.mxu0 0
    %825 = vmatprep.mubr.bf16.mxu0 0
    %826 = vmatmul.mubr.bf16.gmra.mrb[0].mxu0 %v791
    %v827 = vpop.f32.mrb[0].mxu0
    %v828 = vadd.f32 0.0, %v827
    %v829 = vpop.f32.mrb[0].mxu0
    %v830 = vpop.f32.mrb[0].mxu0
    %v831 = vpop.f32.mrb[0].mxu0
    %832 = vdwg.mxu0
    %v833 = vmul.f32 %v641, 2.0
    %v834 = vadd.f32 %v546, %v833
    %v835 = vmul.f32 %v733, 2.0
    %v836 = vadd.f32 %v834, %v835
    %v837 = vadd.f32 %v836, %v828
    %v838 = vmul.f32 %v837, 0.00925926
    %v839 = vadd.f32 %v457, %v838
    %s840 = sadd.f32 %s67, 0.11111112
    %v841 = vpack.c.bf16 %v839, %v839
    %v842 = vstv %s840
    %v843 = vmul.f32 %v842, %v46
    %v845 = vsel %vm56, %v841, 0
    %847 = vmatprep.subr.bf16.mxu0 0
    %848 = vmatpush1.bf16.msra.mxu0 %v80
    %849 = vmatprep.subr.bf16.mxu0 0
    %850 = vmatpush1.bf16.msra.mxu0 0
    %851 = vmatprep.subr.bf16.mxu0 0
    %852 = vmatpush1.bf16.msra.mxu0 0
    %853 = vmatprep.subr.bf16.mxu0 0
    %854 = vmatpush1.bf16.msra.mxu0 0
    %855 = vmatprep.subr.bf16.mxu0 0
    %856 = vmatpush1.bf16.msra.mxu0 0
    %857 = vmatprep.subr.bf16.mxu0 0
    %858 = vmatpush1.bf16.msra.mxu0 0
    %859 = vmatprep.subr.bf16.mxu0 0
    %860 = vmatpush1.bf16.msra.mxu0 0
    %861 = vmatprep.subr.bf16.mxu0 0
    %862 = vmatpush1.bf16.msra.mxu0 0
    %863 = vmatprep.subr.bf16.mxu0 0
    %864 = vmatpush1.bf16.msra.mxu0 0
    %865 = vmatprep.subr.bf16.mxu0 0
    %866 = vmatpush1.bf16.msra.mxu0 0
    %867 = vmatprep.subr.bf16.mxu0 0
    %868 = vmatpush1.bf16.msra.mxu0 0
    %869 = vmatprep.subr.bf16.mxu0 0
    %870 = vmatpush1.bf16.msra.mxu0 0
    %871 = vmatprep.subr.bf16.mxu0 0
    %872 = vmatpush1.bf16.msra.mxu0 0
    %873 = vmatprep.subr.bf16.mxu0 0
    %874 = vmatpush1.bf16.msra.mxu0 0
    %875 = vmatprep.subr.bf16.mxu0 0
    %876 = vmatpush1.bf16.msra.mxu0 0
    %877 = vmatprep.subr.bf16.mxu0 0
    %878 = vmatpush1.bf16.msra.mxu0 0
    %879 = vmatprep.mubr.bf16.mxu0 0
    %880 = vmatmul.mubr.bf16.gmra.mrb[0].mxu0 %v845
    %v881 = vpop.f32.mrb[0].mxu0
    %v882 = vadd.f32 %v843, %v881
    %v883 = vpop.f32.mrb[0].mxu0
    %v884 = vpop.f32.mrb[0].mxu0
    %v885 = vpop.f32.mrb[0].mxu0
    %886 = vdwg.mxu0
    %v887 = vadd.f32 %v882, %v53
    %v888 = vtanh.pop %v887
    %v889 = vpack.c.bf16 %v888, %v888
    %v891 = vsel %vm125, %v889, 0
    %893 = vmatprep.subr.bf16.mxu0 0
    %894 = vmatpush1.bf16.msra.mxu0 %v35
    %895 = vmatprep.subr.bf16.mxu0 0
    %896 = vmatpush1.bf16.msra.mxu0 %v36
    %897 = vmatprep.subr.bf16.mxu0 0
    %898 = vmatpush1.bf16.msra.mxu0 %v37
    %899 = vmatprep.subr.bf16.mxu0 0
    %900 = vmatpush1.bf16.msra.mxu0 %v38
    %901 = vmatprep.subr.bf16.mxu0 0
    %902 = vmatpush1.bf16.msra.mxu0 %v39
    %903 = vmatprep.subr.bf16.mxu0 0
    %904 = vmatpush1.bf16.msra.mxu0 %v40
    %905 = vmatprep.subr.bf16.mxu0 0
    %906 = vmatpush1.bf16.msra.mxu0 0
    %907 = vmatprep.subr.bf16.mxu0 0
    %908 = vmatpush1.bf16.msra.mxu0 0
    %909 = vmatprep.subr.bf16.mxu0 0
    %910 = vmatpush1.bf16.msra.mxu0 0
    %911 = vmatprep.subr.bf16.mxu0 0
    %912 = vmatpush1.bf16.msra.mxu0 0
    %913 = vmatprep.subr.bf16.mxu0 0
    %914 = vmatpush1.bf16.msra.mxu0 0
    %915 = vmatprep.subr.bf16.mxu0 0
    %916 = vmatpush1.bf16.msra.mxu0 0
    %917 = vmatprep.subr.bf16.mxu0 0
    %918 = vmatpush1.bf16.msra.mxu0 0
    %919 = vmatprep.subr.bf16.mxu0 0
    %920 = vmatpush1.bf16.msra.mxu0 0
    %921 = vmatprep.subr.bf16.mxu0 0
    %922 = vmatpush1.bf16.msra.mxu0 0
    %923 = vmatprep.subr.bf16.mxu0 0
    %924 = vmatpush1.bf16.msra.mxu0 0
    %925 = vmatprep.mubr.bf16.mxu0 0
    %926 = vmatmul.mubr.bf16.gmra.mrb[0].mxu0 %v891
    %v927 = vpop.f32.mrb[0].mxu0
    %v928 = vadd.f32 0.0, %v927
    %v929 = vpop.f32.mrb[0].mxu0
    %v930 = vpop.f32.mrb[0].mxu0
    %v931 = vpop.f32.mrb[0].mxu0
    %932 = vdwg.mxu0
    %s933 = sadd.f32 %s840, 0.02777778
    %v934 = vmul.f32 %v928, 0.02777778
    %v935 = vadd.f32 %v839, %v934
    %v936 = vpack.c.bf16 %v935, %v935
    %v937 = vstv %s933
    %v938 = vmul.f32 %v937, %v46
    %v940 = vsel %vm56, %v936, 0
    %942 = vmatprep.subr.bf16.mxu0 0
    %943 = vmatpush1.bf16.msra.mxu0 %v80
    %944 = vmatprep.subr.bf16.mxu0 0
    %945 = vmatpush1.bf16.msra.mxu0 0
    %946 = vmatprep.subr.bf16.mxu0 0
    %947 = vmatpush1.bf16.msra.mxu0 0
    %948 = vmatprep.subr.bf16.mxu0 0
    %949 = vmatpush1.bf16.msra.mxu0 0
    %950 = vmatprep.subr.bf16.mxu0 0
    %951 = vmatpush1.bf16.msra.mxu0 0
    %952 = vmatprep.subr.bf16.mxu0 0
    %953 = vmatpush1.bf16.msra.mxu0 0
    %954 = vmatprep.subr.bf16.mxu0 0
    %955 = vmatpush1.bf16.msra.mxu0 0
    %956 = vmatprep.subr.bf16.mxu0 0
    %957 = vmatpush1.bf16.msra.mxu0 0
    %958 = vmatprep.subr.bf16.mxu0 0
    %959 = vmatpush1.bf16.msra.mxu0 0
    %960 = vmatprep.subr.bf16.mxu0 0
    %961 = vmatpush1.bf16.msra.mxu0 0
    %962 = vmatprep.subr.bf16.mxu0 0
    %963 = vmatpush1.bf16.msra.mxu0 0
    %964 = vmatprep.subr.bf16.mxu0 0
    %965 = vmatpush1.bf16.msra.mxu0 0
    %966 = vmatprep.subr.bf16.mxu0 0
    %967 = vmatpush1.bf16.msra.mxu0 0
    %968 = vmatprep.subr.bf16.mxu0 0
    %969 = vmatpush1.bf16.msra.mxu0 0
    %970 = vmatprep.subr.bf16.mxu0 0
    %971 = vmatpush1.bf16.msra.mxu0 0
    %972 = vmatprep.subr.bf16.mxu0 0
    %973 = vmatpush1.bf16.msra.mxu0 0
    %974 = vmatprep.mubr.bf16.mxu0 0
    %975 = vmatmul.mubr.bf16.gmra.mrb[0].mxu0 %v940
    %v976 = vpop.f32.mrb[0].mxu0
    %v977 = vadd.f32 %v938, %v976
    %v978 = vpop.f32.mrb[0].mxu0
    %v979 = vpop.f32.mrb[0].mxu0
    %v980 = vpop.f32.mrb[0].mxu0
    %981 = vdwg.mxu0
    %v982 = vadd.f32 %v977, %v53
    %v983 = vtanh.pop %v982
    %v984 = vpack.c.bf16 %v983, %v983
    %v986 = vsel %vm125, %v984, 0
    %988 = vmatprep.subr.bf16.mxu0 0
    %989 = vmatpush1.bf16.msra.mxu0 %v35
    %990 = vmatprep.subr.bf16.mxu0 0
    %991 = vmatpush1.bf16.msra.mxu0 %v36
    %992 = vmatprep.subr.bf16.mxu0 0
    %993 = vmatpush1.bf16.msra.mxu0 %v37
    %994 = vmatprep.subr.bf16.mxu0 0
    %995 = vmatpush1.bf16.msra.mxu0 %v38
    %996 = vmatprep.subr.bf16.mxu0 0
    %997 = vmatpush1.bf16.msra.mxu0 %v39
    %998 = vmatprep.subr.bf16.mxu0 0
    %999 = vmatpush1.bf16.msra.mxu0 %v40
    %1000 = vmatprep.subr.bf16.mxu0 0
    %1001 = vmatpush1.bf16.msra.mxu0 0
    %1002 = vmatprep.subr.bf16.mxu0 0
    %1003 = vmatpush1.bf16.msra.mxu0 0
    %1004 = vmatprep.subr.bf16.mxu0 0
    %1005 = vmatpush1.bf16.msra.mxu0 0
    %1006 = vmatprep.subr.bf16.mxu0 0
    %1007 = vmatpush1.bf16.msra.mxu0 0
    %1008 = vmatprep.subr.bf16.mxu0 0
    %1009 = vmatpush1.bf16.msra.mxu0 0
    %1010 = vmatprep.subr.bf16.mxu0 0
    %1011 = vmatpush1.bf16.msra.mxu0 0
    %1012 = vmatprep.subr.bf16.mxu0 0
    %1013 = vmatpush1.bf16.msra.mxu0 0
    %1014 = vmatprep.subr.bf16.mxu0 0
    %1015 = vmatpush1.bf16.msra.mxu0 0
    %1016 = vmatprep.subr.bf16.mxu0 0
    %1017 = vmatpush1.bf16.msra.mxu0 0
    %1018 = vmatprep.subr.bf16.mxu0 0
    %1019 = vmatpush1.bf16.msra.mxu0 0
    %1020 = vmatprep.mubr.bf16.mxu0 0
    %1021 = vmatmul.mubr.bf16.gmra.mrb[0].mxu0 %v986
    %v1022 = vpop.f32.mrb[0].mxu0
    %v1023 = vadd.f32 0.0, %v1022
    %v1024 = vpop.f32.mrb[0].mxu0
    %v1025 = vpop.f32.mrb[0].mxu0
    %v1026 = vpop.f32.mrb[0].mxu0
    %1027 = vdwg.mxu0
    %v1028 = vmul.f32 %v1023, 0.02777778
    %v1029 = vadd.f32 %v839, %v1028
    %v1030 = vpack.c.bf16 %v1029, %v1029
    %v1032 = vsel %vm56, %v1030, 0
    %1034 = vmatprep.subr.bf16.mxu0 0
    %1035 = vmatpush1.bf16.msra.mxu0 %v80
    %1036 = vmatprep.subr.bf16.mxu0 0
    %1037 = vmatpush1.bf16.msra.mxu0 0
    %1038 = vmatprep.subr.bf16.mxu0 0
    %1039 = vmatpush1.bf16.msra.mxu0 0
    %1040 = vmatprep.subr.bf16.mxu0 0
    %1041 = vmatpush1.bf16.msra.mxu0 0
    %1042 = vmatprep.subr.bf16.mxu0 0
    %1043 = vmatpush1.bf16.msra.mxu0 0
    %1044 = vmatprep.subr.bf16.mxu0 0
    %1045 = vmatpush1.bf16.msra.mxu0 0
    %1046 = vmatprep.subr.bf16.mxu0 0
    %1047 = vmatpush1.bf16.msra.mxu0 0
    %1048 = vmatprep.subr.bf16.mxu0 0
    %1049 = vmatpush1.bf16.msra.mxu0 0
    %1050 = vmatprep.subr.bf16.mxu0 0
    %1051 = vmatpush1.bf16.msra.mxu0 0
    %1052 = vmatprep.subr.bf16.mxu0 0
    %1053 = vmatpush1.bf16.msra.mxu0 0
    %1054 = vmatprep.subr.bf16.mxu0 0
    %1055 = vmatpush1.bf16.msra.mxu0 0
    %1056 = vmatprep.subr.bf16.mxu0 0
    %1057 = vmatpush1.bf16.msra.mxu0 0
    %1058 = vmatprep.subr.bf16.mxu0 0
    %1059 = vmatpush1.bf16.msra.mxu0 0
    %1060 = vmatprep.subr.bf16.mxu0 0
    %1061 = vmatpush1.bf16.msra.mxu0 0
    %1062 = vmatprep.subr.bf16.mxu0 0
    %1063 = vmatpush1.bf16.msra.mxu0 0
    %1064 = vmatprep.subr.bf16.mxu0 0
    %1065 = vmatpush1.bf16.msra.mxu0 0
    %1066 = vmatprep.mubr.bf16.mxu0 0
    %1067 = vmatmul.mubr.bf16.gmra.mrb[0].mxu0 %v1032
    %v1068 = vpop.f32.mrb[0].mxu0
    %v1069 = vadd.f32 %v938, %v1068
    %v1070 = vpop.f32.mrb[0].mxu0
    %v1071 = vpop.f32.mrb[0].mxu0
    %v1072 = vpop.f32.mrb[0].mxu0
    %1073 = vdwg.mxu0
    %v1074 = vadd.f32 %v1069, %v53
    %v1075 = vtanh.pop %v1074
    %v1076 = vpack.c.bf16 %v1075, %v1075
    %v1078 = vsel %vm125, %v1076, 0
    %1080 = vmatprep.subr.bf16.mxu0 0
    %1081 = vmatpush1.bf16.msra.mxu0 %v35
    %1082 = vmatprep.subr.bf16.mxu0 0
    %1083 = vmatpush1.bf16.msra.mxu0 %v36
    %1084 = vmatprep.subr.bf16.mxu0 0
    %1085 = vmatpush1.bf16.msra.mxu0 %v37
    %1086 = vmatprep.subr.bf16.mxu0 0
    %1087 = vmatpush1.bf16.msra.mxu0 %v38
    %1088 = vmatprep.subr.bf16.mxu0 0
    %1089 = vmatpush1.bf16.msra.mxu0 %v39
    %1090 = vmatprep.subr.bf16.mxu0 0
    %1091 = vmatpush1.bf16.msra.mxu0 %v40
    %1092 = vmatprep.subr.bf16.mxu0 0
    %1093 = vmatpush1.bf16.msra.mxu0 0
    %1094 = vmatprep.subr.bf16.mxu0 0
    %1095 = vmatpush1.bf16.msra.mxu0 0
    %1096 = vmatprep.subr.bf16.mxu0 0
    %1097 = vmatpush1.bf16.msra.mxu0 0
    %1098 = vmatprep.subr.bf16.mxu0 0
    %1099 = vmatpush1.bf16.msra.mxu0 0
    %1100 = vmatprep.subr.bf16.mxu0 0
    %1101 = vmatpush1.bf16.msra.mxu0 0
    %1102 = vmatprep.subr.bf16.mxu0 0
    %1103 = vmatpush1.bf16.msra.mxu0 0
    %1104 = vmatprep.subr.bf16.mxu0 0
    %1105 = vmatpush1.bf16.msra.mxu0 0
    %1106 = vmatprep.subr.bf16.mxu0 0
    %1107 = vmatpush1.bf16.msra.mxu0 0
    %1108 = vmatprep.subr.bf16.mxu0 0
    %1109 = vmatpush1.bf16.msra.mxu0 0
    %1110 = vmatprep.subr.bf16.mxu0 0
    %1111 = vmatpush1.bf16.msra.mxu0 0
    %1112 = vmatprep.mubr.bf16.mxu0 0
    %1113 = vmatmul.mubr.bf16.gmra.mrb[0].mxu0 %v1078
    %v1114 = vpop.f32.mrb[0].mxu0
    %v1115 = vadd.f32 0.0, %v1114
    %v1116 = vpop.f32.mrb[0].mxu0
    %v1117 = vpop.f32.mrb[0].mxu0
    %v1118 = vpop.f32.mrb[0].mxu0
    %1119 = vdwg.mxu0
    %s1120 = sadd.f32 %s840, 0.05555556
    %v1121 = vmul.f32 %v1115, 0.05555556
    %v1122 = vadd.f32 %v839, %v1121
    %v1123 = vpack.c.bf16 %v1122, %v1122
    %v1124 = vstv %s1120
    %v1125 = vmul.f32 %v1124, %v46
    %v1127 = vsel %vm56, %v1123, 0
    %1129 = vmatprep.subr.bf16.mxu0 0
    %1130 = vmatpush1.bf16.msra.mxu0 %v80
    %1131 = vmatprep.subr.bf16.mxu0 0
    %1132 = vmatpush1.bf16.msra.mxu0 0
    %1133 = vmatprep.subr.bf16.mxu0 0
    %1134 = vmatpush1.bf16.msra.mxu0 0
    %1135 = vmatprep.subr.bf16.mxu0 0
    %1136 = vmatpush1.bf16.msra.mxu0 0
    %1137 = vmatprep.subr.bf16.mxu0 0
    %1138 = vmatpush1.bf16.msra.mxu0 0
    %1139 = vmatprep.subr.bf16.mxu0 0
    %1140 = vmatpush1.bf16.msra.mxu0 0
    %1141 = vmatprep.subr.bf16.mxu0 0
    %1142 = vmatpush1.bf16.msra.mxu0 0
    %1143 = vmatprep.subr.bf16.mxu0 0
    %1144 = vmatpush1.bf16.msra.mxu0 0
    %1145 = vmatprep.subr.bf16.mxu0 0
    %1146 = vmatpush1.bf16.msra.mxu0 0
    %1147 = vmatprep.subr.bf16.mxu0 0
    %1148 = vmatpush1.bf16.msra.mxu0 0
    %1149 = vmatprep.subr.bf16.mxu0 0
    %1150 = vmatpush1.bf16.msra.mxu0 0
    %1151 = vmatprep.subr.bf16.mxu0 0
    %1152 = vmatpush1.bf16.msra.mxu0 0
    %1153 = vmatprep.subr.bf16.mxu0 0
    %1154 = vmatpush1.bf16.msra.mxu0 0
    %1155 = vmatprep.subr.bf16.mxu0 0
    %1156 = vmatpush1.bf16.msra.mxu0 0
    %1157 = vmatprep.subr.bf16.mxu0 0
    %1158 = vmatpush1.bf16.msra.mxu0 0
    %1159 = vmatprep.subr.bf16.mxu0 0
    %1160 = vmatpush1.bf16.msra.mxu0 0
    %1161 = vmatprep.mubr.bf16.mxu0 0
    %1162 = vmatmul.mubr.bf16.gmra.mrb[0].mxu0 %v1127
    %v1163 = vpop.f32.mrb[0].mxu0
    %v1164 = vadd.f32 %v1125, %v1163
    %v1165 = vpop.f32.mrb[0].mxu0
    %v1166 = vpop.f32.mrb[0].mxu0
    %v1167 = vpop.f32.mrb[0].mxu0
    %1168 = vdwg.mxu0
    %v1169 = vadd.f32 %v1164, %v53
    %v1170 = vtanh.pop %v1169
    %v1171 = vpack.c.bf16 %v1170, %v1170
    %v1173 = vsel %vm125, %v1171, 0
    %1175 = vmatprep.subr.bf16.mxu0 0
    %1176 = vmatpush1.bf16.msra.mxu0 %v35
    %1177 = vmatprep.subr.bf16.mxu0 0
    %1178 = vmatpush1.bf16.msra.mxu0 %v36
    %1179 = vmatprep.subr.bf16.mxu0 0
    %1180 = vmatpush1.bf16.msra.mxu0 %v37
    %1181 = vmatprep.subr.bf16.mxu0 0
    %1182 = vmatpush1.bf16.msra.mxu0 %v38
    %1183 = vmatprep.subr.bf16.mxu0 0
    %1184 = vmatpush1.bf16.msra.mxu0 %v39
    %1185 = vmatprep.subr.bf16.mxu0 0
    %1186 = vmatpush1.bf16.msra.mxu0 %v40
    %1187 = vmatprep.subr.bf16.mxu0 0
    %1188 = vmatpush1.bf16.msra.mxu0 0
    %1189 = vmatprep.subr.bf16.mxu0 0
    %1190 = vmatpush1.bf16.msra.mxu0 0
    %1191 = vmatprep.subr.bf16.mxu0 0
    %1192 = vmatpush1.bf16.msra.mxu0 0
    %1193 = vmatprep.subr.bf16.mxu0 0
    %1194 = vmatpush1.bf16.msra.mxu0 0
    %1195 = vmatprep.subr.bf16.mxu0 0
    %1196 = vmatpush1.bf16.msra.mxu0 0
    %1197 = vmatprep.subr.bf16.mxu0 0
    %1198 = vmatpush1.bf16.msra.mxu0 0
    %1199 = vmatprep.subr.bf16.mxu0 0
    %1200 = vmatpush1.bf16.msra.mxu0 0
    %1201 = vmatprep.subr.bf16.mxu0 0
    %1202 = vmatpush1.bf16.msra.mxu0 0
    %1203 = vmatprep.subr.bf16.mxu0 0
    %1204 = vmatpush1.bf16.msra.mxu0 0
    %1205 = vmatprep.subr.bf16.mxu0 0
    %1206 = vmatpush1.bf16.msra.mxu0 0
    %1207 = vmatprep.mubr.bf16.mxu0 0
    %1208 = vmatmul.mubr.bf16.gmra.mrb[0].mxu0 %v1173
    %v1209 = vpop.f32.mrb[0].mxu0
    %v1210 = vadd.f32 0.0, %v1209
    %v1211 = vpop.f32.mrb[0].mxu0
    %v1212 = vpop.f32.mrb[0].mxu0
    %v1213 = vpop.f32.mrb[0].mxu0
    %1214 = vdwg.mxu0
    %v1215 = vmul.f32 %v1023, 2.0
    %v1216 = vadd.f32 %v928, %v1215
    %v1217 = vmul.f32 %v1115, 2.0
    %v1218 = vadd.f32 %v1216, %v1217
    %v1219 = vadd.f32 %v1218, %v1210
    %v1220 = vmul.f32 %v1219, 0.00925926
    %v1221 = vadd.f32 %v839, %v1220
    %s1222 = sadd.f32 %s67, 0.16666669
    %v1223 = vpack.c.bf16 %v1221, %v1221
    %v1224 = vstv %s1222
    %v1225 = vmul.f32 %v1224, %v46
    %v1227 = vsel %vm56, %v1223, 0
    %1229 = vmatprep.subr.bf16.mxu0 0
    %1230 = vmatpush1.bf16.msra.mxu0 %v80
    %1231 = vmatprep.subr.bf16.mxu0 0
    %1232 = vmatpush1.bf16.msra.mxu0 0
    %1233 = vmatprep.subr.bf16.mxu0 0
    %1234 = vmatpush1.bf16.msra.mxu0 0
    %1235 = vmatprep.subr.bf16.mxu0 0
    %1236 = vmatpush1.bf16.msra.mxu0 0
    %1237 = vmatprep.subr.bf16.mxu0 0
    %1238 = vmatpush1.bf16.msra.mxu0 0
    %1239 = vmatprep.subr.bf16.mxu0 0
    %1240 = vmatpush1.bf16.msra.mxu0 0
    %1241 = vmatprep.subr.bf16.mxu0 0
    %1242 = vmatpush1.bf16.msra.mxu0 0
    %1243 = vmatprep.subr.bf16.mxu0 0
    %1244 = vmatpush1.bf16.msra.mxu0 0
    %1245 = vmatprep.subr.bf16.mxu0 0
    %1246 = vmatpush1.bf16.msra.mxu0 0
    %1247 = vmatprep.subr.bf16.mxu0 0
    %1248 = vmatpush1.bf16.msra.mxu0 0
    %1249 = vmatprep.subr.bf16.mxu0 0
    %1250 = vmatpush1.bf16.msra.mxu0 0
    %1251 = vmatprep.subr.bf16.mxu0 0
    %1252 = vmatpush1.bf16.msra.mxu0 0
    %1253 = vmatprep.subr.bf16.mxu0 0
    %1254 = vmatpush1.bf16.msra.mxu0 0
    %1255 = vmatprep.subr.bf16.mxu0 0
    %1256 = vmatpush1.bf16.msra.mxu0 0
    %1257 = vmatprep.subr.bf16.mxu0 0
    %1258 = vmatpush1.bf16.msra.mxu0 0
    %1259 = vmatprep.subr.bf16.mxu0 0
    %1260 = vmatpush1.bf16.msra.mxu0 0
    %1261 = vmatprep.mubr.bf16.mxu0 0
    %1262 = vmatmul.mubr.bf16.gmra.mrb[0].mxu0 %v1227
    %v1263 = vpop.f32.mrb[0].mxu0
    %v1264 = vadd.f32 %v1225, %v1263
    %v1265 = vpop.f32.mrb[0].mxu0
    %v1266 = vpop.f32.mrb[0].mxu0
    %v1267 = vpop.f32.mrb[0].mxu0
    %1268 = vdwg.mxu0
    %v1269 = vadd.f32 %v1264, %v53
    %v1270 = vtanh.pop %v1269
    %v1271 = vpack.c.bf16 %v1270, %v1270
    %v1273 = vsel %vm125, %v1271, 0
    %1275 = vmatprep.subr.bf16.mxu0 0
    %1276 = vmatpush1.bf16.msra.mxu0 %v35
    %1277 = vmatprep.subr.bf16.mxu0 0
    %1278 = vmatpush1.bf16.msra.mxu0 %v36
    %1279 = vmatprep.subr.bf16.mxu0 0
    %1280 = vmatpush1.bf16.msra.mxu0 %v37
    %1281 = vmatprep.subr.bf16.mxu0 0
    %1282 = vmatpush1.bf16.msra.mxu0 %v38
    %1283 = vmatprep.subr.bf16.mxu0 0
    %1284 = vmatpush1.bf16.msra.mxu0 %v39
    %1285 = vmatprep.subr.bf16.mxu0 0
    %1286 = vmatpush1.bf16.msra.mxu0 %v40
    %1287 = vmatprep.subr.bf16.mxu0 0
    %1288 = vmatpush1.bf16.msra.mxu0 0
    %1289 = vmatprep.subr.bf16.mxu0 0
    %1290 = vmatpush1.bf16.msra.mxu0 0
    %1291 = vmatprep.subr.bf16.mxu0 0
    %1292 = vmatpush1.bf16.msra.mxu0 0
    %1293 = vmatprep.subr.bf16.mxu0 0
    %1294 = vmatpush1.bf16.msra.mxu0 0
    %1295 = vmatprep.subr.bf16.mxu0 0
    %1296 = vmatpush1.bf16.msra.mxu0 0
    %1297 = vmatprep.subr.bf16.mxu0 0
    %1298 = vmatpush1.bf16.msra.mxu0 0
    %1299 = vmatprep.subr.bf16.mxu0 0
    %1300 = vmatpush1.bf16.msra.mxu0 0
    %1301 = vmatprep.subr.bf16.mxu0 0
    %1302 = vmatpush1.bf16.msra.mxu0 0
    %1303 = vmatprep.subr.bf16.mxu0 0
    %1304 = vmatpush1.bf16.msra.mxu0 0
    %1305 = vmatprep.subr.bf16.mxu0 0
    %1306 = vmatpush1.bf16.msra.mxu0 0
    %1307 = vmatprep.mubr.bf16.mxu0 0
    %1308 = vmatmul.mubr.bf16.gmra.mrb[0].mxu0 %v1273
    %v1309 = vpop.f32.mrb[0].mxu0
    %v1310 = vadd.f32 0.0, %v1309
    %v1311 = vpop.f32.mrb[0].mxu0
    %v1312 = vpop.f32.mrb[0].mxu0
    %v1313 = vpop.f32.mrb[0].mxu0
    %1314 = vdwg.mxu0
    %s1315 = sadd.f32 %s1222, 0.02777778
    %v1316 = vmul.f32 %v1310, 0.02777778
    %v1317 = vadd.f32 %v1221, %v1316
    %v1318 = vpack.c.bf16 %v1317, %v1317
    %v1319 = vstv %s1315
    %v1320 = vmul.f32 %v1319, %v46
    %v1322 = vsel %vm56, %v1318, 0
    %1324 = vmatprep.subr.bf16.mxu0 0
    %1325 = vmatpush1.bf16.msra.mxu0 %v80
    %1326 = vmatprep.subr.bf16.mxu0 0
    %1327 = vmatpush1.bf16.msra.mxu0 0
    %1328 = vmatprep.subr.bf16.mxu0 0
    %1329 = vmatpush1.bf16.msra.mxu0 0
    %1330 = vmatprep.subr.bf16.mxu0 0
    %1331 = vmatpush1.bf16.msra.mxu0 0
    %1332 = vmatprep.subr.bf16.mxu0 0
    %1333 = vmatpush1.bf16.msra.mxu0 0
    %1334 = vmatprep.subr.bf16.mxu0 0
    %1335 = vmatpush1.bf16.msra.mxu0 0
    %1336 = vmatprep.subr.bf16.mxu0 0
    %1337 = vmatpush1.bf16.msra.mxu0 0
    %1338 = vmatprep.subr.bf16.mxu0 0
    %1339 = vmatpush1.bf16.msra.mxu0 0
    %1340 = vmatprep.subr.bf16.mxu0 0
    %1341 = vmatpush1.bf16.msra.mxu0 0
    %1342 = vmatprep.subr.bf16.mxu0 0
    %1343 = vmatpush1.bf16.msra.mxu0 0
    %1344 = vmatprep.subr.bf16.mxu0 0
    %1345 = vmatpush1.bf16.msra.mxu0 0
    %1346 = vmatprep.subr.bf16.mxu0 0
    %1347 = vmatpush1.bf16.msra.mxu0 0
    %1348 = vmatprep.subr.bf16.mxu0 0
    %1349 = vmatpush1.bf16.msra.mxu0 0
    %1350 = vmatprep.subr.bf16.mxu0 0
    %1351 = vmatpush1.bf16.msra.mxu0 0
    %1352 = vmatprep.subr.bf16.mxu0 0
    %1353 = vmatpush1.bf16.msra.mxu0 0
    %1354 = vmatprep.subr.bf16.mxu0 0
    %1355 = vmatpush1.bf16.msra.mxu0 0
    %1356 = vmatprep.mubr.bf16.mxu0 0
    %1357 = vmatmul.mubr.bf16.gmra.mrb[0].mxu0 %v1322
    %v1358 = vpop.f32.mrb[0].mxu0
    %v1359 = vadd.f32 %v1320, %v1358
    %v1360 = vpop.f32.mrb[0].mxu0
    %v1361 = vpop.f32.mrb[0].mxu0
    %v1362 = vpop.f32.mrb[0].mxu0
    %1363 = vdwg.mxu0
    %v1364 = vadd.f32 %v1359, %v53
    %v1365 = vtanh.pop %v1364
    %v1366 = vpack.c.bf16 %v1365, %v1365
    %v1368 = vsel %vm125, %v1366, 0
    %1370 = vmatprep.subr.bf16.mxu0 0
    %1371 = vmatpush1.bf16.msra.mxu0 %v35
    %1372 = vmatprep.subr.bf16.mxu0 0
    %1373 = vmatpush1.bf16.msra.mxu0 %v36
    %1374 = vmatprep.subr.bf16.mxu0 0
    %1375 = vmatpush1.bf16.msra.mxu0 %v37
    %1376 = vmatprep.subr.bf16.mxu0 0
    %1377 = vmatpush1.bf16.msra.mxu0 %v38
    %1378 = vmatprep.subr.bf16.mxu0 0
    %1379 = vmatpush1.bf16.msra.mxu0 %v39
    %1380 = vmatprep.subr.bf16.mxu0 0
    %1381 = vmatpush1.bf16.msra.mxu0 %v40
    %1382 = vmatprep.subr.bf16.mxu0 0
    %1383 = vmatpush1.bf16.msra.mxu0 0
    %1384 = vmatprep.subr.bf16.mxu0 0
    %1385 = vmatpush1.bf16.msra.mxu0 0
    %1386 = vmatprep.subr.bf16.mxu0 0
    %1387 = vmatpush1.bf16.msra.mxu0 0
    %1388 = vmatprep.subr.bf16.mxu0 0
    %1389 = vmatpush1.bf16.msra.mxu0 0
    %1390 = vmatprep.subr.bf16.mxu0 0
    %1391 = vmatpush1.bf16.msra.mxu0 0
    %1392 = vmatprep.subr.bf16.mxu0 0
    %1393 = vmatpush1.bf16.msra.mxu0 0
    %1394 = vmatprep.subr.bf16.mxu0 0
    %1395 = vmatpush1.bf16.msra.mxu0 0
    %1396 = vmatprep.subr.bf16.mxu0 0
    %1397 = vmatpush1.bf16.msra.mxu0 0
    %1398 = vmatprep.subr.bf16.mxu0 0
    %1399 = vmatpush1.bf16.msra.mxu0 0
    %1400 = vmatprep.subr.bf16.mxu0 0
    %1401 = vmatpush1.bf16.msra.mxu0 0
    %1402 = vmatprep.mubr.bf16.mxu0 0
    %1403 = vmatmul.mubr.bf16.gmra.mrb[0].mxu0 %v1368
    %v1404 = vpop.f32.mrb[0].mxu0
    %v1405 = vadd.f32 0.0, %v1404
    %v1406 = vpop.f32.mrb[0].mxu0
    %v1407 = vpop.f32.mrb[0].mxu0
    %v1408 = vpop.f32.mrb[0].mxu0
    %1409 = vdwg.mxu0
    %v1410 = vmul.f32 %v1405, 0.02777778
    %v1411 = vadd.f32 %v1221, %v1410
    %v1412 = vpack.c.bf16 %v1411, %v1411
    %v1414 = vsel %vm56, %v1412, 0
    %1416 = vmatprep.subr.bf16.mxu0 0
    %1417 = vmatpush1.bf16.msra.mxu0 %v80
    %1418 = vmatprep.subr.bf16.mxu0 0
    %1419 = vmatpush1.bf16.msra.mxu0 0
    %1420 = vmatprep.subr.bf16.mxu0 0
    %1421 = vmatpush1.bf16.msra.mxu0 0
    %1422 = vmatprep.subr.bf16.mxu0 0
    %1423 = vmatpush1.bf16.msra.mxu0 0
    %1424 = vmatprep.subr.bf16.mxu0 0
    %1425 = vmatpush1.bf16.msra.mxu0 0
    %1426 = vmatprep.subr.bf16.mxu0 0
    %1427 = vmatpush1.bf16.msra.mxu0 0
    %1428 = vmatprep.subr.bf16.mxu0 0
    %1429 = vmatpush1.bf16.msra.mxu0 0
    %1430 = vmatprep.subr.bf16.mxu0 0
    %1431 = vmatpush1.bf16.msra.mxu0 0
    %1432 = vmatprep.subr.bf16.mxu0 0
    %1433 = vmatpush1.bf16.msra.mxu0 0
    %1434 = vmatprep.subr.bf16.mxu0 0
    %1435 = vmatpush1.bf16.msra.mxu0 0
    %1436 = vmatprep.subr.bf16.mxu0 0
    %1437 = vmatpush1.bf16.msra.mxu0 0
    %1438 = vmatprep.subr.bf16.mxu0 0
    %1439 = vmatpush1.bf16.msra.mxu0 0
    %1440 = vmatprep.subr.bf16.mxu0 0
    %1441 = vmatpush1.bf16.msra.mxu0 0
    %1442 = vmatprep.subr.bf16.mxu0 0
    %1443 = vmatpush1.bf16.msra.mxu0 0
    %1444 = vmatprep.subr.bf16.mxu0 0
    %1445 = vmatpush1.bf16.msra.mxu0 0
    %1446 = vmatprep.subr.bf16.mxu0 0
    %1447 = vmatpush1.bf16.msra.mxu0 0
    %1448 = vmatprep.mubr.bf16.mxu0 0
    %1449 = vmatmul.mubr.bf16.gmra.mrb[0].mxu0 %v1414
    %v1450 = vpop.f32.mrb[0].mxu0
    %v1451 = vadd.f32 %v1320, %v1450
    %v1452 = vpop.f32.mrb[0].mxu0
    %v1453 = vpop.f32.mrb[0].mxu0
    %v1454 = vpop.f32.mrb[0].mxu0
    %1455 = vdwg.mxu0
    %v1456 = vadd.f32 %v1451, %v53
    %v1457 = vtanh.pop %v1456
    %v1458 = vpack.c.bf16 %v1457, %v1457
    %v1460 = vsel %vm125, %v1458, 0
    %1462 = vmatprep.subr.bf16.mxu0 0
    %1463 = vmatpush1.bf16.msra.mxu0 %v35
    %1464 = vmatprep.subr.bf16.mxu0 0
    %1465 = vmatpush1.bf16.msra.mxu0 %v36
    %1466 = vmatprep.subr.bf16.mxu0 0
    %1467 = vmatpush1.bf16.msra.mxu0 %v37
    %1468 = vmatprep.subr.bf16.mxu0 0
    %1469 = vmatpush1.bf16.msra.mxu0 %v38
    %1470 = vmatprep.subr.bf16.mxu0 0
    %1471 = vmatpush1.bf16.msra.mxu0 %v39
    %1472 = vmatprep.subr.bf16.mxu0 0
    %1473 = vmatpush1.bf16.msra.mxu0 %v40
    %1474 = vmatprep.subr.bf16.mxu0 0
    %1475 = vmatpush1.bf16.msra.mxu0 0
    %1476 = vmatprep.subr.bf16.mxu0 0
    %1477 = vmatpush1.bf16.msra.mxu0 0
    %1478 = vmatprep.subr.bf16.mxu0 0
    %1479 = vmatpush1.bf16.msra.mxu0 0
    %1480 = vmatprep.subr.bf16.mxu0 0
    %1481 = vmatpush1.bf16.msra.mxu0 0
    %1482 = vmatprep.subr.bf16.mxu0 0
    %1483 = vmatpush1.bf16.msra.mxu0 0
    %1484 = vmatprep.subr.bf16.mxu0 0
    %1485 = vmatpush1.bf16.msra.mxu0 0
    %1486 = vmatprep.subr.bf16.mxu0 0
    %1487 = vmatpush1.bf16.msra.mxu0 0
    %1488 = vmatprep.subr.bf16.mxu0 0
    %1489 = vmatpush1.bf16.msra.mxu0 0
    %1490 = vmatprep.subr.bf16.mxu0 0
    %1491 = vmatpush1.bf16.msra.mxu0 0
    %1492 = vmatprep.subr.bf16.mxu0 0
    %1493 = vmatpush1.bf16.msra.mxu0 0
    %1494 = vmatprep.mubr.bf16.mxu0 0
    %1495 = vmatmul.mubr.bf16.gmra.mrb[0].mxu0 %v1460
    %v1496 = vpop.f32.mrb[0].mxu0
    %v1497 = vadd.f32 0.0, %v1496
    %v1498 = vpop.f32.mrb[0].mxu0
    %v1499 = vpop.f32.mrb[0].mxu0
    %v1500 = vpop.f32.mrb[0].mxu0
    %1501 = vdwg.mxu0
    %s1502 = sadd.f32 %s1222, 0.05555556
    %v1503 = vmul.f32 %v1497, 0.05555556
    %v1504 = vadd.f32 %v1221, %v1503
    %v1505 = vpack.c.bf16 %v1504, %v1504
    %v1506 = vstv %s1502
    %v1507 = vmul.f32 %v1506, %v46
    %v1509 = vsel %vm56, %v1505, 0
    %1511 = vmatprep.subr.bf16.mxu0 0
    %1512 = vmatpush1.bf16.msra.mxu0 %v80
    %1513 = vmatprep.subr.bf16.mxu0 0
    %1514 = vmatpush1.bf16.msra.mxu0 0
    %1515 = vmatprep.subr.bf16.mxu0 0
    %1516 = vmatpush1.bf16.msra.mxu0 0
    %1517 = vmatprep.subr.bf16.mxu0 0
    %1518 = vmatpush1.bf16.msra.mxu0 0
    %1519 = vmatprep.subr.bf16.mxu0 0
    %1520 = vmatpush1.bf16.msra.mxu0 0
    %1521 = vmatprep.subr.bf16.mxu0 0
    %1522 = vmatpush1.bf16.msra.mxu0 0
    %1523 = vmatprep.subr.bf16.mxu0 0
    %1524 = vmatpush1.bf16.msra.mxu0 0
    %1525 = vmatprep.subr.bf16.mxu0 0
    %1526 = vmatpush1.bf16.msra.mxu0 0
    %1527 = vmatprep.subr.bf16.mxu0 0
    %1528 = vmatpush1.bf16.msra.mxu0 0
    %1529 = vmatprep.subr.bf16.mxu0 0
    %1530 = vmatpush1.bf16.msra.mxu0 0
    %1531 = vmatprep.subr.bf16.mxu0 0
    %1532 = vmatpush1.bf16.msra.mxu0 0
    %1533 = vmatprep.subr.bf16.mxu0 0
    %1534 = vmatpush1.bf16.msra.mxu0 0
    %1535 = vmatprep.subr.bf16.mxu0 0
    %1536 = vmatpush1.bf16.msra.mxu0 0
    %1537 = vmatprep.subr.bf16.mxu0 0
    %1538 = vmatpush1.bf16.msra.mxu0 0
    %1539 = vmatprep.subr.bf16.mxu0 0
    %1540 = vmatpush1.bf16.msra.mxu0 0
    %1541 = vmatprep.subr.bf16.mxu0 0
    %1542 = vmatpush1.bf16.msra.mxu0 0
    %1543 = vmatprep.mubr.bf16.mxu0 0
    %1544 = vmatmul.mubr.bf16.gmra.mrb[0].mxu0 %v1509
    %v1545 = vpop.f32.mrb[0].mxu0
    %v1546 = vadd.f32 %v1507, %v1545
    %v1547 = vpop.f32.mrb[0].mxu0
    %v1548 = vpop.f32.mrb[0].mxu0
    %v1549 = vpop.f32.mrb[0].mxu0
    %1550 = vdwg.mxu0
    %v1551 = vadd.f32 %v1546, %v53
    %v1552 = vtanh.pop %v1551
    %v1553 = vpack.c.bf16 %v1552, %v1552
    %v1555 = vsel %vm125, %v1553, 0
    %1557 = vmatprep.subr.bf16.mxu0 0
    %1558 = vmatpush1.bf16.msra.mxu0 %v35
    %1559 = vmatprep.subr.bf16.mxu0 0
    %1560 = vmatpush1.bf16.msra.mxu0 %v36
    %1561 = vmatprep.subr.bf16.mxu0 0
    %1562 = vmatpush1.bf16.msra.mxu0 %v37
    %1563 = vmatprep.subr.bf16.mxu0 0
    %1564 = vmatpush1.bf16.msra.mxu0 %v38
    %1565 = vmatprep.subr.bf16.mxu0 0
    %1566 = vmatpush1.bf16.msra.mxu0 %v39
    %1567 = vmatprep.subr.bf16.mxu0 0
    %1568 = vmatpush1.bf16.msra.mxu0 %v40
    %1569 = vmatprep.subr.bf16.mxu0 0
    %1570 = vmatpush1.bf16.msra.mxu0 0
    %1571 = vmatprep.subr.bf16.mxu0 0
    %1572 = vmatpush1.bf16.msra.mxu0 0
    %1573 = vmatprep.subr.bf16.mxu0 0
    %1574 = vmatpush1.bf16.msra.mxu0 0
    %1575 = vmatprep.subr.bf16.mxu0 0
    %1576 = vmatpush1.bf16.msra.mxu0 0
    %1577 = vmatprep.subr.bf16.mxu0 0
    %1578 = vmatpush1.bf16.msra.mxu0 0
    %1579 = vmatprep.subr.bf16.mxu0 0
    %1580 = vmatpush1.bf16.msra.mxu0 0
    %1581 = vmatprep.subr.bf16.mxu0 0
    %1582 = vmatpush1.bf16.msra.mxu0 0
    %1583 = vmatprep.subr.bf16.mxu0 0
    %1584 = vmatpush1.bf16.msra.mxu0 0
    %1585 = vmatprep.subr.bf16.mxu0 0
    %1586 = vmatpush1.bf16.msra.mxu0 0
    %1587 = vmatprep.subr.bf16.mxu0 0
    %1588 = vmatpush1.bf16.msra.mxu0 0
    %1589 = vmatprep.mubr.bf16.mxu0 0
    %1590 = vmatmul.mubr.bf16.gmra.mrb[0].mxu0 %v1555
    %v1591 = vpop.f32.mrb[0].mxu0
    %v1592 = vadd.f32 0.0, %v1591
    %v1593 = vpop.f32.mrb[0].mxu0
    %v1594 = vpop.f32.mrb[0].mxu0
    %v1595 = vpop.f32.mrb[0].mxu0
    %1596 = vdwg.mxu0
    %v1597 = vmul.f32 %v1405, 2.0
    %v1598 = vadd.f32 %v1310, %v1597
    %v1599 = vmul.f32 %v1497, 2.0
    %v1600 = vadd.f32 %v1598, %v1599
    %v1601 = vadd.f32 %v1600, %v1592
    %v1602 = vmul.f32 %v1601, 0.00925926
    %v1603 = vadd.f32 %v1221, %v1602
    %s1604 = sadd.f32 %s67, 0.22222224
    %v1605 = vpack.c.bf16 %v1603, %v1603
    %v1606 = vstv %s1604
    %v1607 = vmul.f32 %v1606, %v46
    %v1609 = vsel %vm56, %v1605, 0
    %1611 = vmatprep.subr.bf16.mxu0 0
    %1612 = vmatpush1.bf16.msra.mxu0 %v80
    %1613 = vmatprep.subr.bf16.mxu0 0
    %1614 = vmatpush1.bf16.msra.mxu0 0
    %1615 = vmatprep.subr.bf16.mxu0 0
    %1616 = vmatpush1.bf16.msra.mxu0 0
    %1617 = vmatprep.subr.bf16.mxu0 0
    %1618 = vmatpush1.bf16.msra.mxu0 0
    %1619 = vmatprep.subr.bf16.mxu0 0
    %1620 = vmatpush1.bf16.msra.mxu0 0
    %1621 = vmatprep.subr.bf16.mxu0 0
    %1622 = vmatpush1.bf16.msra.mxu0 0
    %1623 = vmatprep.subr.bf16.mxu0 0
    %1624 = vmatpush1.bf16.msra.mxu0 0
    %1625 = vmatprep.subr.bf16.mxu0 0
    %1626 = vmatpush1.bf16.msra.mxu0 0
    %1627 = vmatprep.subr.bf16.mxu0 0
    %1628 = vmatpush1.bf16.msra.mxu0 0
    %1629 = vmatprep.subr.bf16.mxu0 0
    %1630 = vmatpush1.bf16.msra.mxu0 0
    %1631 = vmatprep.subr.bf16.mxu0 0
    %1632 = vmatpush1.bf16.msra.mxu0 0
    %1633 = vmatprep.subr.bf16.mxu0 0
    %1634 = vmatpush1.bf16.msra.mxu0 0
    %1635 = vmatprep.subr.bf16.mxu0 0
    %1636 = vmatpush1.bf16.msra.mxu0 0
    %1637 = vmatprep.subr.bf16.mxu0 0
    %1638 = vmatpush1.bf16.msra.mxu0 0
    %1639 = vmatprep.subr.bf16.mxu0 0
    %1640 = vmatpush1.bf16.msra.mxu0 0
    %1641 = vmatprep.subr.bf16.mxu0 0
    %1642 = vmatpush1.bf16.msra.mxu0 0
    %1643 = vmatprep.mubr.bf16.mxu0 0
    %1644 = vmatmul.mubr.bf16.gmra.mrb[0].mxu0 %v1609
    %v1645 = vpop.f32.mrb[0].mxu0
    %v1646 = vadd.f32 %v1607, %v1645
    %v1647 = vpop.f32.mrb[0].mxu0
    %v1648 = vpop.f32.mrb[0].mxu0
    %v1649 = vpop.f32.mrb[0].mxu0
    %1650 = vdwg.mxu0
    %v1651 = vadd.f32 %v1646, %v53
    %v1652 = vtanh.pop %v1651
    %v1653 = vpack.c.bf16 %v1652, %v1652
    %v1655 = vsel %vm125, %v1653, 0
    %1657 = vmatprep.subr.bf16.mxu0 0
    %1658 = vmatpush1.bf16.msra.mxu0 %v35
    %1659 = vmatprep.subr.bf16.mxu0 0
    %1660 = vmatpush1.bf16.msra.mxu0 %v36
    %1661 = vmatprep.subr.bf16.mxu0 0
    %1662 = vmatpush1.bf16.msra.mxu0 %v37
    %1663 = vmatprep.subr.bf16.mxu0 0
    %1664 = vmatpush1.bf16.msra.mxu0 %v38
    %1665 = vmatprep.subr.bf16.mxu0 0
    %1666 = vmatpush1.bf16.msra.mxu0 %v39
    %1667 = vmatprep.subr.bf16.mxu0 0
    %1668 = vmatpush1.bf16.msra.mxu0 %v40
    %1669 = vmatprep.subr.bf16.mxu0 0
    %1670 = vmatpush1.bf16.msra.mxu0 0
    %1671 = vmatprep.subr.bf16.mxu0 0
    %1672 = vmatpush1.bf16.msra.mxu0 0
    %1673 = vmatprep.subr.bf16.mxu0 0
    %1674 = vmatpush1.bf16.msra.mxu0 0
    %1675 = vmatprep.subr.bf16.mxu0 0
    %1676 = vmatpush1.bf16.msra.mxu0 0
    %1677 = vmatprep.subr.bf16.mxu0 0
    %1678 = vmatpush1.bf16.msra.mxu0 0
    %1679 = vmatprep.subr.bf16.mxu0 0
    %1680 = vmatpush1.bf16.msra.mxu0 0
    %1681 = vmatprep.subr.bf16.mxu0 0
    %1682 = vmatpush1.bf16.msra.mxu0 0
    %1683 = vmatprep.subr.bf16.mxu0 0
    %1684 = vmatpush1.bf16.msra.mxu0 0
    %1685 = vmatprep.subr.bf16.mxu0 0
    %1686 = vmatpush1.bf16.msra.mxu0 0
    %1687 = vmatprep.subr.bf16.mxu0 0
    %1688 = vmatpush1.bf16.msra.mxu0 0
    %1689 = vmatprep.mubr.bf16.mxu0 0
    %1690 = vmatmul.mubr.bf16.gmra.mrb[0].mxu0 %v1655
    %v1691 = vpop.f32.mrb[0].mxu0
    %v1692 = vadd.f32 0.0, %v1691
    %v1693 = vpop.f32.mrb[0].mxu0
    %v1694 = vpop.f32.mrb[0].mxu0
    %v1695 = vpop.f32.mrb[0].mxu0
    %1696 = vdwg.mxu0
    %s1697 = sadd.f32 %s1604, 0.02777778
    %v1698 = vmul.f32 %v1692, 0.02777778
    %v1699 = vadd.f32 %v1603, %v1698
    %v1700 = vpack.c.bf16 %v1699, %v1699
    %v1701 = vstv %s1697
    %v1702 = vmul.f32 %v1701, %v46
    %v1704 = vsel %vm56, %v1700, 0
    %1706 = vmatprep.subr.bf16.mxu0 0
    %1707 = vmatpush1.bf16.msra.mxu0 %v80
    %1708 = vmatprep.subr.bf16.mxu0 0
    %1709 = vmatpush1.bf16.msra.mxu0 0
    %1710 = vmatprep.subr.bf16.mxu0 0
    %1711 = vmatpush1.bf16.msra.mxu0 0
    %1712 = vmatprep.subr.bf16.mxu0 0
    %1713 = vmatpush1.bf16.msra.mxu0 0
    %1714 = vmatprep.subr.bf16.mxu0 0
    %1715 = vmatpush1.bf16.msra.mxu0 0
    %1716 = vmatprep.subr.bf16.mxu0 0
    %1717 = vmatpush1.bf16.msra.mxu0 0
    %1718 = vmatprep.subr.bf16.mxu0 0
    %1719 = vmatpush1.bf16.msra.mxu0 0
    %1720 = vmatprep.subr.bf16.mxu0 0
    %1721 = vmatpush1.bf16.msra.mxu0 0
    %1722 = vmatprep.subr.bf16.mxu0 0
    %1723 = vmatpush1.bf16.msra.mxu0 0
    %1724 = vmatprep.subr.bf16.mxu0 0
    %1725 = vmatpush1.bf16.msra.mxu0 0
    %1726 = vmatprep.subr.bf16.mxu0 0
    %1727 = vmatpush1.bf16.msra.mxu0 0
    %1728 = vmatprep.subr.bf16.mxu0 0
    %1729 = vmatpush1.bf16.msra.mxu0 0
    %1730 = vmatprep.subr.bf16.mxu0 0
    %1731 = vmatpush1.bf16.msra.mxu0 0
    %1732 = vmatprep.subr.bf16.mxu0 0
    %1733 = vmatpush1.bf16.msra.mxu0 0
    %1734 = vmatprep.subr.bf16.mxu0 0
    %1735 = vmatpush1.bf16.msra.mxu0 0
    %1736 = vmatprep.subr.bf16.mxu0 0
    %1737 = vmatpush1.bf16.msra.mxu0 0
    %1738 = vmatprep.mubr.bf16.mxu0 0
    %1739 = vmatmul.mubr.bf16.gmra.mrb[0].mxu0 %v1704
    %v1740 = vpop.f32.mrb[0].mxu0
    %v1741 = vadd.f32 %v1702, %v1740
    %v1742 = vpop.f32.mrb[0].mxu0
    %v1743 = vpop.f32.mrb[0].mxu0
    %v1744 = vpop.f32.mrb[0].mxu0
    %1745 = vdwg.mxu0
    %v1746 = vadd.f32 %v1741, %v53
    %v1747 = vtanh.pop %v1746
    %v1748 = vpack.c.bf16 %v1747, %v1747
    %v1750 = vsel %vm125, %v1748, 0
    %1752 = vmatprep.subr.bf16.mxu0 0
    %1753 = vmatpush1.bf16.msra.mxu0 %v35
    %1754 = vmatprep.subr.bf16.mxu0 0
    %1755 = vmatpush1.bf16.msra.mxu0 %v36
    %1756 = vmatprep.subr.bf16.mxu0 0
    %1757 = vmatpush1.bf16.msra.mxu0 %v37
    %1758 = vmatprep.subr.bf16.mxu0 0
    %1759 = vmatpush1.bf16.msra.mxu0 %v38
    %1760 = vmatprep.subr.bf16.mxu0 0
    %1761 = vmatpush1.bf16.msra.mxu0 %v39
    %1762 = vmatprep.subr.bf16.mxu0 0
    %1763 = vmatpush1.bf16.msra.mxu0 %v40
    %1764 = vmatprep.subr.bf16.mxu0 0
    %1765 = vmatpush1.bf16.msra.mxu0 0
    %1766 = vmatprep.subr.bf16.mxu0 0
    %1767 = vmatpush1.bf16.msra.mxu0 0
    %1768 = vmatprep.subr.bf16.mxu0 0
    %1769 = vmatpush1.bf16.msra.mxu0 0
    %1770 = vmatprep.subr.bf16.mxu0 0
    %1771 = vmatpush1.bf16.msra.mxu0 0
    %1772 = vmatprep.subr.bf16.mxu0 0
    %1773 = vmatpush1.bf16.msra.mxu0 0
    %1774 = vmatprep.subr.bf16.mxu0 0
    %1775 = vmatpush1.bf16.msra.mxu0 0
    %1776 = vmatprep.subr.bf16.mxu0 0
    %1777 = vmatpush1.bf16.msra.mxu0 0
    %1778 = vmatprep.subr.bf16.mxu0 0
    %1779 = vmatpush1.bf16.msra.mxu0 0
    %1780 = vmatprep.subr.bf16.mxu0 0
    %1781 = vmatpush1.bf16.msra.mxu0 0
    %1782 = vmatprep.subr.bf16.mxu0 0
    %1783 = vmatpush1.bf16.msra.mxu0 0
    %1784 = vmatprep.mubr.bf16.mxu0 0
    %1785 = vmatmul.mubr.bf16.gmra.mrb[0].mxu0 %v1750
    %v1786 = vpop.f32.mrb[0].mxu0
    %v1787 = vadd.f32 0.0, %v1786
    %v1788 = vpop.f32.mrb[0].mxu0
    %v1789 = vpop.f32.mrb[0].mxu0
    %v1790 = vpop.f32.mrb[0].mxu0
    %1791 = vdwg.mxu0
    %v1792 = vmul.f32 %v1787, 0.02777778
    %v1793 = vadd.f32 %v1603, %v1792
    %v1794 = vpack.c.bf16 %v1793, %v1793
    %v1796 = vsel %vm56, %v1794, 0
    %1798 = vmatprep.subr.bf16.mxu0 0
    %1799 = vmatpush1.bf16.msra.mxu0 %v80
    %1800 = vmatprep.subr.bf16.mxu0 0
    %1801 = vmatpush1.bf16.msra.mxu0 0
    %1802 = vmatprep.subr.bf16.mxu0 0
    %1803 = vmatpush1.bf16.msra.mxu0 0
    %1804 = vmatprep.subr.bf16.mxu0 0
    %1805 = vmatpush1.bf16.msra.mxu0 0
    %1806 = vmatprep.subr.bf16.mxu0 0
    %1807 = vmatpush1.bf16.msra.mxu0 0
    %1808 = vmatprep.subr.bf16.mxu0 0
    %1809 = vmatpush1.bf16.msra.mxu0 0
    %1810 = vmatprep.subr.bf16.mxu0 0
    %1811 = vmatpush1.bf16.msra.mxu0 0
    %1812 = vmatprep.subr.bf16.mxu0 0
    %1813 = vmatpush1.bf16.msra.mxu0 0
    %1814 = vmatprep.subr.bf16.mxu0 0
    %1815 = vmatpush1.bf16.msra.mxu0 0
    %1816 = vmatprep.subr.bf16.mxu0 0
    %1817 = vmatpush1.bf16.msra.mxu0 0
    %1818 = vmatprep.subr.bf16.mxu0 0
    %1819 = vmatpush1.bf16.msra.mxu0 0
    %1820 = vmatprep.subr.bf16.mxu0 0
    %1821 = vmatpush1.bf16.msra.mxu0 0
    %1822 = vmatprep.subr.bf16.mxu0 0
    %1823 = vmatpush1.bf16.msra.mxu0 0
    %1824 = vmatprep.subr.bf16.mxu0 0
    %1825 = vmatpush1.bf16.msra.mxu0 0
    %1826 = vmatprep.subr.bf16.mxu0 0
    %1827 = vmatpush1.bf16.msra.mxu0 0
    %1828 = vmatprep.subr.bf16.mxu0 0
    %1829 = vmatpush1.bf16.msra.mxu0 0
    %1830 = vmatprep.mubr.bf16.mxu0 0
    %1831 = vmatmul.mubr.bf16.gmra.mrb[0].mxu0 %v1796
    %v1832 = vpop.f32.mrb[0].mxu0
    %v1833 = vadd.f32 %v1702, %v1832
    %v1834 = vpop.f32.mrb[0].mxu0
    %v1835 = vpop.f32.mrb[0].mxu0
    %v1836 = vpop.f32.mrb[0].mxu0
    %1837 = vdwg.mxu0
    %v1838 = vadd.f32 %v1833, %v53
    %v1839 = vtanh.pop %v1838
    %v1840 = vpack.c.bf16 %v1839, %v1839
    %v1842 = vsel %vm125, %v1840, 0
    %1844 = vmatprep.subr.bf16.mxu0 0
    %1845 = vmatpush1.bf16.msra.mxu0 %v35
    %1846 = vmatprep.subr.bf16.mxu0 0
    %1847 = vmatpush1.bf16.msra.mxu0 %v36
    %1848 = vmatprep.subr.bf16.mxu0 0
    %1849 = vmatpush1.bf16.msra.mxu0 %v37
    %1850 = vmatprep.subr.bf16.mxu0 0
    %1851 = vmatpush1.bf16.msra.mxu0 %v38
    %1852 = vmatprep.subr.bf16.mxu0 0
    %1853 = vmatpush1.bf16.msra.mxu0 %v39
    %1854 = vmatprep.subr.bf16.mxu0 0
    %1855 = vmatpush1.bf16.msra.mxu0 %v40
    %1856 = vmatprep.subr.bf16.mxu0 0
    %1857 = vmatpush1.bf16.msra.mxu0 0
    %1858 = vmatprep.subr.bf16.mxu0 0
    %1859 = vmatpush1.bf16.msra.mxu0 0
    %1860 = vmatprep.subr.bf16.mxu0 0
    %1861 = vmatpush1.bf16.msra.mxu0 0
    %1862 = vmatprep.subr.bf16.mxu0 0
    %1863 = vmatpush1.bf16.msra.mxu0 0
    %1864 = vmatprep.subr.bf16.mxu0 0
    %1865 = vmatpush1.bf16.msra.mxu0 0
    %1866 = vmatprep.subr.bf16.mxu0 0
    %1867 = vmatpush1.bf16.msra.mxu0 0
    %1868 = vmatprep.subr.bf16.mxu0 0
    %1869 = vmatpush1.bf16.msra.mxu0 0
    %1870 = vmatprep.subr.bf16.mxu0 0
    %1871 = vmatpush1.bf16.msra.mxu0 0
    %1872 = vmatprep.subr.bf16.mxu0 0
    %1873 = vmatpush1.bf16.msra.mxu0 0
    %1874 = vmatprep.subr.bf16.mxu0 0
    %1875 = vmatpush1.bf16.msra.mxu0 0
    %1876 = vmatprep.mubr.bf16.mxu0 0
    %1877 = vmatmul.mubr.bf16.gmra.mrb[0].mxu0 %v1842
    %v1878 = vpop.f32.mrb[0].mxu0
    %v1879 = vadd.f32 0.0, %v1878
    %v1880 = vpop.f32.mrb[0].mxu0
    %v1881 = vpop.f32.mrb[0].mxu0
    %v1882 = vpop.f32.mrb[0].mxu0
    %1883 = vdwg.mxu0
    %s1884 = sadd.f32 %s1604, 0.05555556
    %v1885 = vmul.f32 %v1879, 0.05555556
    %v1886 = vadd.f32 %v1603, %v1885
    %v1887 = vpack.c.bf16 %v1886, %v1886
    %v1888 = vstv %s1884
    %v1889 = vmul.f32 %v1888, %v46
    %v1891 = vsel %vm56, %v1887, 0
    %1893 = vmatprep.subr.bf16.mxu0 0
    %1894 = vmatpush1.bf16.msra.mxu0 %v80
    %1895 = vmatprep.subr.bf16.mxu0 0
    %1896 = vmatpush1.bf16.msra.mxu0 0
    %1897 = vmatprep.subr.bf16.mxu0 0
    %1898 = vmatpush1.bf16.msra.mxu0 0
    %1899 = vmatprep.subr.bf16.mxu0 0
    %1900 = vmatpush1.bf16.msra.mxu0 0
    %1901 = vmatprep.subr.bf16.mxu0 0
    %1902 = vmatpush1.bf16.msra.mxu0 0
    %1903 = vmatprep.subr.bf16.mxu0 0
    %1904 = vmatpush1.bf16.msra.mxu0 0
    %1905 = vmatprep.subr.bf16.mxu0 0
    %1906 = vmatpush1.bf16.msra.mxu0 0
    %1907 = vmatprep.subr.bf16.mxu0 0
    %1908 = vmatpush1.bf16.msra.mxu0 0
    %1909 = vmatprep.subr.bf16.mxu0 0
    %1910 = vmatpush1.bf16.msra.mxu0 0
    %1911 = vmatprep.subr.bf16.mxu0 0
    %1912 = vmatpush1.bf16.msra.mxu0 0
    %1913 = vmatprep.subr.bf16.mxu0 0
    %1914 = vmatpush1.bf16.msra.mxu0 0
    %1915 = vmatprep.subr.bf16.mxu0 0
    %1916 = vmatpush1.bf16.msra.mxu0 0
    %1917 = vmatprep.subr.bf16.mxu0 0
    %1918 = vmatpush1.bf16.msra.mxu0 0
    %1919 = vmatprep.subr.bf16.mxu0 0
    %1920 = vmatpush1.bf16.msra.mxu0 0
    %1921 = vmatprep.subr.bf16.mxu0 0
    %1922 = vmatpush1.bf16.msra.mxu0 0
    %1923 = vmatprep.subr.bf16.mxu0 0
    %1924 = vmatpush1.bf16.msra.mxu0 0
    %1925 = vmatprep.mubr.bf16.mxu0 0
    %1926 = vmatmul.mubr.bf16.gmra.mrb[0].mxu0 %v1891
    %v1927 = vpop.f32.mrb[0].mxu0
    %v1928 = vadd.f32 %v1889, %v1927
    %v1929 = vpop.f32.mrb[0].mxu0
    %v1930 = vpop.f32.mrb[0].mxu0
    %v1931 = vpop.f32.mrb[0].mxu0
    %1932 = vdwg.mxu0
    %v1933 = vadd.f32 %v1928, %v53
    %v1934 = vtanh.pop %v1933
    %v1935 = vpack.c.bf16 %v1934, %v1934
    %v1937 = vsel %vm125, %v1935, 0
    %1939 = vmatprep.subr.bf16.mxu0 0
    %1940 = vmatpush1.bf16.msra.mxu0 %v35
    %1941 = vmatprep.subr.bf16.mxu0 0
    %1942 = vmatpush1.bf16.msra.mxu0 %v36
    %1943 = vmatprep.subr.bf16.mxu0 0
    %1944 = vmatpush1.bf16.msra.mxu0 %v37
    %1945 = vmatprep.subr.bf16.mxu0 0
    %1946 = vmatpush1.bf16.msra.mxu0 %v38
    %1947 = vmatprep.subr.bf16.mxu0 0
    %1948 = vmatpush1.bf16.msra.mxu0 %v39
    %1949 = vmatprep.subr.bf16.mxu0 0
    %1950 = vmatpush1.bf16.msra.mxu0 %v40
    %1951 = vmatprep.subr.bf16.mxu0 0
    %1952 = vmatpush1.bf16.msra.mxu0 0
    %1953 = vmatprep.subr.bf16.mxu0 0
    %1954 = vmatpush1.bf16.msra.mxu0 0
    %1955 = vmatprep.subr.bf16.mxu0 0
    %1956 = vmatpush1.bf16.msra.mxu0 0
    %1957 = vmatprep.subr.bf16.mxu0 0
    %1958 = vmatpush1.bf16.msra.mxu0 0
    %1959 = vmatprep.subr.bf16.mxu0 0
    %1960 = vmatpush1.bf16.msra.mxu0 0
    %1961 = vmatprep.subr.bf16.mxu0 0
    %1962 = vmatpush1.bf16.msra.mxu0 0
    %1963 = vmatprep.subr.bf16.mxu0 0
    %1964 = vmatpush1.bf16.msra.mxu0 0
    %1965 = vmatprep.subr.bf16.mxu0 0
    %1966 = vmatpush1.bf16.msra.mxu0 0
    %1967 = vmatprep.subr.bf16.mxu0 0
    %1968 = vmatpush1.bf16.msra.mxu0 0
    %1969 = vmatprep.subr.bf16.mxu0 0
    %1970 = vmatpush1.bf16.msra.mxu0 0
    %1971 = vmatprep.mubr.bf16.mxu0 0
    %1972 = vmatmul.mubr.bf16.gmra.mrb[0].mxu0 %v1937
    %v1973 = vpop.f32.mrb[0].mxu0
    %v1974 = vadd.f32 0.0, %v1973
    %v1975 = vpop.f32.mrb[0].mxu0
    %v1976 = vpop.f32.mrb[0].mxu0
    %v1977 = vpop.f32.mrb[0].mxu0
    %1978 = vdwg.mxu0
    %v1979 = vmul.f32 %v1787, 2.0
    %v1980 = vadd.f32 %v1692, %v1979
    %v1981 = vmul.f32 %v1879, 2.0
    %v1982 = vadd.f32 %v1980, %v1981
    %v1983 = vadd.f32 %v1982, %v1974
    %v1984 = vmul.f32 %v1983, 0.00925926
    %v1985 = vadd.f32 %v1603, %v1984
    %s1986 = sadd.f32 %s67, 0.2777778
    %v1987 = vpack.c.bf16 %v1985, %v1985
    %v1988 = vstv %s1986
    %v1989 = vmul.f32 %v1988, %v46
    %v1991 = vsel %vm56, %v1987, 0
    %1993 = vmatprep.subr.bf16.mxu0 0
    %1994 = vmatpush1.bf16.msra.mxu0 %v80
    %1995 = vmatprep.subr.bf16.mxu0 0
    %1996 = vmatpush1.bf16.msra.mxu0 0
    %1997 = vmatprep.subr.bf16.mxu0 0
    %1998 = vmatpush1.bf16.msra.mxu0 0
    %1999 = vmatprep.subr.bf16.mxu0 0
    %2000 = vmatpush1.bf16.msra.mxu0 0
    %2001 = vmatprep.subr.bf16.mxu0 0
    %2002 = vmatpush1.bf16.msra.mxu0 0
    %2003 = vmatprep.subr.bf16.mxu0 0
    %2004 = vmatpush1.bf16.msra.mxu0 0
    %2005 = vmatprep.subr.bf16.mxu0 0
    %2006 = vmatpush1.bf16.msra.mxu0 0
    %2007 = vmatprep.subr.bf16.mxu0 0
    %2008 = vmatpush1.bf16.msra.mxu0 0
    %2009 = vmatprep.subr.bf16.mxu0 0
    %2010 = vmatpush1.bf16.msra.mxu0 0
    %2011 = vmatprep.subr.bf16.mxu0 0
    %2012 = vmatpush1.bf16.msra.mxu0 0
    %2013 = vmatprep.subr.bf16.mxu0 0
    %2014 = vmatpush1.bf16.msra.mxu0 0
    %2015 = vmatprep.subr.bf16.mxu0 0
    %2016 = vmatpush1.bf16.msra.mxu0 0
    %2017 = vmatprep.subr.bf16.mxu0 0
    %2018 = vmatpush1.bf16.msra.mxu0 0
    %2019 = vmatprep.subr.bf16.mxu0 0
    %2020 = vmatpush1.bf16.msra.mxu0 0
    %2021 = vmatprep.subr.bf16.mxu0 0
    %2022 = vmatpush1.bf16.msra.mxu0 0
    %2023 = vmatprep.subr.bf16.mxu0 0
    %2024 = vmatpush1.bf16.msra.mxu0 0
    %2025 = vmatprep.mubr.bf16.mxu0 0
    %2026 = vmatmul.mubr.bf16.gmra.mrb[0].mxu0 %v1991
    %v2027 = vpop.f32.mrb[0].mxu0
    %v2028 = vadd.f32 %v1989, %v2027
    %v2029 = vpop.f32.mrb[0].mxu0
    %v2030 = vpop.f32.mrb[0].mxu0
    %v2031 = vpop.f32.mrb[0].mxu0
    %2032 = vdwg.mxu0
    %v2033 = vadd.f32 %v2028, %v53
    %v2034 = vtanh.pop %v2033
    %v2035 = vpack.c.bf16 %v2034, %v2034
    %v2037 = vsel %vm125, %v2035, 0
    %2039 = vmatprep.subr.bf16.mxu0 0
    %2040 = vmatpush1.bf16.msra.mxu0 %v35
    %2041 = vmatprep.subr.bf16.mxu0 0
    %2042 = vmatpush1.bf16.msra.mxu0 %v36
    %2043 = vmatprep.subr.bf16.mxu0 0
    %2044 = vmatpush1.bf16.msra.mxu0 %v37
    %2045 = vmatprep.subr.bf16.mxu0 0
    %2046 = vmatpush1.bf16.msra.mxu0 %v38
    %2047 = vmatprep.subr.bf16.mxu0 0
    %2048 = vmatpush1.bf16.msra.mxu0 %v39
    %2049 = vmatprep.subr.bf16.mxu0 0
    %2050 = vmatpush1.bf16.msra.mxu0 %v40
    %2051 = vmatprep.subr.bf16.mxu0 0
    %2052 = vmatpush1.bf16.msra.mxu0 0
    %2053 = vmatprep.subr.bf16.mxu0 0
    %2054 = vmatpush1.bf16.msra.mxu0 0
    %2055 = vmatprep.subr.bf16.mxu0 0
    %2056 = vmatpush1.bf16.msra.mxu0 0
    %2057 = vmatprep.subr.bf16.mxu0 0
    %2058 = vmatpush1.bf16.msra.mxu0 0
    %2059 = vmatprep.subr.bf16.mxu0 0
    %2060 = vmatpush1.bf16.msra.mxu0 0
    %2061 = vmatprep.subr.bf16.mxu0 0
    %2062 = vmatpush1.bf16.msra.mxu0 0
    %2063 = vmatprep.subr.bf16.mxu0 0
    %2064 = vmatpush1.bf16.msra.mxu0 0
    %2065 = vmatprep.subr.bf16.mxu0 0
    %2066 = vmatpush1.bf16.msra.mxu0 0
    %2067 = vmatprep.subr.bf16.mxu0 0
    %2068 = vmatpush1.bf16.msra.mxu0 0
    %2069 = vmatprep.subr.bf16.mxu0 0
    %2070 = vmatpush1.bf16.msra.mxu0 0
    %2071 = vmatprep.mubr.bf16.mxu0 0
    %2072 = vmatmul.mubr.bf16.gmra.mrb[0].mxu0 %v2037
    %v2073 = vpop.f32.mrb[0].mxu0
    %v2074 = vadd.f32 0.0, %v2073
    %v2075 = vpop.f32.mrb[0].mxu0
    %v2076 = vpop.f32.mrb[0].mxu0
    %v2077 = vpop.f32.mrb[0].mxu0
    %2078 = vdwg.mxu0
    %s2079 = sadd.f32 %s1986, 0.02777778
    %v2080 = vmul.f32 %v2074, 0.02777778
    %v2081 = vadd.f32 %v1985, %v2080
    %v2082 = vpack.c.bf16 %v2081, %v2081
    %v2083 = vstv %s2079
    %v2084 = vmul.f32 %v2083, %v46
    %v2086 = vsel %vm56, %v2082, 0
    %2088 = vmatprep.subr.bf16.mxu0 0
    %2089 = vmatpush1.bf16.msra.mxu0 %v80
    %2090 = vmatprep.subr.bf16.mxu0 0
    %2091 = vmatpush1.bf16.msra.mxu0 0
    %2092 = vmatprep.subr.bf16.mxu0 0
    %2093 = vmatpush1.bf16.msra.mxu0 0
    %2094 = vmatprep.subr.bf16.mxu0 0
    %2095 = vmatpush1.bf16.msra.mxu0 0
    %2096 = vmatprep.subr.bf16.mxu0 0
    %2097 = vmatpush1.bf16.msra.mxu0 0
    %2098 = vmatprep.subr.bf16.mxu0 0
    %2099 = vmatpush1.bf16.msra.mxu0 0
    %2100 = vmatprep.subr.bf16.mxu0 0
    %2101 = vmatpush1.bf16.msra.mxu0 0
    %2102 = vmatprep.subr.bf16.mxu0 0
    %2103 = vmatpush1.bf16.msra.mxu0 0
    %2104 = vmatprep.subr.bf16.mxu0 0
    %2105 = vmatpush1.bf16.msra.mxu0 0
    %2106 = vmatprep.subr.bf16.mxu0 0
    %2107 = vmatpush1.bf16.msra.mxu0 0
    %2108 = vmatprep.subr.bf16.mxu0 0
    %2109 = vmatpush1.bf16.msra.mxu0 0
    %2110 = vmatprep.subr.bf16.mxu0 0
    %2111 = vmatpush1.bf16.msra.mxu0 0
    %2112 = vmatprep.subr.bf16.mxu0 0
    %2113 = vmatpush1.bf16.msra.mxu0 0
    %2114 = vmatprep.subr.bf16.mxu0 0
    %2115 = vmatpush1.bf16.msra.mxu0 0
    %2116 = vmatprep.subr.bf16.mxu0 0
    %2117 = vmatpush1.bf16.msra.mxu0 0
    %2118 = vmatprep.subr.bf16.mxu0 0
    %2119 = vmatpush1.bf16.msra.mxu0 0
    %2120 = vmatprep.mubr.bf16.mxu0 0
    %2121 = vmatmul.mubr.bf16.gmra.mrb[0].mxu0 %v2086
    %v2122 = vpop.f32.mrb[0].mxu0
    %v2123 = vadd.f32 %v2084, %v2122
    %v2124 = vpop.f32.mrb[0].mxu0
    %v2125 = vpop.f32.mrb[0].mxu0
    %v2126 = vpop.f32.mrb[0].mxu0
    %2127 = vdwg.mxu0
    %v2128 = vadd.f32 %v2123, %v53
    %v2129 = vtanh.pop %v2128
    %v2130 = vpack.c.bf16 %v2129, %v2129
    %v2132 = vsel %vm125, %v2130, 0
    %2134 = vmatprep.subr.bf16.mxu0 0
    %2135 = vmatpush1.bf16.msra.mxu0 %v35
    %2136 = vmatprep.subr.bf16.mxu0 0
    %2137 = vmatpush1.bf16.msra.mxu0 %v36
    %2138 = vmatprep.subr.bf16.mxu0 0
    %2139 = vmatpush1.bf16.msra.mxu0 %v37
    %2140 = vmatprep.subr.bf16.mxu0 0
    %2141 = vmatpush1.bf16.msra.mxu0 %v38
    %2142 = vmatprep.subr.bf16.mxu0 0
    %2143 = vmatpush1.bf16.msra.mxu0 %v39
    %2144 = vmatprep.subr.bf16.mxu0 0
    %2145 = vmatpush1.bf16.msra.mxu0 %v40
    %2146 = vmatprep.subr.bf16.mxu0 0
    %2147 = vmatpush1.bf16.msra.mxu0 0
    %2148 = vmatprep.subr.bf16.mxu0 0
    %2149 = vmatpush1.bf16.msra.mxu0 0
    %2150 = vmatprep.subr.bf16.mxu0 0
    %2151 = vmatpush1.bf16.msra.mxu0 0
    %2152 = vmatprep.subr.bf16.mxu0 0
    %2153 = vmatpush1.bf16.msra.mxu0 0
    %2154 = vmatprep.subr.bf16.mxu0 0
    %2155 = vmatpush1.bf16.msra.mxu0 0
    %2156 = vmatprep.subr.bf16.mxu0 0
    %2157 = vmatpush1.bf16.msra.mxu0 0
    %2158 = vmatprep.subr.bf16.mxu0 0
    %2159 = vmatpush1.bf16.msra.mxu0 0
    %2160 = vmatprep.subr.bf16.mxu0 0
    %2161 = vmatpush1.bf16.msra.mxu0 0
    %2162 = vmatprep.subr.bf16.mxu0 0
    %2163 = vmatpush1.bf16.msra.mxu0 0
    %2164 = vmatprep.subr.bf16.mxu0 0
    %2165 = vmatpush1.bf16.msra.mxu0 0
    %2166 = vmatprep.mubr.bf16.mxu0 0
    %2167 = vmatmul.mubr.bf16.gmra.mrb[0].mxu0 %v2132
    %v2168 = vpop.f32.mrb[0].mxu0
    %v2169 = vadd.f32 0.0, %v2168
    %v2170 = vpop.f32.mrb[0].mxu0
    %v2171 = vpop.f32.mrb[0].mxu0
    %v2172 = vpop.f32.mrb[0].mxu0
    %2173 = vdwg.mxu0
    %v2174 = vmul.f32 %v2169, 0.02777778
    %v2175 = vadd.f32 %v1985, %v2174
    %v2176 = vpack.c.bf16 %v2175, %v2175
    %v2178 = vsel %vm56, %v2176, 0
    %2180 = vmatprep.subr.bf16.mxu0 0
    %2181 = vmatpush1.bf16.msra.mxu0 %v80
    %2182 = vmatprep.subr.bf16.mxu0 0
    %2183 = vmatpush1.bf16.msra.mxu0 0
    %2184 = vmatprep.subr.bf16.mxu0 0
    %2185 = vmatpush1.bf16.msra.mxu0 0
    %2186 = vmatprep.subr.bf16.mxu0 0
    %2187 = vmatpush1.bf16.msra.mxu0 0
    %2188 = vmatprep.subr.bf16.mxu0 0
    %2189 = vmatpush1.bf16.msra.mxu0 0
    %2190 = vmatprep.subr.bf16.mxu0 0
    %2191 = vmatpush1.bf16.msra.mxu0 0
    %2192 = vmatprep.subr.bf16.mxu0 0
    %2193 = vmatpush1.bf16.msra.mxu0 0
    %2194 = vmatprep.subr.bf16.mxu0 0
    %2195 = vmatpush1.bf16.msra.mxu0 0
    %2196 = vmatprep.subr.bf16.mxu0 0
    %2197 = vmatpush1.bf16.msra.mxu0 0
    %2198 = vmatprep.subr.bf16.mxu0 0
    %2199 = vmatpush1.bf16.msra.mxu0 0
    %2200 = vmatprep.subr.bf16.mxu0 0
    %2201 = vmatpush1.bf16.msra.mxu0 0
    %2202 = vmatprep.subr.bf16.mxu0 0
    %2203 = vmatpush1.bf16.msra.mxu0 0
    %2204 = vmatprep.subr.bf16.mxu0 0
    %2205 = vmatpush1.bf16.msra.mxu0 0
    %2206 = vmatprep.subr.bf16.mxu0 0
    %2207 = vmatpush1.bf16.msra.mxu0 0
    %2208 = vmatprep.subr.bf16.mxu0 0
    %2209 = vmatpush1.bf16.msra.mxu0 0
    %2210 = vmatprep.subr.bf16.mxu0 0
    %2211 = vmatpush1.bf16.msra.mxu0 0
    %2212 = vmatprep.mubr.bf16.mxu0 0
    %2213 = vmatmul.mubr.bf16.gmra.mrb[0].mxu0 %v2178
    %v2214 = vpop.f32.mrb[0].mxu0
    %v2215 = vadd.f32 %v2084, %v2214
    %v2216 = vpop.f32.mrb[0].mxu0
    %v2217 = vpop.f32.mrb[0].mxu0
    %v2218 = vpop.f32.mrb[0].mxu0
    %2219 = vdwg.mxu0
    %v2220 = vadd.f32 %v2215, %v53
    %v2221 = vtanh.pop %v2220
    %v2222 = vpack.c.bf16 %v2221, %v2221
    %v2224 = vsel %vm125, %v2222, 0
    %2226 = vmatprep.subr.bf16.mxu0 0
    %2227 = vmatpush1.bf16.msra.mxu0 %v35
    %2228 = vmatprep.subr.bf16.mxu0 0
    %2229 = vmatpush1.bf16.msra.mxu0 %v36
    %2230 = vmatprep.subr.bf16.mxu0 0
    %2231 = vmatpush1.bf16.msra.mxu0 %v37
    %2232 = vmatprep.subr.bf16.mxu0 0
    %2233 = vmatpush1.bf16.msra.mxu0 %v38
    %2234 = vmatprep.subr.bf16.mxu0 0
    %2235 = vmatpush1.bf16.msra.mxu0 %v39
    %2236 = vmatprep.subr.bf16.mxu0 0
    %2237 = vmatpush1.bf16.msra.mxu0 %v40
    %2238 = vmatprep.subr.bf16.mxu0 0
    %2239 = vmatpush1.bf16.msra.mxu0 0
    %2240 = vmatprep.subr.bf16.mxu0 0
    %2241 = vmatpush1.bf16.msra.mxu0 0
    %2242 = vmatprep.subr.bf16.mxu0 0
    %2243 = vmatpush1.bf16.msra.mxu0 0
    %2244 = vmatprep.subr.bf16.mxu0 0
    %2245 = vmatpush1.bf16.msra.mxu0 0
    %2246 = vmatprep.subr.bf16.mxu0 0
    %2247 = vmatpush1.bf16.msra.mxu0 0
    %2248 = vmatprep.subr.bf16.mxu0 0
    %2249 = vmatpush1.bf16.msra.mxu0 0
    %2250 = vmatprep.subr.bf16.mxu0 0
    %2251 = vmatpush1.bf16.msra.mxu0 0
    %2252 = vmatprep.subr.bf16.mxu0 0
    %2253 = vmatpush1.bf16.msra.mxu0 0
    %2254 = vmatprep.subr.bf16.mxu0 0
    %2255 = vmatpush1.bf16.msra.mxu0 0
    %2256 = vmatprep.subr.bf16.mxu0 0
    %2257 = vmatpush1.bf16.msra.mxu0 0
    %2258 = vmatprep.mubr.bf16.mxu0 0
    %2259 = vmatmul.mubr.bf16.gmra.mrb[0].mxu0 %v2224
    %v2260 = vpop.f32.mrb[0].mxu0
    %v2261 = vadd.f32 0.0, %v2260
    %v2262 = vpop.f32.mrb[0].mxu0
    %v2263 = vpop.f32.mrb[0].mxu0
    %v2264 = vpop.f32.mrb[0].mxu0
    %2265 = vdwg.mxu0
    %s2266 = sadd.f32 %s1986, 0.05555556
    %v2267 = vmul.f32 %v2261, 0.05555556
    %v2268 = vadd.f32 %v1985, %v2267
    %v2269 = vpack.c.bf16 %v2268, %v2268
    %v2270 = vstv %s2266
    %v2271 = vmul.f32 %v2270, %v46
    %v2273 = vsel %vm56, %v2269, 0
    %2275 = vmatprep.subr.bf16.mxu0 0
    %2276 = vmatpush1.bf16.msra.mxu0 %v80
    %2277 = vmatprep.subr.bf16.mxu0 0
    %2278 = vmatpush1.bf16.msra.mxu0 0
    %2279 = vmatprep.subr.bf16.mxu0 0
    %2280 = vmatpush1.bf16.msra.mxu0 0
    %2281 = vmatprep.subr.bf16.mxu0 0
    %2282 = vmatpush1.bf16.msra.mxu0 0
    %2283 = vmatprep.subr.bf16.mxu0 0
    %2284 = vmatpush1.bf16.msra.mxu0 0
    %2285 = vmatprep.subr.bf16.mxu0 0
    %2286 = vmatpush1.bf16.msra.mxu0 0
    %2287 = vmatprep.subr.bf16.mxu0 0
    %2288 = vmatpush1.bf16.msra.mxu0 0
    %2289 = vmatprep.subr.bf16.mxu0 0
    %2290 = vmatpush1.bf16.msra.mxu0 0
    %2291 = vmatprep.subr.bf16.mxu0 0
    %2292 = vmatpush1.bf16.msra.mxu0 0
    %2293 = vmatprep.subr.bf16.mxu0 0
    %2294 = vmatpush1.bf16.msra.mxu0 0
    %2295 = vmatprep.subr.bf16.mxu0 0
    %2296 = vmatpush1.bf16.msra.mxu0 0
    %2297 = vmatprep.subr.bf16.mxu0 0
    %2298 = vmatpush1.bf16.msra.mxu0 0
    %2299 = vmatprep.subr.bf16.mxu0 0
    %2300 = vmatpush1.bf16.msra.mxu0 0
    %2301 = vmatprep.subr.bf16.mxu0 0
    %2302 = vmatpush1.bf16.msra.mxu0 0
    %2303 = vmatprep.subr.bf16.mxu0 0
    %2304 = vmatpush1.bf16.msra.mxu0 0
    %2305 = vmatprep.subr.bf16.mxu0 0
    %2306 = vmatpush1.bf16.msra.mxu0 0
    %2307 = vmatprep.mubr.bf16.mxu0 0
    %2308 = vmatmul.mubr.bf16.gmra.mrb[0].mxu0 %v2273
    %v2309 = vpop.f32.mrb[0].mxu0
    %v2310 = vadd.f32 %v2271, %v2309
    %v2311 = vpop.f32.mrb[0].mxu0
    %v2312 = vpop.f32.mrb[0].mxu0
    %v2313 = vpop.f32.mrb[0].mxu0
    %2314 = vdwg.mxu0
    %v2315 = vadd.f32 %v2310, %v53
    %v2316 = vtanh.pop %v2315
    %v2317 = vpack.c.bf16 %v2316, %v2316
    %v2319 = vsel %vm125, %v2317, 0
    %2321 = vmatprep.subr.bf16.mxu0 0
    %2322 = vmatpush1.bf16.msra.mxu0 %v35
    %2323 = vmatprep.subr.bf16.mxu0 0
    %2324 = vmatpush1.bf16.msra.mxu0 %v36
    %2325 = vmatprep.subr.bf16.mxu0 0
    %2326 = vmatpush1.bf16.msra.mxu0 %v37
    %2327 = vmatprep.subr.bf16.mxu0 0
    %2328 = vmatpush1.bf16.msra.mxu0 %v38
    %2329 = vmatprep.subr.bf16.mxu0 0
    %2330 = vmatpush1.bf16.msra.mxu0 %v39
    %2331 = vmatprep.subr.bf16.mxu0 0
    %2332 = vmatpush1.bf16.msra.mxu0 %v40
    %2333 = vmatprep.subr.bf16.mxu0 0
    %2334 = vmatpush1.bf16.msra.mxu0 0
    %2335 = vmatprep.subr.bf16.mxu0 0
    %2336 = vmatpush1.bf16.msra.mxu0 0
    %2337 = vmatprep.subr.bf16.mxu0 0
    %2338 = vmatpush1.bf16.msra.mxu0 0
    %2339 = vmatprep.subr.bf16.mxu0 0
    %2340 = vmatpush1.bf16.msra.mxu0 0
    %2341 = vmatprep.subr.bf16.mxu0 0
    %2342 = vmatpush1.bf16.msra.mxu0 0
    %2343 = vmatprep.subr.bf16.mxu0 0
    %2344 = vmatpush1.bf16.msra.mxu0 0
    %2345 = vmatprep.subr.bf16.mxu0 0
    %2346 = vmatpush1.bf16.msra.mxu0 0
    %2347 = vmatprep.subr.bf16.mxu0 0
    %2348 = vmatpush1.bf16.msra.mxu0 0
    %2349 = vmatprep.subr.bf16.mxu0 0
    %2350 = vmatpush1.bf16.msra.mxu0 0
    %2351 = vmatprep.subr.bf16.mxu0 0
    %2352 = vmatpush1.bf16.msra.mxu0 0
    %2353 = vmatprep.mubr.bf16.mxu0 0
    %2354 = vmatmul.mubr.bf16.gmra.mrb[0].mxu0 %v2319
    %v2355 = vpop.f32.mrb[0].mxu0
    %v2356 = vadd.f32 0.0, %v2355
    %v2357 = vpop.f32.mrb[0].mxu0
    %v2358 = vpop.f32.mrb[0].mxu0
    %v2359 = vpop.f32.mrb[0].mxu0
    %2360 = vdwg.mxu0
    %v2361 = vmul.f32 %v2169, 2.0
    %v2362 = vadd.f32 %v2074, %v2361
    %v2363 = vmul.f32 %v2261, 2.0
    %v2364 = vadd.f32 %v2362, %v2363
    %v2365 = vadd.f32 %v2364, %v2356
    %v2366 = vmul.f32 %v2365, 0.00925926
    %v2367 = vadd.f32 %v1985, %v2366
    %s2368 = sadd.f32 %s67, 0.33333337
    %v2369 = vpack.c.bf16 %v2367, %v2367
    %v2370 = vstv %s2368
    %v2371 = vmul.f32 %v2370, %v46
    %v2373 = vsel %vm56, %v2369, 0
    %2375 = vmatprep.subr.bf16.mxu0 0
    %2376 = vmatpush1.bf16.msra.mxu0 %v80
    %2377 = vmatprep.subr.bf16.mxu0 0
    %2378 = vmatpush1.bf16.msra.mxu0 0
    %2379 = vmatprep.subr.bf16.mxu0 0
    %2380 = vmatpush1.bf16.msra.mxu0 0
    %2381 = vmatprep.subr.bf16.mxu0 0
    %2382 = vmatpush1.bf16.msra.mxu0 0
    %2383 = vmatprep.subr.bf16.mxu0 0
    %2384 = vmatpush1.bf16.msra.mxu0 0
    %2385 = vmatprep.subr.bf16.mxu0 0
    %2386 = vmatpush1.bf16.msra.mxu0 0
    %2387 = vmatprep.subr.bf16.mxu0 0
    %2388 = vmatpush1.bf16.msra.mxu0 0
    %2389 = vmatprep.subr.bf16.mxu0 0
    %2390 = vmatpush1.bf16.msra.mxu0 0
    %2391 = vmatprep.subr.bf16.mxu0 0
    %2392 = vmatpush1.bf16.msra.mxu0 0
    %2393 = vmatprep.subr.bf16.mxu0 0
    %2394 = vmatpush1.bf16.msra.mxu0 0
    %2395 = vmatprep.subr.bf16.mxu0 0
    %2396 = vmatpush1.bf16.msra.mxu0 0
    %2397 = vmatprep.subr.bf16.mxu0 0
    %2398 = vmatpush1.bf16.msra.mxu0 0
    %2399 = vmatprep.subr.bf16.mxu0 0
    %2400 = vmatpush1.bf16.msra.mxu0 0
    %2401 = vmatprep.subr.bf16.mxu0 0
    %2402 = vmatpush1.bf16.msra.mxu0 0
    %2403 = vmatprep.subr.bf16.mxu0 0
    %2404 = vmatpush1.bf16.msra.mxu0 0
    %2405 = vmatprep.subr.bf16.mxu0 0
    %2406 = vmatpush1.bf16.msra.mxu0 0
    %2407 = vmatprep.mubr.bf16.mxu0 0
    %2408 = vmatmul.mubr.bf16.gmra.mrb[0].mxu0 %v2373
    %v2409 = vpop.f32.mrb[0].mxu0
    %v2410 = vadd.f32 %v2371, %v2409
    %v2411 = vpop.f32.mrb[0].mxu0
    %v2412 = vpop.f32.mrb[0].mxu0
    %v2413 = vpop.f32.mrb[0].mxu0
    %2414 = vdwg.mxu0
    %v2415 = vadd.f32 %v2410, %v53
    %v2416 = vtanh.pop %v2415
    %v2417 = vpack.c.bf16 %v2416, %v2416
    %v2419 = vsel %vm125, %v2417, 0
    %2421 = vmatprep.subr.bf16.mxu0 0
    %2422 = vmatpush1.bf16.msra.mxu0 %v35
    %2423 = vmatprep.subr.bf16.mxu0 0
    %2424 = vmatpush1.bf16.msra.mxu0 %v36
    %2425 = vmatprep.subr.bf16.mxu0 0
    %2426 = vmatpush1.bf16.msra.mxu0 %v37
    %2427 = vmatprep.subr.bf16.mxu0 0
    %2428 = vmatpush1.bf16.msra.mxu0 %v38
    %2429 = vmatprep.subr.bf16.mxu0 0
    %2430 = vmatpush1.bf16.msra.mxu0 %v39
    %2431 = vmatprep.subr.bf16.mxu0 0
    %2432 = vmatpush1.bf16.msra.mxu0 %v40
    %2433 = vmatprep.subr.bf16.mxu0 0
    %2434 = vmatpush1.bf16.msra.mxu0 0
    %2435 = vmatprep.subr.bf16.mxu0 0
    %2436 = vmatpush1.bf16.msra.mxu0 0
    %2437 = vmatprep.subr.bf16.mxu0 0
    %2438 = vmatpush1.bf16.msra.mxu0 0
    %2439 = vmatprep.subr.bf16.mxu0 0
    %2440 = vmatpush1.bf16.msra.mxu0 0
    %2441 = vmatprep.subr.bf16.mxu0 0
    %2442 = vmatpush1.bf16.msra.mxu0 0
    %2443 = vmatprep.subr.bf16.mxu0 0
    %2444 = vmatpush1.bf16.msra.mxu0 0
    %2445 = vmatprep.subr.bf16.mxu0 0
    %2446 = vmatpush1.bf16.msra.mxu0 0
    %2447 = vmatprep.subr.bf16.mxu0 0
    %2448 = vmatpush1.bf16.msra.mxu0 0
    %2449 = vmatprep.subr.bf16.mxu0 0
    %2450 = vmatpush1.bf16.msra.mxu0 0
    %2451 = vmatprep.subr.bf16.mxu0 0
    %2452 = vmatpush1.bf16.msra.mxu0 0
    %2453 = vmatprep.mubr.bf16.mxu0 0
    %2454 = vmatmul.mubr.bf16.gmra.mrb[0].mxu0 %v2419
    %v2455 = vpop.f32.mrb[0].mxu0
    %v2456 = vadd.f32 0.0, %v2455
    %v2457 = vpop.f32.mrb[0].mxu0
    %v2458 = vpop.f32.mrb[0].mxu0
    %v2459 = vpop.f32.mrb[0].mxu0
    %2460 = vdwg.mxu0
    %s2461 = sadd.f32 %s2368, 0.02777778
    %v2462 = vmul.f32 %v2456, 0.02777778
    %v2463 = vadd.f32 %v2367, %v2462
    %v2464 = vpack.c.bf16 %v2463, %v2463
    %v2465 = vstv %s2461
    %v2466 = vmul.f32 %v2465, %v46
    %v2468 = vsel %vm56, %v2464, 0
    %2470 = vmatprep.subr.bf16.mxu0 0
    %2471 = vmatpush1.bf16.msra.mxu0 %v80
    %2472 = vmatprep.subr.bf16.mxu0 0
    %2473 = vmatpush1.bf16.msra.mxu0 0
    %2474 = vmatprep.subr.bf16.mxu0 0
    %2475 = vmatpush1.bf16.msra.mxu0 0
    %2476 = vmatprep.subr.bf16.mxu0 0
    %2477 = vmatpush1.bf16.msra.mxu0 0
    %2478 = vmatprep.subr.bf16.mxu0 0
    %2479 = vmatpush1.bf16.msra.mxu0 0
    %2480 = vmatprep.subr.bf16.mxu0 0
    %2481 = vmatpush1.bf16.msra.mxu0 0
    %2482 = vmatprep.subr.bf16.mxu0 0
    %2483 = vmatpush1.bf16.msra.mxu0 0
    %2484 = vmatprep.subr.bf16.mxu0 0
    %2485 = vmatpush1.bf16.msra.mxu0 0
    %2486 = vmatprep.subr.bf16.mxu0 0
    %2487 = vmatpush1.bf16.msra.mxu0 0
    %2488 = vmatprep.subr.bf16.mxu0 0
    %2489 = vmatpush1.bf16.msra.mxu0 0
    %2490 = vmatprep.subr.bf16.mxu0 0
    %2491 = vmatpush1.bf16.msra.mxu0 0
    %2492 = vmatprep.subr.bf16.mxu0 0
    %2493 = vmatpush1.bf16.msra.mxu0 0
    %2494 = vmatprep.subr.bf16.mxu0 0
    %2495 = vmatpush1.bf16.msra.mxu0 0
    %2496 = vmatprep.subr.bf16.mxu0 0
    %2497 = vmatpush1.bf16.msra.mxu0 0
    %2498 = vmatprep.subr.bf16.mxu0 0
    %2499 = vmatpush1.bf16.msra.mxu0 0
    %2500 = vmatprep.subr.bf16.mxu0 0
    %2501 = vmatpush1.bf16.msra.mxu0 0
    %2502 = vmatprep.mubr.bf16.mxu0 0
    %2503 = vmatmul.mubr.bf16.gmra.mrb[0].mxu0 %v2468
    %v2504 = vpop.f32.mrb[0].mxu0
    %v2505 = vadd.f32 %v2466, %v2504
    %v2506 = vpop.f32.mrb[0].mxu0
    %v2507 = vpop.f32.mrb[0].mxu0
    %v2508 = vpop.f32.mrb[0].mxu0
    %2509 = vdwg.mxu0
    %v2510 = vadd.f32 %v2505, %v53
    %v2511 = vtanh.pop %v2510
    %v2512 = vpack.c.bf16 %v2511, %v2511
    %v2514 = vsel %vm125, %v2512, 0
    %2516 = vmatprep.subr.bf16.mxu0 0
    %2517 = vmatpush1.bf16.msra.mxu0 %v35
    %2518 = vmatprep.subr.bf16.mxu0 0
    %2519 = vmatpush1.bf16.msra.mxu0 %v36
    %2520 = vmatprep.subr.bf16.mxu0 0
    %2521 = vmatpush1.bf16.msra.mxu0 %v37
    %2522 = vmatprep.subr.bf16.mxu0 0
    %2523 = vmatpush1.bf16.msra.mxu0 %v38
    %2524 = vmatprep.subr.bf16.mxu0 0
    %2525 = vmatpush1.bf16.msra.mxu0 %v39
    %2526 = vmatprep.subr.bf16.mxu0 0
    %2527 = vmatpush1.bf16.msra.mxu0 %v40
    %2528 = vmatprep.subr.bf16.mxu0 0
    %2529 = vmatpush1.bf16.msra.mxu0 0
    %2530 = vmatprep.subr.bf16.mxu0 0
    %2531 = vmatpush1.bf16.msra.mxu0 0
    %2532 = vmatprep.subr.bf16.mxu0 0
    %2533 = vmatpush1.bf16.msra.mxu0 0
    %2534 = vmatprep.subr.bf16.mxu0 0
    %2535 = vmatpush1.bf16.msra.mxu0 0
    %2536 = vmatprep.subr.bf16.mxu0 0
    %2537 = vmatpush1.bf16.msra.mxu0 0
    %2538 = vmatprep.subr.bf16.mxu0 0
    %2539 = vmatpush1.bf16.msra.mxu0 0
    %2540 = vmatprep.subr.bf16.mxu0 0
    %2541 = vmatpush1.bf16.msra.mxu0 0
    %2542 = vmatprep.subr.bf16.mxu0 0
    %2543 = vmatpush1.bf16.msra.mxu0 0
    %2544 = vmatprep.subr.bf16.mxu0 0
    %2545 = vmatpush1.bf16.msra.mxu0 0
    %2546 = vmatprep.subr.bf16.mxu0 0
    %2547 = vmatpush1.bf16.msra.mxu0 0
    %2548 = vmatprep.mubr.bf16.mxu0 0
    %2549 = vmatmul.mubr.bf16.gmra.mrb[0].mxu0 %v2514
    %v2550 = vpop.f32.mrb[0].mxu0
    %v2551 = vadd.f32 0.0, %v2550
    %v2552 = vpop.f32.mrb[0].mxu0
    %v2553 = vpop.f32.mrb[0].mxu0
    %v2554 = vpop.f32.mrb[0].mxu0
    %2555 = vdwg.mxu0
    %v2556 = vmul.f32 %v2551, 0.02777778
    %v2557 = vadd.f32 %v2367, %v2556
    %v2558 = vpack.c.bf16 %v2557, %v2557
    %v2560 = vsel %vm56, %v2558, 0
    %2562 = vmatprep.subr.bf16.mxu0 0
    %2563 = vmatpush1.bf16.msra.mxu0 %v80
    %2564 = vmatprep.subr.bf16.mxu0 0
    %2565 = vmatpush1.bf16.msra.mxu0 0
    %2566 = vmatprep.subr.bf16.mxu0 0
    %2567 = vmatpush1.bf16.msra.mxu0 0
    %2568 = vmatprep.subr.bf16.mxu0 0
    %2569 = vmatpush1.bf16.msra.mxu0 0
    %2570 = vmatprep.subr.bf16.mxu0 0
    %2571 = vmatpush1.bf16.msra.mxu0 0
    %2572 = vmatprep.subr.bf16.mxu0 0
    %2573 = vmatpush1.bf16.msra.mxu0 0
    %2574 = vmatprep.subr.bf16.mxu0 0
    %2575 = vmatpush1.bf16.msra.mxu0 0
    %2576 = vmatprep.subr.bf16.mxu0 0
    %2577 = vmatpush1.bf16.msra.mxu0 0
    %2578 = vmatprep.subr.bf16.mxu0 0
    %2579 = vmatpush1.bf16.msra.mxu0 0
    %2580 = vmatprep.subr.bf16.mxu0 0
    %2581 = vmatpush1.bf16.msra.mxu0 0
    %2582 = vmatprep.subr.bf16.mxu0 0
    %2583 = vmatpush1.bf16.msra.mxu0 0
    %2584 = vmatprep.subr.bf16.mxu0 0
    %2585 = vmatpush1.bf16.msra.mxu0 0
    %2586 = vmatprep.subr.bf16.mxu0 0
    %2587 = vmatpush1.bf16.msra.mxu0 0
    %2588 = vmatprep.subr.bf16.mxu0 0
    %2589 = vmatpush1.bf16.msra.mxu0 0
    %2590 = vmatprep.subr.bf16.mxu0 0
    %2591 = vmatpush1.bf16.msra.mxu0 0
    %2592 = vmatprep.subr.bf16.mxu0 0
    %2593 = vmatpush1.bf16.msra.mxu0 0
    %2594 = vmatprep.mubr.bf16.mxu0 0
    %2595 = vmatmul.mubr.bf16.gmra.mrb[0].mxu0 %v2560
    %v2596 = vpop.f32.mrb[0].mxu0
    %v2597 = vadd.f32 %v2466, %v2596
    %v2598 = vpop.f32.mrb[0].mxu0
    %v2599 = vpop.f32.mrb[0].mxu0
    %v2600 = vpop.f32.mrb[0].mxu0
    %2601 = vdwg.mxu0
    %v2602 = vadd.f32 %v2597, %v53
    %v2603 = vtanh.pop %v2602
    %v2604 = vpack.c.bf16 %v2603, %v2603
    %v2606 = vsel %vm125, %v2604, 0
    %2608 = vmatprep.subr.bf16.mxu0 0
    %2609 = vmatpush1.bf16.msra.mxu0 %v35
    %2610 = vmatprep.subr.bf16.mxu0 0
    %2611 = vmatpush1.bf16.msra.mxu0 %v36
    %2612 = vmatprep.subr.bf16.mxu0 0
    %2613 = vmatpush1.bf16.msra.mxu0 %v37
    %2614 = vmatprep.subr.bf16.mxu0 0
    %2615 = vmatpush1.bf16.msra.mxu0 %v38
    %2616 = vmatprep.subr.bf16.mxu0 0
    %2617 = vmatpush1.bf16.msra.mxu0 %v39
    %2618 = vmatprep.subr.bf16.mxu0 0
    %2619 = vmatpush1.bf16.msra.mxu0 %v40
    %2620 = vmatprep.subr.bf16.mxu0 0
    %2621 = vmatpush1.bf16.msra.mxu0 0
    %2622 = vmatprep.subr.bf16.mxu0 0
    %2623 = vmatpush1.bf16.msra.mxu0 0
    %2624 = vmatprep.subr.bf16.mxu0 0
    %2625 = vmatpush1.bf16.msra.mxu0 0
    %2626 = vmatprep.subr.bf16.mxu0 0
    %2627 = vmatpush1.bf16.msra.mxu0 0
    %2628 = vmatprep.subr.bf16.mxu0 0
    %2629 = vmatpush1.bf16.msra.mxu0 0
    %2630 = vmatprep.subr.bf16.mxu0 0
    %2631 = vmatpush1.bf16.msra.mxu0 0
    %2632 = vmatprep.subr.bf16.mxu0 0
    %2633 = vmatpush1.bf16.msra.mxu0 0
    %2634 = vmatprep.subr.bf16.mxu0 0
    %2635 = vmatpush1.bf16.msra.mxu0 0
    %2636 = vmatprep.subr.bf16.mxu0 0
    %2637 = vmatpush1.bf16.msra.mxu0 0
    %2638 = vmatprep.subr.bf16.mxu0 0
    %2639 = vmatpush1.bf16.msra.mxu0 0
    %2640 = vmatprep.mubr.bf16.mxu0 0
    %2641 = vmatmul.mubr.bf16.gmra.mrb[0].mxu0 %v2606
    %v2642 = vpop.f32.mrb[0].mxu0
    %v2643 = vadd.f32 0.0, %v2642
    %v2644 = vpop.f32.mrb[0].mxu0
    %v2645 = vpop.f32.mrb[0].mxu0
    %v2646 = vpop.f32.mrb[0].mxu0
    %2647 = vdwg.mxu0
    %s2648 = sadd.f32 %s2368, 0.05555556
    %v2649 = vmul.f32 %v2643, 0.05555556
    %v2650 = vadd.f32 %v2367, %v2649
    %v2651 = vpack.c.bf16 %v2650, %v2650
    %v2652 = vstv %s2648
    %v2653 = vmul.f32 %v2652, %v46
    %v2655 = vsel %vm56, %v2651, 0
    %2657 = vmatprep.subr.bf16.mxu0 0
    %2658 = vmatpush1.bf16.msra.mxu0 %v80
    %2659 = vmatprep.subr.bf16.mxu0 0
    %2660 = vmatpush1.bf16.msra.mxu0 0
    %2661 = vmatprep.subr.bf16.mxu0 0
    %2662 = vmatpush1.bf16.msra.mxu0 0
    %2663 = vmatprep.subr.bf16.mxu0 0
    %2664 = vmatpush1.bf16.msra.mxu0 0
    %2665 = vmatprep.subr.bf16.mxu0 0
    %2666 = vmatpush1.bf16.msra.mxu0 0
    %2667 = vmatprep.subr.bf16.mxu0 0
    %2668 = vmatpush1.bf16.msra.mxu0 0
    %2669 = vmatprep.subr.bf16.mxu0 0
    %2670 = vmatpush1.bf16.msra.mxu0 0
    %2671 = vmatprep.subr.bf16.mxu0 0
    %2672 = vmatpush1.bf16.msra.mxu0 0
    %2673 = vmatprep.subr.bf16.mxu0 0
    %2674 = vmatpush1.bf16.msra.mxu0 0
    %2675 = vmatprep.subr.bf16.mxu0 0
    %2676 = vmatpush1.bf16.msra.mxu0 0
    %2677 = vmatprep.subr.bf16.mxu0 0
    %2678 = vmatpush1.bf16.msra.mxu0 0
    %2679 = vmatprep.subr.bf16.mxu0 0
    %2680 = vmatpush1.bf16.msra.mxu0 0
    %2681 = vmatprep.subr.bf16.mxu0 0
    %2682 = vmatpush1.bf16.msra.mxu0 0
    %2683 = vmatprep.subr.bf16.mxu0 0
    %2684 = vmatpush1.bf16.msra.mxu0 0
    %2685 = vmatprep.subr.bf16.mxu0 0
    %2686 = vmatpush1.bf16.msra.mxu0 0
    %2687 = vmatprep.subr.bf16.mxu0 0
    %2688 = vmatpush1.bf16.msra.mxu0 0
    %2689 = vmatprep.mubr.bf16.mxu0 0
    %2690 = vmatmul.mubr.bf16.gmra.mrb[0].mxu0 %v2655
    %v2691 = vpop.f32.mrb[0].mxu0
    %v2692 = vadd.f32 %v2653, %v2691
    %v2693 = vpop.f32.mrb[0].mxu0
    %v2694 = vpop.f32.mrb[0].mxu0
    %v2695 = vpop.f32.mrb[0].mxu0
    %2696 = vdwg.mxu0
    %v2697 = vadd.f32 %v2692, %v53
    %v2698 = vtanh.pop %v2697
    %v2699 = vpack.c.bf16 %v2698, %v2698
    %v2701 = vsel %vm125, %v2699, 0
    %2703 = vmatprep.subr.bf16.mxu0 0
    %2704 = vmatpush1.bf16.msra.mxu0 %v35
    %2705 = vmatprep.subr.bf16.mxu0 0
    %2706 = vmatpush1.bf16.msra.mxu0 %v36
    %2707 = vmatprep.subr.bf16.mxu0 0
    %2708 = vmatpush1.bf16.msra.mxu0 %v37
    %2709 = vmatprep.subr.bf16.mxu0 0
    %2710 = vmatpush1.bf16.msra.mxu0 %v38
    %2711 = vmatprep.subr.bf16.mxu0 0
    %2712 = vmatpush1.bf16.msra.mxu0 %v39
    %2713 = vmatprep.subr.bf16.mxu0 0
    %2714 = vmatpush1.bf16.msra.mxu0 %v40
    %2715 = vmatprep.subr.bf16.mxu0 0
    %2716 = vmatpush1.bf16.msra.mxu0 0
    %2717 = vmatprep.subr.bf16.mxu0 0
    %2718 = vmatpush1.bf16.msra.mxu0 0
    %2719 = vmatprep.subr.bf16.mxu0 0
    %2720 = vmatpush1.bf16.msra.mxu0 0
    %2721 = vmatprep.subr.bf16.mxu0 0
    %2722 = vmatpush1.bf16.msra.mxu0 0
    %2723 = vmatprep.subr.bf16.mxu0 0
    %2724 = vmatpush1.bf16.msra.mxu0 0
    %2725 = vmatprep.subr.bf16.mxu0 0
    %2726 = vmatpush1.bf16.msra.mxu0 0
    %2727 = vmatprep.subr.bf16.mxu0 0
    %2728 = vmatpush1.bf16.msra.mxu0 0
    %2729 = vmatprep.subr.bf16.mxu0 0
    %2730 = vmatpush1.bf16.msra.mxu0 0
    %2731 = vmatprep.subr.bf16.mxu0 0
    %2732 = vmatpush1.bf16.msra.mxu0 0
    %2733 = vmatprep.subr.bf16.mxu0 0
    %2734 = vmatpush1.bf16.msra.mxu0 0
    %2735 = vmatprep.mubr.bf16.mxu0 0
    %2736 = vmatmul.mubr.bf16.gmra.mrb[0].mxu0 %v2701
    %v2737 = vpop.f32.mrb[0].mxu0
    %v2738 = vadd.f32 0.0, %v2737
    %v2739 = vpop.f32.mrb[0].mxu0
    %v2740 = vpop.f32.mrb[0].mxu0
    %v2741 = vpop.f32.mrb[0].mxu0
    %2742 = vdwg.mxu0
    %v2743 = vmul.f32 %v2551, 2.0
    %v2744 = vadd.f32 %v2456, %v2743
    %v2745 = vmul.f32 %v2643, 2.0
    %v2746 = vadd.f32 %v2744, %v2745
    %v2747 = vadd.f32 %v2746, %v2738
    %v2748 = vmul.f32 %v2747, 0.00925926
    %v2749 = vadd.f32 %v2367, %v2748
    %s2750 = sadd.f32 %s67, 0.38888893
    %v2751 = vpack.c.bf16 %v2749, %v2749
    %v2752 = vstv %s2750
    %v2753 = vmul.f32 %v2752, %v46
    %v2755 = vsel %vm56, %v2751, 0
    %2757 = vmatprep.subr.bf16.mxu0 0
    %2758 = vmatpush1.bf16.msra.mxu0 %v80
    %2759 = vmatprep.subr.bf16.mxu0 0
    %2760 = vmatpush1.bf16.msra.mxu0 0
    %2761 = vmatprep.subr.bf16.mxu0 0
    %2762 = vmatpush1.bf16.msra.mxu0 0
    %2763 = vmatprep.subr.bf16.mxu0 0
    %2764 = vmatpush1.bf16.msra.mxu0 0
    %2765 = vmatprep.subr.bf16.mxu0 0
    %2766 = vmatpush1.bf16.msra.mxu0 0
    %2767 = vmatprep.subr.bf16.mxu0 0
    %2768 = vmatpush1.bf16.msra.mxu0 0
    %2769 = vmatprep.subr.bf16.mxu0 0
    %2770 = vmatpush1.bf16.msra.mxu0 0
    %2771 = vmatprep.subr.bf16.mxu0 0
    %2772 = vmatpush1.bf16.msra.mxu0 0
    %2773 = vmatprep.subr.bf16.mxu0 0
    %2774 = vmatpush1.bf16.msra.mxu0 0
    %2775 = vmatprep.subr.bf16.mxu0 0
    %2776 = vmatpush1.bf16.msra.mxu0 0
    %2777 = vmatprep.subr.bf16.mxu0 0
    %2778 = vmatpush1.bf16.msra.mxu0 0
    %2779 = vmatprep.subr.bf16.mxu0 0
    %2780 = vmatpush1.bf16.msra.mxu0 0
    %2781 = vmatprep.subr.bf16.mxu0 0
    %2782 = vmatpush1.bf16.msra.mxu0 0
    %2783 = vmatprep.subr.bf16.mxu0 0
    %2784 = vmatpush1.bf16.msra.mxu0 0
    %2785 = vmatprep.subr.bf16.mxu0 0
    %2786 = vmatpush1.bf16.msra.mxu0 0
    %2787 = vmatprep.subr.bf16.mxu0 0
    %2788 = vmatpush1.bf16.msra.mxu0 0
    %2789 = vmatprep.mubr.bf16.mxu0 0
    %2790 = vmatmul.mubr.bf16.gmra.mrb[0].mxu0 %v2755
    %v2791 = vpop.f32.mrb[0].mxu0
    %v2792 = vadd.f32 %v2753, %v2791
    %v2793 = vpop.f32.mrb[0].mxu0
    %v2794 = vpop.f32.mrb[0].mxu0
    %v2795 = vpop.f32.mrb[0].mxu0
    %2796 = vdwg.mxu0
    %v2797 = vadd.f32 %v2792, %v53
    %v2798 = vtanh.pop %v2797
    %v2799 = vpack.c.bf16 %v2798, %v2798
    %v2801 = vsel %vm125, %v2799, 0
    %2803 = vmatprep.subr.bf16.mxu0 0
    %2804 = vmatpush1.bf16.msra.mxu0 %v35
    %2805 = vmatprep.subr.bf16.mxu0 0
    %2806 = vmatpush1.bf16.msra.mxu0 %v36
    %2807 = vmatprep.subr.bf16.mxu0 0
    %2808 = vmatpush1.bf16.msra.mxu0 %v37
    %2809 = vmatprep.subr.bf16.mxu0 0
    %2810 = vmatpush1.bf16.msra.mxu0 %v38
    %2811 = vmatprep.subr.bf16.mxu0 0
    %2812 = vmatpush1.bf16.msra.mxu0 %v39
    %2813 = vmatprep.subr.bf16.mxu0 0
    %2814 = vmatpush1.bf16.msra.mxu0 %v40
    %2815 = vmatprep.subr.bf16.mxu0 0
    %2816 = vmatpush1.bf16.msra.mxu0 0
    %2817 = vmatprep.subr.bf16.mxu0 0
    %2818 = vmatpush1.bf16.msra.mxu0 0
    %2819 = vmatprep.subr.bf16.mxu0 0
    %2820 = vmatpush1.bf16.msra.mxu0 0
    %2821 = vmatprep.subr.bf16.mxu0 0
    %2822 = vmatpush1.bf16.msra.mxu0 0
    %2823 = vmatprep.subr.bf16.mxu0 0
    %2824 = vmatpush1.bf16.msra.mxu0 0
    %2825 = vmatprep.subr.bf16.mxu0 0
    %2826 = vmatpush1.bf16.msra.mxu0 0
    %2827 = vmatprep.subr.bf16.mxu0 0
    %2828 = vmatpush1.bf16.msra.mxu0 0
    %2829 = vmatprep.subr.bf16.mxu0 0
    %2830 = vmatpush1.bf16.msra.mxu0 0
    %2831 = vmatprep.subr.bf16.mxu0 0
    %2832 = vmatpush1.bf16.msra.mxu0 0
    %2833 = vmatprep.subr.bf16.mxu0 0
    %2834 = vmatpush1.bf16.msra.mxu0 0
    %2835 = vmatprep.mubr.bf16.mxu0 0
    %2836 = vmatmul.mubr.bf16.gmra.mrb[0].mxu0 %v2801
    %v2837 = vpop.f32.mrb[0].mxu0
    %v2838 = vadd.f32 0.0, %v2837
    %v2839 = vpop.f32.mrb[0].mxu0
    %v2840 = vpop.f32.mrb[0].mxu0
    %v2841 = vpop.f32.mrb[0].mxu0
    %2842 = vdwg.mxu0
    %s2843 = sadd.f32 %s2750, 0.02777778
    %v2844 = vmul.f32 %v2838, 0.02777778
    %v2845 = vadd.f32 %v2749, %v2844
    %v2846 = vpack.c.bf16 %v2845, %v2845
    %v2847 = vstv %s2843
    %v2848 = vmul.f32 %v2847, %v46
    %v2850 = vsel %vm56, %v2846, 0
    %2852 = vmatprep.subr.bf16.mxu0 0
    %2853 = vmatpush1.bf16.msra.mxu0 %v80
    %2854 = vmatprep.subr.bf16.mxu0 0
    %2855 = vmatpush1.bf16.msra.mxu0 0
    %2856 = vmatprep.subr.bf16.mxu0 0
    %2857 = vmatpush1.bf16.msra.mxu0 0
    %2858 = vmatprep.subr.bf16.mxu0 0
    %2859 = vmatpush1.bf16.msra.mxu0 0
    %2860 = vmatprep.subr.bf16.mxu0 0
    %2861 = vmatpush1.bf16.msra.mxu0 0
    %2862 = vmatprep.subr.bf16.mxu0 0
    %2863 = vmatpush1.bf16.msra.mxu0 0
    %2864 = vmatprep.subr.bf16.mxu0 0
    %2865 = vmatpush1.bf16.msra.mxu0 0
    %2866 = vmatprep.subr.bf16.mxu0 0
    %2867 = vmatpush1.bf16.msra.mxu0 0
    %2868 = vmatprep.subr.bf16.mxu0 0
    %2869 = vmatpush1.bf16.msra.mxu0 0
    %2870 = vmatprep.subr.bf16.mxu0 0
    %2871 = vmatpush1.bf16.msra.mxu0 0
    %2872 = vmatprep.subr.bf16.mxu0 0
    %2873 = vmatpush1.bf16.msra.mxu0 0
    %2874 = vmatprep.subr.bf16.mxu0 0
    %2875 = vmatpush1.bf16.msra.mxu0 0
    %2876 = vmatprep.subr.bf16.mxu0 0
    %2877 = vmatpush1.bf16.msra.mxu0 0
    %2878 = vmatprep.subr.bf16.mxu0 0
    %2879 = vmatpush1.bf16.msra.mxu0 0
    %2880 = vmatprep.subr.bf16.mxu0 0
    %2881 = vmatpush1.bf16.msra.mxu0 0
    %2882 = vmatprep.subr.bf16.mxu0 0
    %2883 = vmatpush1.bf16.msra.mxu0 0
    %2884 = vmatprep.mubr.bf16.mxu0 0
    %2885 = vmatmul.mubr.bf16.gmra.mrb[0].mxu0 %v2850
    %v2886 = vpop.f32.mrb[0].mxu0
    %v2887 = vadd.f32 %v2848, %v2886
    %v2888 = vpop.f32.mrb[0].mxu0
    %v2889 = vpop.f32.mrb[0].mxu0
    %v2890 = vpop.f32.mrb[0].mxu0
    %2891 = vdwg.mxu0
    %v2892 = vadd.f32 %v2887, %v53
    %v2893 = vtanh.pop %v2892
    %v2894 = vpack.c.bf16 %v2893, %v2893
    %v2896 = vsel %vm125, %v2894, 0
    %2898 = vmatprep.subr.bf16.mxu0 0
    %2899 = vmatpush1.bf16.msra.mxu0 %v35
    %2900 = vmatprep.subr.bf16.mxu0 0
    %2901 = vmatpush1.bf16.msra.mxu0 %v36
    %2902 = vmatprep.subr.bf16.mxu0 0
    %2903 = vmatpush1.bf16.msra.mxu0 %v37
    %2904 = vmatprep.subr.bf16.mxu0 0
    %2905 = vmatpush1.bf16.msra.mxu0 %v38
    %2906 = vmatprep.subr.bf16.mxu0 0
    %2907 = vmatpush1.bf16.msra.mxu0 %v39
    %2908 = vmatprep.subr.bf16.mxu0 0
    %2909 = vmatpush1.bf16.msra.mxu0 %v40
    %2910 = vmatprep.subr.bf16.mxu0 0
    %2911 = vmatpush1.bf16.msra.mxu0 0
    %2912 = vmatprep.subr.bf16.mxu0 0
    %2913 = vmatpush1.bf16.msra.mxu0 0
    %2914 = vmatprep.subr.bf16.mxu0 0
    %2915 = vmatpush1.bf16.msra.mxu0 0
    %2916 = vmatprep.subr.bf16.mxu0 0
    %2917 = vmatpush1.bf16.msra.mxu0 0
    %2918 = vmatprep.subr.bf16.mxu0 0
    %2919 = vmatpush1.bf16.msra.mxu0 0
    %2920 = vmatprep.subr.bf16.mxu0 0
    %2921 = vmatpush1.bf16.msra.mxu0 0
    %2922 = vmatprep.subr.bf16.mxu0 0
    %2923 = vmatpush1.bf16.msra.mxu0 0
    %2924 = vmatprep.subr.bf16.mxu0 0
    %2925 = vmatpush1.bf16.msra.mxu0 0
    %2926 = vmatprep.subr.bf16.mxu0 0
    %2927 = vmatpush1.bf16.msra.mxu0 0
    %2928 = vmatprep.subr.bf16.mxu0 0
    %2929 = vmatpush1.bf16.msra.mxu0 0
    %2930 = vmatprep.mubr.bf16.mxu0 0
    %2931 = vmatmul.mubr.bf16.gmra.mrb[0].mxu0 %v2896
    %v2932 = vpop.f32.mrb[0].mxu0
    %v2933 = vadd.f32 0.0, %v2932
    %v2934 = vpop.f32.mrb[0].mxu0
    %v2935 = vpop.f32.mrb[0].mxu0
    %v2936 = vpop.f32.mrb[0].mxu0
    %2937 = vdwg.mxu0
    %v2938 = vmul.f32 %v2933, 0.02777778
    %v2939 = vadd.f32 %v2749, %v2938
    %v2940 = vpack.c.bf16 %v2939, %v2939
    %v2942 = vsel %vm56, %v2940, 0
    %2944 = vmatprep.subr.bf16.mxu0 0
    %2945 = vmatpush1.bf16.msra.mxu0 %v80
    %2946 = vmatprep.subr.bf16.mxu0 0
    %2947 = vmatpush1.bf16.msra.mxu0 0
    %2948 = vmatprep.subr.bf16.mxu0 0
    %2949 = vmatpush1.bf16.msra.mxu0 0
    %2950 = vmatprep.subr.bf16.mxu0 0
    %2951 = vmatpush1.bf16.msra.mxu0 0
    %2952 = vmatprep.subr.bf16.mxu0 0
    %2953 = vmatpush1.bf16.msra.mxu0 0
    %2954 = vmatprep.subr.bf16.mxu0 0
    %2955 = vmatpush1.bf16.msra.mxu0 0
    %2956 = vmatprep.subr.bf16.mxu0 0
    %2957 = vmatpush1.bf16.msra.mxu0 0
    %2958 = vmatprep.subr.bf16.mxu0 0
    %2959 = vmatpush1.bf16.msra.mxu0 0
    %2960 = vmatprep.subr.bf16.mxu0 0
    %2961 = vmatpush1.bf16.msra.mxu0 0
    %2962 = vmatprep.subr.bf16.mxu0 0
    %2963 = vmatpush1.bf16.msra.mxu0 0
    %2964 = vmatprep.subr.bf16.mxu0 0
    %2965 = vmatpush1.bf16.msra.mxu0 0
    %2966 = vmatprep.subr.bf16.mxu0 0
    %2967 = vmatpush1.bf16.msra.mxu0 0
    %2968 = vmatprep.subr.bf16.mxu0 0
    %2969 = vmatpush1.bf16.msra.mxu0 0
    %2970 = vmatprep.subr.bf16.mxu0 0
    %2971 = vmatpush1.bf16.msra.mxu0 0
    %2972 = vmatprep.subr.bf16.mxu0 0
    %2973 = vmatpush1.bf16.msra.mxu0 0
    %2974 = vmatprep.subr.bf16.mxu0 0
    %2975 = vmatpush1.bf16.msra.mxu0 0
    %2976 = vmatprep.mubr.bf16.mxu0 0
    %2977 = vmatmul.mubr.bf16.gmra.mrb[0].mxu0 %v2942
    %v2978 = vpop.f32.mrb[0].mxu0
    %v2979 = vadd.f32 %v2848, %v2978
    %v2980 = vpop.f32.mrb[0].mxu0
    %v2981 = vpop.f32.mrb[0].mxu0
    %v2982 = vpop.f32.mrb[0].mxu0
    %2983 = vdwg.mxu0
    %v2984 = vadd.f32 %v2979, %v53
    %v2985 = vtanh.pop %v2984
    %v2986 = vpack.c.bf16 %v2985, %v2985
    %v2988 = vsel %vm125, %v2986, 0
    %2990 = vmatprep.subr.bf16.mxu0 0
    %2991 = vmatpush1.bf16.msra.mxu0 %v35
    %2992 = vmatprep.subr.bf16.mxu0 0
    %2993 = vmatpush1.bf16.msra.mxu0 %v36
    %2994 = vmatprep.subr.bf16.mxu0 0
    %2995 = vmatpush1.bf16.msra.mxu0 %v37
    %2996 = vmatprep.subr.bf16.mxu0 0
    %2997 = vmatpush1.bf16.msra.mxu0 %v38
    %2998 = vmatprep.subr.bf16.mxu0 0
    %2999 = vmatpush1.bf16.msra.mxu0 %v39
    %3000 = vmatprep.subr.bf16.mxu0 0
    %3001 = vmatpush1.bf16.msra.mxu0 %v40
    %3002 = vmatprep.subr.bf16.mxu0 0
    %3003 = vmatpush1.bf16.msra.mxu0 0
    %3004 = vmatprep.subr.bf16.mxu0 0
    %3005 = vmatpush1.bf16.msra.mxu0 0
    %3006 = vmatprep.subr.bf16.mxu0 0
    %3007 = vmatpush1.bf16.msra.mxu0 0
    %3008 = vmatprep.subr.bf16.mxu0 0
    %3009 = vmatpush1.bf16.msra.mxu0 0
    %3010 = vmatprep.subr.bf16.mxu0 0
    %3011 = vmatpush1.bf16.msra.mxu0 0
    %3012 = vmatprep.subr.bf16.mxu0 0
    %3013 = vmatpush1.bf16.msra.mxu0 0
    %3014 = vmatprep.subr.bf16.mxu0 0
    %3015 = vmatpush1.bf16.msra.mxu0 0
    %3016 = vmatprep.subr.bf16.mxu0 0
    %3017 = vmatpush1.bf16.msra.mxu0 0
    %3018 = vmatprep.subr.bf16.mxu0 0
    %3019 = vmatpush1.bf16.msra.mxu0 0
    %3020 = vmatprep.subr.bf16.mxu0 0
    %3021 = vmatpush1.bf16.msra.mxu0 0
    %3022 = vmatprep.mubr.bf16.mxu0 0
    %3023 = vmatmul.mubr.bf16.gmra.mrb[0].mxu0 %v2988
    %v3024 = vpop.f32.mrb[0].mxu0
    %v3025 = vadd.f32 0.0, %v3024
    %v3026 = vpop.f32.mrb[0].mxu0
    %v3027 = vpop.f32.mrb[0].mxu0
    %v3028 = vpop.f32.mrb[0].mxu0
    %3029 = vdwg.mxu0
    %s3030 = sadd.f32 %s2750, 0.05555556
    %v3031 = vmul.f32 %v3025, 0.05555556
    %v3032 = vadd.f32 %v2749, %v3031
    %v3033 = vpack.c.bf16 %v3032, %v3032
    %v3034 = vstv %s3030
    %v3035 = vmul.f32 %v3034, %v46
    %v3037 = vsel %vm56, %v3033, 0
    %3039 = vmatprep.subr.bf16.mxu0 0
    %3040 = vmatpush1.bf16.msra.mxu0 %v80
    %3041 = vmatprep.subr.bf16.mxu0 0
    %3042 = vmatpush1.bf16.msra.mxu0 0
    %3043 = vmatprep.subr.bf16.mxu0 0
    %3044 = vmatpush1.bf16.msra.mxu0 0
    %3045 = vmatprep.subr.bf16.mxu0 0
    %3046 = vmatpush1.bf16.msra.mxu0 0
    %3047 = vmatprep.subr.bf16.mxu0 0
    %3048 = vmatpush1.bf16.msra.mxu0 0
    %3049 = vmatprep.subr.bf16.mxu0 0
    %3050 = vmatpush1.bf16.msra.mxu0 0
    %3051 = vmatprep.subr.bf16.mxu0 0
    %3052 = vmatpush1.bf16.msra.mxu0 0
    %3053 = vmatprep.subr.bf16.mxu0 0
    %3054 = vmatpush1.bf16.msra.mxu0 0
    %3055 = vmatprep.subr.bf16.mxu0 0
    %3056 = vmatpush1.bf16.msra.mxu0 0
    %3057 = vmatprep.subr.bf16.mxu0 0
    %3058 = vmatpush1.bf16.msra.mxu0 0
    %3059 = vmatprep.subr.bf16.mxu0 0
    %3060 = vmatpush1.bf16.msra.mxu0 0
    %3061 = vmatprep.subr.bf16.mxu0 0
    %3062 = vmatpush1.bf16.msra.mxu0 0
    %3063 = vmatprep.subr.bf16.mxu0 0
    %3064 = vmatpush1.bf16.msra.mxu0 0
    %3065 = vmatprep.subr.bf16.mxu0 0
    %3066 = vmatpush1.bf16.msra.mxu0 0
    %3067 = vmatprep.subr.bf16.mxu0 0
    %3068 = vmatpush1.bf16.msra.mxu0 0
    %3069 = vmatprep.subr.bf16.mxu0 0
    %3070 = vmatpush1.bf16.msra.mxu0 0
    %3071 = vmatprep.mubr.bf16.mxu0 0
    %3072 = vmatmul.mubr.bf16.gmra.mrb[0].mxu0 %v3037
    %v3073 = vpop.f32.mrb[0].mxu0
    %v3074 = vadd.f32 %v3035, %v3073
    %v3075 = vpop.f32.mrb[0].mxu0
    %v3076 = vpop.f32.mrb[0].mxu0
    %v3077 = vpop.f32.mrb[0].mxu0
    %3078 = vdwg.mxu0
    %v3079 = vadd.f32 %v3074, %v53
    %v3080 = vtanh.pop %v3079
    %v3081 = vpack.c.bf16 %v3080, %v3080
    %v3083 = vsel %vm125, %v3081, 0
    %3085 = vmatprep.subr.bf16.mxu0 0
    %3086 = vmatpush1.bf16.msra.mxu0 %v35
    %3087 = vmatprep.subr.bf16.mxu0 0
    %3088 = vmatpush1.bf16.msra.mxu0 %v36
    %3089 = vmatprep.subr.bf16.mxu0 0
    %3090 = vmatpush1.bf16.msra.mxu0 %v37
    %3091 = vmatprep.subr.bf16.mxu0 0
    %3092 = vmatpush1.bf16.msra.mxu0 %v38
    %3093 = vmatprep.subr.bf16.mxu0 0
    %3094 = vmatpush1.bf16.msra.mxu0 %v39
    %3095 = vmatprep.subr.bf16.mxu0 0
    %3096 = vmatpush1.bf16.msra.mxu0 %v40
    %3097 = vmatprep.subr.bf16.mxu0 0
    %3098 = vmatpush1.bf16.msra.mxu0 0
    %3099 = vmatprep.subr.bf16.mxu0 0
    %3100 = vmatpush1.bf16.msra.mxu0 0
    %3101 = vmatprep.subr.bf16.mxu0 0
    %3102 = vmatpush1.bf16.msra.mxu0 0
    %3103 = vmatprep.subr.bf16.mxu0 0
    %3104 = vmatpush1.bf16.msra.mxu0 0
    %3105 = vmatprep.subr.bf16.mxu0 0
    %3106 = vmatpush1.bf16.msra.mxu0 0
    %3107 = vmatprep.subr.bf16.mxu0 0
    %3108 = vmatpush1.bf16.msra.mxu0 0
    %3109 = vmatprep.subr.bf16.mxu0 0
    %3110 = vmatpush1.bf16.msra.mxu0 0
    %3111 = vmatprep.subr.bf16.mxu0 0
    %3112 = vmatpush1.bf16.msra.mxu0 0
    %3113 = vmatprep.subr.bf16.mxu0 0
    %3114 = vmatpush1.bf16.msra.mxu0 0
    %3115 = vmatprep.subr.bf16.mxu0 0
    %3116 = vmatpush1.bf16.msra.mxu0 0
    %3117 = vmatprep.mubr.bf16.mxu0 0
    %3118 = vmatmul.mubr.bf16.gmra.mrb[0].mxu0 %v3083
    %v3119 = vpop.f32.mrb[0].mxu0
    %v3120 = vadd.f32 0.0, %v3119
    %v3121 = vpop.f32.mrb[0].mxu0
    %v3122 = vpop.f32.mrb[0].mxu0
    %v3123 = vpop.f32.mrb[0].mxu0
    %3124 = vdwg.mxu0
    %v3125 = vmul.f32 %v2933, 2.0
    %v3126 = vadd.f32 %v2838, %v3125
    %v3127 = vmul.f32 %v3025, 2.0
    %v3128 = vadd.f32 %v3126, %v3127
    %v3129 = vadd.f32 %v3128, %v3120
    %v3130 = vmul.f32 %v3129, 0.00925926
    %v3131 = vadd.f32 %v2749, %v3130
    %s3132 = sadd.f32 %s67, 0.44444448
    %v3133 = vpack.c.bf16 %v3131, %v3131
    %v3134 = vstv %s3132
    %v3135 = vmul.f32 %v3134, %v46
    %v3137 = vsel %vm56, %v3133, 0
    %3139 = vmatprep.subr.bf16.mxu0 0
    %3140 = vmatpush1.bf16.msra.mxu0 %v80
    %3141 = vmatprep.subr.bf16.mxu0 0
    %3142 = vmatpush1.bf16.msra.mxu0 0
    %3143 = vmatprep.subr.bf16.mxu0 0
    %3144 = vmatpush1.bf16.msra.mxu0 0
    %3145 = vmatprep.subr.bf16.mxu0 0
    %3146 = vmatpush1.bf16.msra.mxu0 0
    %3147 = vmatprep.subr.bf16.mxu0 0
    %3148 = vmatpush1.bf16.msra.mxu0 0
    %3149 = vmatprep.subr.bf16.mxu0 0
    %3150 = vmatpush1.bf16.msra.mxu0 0
    %3151 = vmatprep.subr.bf16.mxu0 0
    %3152 = vmatpush1.bf16.msra.mxu0 0
    %3153 = vmatprep.subr.bf16.mxu0 0
    %3154 = vmatpush1.bf16.msra.mxu0 0
    %3155 = vmatprep.subr.bf16.mxu0 0
    %3156 = vmatpush1.bf16.msra.mxu0 0
    %3157 = vmatprep.subr.bf16.mxu0 0
    %3158 = vmatpush1.bf16.msra.mxu0 0
    %3159 = vmatprep.subr.bf16.mxu0 0
    %3160 = vmatpush1.bf16.msra.mxu0 0
    %3161 = vmatprep.subr.bf16.mxu0 0
    %3162 = vmatpush1.bf16.msra.mxu0 0
    %3163 = vmatprep.subr.bf16.mxu0 0
    %3164 = vmatpush1.bf16.msra.mxu0 0
    %3165 = vmatprep.subr.bf16.mxu0 0
    %3166 = vmatpush1.bf16.msra.mxu0 0
    %3167 = vmatprep.subr.bf16.mxu0 0
    %3168 = vmatpush1.bf16.msra.mxu0 0
    %3169 = vmatprep.subr.bf16.mxu0 0
    %3170 = vmatpush1.bf16.msra.mxu0 0
    %3171 = vmatprep.mubr.bf16.mxu0 0
    %3172 = vmatmul.mubr.bf16.gmra.mrb[0].mxu0 %v3137
    %v3173 = vpop.f32.mrb[0].mxu0
    %v3174 = vadd.f32 %v3135, %v3173
    %v3175 = vpop.f32.mrb[0].mxu0
    %v3176 = vpop.f32.mrb[0].mxu0
    %v3177 = vpop.f32.mrb[0].mxu0
    %3178 = vdwg.mxu0
    %v3179 = vadd.f32 %v3174, %v53
    %v3180 = vtanh.pop %v3179
    %v3181 = vpack.c.bf16 %v3180, %v3180
    %v3183 = vsel %vm125, %v3181, 0
    %3185 = vmatprep.subr.bf16.mxu0 0
    %3186 = vmatpush1.bf16.msra.mxu0 %v35
    %3187 = vmatprep.subr.bf16.mxu0 0
    %3188 = vmatpush1.bf16.msra.mxu0 %v36
    %3189 = vmatprep.subr.bf16.mxu0 0
    %3190 = vmatpush1.bf16.msra.mxu0 %v37
    %3191 = vmatprep.subr.bf16.mxu0 0
    %3192 = vmatpush1.bf16.msra.mxu0 %v38
    %3193 = vmatprep.subr.bf16.mxu0 0
    %3194 = vmatpush1.bf16.msra.mxu0 %v39
    %3195 = vmatprep.subr.bf16.mxu0 0
    %3196 = vmatpush1.bf16.msra.mxu0 %v40
    %3197 = vmatprep.subr.bf16.mxu0 0
    %3198 = vmatpush1.bf16.msra.mxu0 0
    %3199 = vmatprep.subr.bf16.mxu0 0
    %3200 = vmatpush1.bf16.msra.mxu0 0
    %3201 = vmatprep.subr.bf16.mxu0 0
    %3202 = vmatpush1.bf16.msra.mxu0 0
    %3203 = vmatprep.subr.bf16.mxu0 0
    %3204 = vmatpush1.bf16.msra.mxu0 0
    %3205 = vmatprep.subr.bf16.mxu0 0
    %3206 = vmatpush1.bf16.msra.mxu0 0
    %3207 = vmatprep.subr.bf16.mxu0 0
    %3208 = vmatpush1.bf16.msra.mxu0 0
    %3209 = vmatprep.subr.bf16.mxu0 0
    %3210 = vmatpush1.bf16.msra.mxu0 0
    %3211 = vmatprep.subr.bf16.mxu0 0
    %3212 = vmatpush1.bf16.msra.mxu0 0
    %3213 = vmatprep.subr.bf16.mxu0 0
    %3214 = vmatpush1.bf16.msra.mxu0 0
    %3215 = vmatprep.subr.bf16.mxu0 0
    %3216 = vmatpush1.bf16.msra.mxu0 0
    %3217 = vmatprep.mubr.bf16.mxu0 0
    %3218 = vmatmul.mubr.bf16.gmra.mrb[0].mxu0 %v3183
    %v3219 = vpop.f32.mrb[0].mxu0
    %v3220 = vadd.f32 0.0, %v3219
    %v3221 = vpop.f32.mrb[0].mxu0
    %v3222 = vpop.f32.mrb[0].mxu0
    %v3223 = vpop.f32.mrb[0].mxu0
    %3224 = vdwg.mxu0
    %s3225 = sadd.f32 %s3132, 0.02777778
    %v3226 = vmul.f32 %v3220, 0.02777778
    %v3227 = vadd.f32 %v3131, %v3226
    %v3228 = vpack.c.bf16 %v3227, %v3227
    %v3229 = vstv %s3225
    %v3230 = vmul.f32 %v3229, %v46
    %v3232 = vsel %vm56, %v3228, 0
    %3234 = vmatprep.subr.bf16.mxu0 0
    %3235 = vmatpush1.bf16.msra.mxu0 %v80
    %3236 = vmatprep.subr.bf16.mxu0 0
    %3237 = vmatpush1.bf16.msra.mxu0 0
    %3238 = vmatprep.subr.bf16.mxu0 0
    %3239 = vmatpush1.bf16.msra.mxu0 0
    %3240 = vmatprep.subr.bf16.mxu0 0
    %3241 = vmatpush1.bf16.msra.mxu0 0
    %3242 = vmatprep.subr.bf16.mxu0 0
    %3243 = vmatpush1.bf16.msra.mxu0 0
    %3244 = vmatprep.subr.bf16.mxu0 0
    %3245 = vmatpush1.bf16.msra.mxu0 0
    %3246 = vmatprep.subr.bf16.mxu0 0
    %3247 = vmatpush1.bf16.msra.mxu0 0
    %3248 = vmatprep.subr.bf16.mxu0 0
    %3249 = vmatpush1.bf16.msra.mxu0 0
    %3250 = vmatprep.subr.bf16.mxu0 0
    %3251 = vmatpush1.bf16.msra.mxu0 0
    %3252 = vmatprep.subr.bf16.mxu0 0
    %3253 = vmatpush1.bf16.msra.mxu0 0
    %3254 = vmatprep.subr.bf16.mxu0 0
    %3255 = vmatpush1.bf16.msra.mxu0 0
    %3256 = vmatprep.subr.bf16.mxu0 0
    %3257 = vmatpush1.bf16.msra.mxu0 0
    %3258 = vmatprep.subr.bf16.mxu0 0
    %3259 = vmatpush1.bf16.msra.mxu0 0
    %3260 = vmatprep.subr.bf16.mxu0 0
    %3261 = vmatpush1.bf16.msra.mxu0 0
    %3262 = vmatprep.subr.bf16.mxu0 0
    %3263 = vmatpush1.bf16.msra.mxu0 0
    %3264 = vmatprep.subr.bf16.mxu0 0
    %3265 = vmatpush1.bf16.msra.mxu0 0
    %3266 = vmatprep.mubr.bf16.mxu0 0
    %3267 = vmatmul.mubr.bf16.gmra.mrb[0].mxu0 %v3232
    %v3268 = vpop.f32.mrb[0].mxu0
    %v3269 = vadd.f32 %v3230, %v3268
    %v3270 = vpop.f32.mrb[0].mxu0
    %v3271 = vpop.f32.mrb[0].mxu0
    %v3272 = vpop.f32.mrb[0].mxu0
    %3273 = vdwg.mxu0
    %v3274 = vadd.f32 %v3269, %v53
    %v3275 = vtanh.pop %v3274
    %v3276 = vpack.c.bf16 %v3275, %v3275
    %v3278 = vsel %vm125, %v3276, 0
    %3280 = vmatprep.subr.bf16.mxu0 0
    %3281 = vmatpush1.bf16.msra.mxu0 %v35
    %3282 = vmatprep.subr.bf16.mxu0 0
    %3283 = vmatpush1.bf16.msra.mxu0 %v36
    %3284 = vmatprep.subr.bf16.mxu0 0
    %3285 = vmatpush1.bf16.msra.mxu0 %v37
    %3286 = vmatprep.subr.bf16.mxu0 0
    %3287 = vmatpush1.bf16.msra.mxu0 %v38
    %3288 = vmatprep.subr.bf16.mxu0 0
    %3289 = vmatpush1.bf16.msra.mxu0 %v39
    %3290 = vmatprep.subr.bf16.mxu0 0
    %3291 = vmatpush1.bf16.msra.mxu0 %v40
    %3292 = vmatprep.subr.bf16.mxu0 0
    %3293 = vmatpush1.bf16.msra.mxu0 0
    %3294 = vmatprep.subr.bf16.mxu0 0
    %3295 = vmatpush1.bf16.msra.mxu0 0
    %3296 = vmatprep.subr.bf16.mxu0 0
    %3297 = vmatpush1.bf16.msra.mxu0 0
    %3298 = vmatprep.subr.bf16.mxu0 0
    %3299 = vmatpush1.bf16.msra.mxu0 0
    %3300 = vmatprep.subr.bf16.mxu0 0
    %3301 = vmatpush1.bf16.msra.mxu0 0
    %3302 = vmatprep.subr.bf16.mxu0 0
    %3303 = vmatpush1.bf16.msra.mxu0 0
    %3304 = vmatprep.subr.bf16.mxu0 0
    %3305 = vmatpush1.bf16.msra.mxu0 0
    %3306 = vmatprep.subr.bf16.mxu0 0
    %3307 = vmatpush1.bf16.msra.mxu0 0
    %3308 = vmatprep.subr.bf16.mxu0 0
    %3309 = vmatpush1.bf16.msra.mxu0 0
    %3310 = vmatprep.subr.bf16.mxu0 0
    %3311 = vmatpush1.bf16.msra.mxu0 0
    %3312 = vmatprep.mubr.bf16.mxu0 0
    %3313 = vmatmul.mubr.bf16.gmra.mrb[0].mxu0 %v3278
    %v3314 = vpop.f32.mrb[0].mxu0
    %v3315 = vadd.f32 0.0, %v3314
    %v3316 = vpop.f32.mrb[0].mxu0
    %v3317 = vpop.f32.mrb[0].mxu0
    %v3318 = vpop.f32.mrb[0].mxu0
    %3319 = vdwg.mxu0
    %v3320 = vmul.f32 %v3315, 0.02777778
    %v3321 = vadd.f32 %v3131, %v3320
    %v3322 = vpack.c.bf16 %v3321, %v3321
    %v3324 = vsel %vm56, %v3322, 0
    %3326 = vmatprep.subr.bf16.mxu0 0
    %3327 = vmatpush1.bf16.msra.mxu0 %v80
    %3328 = vmatprep.subr.bf16.mxu0 0
    %3329 = vmatpush1.bf16.msra.mxu0 0
    %3330 = vmatprep.subr.bf16.mxu0 0
    %3331 = vmatpush1.bf16.msra.mxu0 0
    %3332 = vmatprep.subr.bf16.mxu0 0
    %3333 = vmatpush1.bf16.msra.mxu0 0
    %3334 = vmatprep.subr.bf16.mxu0 0
    %3335 = vmatpush1.bf16.msra.mxu0 0
    %3336 = vmatprep.subr.bf16.mxu0 0
    %3337 = vmatpush1.bf16.msra.mxu0 0
    %3338 = vmatprep.subr.bf16.mxu0 0
    %3339 = vmatpush1.bf16.msra.mxu0 0
    %3340 = vmatprep.subr.bf16.mxu0 0
    %3341 = vmatpush1.bf16.msra.mxu0 0
    %3342 = vmatprep.subr.bf16.mxu0 0
    %3343 = vmatpush1.bf16.msra.mxu0 0
    %3344 = vmatprep.subr.bf16.mxu0 0
    %3345 = vmatpush1.bf16.msra.mxu0 0
    %3346 = vmatprep.subr.bf16.mxu0 0
    %3347 = vmatpush1.bf16.msra.mxu0 0
    %3348 = vmatprep.subr.bf16.mxu0 0
    %3349 = vmatpush1.bf16.msra.mxu0 0
    %3350 = vmatprep.subr.bf16.mxu0 0
    %3351 = vmatpush1.bf16.msra.mxu0 0
    %3352 = vmatprep.subr.bf16.mxu0 0
    %3353 = vmatpush1.bf16.msra.mxu0 0
    %3354 = vmatprep.subr.bf16.mxu0 0
    %3355 = vmatpush1.bf16.msra.mxu0 0
    %3356 = vmatprep.subr.bf16.mxu0 0
    %3357 = vmatpush1.bf16.msra.mxu0 0
    %3358 = vmatprep.mubr.bf16.mxu0 0
    %3359 = vmatmul.mubr.bf16.gmra.mrb[0].mxu0 %v3324
    %v3360 = vpop.f32.mrb[0].mxu0
    %v3361 = vadd.f32 %v3230, %v3360
    %v3362 = vpop.f32.mrb[0].mxu0
    %v3363 = vpop.f32.mrb[0].mxu0
    %v3364 = vpop.f32.mrb[0].mxu0
    %3365 = vdwg.mxu0
    %v3366 = vadd.f32 %v3361, %v53
    %v3367 = vtanh.pop %v3366
    %v3368 = vpack.c.bf16 %v3367, %v3367
    %v3370 = vsel %vm125, %v3368, 0
    %3372 = vmatprep.subr.bf16.mxu0 0
    %3373 = vmatpush1.bf16.msra.mxu0 %v35
    %3374 = vmatprep.subr.bf16.mxu0 0
    %3375 = vmatpush1.bf16.msra.mxu0 %v36
    %3376 = vmatprep.subr.bf16.mxu0 0
    %3377 = vmatpush1.bf16.msra.mxu0 %v37
    %3378 = vmatprep.subr.bf16.mxu0 0
    %3379 = vmatpush1.bf16.msra.mxu0 %v38
    %3380 = vmatprep.subr.bf16.mxu0 0
    %3381 = vmatpush1.bf16.msra.mxu0 %v39
    %3382 = vmatprep.subr.bf16.mxu0 0
    %3383 = vmatpush1.bf16.msra.mxu0 %v40
    %3384 = vmatprep.subr.bf16.mxu0 0
    %3385 = vmatpush1.bf16.msra.mxu0 0
    %3386 = vmatprep.subr.bf16.mxu0 0
    %3387 = vmatpush1.bf16.msra.mxu0 0
    %3388 = vmatprep.subr.bf16.mxu0 0
    %3389 = vmatpush1.bf16.msra.mxu0 0
    %3390 = vmatprep.subr.bf16.mxu0 0
    %3391 = vmatpush1.bf16.msra.mxu0 0
    %3392 = vmatprep.subr.bf16.mxu0 0
    %3393 = vmatpush1.bf16.msra.mxu0 0
    %3394 = vmatprep.subr.bf16.mxu0 0
    %3395 = vmatpush1.bf16.msra.mxu0 0
    %3396 = vmatprep.subr.bf16.mxu0 0
    %3397 = vmatpush1.bf16.msra.mxu0 0
    %3398 = vmatprep.subr.bf16.mxu0 0
    %3399 = vmatpush1.bf16.msra.mxu0 0
    %3400 = vmatprep.subr.bf16.mxu0 0
    %3401 = vmatpush1.bf16.msra.mxu0 0
    %3402 = vmatprep.subr.bf16.mxu0 0
    %3403 = vmatpush1.bf16.msra.mxu0 0
    %3404 = vmatprep.mubr.bf16.mxu0 0
    %3405 = vmatmul.mubr.bf16.gmra.mrb[0].mxu0 %v3370
    %v3406 = vpop.f32.mrb[0].mxu0
    %v3407 = vadd.f32 0.0, %v3406
    %v3408 = vpop.f32.mrb[0].mxu0
    %v3409 = vpop.f32.mrb[0].mxu0
    %v3410 = vpop.f32.mrb[0].mxu0
    %3411 = vdwg.mxu0
    %s3412 = sadd.f32 %s3132, 0.05555556
    %v3413 = vmul.f32 %v3407, 0.05555556
    %v3414 = vadd.f32 %v3131, %v3413
    %v3415 = vpack.c.bf16 %v3414, %v3414
    %v3416 = vstv %s3412
    %v3417 = vmul.f32 %v3416, %v46
    %v3419 = vsel %vm56, %v3415, 0
    %3421 = vmatprep.subr.bf16.mxu0 0
    %3422 = vmatpush1.bf16.msra.mxu0 %v80
    %3423 = vmatprep.subr.bf16.mxu0 0
    %3424 = vmatpush1.bf16.msra.mxu0 0
    %3425 = vmatprep.subr.bf16.mxu0 0
    %3426 = vmatpush1.bf16.msra.mxu0 0
    %3427 = vmatprep.subr.bf16.mxu0 0
    %3428 = vmatpush1.bf16.msra.mxu0 0
    %3429 = vmatprep.subr.bf16.mxu0 0
    %3430 = vmatpush1.bf16.msra.mxu0 0
    %3431 = vmatprep.subr.bf16.mxu0 0
    %3432 = vmatpush1.bf16.msra.mxu0 0
    %3433 = vmatprep.subr.bf16.mxu0 0
    %3434 = vmatpush1.bf16.msra.mxu0 0
    %3435 = vmatprep.subr.bf16.mxu0 0
    %3436 = vmatpush1.bf16.msra.mxu0 0
    %3437 = vmatprep.subr.bf16.mxu0 0
    %3438 = vmatpush1.bf16.msra.mxu0 0
    %3439 = vmatprep.subr.bf16.mxu0 0
    %3440 = vmatpush1.bf16.msra.mxu0 0
    %3441 = vmatprep.subr.bf16.mxu0 0
    %3442 = vmatpush1.bf16.msra.mxu0 0
    %3443 = vmatprep.subr.bf16.mxu0 0
    %3444 = vmatpush1.bf16.msra.mxu0 0
    %3445 = vmatprep.subr.bf16.mxu0 0
    %3446 = vmatpush1.bf16.msra.mxu0 0
    %3447 = vmatprep.subr.bf16.mxu0 0
    %3448 = vmatpush1.bf16.msra.mxu0 0
    %3449 = vmatprep.subr.bf16.mxu0 0
    %3450 = vmatpush1.bf16.msra.mxu0 0
    %3451 = vmatprep.subr.bf16.mxu0 0
    %3452 = vmatpush1.bf16.msra.mxu0 0
    %3453 = vmatprep.mubr.bf16.mxu0 0
    %3454 = vmatmul.mubr.bf16.gmra.mrb[0].mxu0 %v3419
    %v3455 = vpop.f32.mrb[0].mxu0
    %v3456 = vadd.f32 %v3417, %v3455
    %v3457 = vpop.f32.mrb[0].mxu0
    %v3458 = vpop.f32.mrb[0].mxu0
    %v3459 = vpop.f32.mrb[0].mxu0
    %3460 = vdwg.mxu0
    %v3461 = vadd.f32 %v3456, %v53
    %v3462 = vtanh.pop %v3461
    %v3463 = vpack.c.bf16 %v3462, %v3462
    %v3465 = vsel %vm125, %v3463, 0
    %3467 = vmatprep.subr.bf16.mxu0 0
    %3468 = vmatpush1.bf16.msra.mxu0 %v35
    %3469 = vmatprep.subr.bf16.mxu0 0
    %3470 = vmatpush1.bf16.msra.mxu0 %v36
    %3471 = vmatprep.subr.bf16.mxu0 0
    %3472 = vmatpush1.bf16.msra.mxu0 %v37
    %3473 = vmatprep.subr.bf16.mxu0 0
    %3474 = vmatpush1.bf16.msra.mxu0 %v38
    %3475 = vmatprep.subr.bf16.mxu0 0
    %3476 = vmatpush1.bf16.msra.mxu0 %v39
    %3477 = vmatprep.subr.bf16.mxu0 0
    %3478 = vmatpush1.bf16.msra.mxu0 %v40
    %3479 = vmatprep.subr.bf16.mxu0 0
    %3480 = vmatpush1.bf16.msra.mxu0 0
    %3481 = vmatprep.subr.bf16.mxu0 0
    %3482 = vmatpush1.bf16.msra.mxu0 0
    %3483 = vmatprep.subr.bf16.mxu0 0
    %3484 = vmatpush1.bf16.msra.mxu0 0
    %3485 = vmatprep.subr.bf16.mxu0 0
    %3486 = vmatpush1.bf16.msra.mxu0 0
    %3487 = vmatprep.subr.bf16.mxu0 0
    %3488 = vmatpush1.bf16.msra.mxu0 0
    %3489 = vmatprep.subr.bf16.mxu0 0
    %3490 = vmatpush1.bf16.msra.mxu0 0
    %3491 = vmatprep.subr.bf16.mxu0 0
    %3492 = vmatpush1.bf16.msra.mxu0 0
    %3493 = vmatprep.subr.bf16.mxu0 0
    %3494 = vmatpush1.bf16.msra.mxu0 0
    %3495 = vmatprep.subr.bf16.mxu0 0
    %3496 = vmatpush1.bf16.msra.mxu0 0
    %3497 = vmatprep.subr.bf16.mxu0 0
    %3498 = vmatpush1.bf16.msra.mxu0 0
    %3499 = vmatprep.mubr.bf16.mxu0 0
    %3500 = vmatmul.mubr.bf16.gmra.mrb[0].mxu0 %v3465
    %v3501 = vpop.f32.mrb[0].mxu0
    %v3502 = vadd.f32 0.0, %v3501
    %v3503 = vpop.f32.mrb[0].mxu0
    %v3504 = vpop.f32.mrb[0].mxu0
    %v3505 = vpop.f32.mrb[0].mxu0
    %3506 = vdwg.mxu0
    %v3507 = vmul.f32 %v3315, 2.0
    %v3508 = vadd.f32 %v3220, %v3507
    %v3509 = vmul.f32 %v3407, 2.0
    %v3510 = vadd.f32 %v3508, %v3509
    %v3511 = vadd.f32 %v3510, %v3502
    %v3512 = vmul.f32 %v3511, 0.00925926
    %v3513 = vadd.f32 %v3131, %v3512
    %s3514 = sadd.f32 %s67, 0.50000006
    %v3515 = vpack.c.bf16 %v3513, %v3513
    %v3516 = vstv %s3514
    %v3517 = vmul.f32 %v3516, %v46
    %v3519 = vsel %vm56, %v3515, 0
    %3521 = vmatprep.subr.bf16.mxu0 0
    %3522 = vmatpush1.bf16.msra.mxu0 %v80
    %3523 = vmatprep.subr.bf16.mxu0 0
    %3524 = vmatpush1.bf16.msra.mxu0 0
    %3525 = vmatprep.subr.bf16.mxu0 0
    %3526 = vmatpush1.bf16.msra.mxu0 0
    %3527 = vmatprep.subr.bf16.mxu0 0
    %3528 = vmatpush1.bf16.msra.mxu0 0
    %3529 = vmatprep.subr.bf16.mxu0 0
    %3530 = vmatpush1.bf16.msra.mxu0 0
    %3531 = vmatprep.subr.bf16.mxu0 0
    %3532 = vmatpush1.bf16.msra.mxu0 0
    %3533 = vmatprep.subr.bf16.mxu0 0
    %3534 = vmatpush1.bf16.msra.mxu0 0
    %3535 = vmatprep.subr.bf16.mxu0 0
    %3536 = vmatpush1.bf16.msra.mxu0 0
    %3537 = vmatprep.subr.bf16.mxu0 0
    %3538 = vmatpush1.bf16.msra.mxu0 0
    %3539 = vmatprep.subr.bf16.mxu0 0
    %3540 = vmatpush1.bf16.msra.mxu0 0
    %3541 = vmatprep.subr.bf16.mxu0 0
    %3542 = vmatpush1.bf16.msra.mxu0 0
    %3543 = vmatprep.subr.bf16.mxu0 0
    %3544 = vmatpush1.bf16.msra.mxu0 0
    %3545 = vmatprep.subr.bf16.mxu0 0
    %3546 = vmatpush1.bf16.msra.mxu0 0
    %3547 = vmatprep.subr.bf16.mxu0 0
    %3548 = vmatpush1.bf16.msra.mxu0 0
    %3549 = vmatprep.subr.bf16.mxu0 0
    %3550 = vmatpush1.bf16.msra.mxu0 0
    %3551 = vmatprep.subr.bf16.mxu0 0
    %3552 = vmatpush1.bf16.msra.mxu0 0
    %3553 = vmatprep.mubr.bf16.mxu0 0
    %3554 = vmatmul.mubr.bf16.gmra.mrb[0].mxu0 %v3519
    %v3555 = vpop.f32.mrb[0].mxu0
    %v3556 = vadd.f32 %v3517, %v3555
    %v3557 = vpop.f32.mrb[0].mxu0
    %v3558 = vpop.f32.mrb[0].mxu0
    %v3559 = vpop.f32.mrb[0].mxu0
    %3560 = vdwg.mxu0
    %v3561 = vadd.f32 %v3556, %v53
    %v3562 = vtanh.pop %v3561
    %v3563 = vpack.c.bf16 %v3562, %v3562
    %v3565 = vsel %vm125, %v3563, 0
    %3567 = vmatprep.subr.bf16.mxu0 0
    %3568 = vmatpush1.bf16.msra.mxu0 %v35
    %3569 = vmatprep.subr.bf16.mxu0 0
    %3570 = vmatpush1.bf16.msra.mxu0 %v36
    %3571 = vmatprep.subr.bf16.mxu0 0
    %3572 = vmatpush1.bf16.msra.mxu0 %v37
    %3573 = vmatprep.subr.bf16.mxu0 0
    %3574 = vmatpush1.bf16.msra.mxu0 %v38
    %3575 = vmatprep.subr.bf16.mxu0 0
    %3576 = vmatpush1.bf16.msra.mxu0 %v39
    %3577 = vmatprep.subr.bf16.mxu0 0
    %3578 = vmatpush1.bf16.msra.mxu0 %v40
    %3579 = vmatprep.subr.bf16.mxu0 0
    %3580 = vmatpush1.bf16.msra.mxu0 0
    %3581 = vmatprep.subr.bf16.mxu0 0
    %3582 = vmatpush1.bf16.msra.mxu0 0
    %3583 = vmatprep.subr.bf16.mxu0 0
    %3584 = vmatpush1.bf16.msra.mxu0 0
    %3585 = vmatprep.subr.bf16.mxu0 0
    %3586 = vmatpush1.bf16.msra.mxu0 0
    %3587 = vmatprep.subr.bf16.mxu0 0
    %3588 = vmatpush1.bf16.msra.mxu0 0
    %3589 = vmatprep.subr.bf16.mxu0 0
    %3590 = vmatpush1.bf16.msra.mxu0 0
    %3591 = vmatprep.subr.bf16.mxu0 0
    %3592 = vmatpush1.bf16.msra.mxu0 0
    %3593 = vmatprep.subr.bf16.mxu0 0
    %3594 = vmatpush1.bf16.msra.mxu0 0
    %3595 = vmatprep.subr.bf16.mxu0 0
    %3596 = vmatpush1.bf16.msra.mxu0 0
    %3597 = vmatprep.subr.bf16.mxu0 0
    %3598 = vmatpush1.bf16.msra.mxu0 0
    %3599 = vmatprep.mubr.bf16.mxu0 0
    %3600 = vmatmul.mubr.bf16.gmra.mrb[0].mxu0 %v3565
    %v3601 = vpop.f32.mrb[0].mxu0
    %v3602 = vadd.f32 0.0, %v3601
    %v3603 = vpop.f32.mrb[0].mxu0
    %v3604 = vpop.f32.mrb[0].mxu0
    %v3605 = vpop.f32.mrb[0].mxu0
    %3606 = vdwg.mxu0
    %s3607 = sadd.f32 %s3514, 0.02777778
    %v3608 = vmul.f32 %v3602, 0.02777778
    %v3609 = vadd.f32 %v3513, %v3608
    %v3610 = vpack.c.bf16 %v3609, %v3609
    %v3611 = vstv %s3607
    %v3612 = vmul.f32 %v3611, %v46
    %v3614 = vsel %vm56, %v3610, 0
    %3616 = vmatprep.subr.bf16.mxu0 0
    %3617 = vmatpush1.bf16.msra.mxu0 %v80
    %3618 = vmatprep.subr.bf16.mxu0 0
    %3619 = vmatpush1.bf16.msra.mxu0 0
    %3620 = vmatprep.subr.bf16.mxu0 0
    %3621 = vmatpush1.bf16.msra.mxu0 0
    %3622 = vmatprep.subr.bf16.mxu0 0
    %3623 = vmatpush1.bf16.msra.mxu0 0
    %3624 = vmatprep.subr.bf16.mxu0 0
    %3625 = vmatpush1.bf16.msra.mxu0 0
    %3626 = vmatprep.subr.bf16.mxu0 0
    %3627 = vmatpush1.bf16.msra.mxu0 0
    %3628 = vmatprep.subr.bf16.mxu0 0
    %3629 = vmatpush1.bf16.msra.mxu0 0
    %3630 = vmatprep.subr.bf16.mxu0 0
    %3631 = vmatpush1.bf16.msra.mxu0 0
    %3632 = vmatprep.subr.bf16.mxu0 0
    %3633 = vmatpush1.bf16.msra.mxu0 0
    %3634 = vmatprep.subr.bf16.mxu0 0
    %3635 = vmatpush1.bf16.msra.mxu0 0
    %3636 = vmatprep.subr.bf16.mxu0 0
    %3637 = vmatpush1.bf16.msra.mxu0 0
    %3638 = vmatprep.subr.bf16.mxu0 0
    %3639 = vmatpush1.bf16.msra.mxu0 0
    %3640 = vmatprep.subr.bf16.mxu0 0
    %3641 = vmatpush1.bf16.msra.mxu0 0
    %3642 = vmatprep.subr.bf16.mxu0 0
    %3643 = vmatpush1.bf16.msra.mxu0 0
    %3644 = vmatprep.subr.bf16.mxu0 0
    %3645 = vmatpush1.bf16.msra.mxu0 0
    %3646 = vmatprep.subr.bf16.mxu0 0
    %3647 = vmatpush1.bf16.msra.mxu0 0
    %3648 = vmatprep.mubr.bf16.mxu0 0
    %3649 = vmatmul.mubr.bf16.gmra.mrb[0].mxu0 %v3614
    %v3650 = vpop.f32.mrb[0].mxu0
    %v3651 = vadd.f32 %v3612, %v3650
    %v3652 = vpop.f32.mrb[0].mxu0
    %v3653 = vpop.f32.mrb[0].mxu0
    %v3654 = vpop.f32.mrb[0].mxu0
    %3655 = vdwg.mxu0
    %v3656 = vadd.f32 %v3651, %v53
    %v3657 = vtanh.pop %v3656
    %v3658 = vpack.c.bf16 %v3657, %v3657
    %v3660 = vsel %vm125, %v3658, 0
    %3662 = vmatprep.subr.bf16.mxu0 0
    %3663 = vmatpush1.bf16.msra.mxu0 %v35
    %3664 = vmatprep.subr.bf16.mxu0 0
    %3665 = vmatpush1.bf16.msra.mxu0 %v36
    %3666 = vmatprep.subr.bf16.mxu0 0
    %3667 = vmatpush1.bf16.msra.mxu0 %v37
    %3668 = vmatprep.subr.bf16.mxu0 0
    %3669 = vmatpush1.bf16.msra.mxu0 %v38
    %3670 = vmatprep.subr.bf16.mxu0 0
    %3671 = vmatpush1.bf16.msra.mxu0 %v39
    %3672 = vmatprep.subr.bf16.mxu0 0
    %3673 = vmatpush1.bf16.msra.mxu0 %v40
    %3674 = vmatprep.subr.bf16.mxu0 0
    %3675 = vmatpush1.bf16.msra.mxu0 0
    %3676 = vmatprep.subr.bf16.mxu0 0
    %3677 = vmatpush1.bf16.msra.mxu0 0
    %3678 = vmatprep.subr.bf16.mxu0 0
    %3679 = vmatpush1.bf16.msra.mxu0 0
    %3680 = vmatprep.subr.bf16.mxu0 0
    %3681 = vmatpush1.bf16.msra.mxu0 0
    %3682 = vmatprep.subr.bf16.mxu0 0
    %3683 = vmatpush1.bf16.msra.mxu0 0
    %3684 = vmatprep.subr.bf16.mxu0 0
    %3685 = vmatpush1.bf16.msra.mxu0 0
    %3686 = vmatprep.subr.bf16.mxu0 0
    %3687 = vmatpush1.bf16.msra.mxu0 0
    %3688 = vmatprep.subr.bf16.mxu0 0
    %3689 = vmatpush1.bf16.msra.mxu0 0
    %3690 = vmatprep.subr.bf16.mxu0 0
    %3691 = vmatpush1.bf16.msra.mxu0 0
    %3692 = vmatprep.subr.bf16.mxu0 0
    %3693 = vmatpush1.bf16.msra.mxu0 0
    %3694 = vmatprep.mubr.bf16.mxu0 0
    %3695 = vmatmul.mubr.bf16.gmra.mrb[0].mxu0 %v3660
    %v3696 = vpop.f32.mrb[0].mxu0
    %v3697 = vadd.f32 0.0, %v3696
    %v3698 = vpop.f32.mrb[0].mxu0
    %v3699 = vpop.f32.mrb[0].mxu0
    %v3700 = vpop.f32.mrb[0].mxu0
    %3701 = vdwg.mxu0
    %v3702 = vmul.f32 %v3697, 0.02777778
    %v3703 = vadd.f32 %v3513, %v3702
    %v3704 = vpack.c.bf16 %v3703, %v3703
    %v3706 = vsel %vm56, %v3704, 0
    %3708 = vmatprep.subr.bf16.mxu0 0
    %3709 = vmatpush1.bf16.msra.mxu0 %v80
    %3710 = vmatprep.subr.bf16.mxu0 0
    %3711 = vmatpush1.bf16.msra.mxu0 0
    %3712 = vmatprep.subr.bf16.mxu0 0
    %3713 = vmatpush1.bf16.msra.mxu0 0
    %3714 = vmatprep.subr.bf16.mxu0 0
    %3715 = vmatpush1.bf16.msra.mxu0 0
    %3716 = vmatprep.subr.bf16.mxu0 0
    %3717 = vmatpush1.bf16.msra.mxu0 0
    %3718 = vmatprep.subr.bf16.mxu0 0
    %3719 = vmatpush1.bf16.msra.mxu0 0
    %3720 = vmatprep.subr.bf16.mxu0 0
    %3721 = vmatpush1.bf16.msra.mxu0 0
    %3722 = vmatprep.subr.bf16.mxu0 0
    %3723 = vmatpush1.bf16.msra.mxu0 0
    %3724 = vmatprep.subr.bf16.mxu0 0
    %3725 = vmatpush1.bf16.msra.mxu0 0
    %3726 = vmatprep.subr.bf16.mxu0 0
    %3727 = vmatpush1.bf16.msra.mxu0 0
    %3728 = vmatprep.subr.bf16.mxu0 0
    %3729 = vmatpush1.bf16.msra.mxu0 0
    %3730 = vmatprep.subr.bf16.mxu0 0
    %3731 = vmatpush1.bf16.msra.mxu0 0
    %3732 = vmatprep.subr.bf16.mxu0 0
    %3733 = vmatpush1.bf16.msra.mxu0 0
    %3734 = vmatprep.subr.bf16.mxu0 0
    %3735 = vmatpush1.bf16.msra.mxu0 0
    %3736 = vmatprep.subr.bf16.mxu0 0
    %3737 = vmatpush1.bf16.msra.mxu0 0
    %3738 = vmatprep.subr.bf16.mxu0 0
    %3739 = vmatpush1.bf16.msra.mxu0 0
    %3740 = vmatprep.mubr.bf16.mxu0 0
    %3741 = vmatmul.mubr.bf16.gmra.mrb[0].mxu0 %v3706
    %v3742 = vpop.f32.mrb[0].mxu0
    %v3743 = vadd.f32 %v3612, %v3742
    %v3744 = vpop.f32.mrb[0].mxu0
    %v3745 = vpop.f32.mrb[0].mxu0
    %v3746 = vpop.f32.mrb[0].mxu0
    %3747 = vdwg.mxu0
    %v3748 = vadd.f32 %v3743, %v53
    %v3749 = vtanh.pop %v3748
    %v3750 = vpack.c.bf16 %v3749, %v3749
    %v3752 = vsel %vm125, %v3750, 0
    %3754 = vmatprep.subr.bf16.mxu0 0
    %3755 = vmatpush1.bf16.msra.mxu0 %v35
    %3756 = vmatprep.subr.bf16.mxu0 0
    %3757 = vmatpush1.bf16.msra.mxu0 %v36
    %3758 = vmatprep.subr.bf16.mxu0 0
    %3759 = vmatpush1.bf16.msra.mxu0 %v37
    %3760 = vmatprep.subr.bf16.mxu0 0
    %3761 = vmatpush1.bf16.msra.mxu0 %v38
    %3762 = vmatprep.subr.bf16.mxu0 0
    %3763 = vmatpush1.bf16.msra.mxu0 %v39
    %3764 = vmatprep.subr.bf16.mxu0 0
    %3765 = vmatpush1.bf16.msra.mxu0 %v40
    %3766 = vmatprep.subr.bf16.mxu0 0
    %3767 = vmatpush1.bf16.msra.mxu0 0
    %3768 = vmatprep.subr.bf16.mxu0 0
    %3769 = vmatpush1.bf16.msra.mxu0 0
    %3770 = vmatprep.subr.bf16.mxu0 0
    %3771 = vmatpush1.bf16.msra.mxu0 0
    %3772 = vmatprep.subr.bf16.mxu0 0
    %3773 = vmatpush1.bf16.msra.mxu0 0
    %3774 = vmatprep.subr.bf16.mxu0 0
    %3775 = vmatpush1.bf16.msra.mxu0 0
    %3776 = vmatprep.subr.bf16.mxu0 0
    %3777 = vmatpush1.bf16.msra.mxu0 0
    %3778 = vmatprep.subr.bf16.mxu0 0
    %3779 = vmatpush1.bf16.msra.mxu0 0
    %3780 = vmatprep.subr.bf16.mxu0 0
    %3781 = vmatpush1.bf16.msra.mxu0 0
    %3782 = vmatprep.subr.bf16.mxu0 0
    %3783 = vmatpush1.bf16.msra.mxu0 0
    %3784 = vmatprep.subr.bf16.mxu0 0
    %3785 = vmatpush1.bf16.msra.mxu0 0
    %3786 = vmatprep.mubr.bf16.mxu0 0
    %3787 = vmatmul.mubr.bf16.gmra.mrb[0].mxu0 %v3752
    %v3788 = vpop.f32.mrb[0].mxu0
    %v3789 = vadd.f32 0.0, %v3788
    %v3790 = vpop.f32.mrb[0].mxu0
    %v3791 = vpop.f32.mrb[0].mxu0
    %v3792 = vpop.f32.mrb[0].mxu0
    %3793 = vdwg.mxu0
    %s3794 = sadd.f32 %s3514, 0.05555556
    %v3795 = vmul.f32 %v3789, 0.05555556
    %v3796 = vadd.f32 %v3513, %v3795
    %v3797 = vpack.c.bf16 %v3796, %v3796
    %v3798 = vstv %s3794
    %v3799 = vmul.f32 %v3798, %v46
    %v3801 = vsel %vm56, %v3797, 0
    %3803 = vmatprep.subr.bf16.mxu0 0
    %3804 = vmatpush1.bf16.msra.mxu0 %v80
    %3805 = vmatprep.subr.bf16.mxu0 0
    %3806 = vmatpush1.bf16.msra.mxu0 0
    %3807 = vmatprep.subr.bf16.mxu0 0
    %3808 = vmatpush1.bf16.msra.mxu0 0
    %3809 = vmatprep.subr.bf16.mxu0 0
    %3810 = vmatpush1.bf16.msra.mxu0 0
    %3811 = vmatprep.subr.bf16.mxu0 0
    %3812 = vmatpush1.bf16.msra.mxu0 0
    %3813 = vmatprep.subr.bf16.mxu0 0
    %3814 = vmatpush1.bf16.msra.mxu0 0
    %3815 = vmatprep.subr.bf16.mxu0 0
    %3816 = vmatpush1.bf16.msra.mxu0 0
    %3817 = vmatprep.subr.bf16.mxu0 0
    %3818 = vmatpush1.bf16.msra.mxu0 0
    %3819 = vmatprep.subr.bf16.mxu0 0
    %3820 = vmatpush1.bf16.msra.mxu0 0
    %3821 = vmatprep.subr.bf16.mxu0 0
    %3822 = vmatpush1.bf16.msra.mxu0 0
    %3823 = vmatprep.subr.bf16.mxu0 0
    %3824 = vmatpush1.bf16.msra.mxu0 0
    %3825 = vmatprep.subr.bf16.mxu0 0
    %3826 = vmatpush1.bf16.msra.mxu0 0
    %3827 = vmatprep.subr.bf16.mxu0 0
    %3828 = vmatpush1.bf16.msra.mxu0 0
    %3829 = vmatprep.subr.bf16.mxu0 0
    %3830 = vmatpush1.bf16.msra.mxu0 0
    %3831 = vmatprep.subr.bf16.mxu0 0
    %3832 = vmatpush1.bf16.msra.mxu0 0
    %3833 = vmatprep.subr.bf16.mxu0 0
    %3834 = vmatpush1.bf16.msra.mxu0 0
    %3835 = vmatprep.mubr.bf16.mxu0 0
    %3836 = vmatmul.mubr.bf16.gmra.mrb[0].mxu0 %v3801
    %v3837 = vpop.f32.mrb[0].mxu0
    %v3838 = vadd.f32 %v3799, %v3837
    %v3839 = vpop.f32.mrb[0].mxu0
    %v3840 = vpop.f32.mrb[0].mxu0
    %v3841 = vpop.f32.mrb[0].mxu0
    %3842 = vdwg.mxu0
    %v3843 = vadd.f32 %v3838, %v53
    %v3844 = vtanh.pop %v3843
    %v3845 = vpack.c.bf16 %v3844, %v3844
    %v3847 = vsel %vm125, %v3845, 0
    %3849 = vmatprep.subr.bf16.mxu0 0
    %3850 = vmatpush1.bf16.msra.mxu0 %v35
    %3851 = vmatprep.subr.bf16.mxu0 0
    %3852 = vmatpush1.bf16.msra.mxu0 %v36
    %3853 = vmatprep.subr.bf16.mxu0 0
    %3854 = vmatpush1.bf16.msra.mxu0 %v37
    %3855 = vmatprep.subr.bf16.mxu0 0
    %3856 = vmatpush1.bf16.msra.mxu0 %v38
    %3857 = vmatprep.subr.bf16.mxu0 0
    %3858 = vmatpush1.bf16.msra.mxu0 %v39
    %3859 = vmatprep.subr.bf16.mxu0 0
    %3860 = vmatpush1.bf16.msra.mxu0 %v40
    %3861 = vmatprep.subr.bf16.mxu0 0
    %3862 = vmatpush1.bf16.msra.mxu0 0
    %3863 = vmatprep.subr.bf16.mxu0 0
    %3864 = vmatpush1.bf16.msra.mxu0 0
    %3865 = vmatprep.subr.bf16.mxu0 0
    %3866 = vmatpush1.bf16.msra.mxu0 0
    %3867 = vmatprep.subr.bf16.mxu0 0
    %3868 = vmatpush1.bf16.msra.mxu0 0
    %3869 = vmatprep.subr.bf16.mxu0 0
    %3870 = vmatpush1.bf16.msra.mxu0 0
    %3871 = vmatprep.subr.bf16.mxu0 0
    %3872 = vmatpush1.bf16.msra.mxu0 0
    %3873 = vmatprep.subr.bf16.mxu0 0
    %3874 = vmatpush1.bf16.msra.mxu0 0
    %3875 = vmatprep.subr.bf16.mxu0 0
    %3876 = vmatpush1.bf16.msra.mxu0 0
    %3877 = vmatprep.subr.bf16.mxu0 0
    %3878 = vmatpush1.bf16.msra.mxu0 0
    %3879 = vmatprep.subr.bf16.mxu0 0
    %3880 = vmatpush1.bf16.msra.mxu0 0
    %3881 = vmatprep.mubr.bf16.mxu0 0
    %3882 = vmatmul.mubr.bf16.gmra.mrb[0].mxu0 %v3847
    %v3883 = vpop.f32.mrb[0].mxu0
    %v3884 = vadd.f32 0.0, %v3883
    %v3885 = vpop.f32.mrb[0].mxu0
    %v3886 = vpop.f32.mrb[0].mxu0
    %v3887 = vpop.f32.mrb[0].mxu0
    %3888 = vdwg.mxu0
    %v3889 = vmul.f32 %v3697, 2.0
    %v3890 = vadd.f32 %v3602, %v3889
    %v3891 = vmul.f32 %v3789, 2.0
    %v3892 = vadd.f32 %v3890, %v3891
    %v3893 = vadd.f32 %v3892, %v3884
    %v3894 = vmul.f32 %v3893, 0.00925926
    %v3895 = vadd.f32 %v3513, %v3894
    %s3896 = sadd.f32 %s67, 0.5555556
    %v3897 = vpack.c.bf16 %v3895, %v3895
    %v3898 = vstv %s3896
    %v3899 = vmul.f32 %v3898, %v46
    %v3901 = vsel %vm56, %v3897, 0
    %3903 = vmatprep.subr.bf16.mxu0 0
    %3904 = vmatpush1.bf16.msra.mxu0 %v80
    %3905 = vmatprep.subr.bf16.mxu0 0
    %3906 = vmatpush1.bf16.msra.mxu0 0
    %3907 = vmatprep.subr.bf16.mxu0 0
    %3908 = vmatpush1.bf16.msra.mxu0 0
    %3909 = vmatprep.subr.bf16.mxu0 0
    %3910 = vmatpush1.bf16.msra.mxu0 0
    %3911 = vmatprep.subr.bf16.mxu0 0
    %3912 = vmatpush1.bf16.msra.mxu0 0
    %3913 = vmatprep.subr.bf16.mxu0 0
    %3914 = vmatpush1.bf16.msra.mxu0 0
    %3915 = vmatprep.subr.bf16.mxu0 0
    %3916 = vmatpush1.bf16.msra.mxu0 0
    %3917 = vmatprep.subr.bf16.mxu0 0
    %3918 = vmatpush1.bf16.msra.mxu0 0
    %3919 = vmatprep.subr.bf16.mxu0 0
    %3920 = vmatpush1.bf16.msra.mxu0 0
    %3921 = vmatprep.subr.bf16.mxu0 0
    %3922 = vmatpush1.bf16.msra.mxu0 0
    %3923 = vmatprep.subr.bf16.mxu0 0
    %3924 = vmatpush1.bf16.msra.mxu0 0
    %3925 = vmatprep.subr.bf16.mxu0 0
    %3926 = vmatpush1.bf16.msra.mxu0 0
    %3927 = vmatprep.subr.bf16.mxu0 0
    %3928 = vmatpush1.bf16.msra.mxu0 0
    %3929 = vmatprep.subr.bf16.mxu0 0
    %3930 = vmatpush1.bf16.msra.mxu0 0
    %3931 = vmatprep.subr.bf16.mxu0 0
    %3932 = vmatpush1.bf16.msra.mxu0 0
    %3933 = vmatprep.subr.bf16.mxu0 0
    %3934 = vmatpush1.bf16.msra.mxu0 0
    %3935 = vmatprep.mubr.bf16.mxu0 0
    %3936 = vmatmul.mubr.bf16.gmra.mrb[0].mxu0 %v3901
    %v3937 = vpop.f32.mrb[0].mxu0
    %v3938 = vadd.f32 %v3899, %v3937
    %v3939 = vpop.f32.mrb[0].mxu0
    %v3940 = vpop.f32.mrb[0].mxu0
    %v3941 = vpop.f32.mrb[0].mxu0
    %3942 = vdwg.mxu0
    %v3943 = vadd.f32 %v3938, %v53
    %v3944 = vtanh.pop %v3943
    %v3945 = vpack.c.bf16 %v3944, %v3944
    %v3947 = vsel %vm125, %v3945, 0
    %3949 = vmatprep.subr.bf16.mxu0 0
    %3950 = vmatpush1.bf16.msra.mxu0 %v35
    %3951 = vmatprep.subr.bf16.mxu0 0
    %3952 = vmatpush1.bf16.msra.mxu0 %v36
    %3953 = vmatprep.subr.bf16.mxu0 0
    %3954 = vmatpush1.bf16.msra.mxu0 %v37
    %3955 = vmatprep.subr.bf16.mxu0 0
    %3956 = vmatpush1.bf16.msra.mxu0 %v38
    %3957 = vmatprep.subr.bf16.mxu0 0
    %3958 = vmatpush1.bf16.msra.mxu0 %v39
    %3959 = vmatprep.subr.bf16.mxu0 0
    %3960 = vmatpush1.bf16.msra.mxu0 %v40
    %3961 = vmatprep.subr.bf16.mxu0 0
    %3962 = vmatpush1.bf16.msra.mxu0 0
    %3963 = vmatprep.subr.bf16.mxu0 0
    %3964 = vmatpush1.bf16.msra.mxu0 0
    %3965 = vmatprep.subr.bf16.mxu0 0
    %3966 = vmatpush1.bf16.msra.mxu0 0
    %3967 = vmatprep.subr.bf16.mxu0 0
    %3968 = vmatpush1.bf16.msra.mxu0 0
    %3969 = vmatprep.subr.bf16.mxu0 0
    %3970 = vmatpush1.bf16.msra.mxu0 0
    %3971 = vmatprep.subr.bf16.mxu0 0
    %3972 = vmatpush1.bf16.msra.mxu0 0
    %3973 = vmatprep.subr.bf16.mxu0 0
    %3974 = vmatpush1.bf16.msra.mxu0 0
    %3975 = vmatprep.subr.bf16.mxu0 0
    %3976 = vmatpush1.bf16.msra.mxu0 0
    %3977 = vmatprep.subr.bf16.mxu0 0
    %3978 = vmatpush1.bf16.msra.mxu0 0
    %3979 = vmatprep.subr.bf16.mxu0 0
    %3980 = vmatpush1.bf16.msra.mxu0 0
    %3981 = vmatprep.mubr.bf16.mxu0 0
    %3982 = vmatmul.mubr.bf16.gmra.mrb[0].mxu0 %v3947
    %v3983 = vpop.f32.mrb[0].mxu0
    %v3984 = vadd.f32 0.0, %v3983
    %v3985 = vpop.f32.mrb[0].mxu0
    %v3986 = vpop.f32.mrb[0].mxu0
    %v3987 = vpop.f32.mrb[0].mxu0
    %3988 = vdwg.mxu0
    %s3989 = sadd.f32 %s3896, 0.02777778
    %v3990 = vmul.f32 %v3984, 0.02777778
    %v3991 = vadd.f32 %v3895, %v3990
    %v3992 = vpack.c.bf16 %v3991, %v3991
    %v3993 = vstv %s3989
    %v3994 = vmul.f32 %v3993, %v46
    %v3996 = vsel %vm56, %v3992, 0
    %3998 = vmatprep.subr.bf16.mxu0 0
    %3999 = vmatpush1.bf16.msra.mxu0 %v80
    %4000 = vmatprep.subr.bf16.mxu0 0
    %4001 = vmatpush1.bf16.msra.mxu0 0
    %4002 = vmatprep.subr.bf16.mxu0 0
    %4003 = vmatpush1.bf16.msra.mxu0 0
    %4004 = vmatprep.subr.bf16.mxu0 0
    %4005 = vmatpush1.bf16.msra.mxu0 0
    %4006 = vmatprep.subr.bf16.mxu0 0
    %4007 = vmatpush1.bf16.msra.mxu0 0
    %4008 = vmatprep.subr.bf16.mxu0 0
    %4009 = vmatpush1.bf16.msra.mxu0 0
    %4010 = vmatprep.subr.bf16.mxu0 0
    %4011 = vmatpush1.bf16.msra.mxu0 0
    %4012 = vmatprep.subr.bf16.mxu0 0
    %4013 = vmatpush1.bf16.msra.mxu0 0
    %4014 = vmatprep.subr.bf16.mxu0 0
    %4015 = vmatpush1.bf16.msra.mxu0 0
    %4016 = vmatprep.subr.bf16.mxu0 0
    %4017 = vmatpush1.bf16.msra.mxu0 0
    %4018 = vmatprep.subr.bf16.mxu0 0
    %4019 = vmatpush1.bf16.msra.mxu0 0
    %4020 = vmatprep.subr.bf16.mxu0 0
    %4021 = vmatpush1.bf16.msra.mxu0 0
    %4022 = vmatprep.subr.bf16.mxu0 0
    %4023 = vmatpush1.bf16.msra.mxu0 0
    %4024 = vmatprep.subr.bf16.mxu0 0
    %4025 = vmatpush1.bf16.msra.mxu0 0
    %4026 = vmatprep.subr.bf16.mxu0 0
    %4027 = vmatpush1.bf16.msra.mxu0 0
    %4028 = vmatprep.subr.bf16.mxu0 0
    %4029 = vmatpush1.bf16.msra.mxu0 0
    %4030 = vmatprep.mubr.bf16.mxu0 0
    %4031 = vmatmul.mubr.bf16.gmra.mrb[0].mxu0 %v3996
    %v4032 = vpop.f32.mrb[0].mxu0
    %v4033 = vadd.f32 %v3994, %v4032
    %v4034 = vpop.f32.mrb[0].mxu0
    %v4035 = vpop.f32.mrb[0].mxu0
    %v4036 = vpop.f32.mrb[0].mxu0
    %4037 = vdwg.mxu0
    %v4038 = vadd.f32 %v4033, %v53
    %v4039 = vtanh.pop %v4038
    %v4040 = vpack.c.bf16 %v4039, %v4039
    %v4042 = vsel %vm125, %v4040, 0
    %4044 = vmatprep.subr.bf16.mxu0 0
    %4045 = vmatpush1.bf16.msra.mxu0 %v35
    %4046 = vmatprep.subr.bf16.mxu0 0
    %4047 = vmatpush1.bf16.msra.mxu0 %v36
    %4048 = vmatprep.subr.bf16.mxu0 0
    %4049 = vmatpush1.bf16.msra.mxu0 %v37
    %4050 = vmatprep.subr.bf16.mxu0 0
    %4051 = vmatpush1.bf16.msra.mxu0 %v38
    %4052 = vmatprep.subr.bf16.mxu0 0
    %4053 = vmatpush1.bf16.msra.mxu0 %v39
    %4054 = vmatprep.subr.bf16.mxu0 0
    %4055 = vmatpush1.bf16.msra.mxu0 %v40
    %4056 = vmatprep.subr.bf16.mxu0 0
    %4057 = vmatpush1.bf16.msra.mxu0 0
    %4058 = vmatprep.subr.bf16.mxu0 0
    %4059 = vmatpush1.bf16.msra.mxu0 0
    %4060 = vmatprep.subr.bf16.mxu0 0
    %4061 = vmatpush1.bf16.msra.mxu0 0
    %4062 = vmatprep.subr.bf16.mxu0 0
    %4063 = vmatpush1.bf16.msra.mxu0 0
    %4064 = vmatprep.subr.bf16.mxu0 0
    %4065 = vmatpush1.bf16.msra.mxu0 0
    %4066 = vmatprep.subr.bf16.mxu0 0
    %4067 = vmatpush1.bf16.msra.mxu0 0
    %4068 = vmatprep.subr.bf16.mxu0 0
    %4069 = vmatpush1.bf16.msra.mxu0 0
    %4070 = vmatprep.subr.bf16.mxu0 0
    %4071 = vmatpush1.bf16.msra.mxu0 0
    %4072 = vmatprep.subr.bf16.mxu0 0
    %4073 = vmatpush1.bf16.msra.mxu0 0
    %4074 = vmatprep.subr.bf16.mxu0 0
    %4075 = vmatpush1.bf16.msra.mxu0 0
    %4076 = vmatprep.mubr.bf16.mxu0 0
    %4077 = vmatmul.mubr.bf16.gmra.mrb[0].mxu0 %v4042
    %v4078 = vpop.f32.mrb[0].mxu0
    %v4079 = vadd.f32 0.0, %v4078
    %v4080 = vpop.f32.mrb[0].mxu0
    %v4081 = vpop.f32.mrb[0].mxu0
    %v4082 = vpop.f32.mrb[0].mxu0
    %4083 = vdwg.mxu0
    %v4084 = vmul.f32 %v4079, 0.02777778
    %v4085 = vadd.f32 %v3895, %v4084
    %v4086 = vpack.c.bf16 %v4085, %v4085
    %v4088 = vsel %vm56, %v4086, 0
    %4090 = vmatprep.subr.bf16.mxu0 0
    %4091 = vmatpush1.bf16.msra.mxu0 %v80
    %4092 = vmatprep.subr.bf16.mxu0 0
    %4093 = vmatpush1.bf16.msra.mxu0 0
    %4094 = vmatprep.subr.bf16.mxu0 0
    %4095 = vmatpush1.bf16.msra.mxu0 0
    %4096 = vmatprep.subr.bf16.mxu0 0
    %4097 = vmatpush1.bf16.msra.mxu0 0
    %4098 = vmatprep.subr.bf16.mxu0 0
    %4099 = vmatpush1.bf16.msra.mxu0 0
    %4100 = vmatprep.subr.bf16.mxu0 0
    %4101 = vmatpush1.bf16.msra.mxu0 0
    %4102 = vmatprep.subr.bf16.mxu0 0
    %4103 = vmatpush1.bf16.msra.mxu0 0
    %4104 = vmatprep.subr.bf16.mxu0 0
    %4105 = vmatpush1.bf16.msra.mxu0 0
    %4106 = vmatprep.subr.bf16.mxu0 0
    %4107 = vmatpush1.bf16.msra.mxu0 0
    %4108 = vmatprep.subr.bf16.mxu0 0
    %4109 = vmatpush1.bf16.msra.mxu0 0
    %4110 = vmatprep.subr.bf16.mxu0 0
    %4111 = vmatpush1.bf16.msra.mxu0 0
    %4112 = vmatprep.subr.bf16.mxu0 0
    %4113 = vmatpush1.bf16.msra.mxu0 0
    %4114 = vmatprep.subr.bf16.mxu0 0
    %4115 = vmatpush1.bf16.msra.mxu0 0
    %4116 = vmatprep.subr.bf16.mxu0 0
    %4117 = vmatpush1.bf16.msra.mxu0 0
    %4118 = vmatprep.subr.bf16.mxu0 0
    %4119 = vmatpush1.bf16.msra.mxu0 0
    %4120 = vmatprep.subr.bf16.mxu0 0
    %4121 = vmatpush1.bf16.msra.mxu0 0
    %4122 = vmatprep.mubr.bf16.mxu0 0
    %4123 = vmatmul.mubr.bf16.gmra.mrb[0].mxu0 %v4088
    %v4124 = vpop.f32.mrb[0].mxu0
    %v4125 = vadd.f32 %v3994, %v4124
    %v4126 = vpop.f32.mrb[0].mxu0
    %v4127 = vpop.f32.mrb[0].mxu0
    %v4128 = vpop.f32.mrb[0].mxu0
    %4129 = vdwg.mxu0
    %v4130 = vadd.f32 %v4125, %v53
    %v4131 = vtanh.pop %v4130
    %v4132 = vpack.c.bf16 %v4131, %v4131
    %v4134 = vsel %vm125, %v4132, 0
    %4136 = vmatprep.subr.bf16.mxu0 0
    %4137 = vmatpush1.bf16.msra.mxu0 %v35
    %4138 = vmatprep.subr.bf16.mxu0 0
    %4139 = vmatpush1.bf16.msra.mxu0 %v36
    %4140 = vmatprep.subr.bf16.mxu0 0
    %4141 = vmatpush1.bf16.msra.mxu0 %v37
    %4142 = vmatprep.subr.bf16.mxu0 0
    %4143 = vmatpush1.bf16.msra.mxu0 %v38
    %4144 = vmatprep.subr.bf16.mxu0 0
    %4145 = vmatpush1.bf16.msra.mxu0 %v39
    %4146 = vmatprep.subr.bf16.mxu0 0
    %4147 = vmatpush1.bf16.msra.mxu0 %v40
    %4148 = vmatprep.subr.bf16.mxu0 0
    %4149 = vmatpush1.bf16.msra.mxu0 0
    %4150 = vmatprep.subr.bf16.mxu0 0
    %4151 = vmatpush1.bf16.msra.mxu0 0
    %4152 = vmatprep.subr.bf16.mxu0 0
    %4153 = vmatpush1.bf16.msra.mxu0 0
    %4154 = vmatprep.subr.bf16.mxu0 0
    %4155 = vmatpush1.bf16.msra.mxu0 0
    %4156 = vmatprep.subr.bf16.mxu0 0
    %4157 = vmatpush1.bf16.msra.mxu0 0
    %4158 = vmatprep.subr.bf16.mxu0 0
    %4159 = vmatpush1.bf16.msra.mxu0 0
    %4160 = vmatprep.subr.bf16.mxu0 0
    %4161 = vmatpush1.bf16.msra.mxu0 0
    %4162 = vmatprep.subr.bf16.mxu0 0
    %4163 = vmatpush1.bf16.msra.mxu0 0
    %4164 = vmatprep.subr.bf16.mxu0 0
    %4165 = vmatpush1.bf16.msra.mxu0 0
    %4166 = vmatprep.subr.bf16.mxu0 0
    %4167 = vmatpush1.bf16.msra.mxu0 0
    %4168 = vmatprep.mubr.bf16.mxu0 0
    %4169 = vmatmul.mubr.bf16.gmra.mrb[0].mxu0 %v4134
    %v4170 = vpop.f32.mrb[0].mxu0
    %v4171 = vadd.f32 0.0, %v4170
    %v4172 = vpop.f32.mrb[0].mxu0
    %v4173 = vpop.f32.mrb[0].mxu0
    %v4174 = vpop.f32.mrb[0].mxu0
    %4175 = vdwg.mxu0
    %s4176 = sadd.f32 %s3896, 0.05555556
    %v4177 = vmul.f32 %v4171, 0.05555556
    %v4178 = vadd.f32 %v3895, %v4177
    %v4179 = vpack.c.bf16 %v4178, %v4178
    %v4180 = vstv %s4176
    %v4181 = vmul.f32 %v4180, %v46
    %v4183 = vsel %vm56, %v4179, 0
    %4185 = vmatprep.subr.bf16.mxu0 0
    %4186 = vmatpush1.bf16.msra.mxu0 %v80
    %4187 = vmatprep.subr.bf16.mxu0 0
    %4188 = vmatpush1.bf16.msra.mxu0 0
    %4189 = vmatprep.subr.bf16.mxu0 0
    %4190 = vmatpush1.bf16.msra.mxu0 0
    %4191 = vmatprep.subr.bf16.mxu0 0
    %4192 = vmatpush1.bf16.msra.mxu0 0
    %4193 = vmatprep.subr.bf16.mxu0 0
    %4194 = vmatpush1.bf16.msra.mxu0 0
    %4195 = vmatprep.subr.bf16.mxu0 0
    %4196 = vmatpush1.bf16.msra.mxu0 0
    %4197 = vmatprep.subr.bf16.mxu0 0
    %4198 = vmatpush1.bf16.msra.mxu0 0
    %4199 = vmatprep.subr.bf16.mxu0 0
    %4200 = vmatpush1.bf16.msra.mxu0 0
    %4201 = vmatprep.subr.bf16.mxu0 0
    %4202 = vmatpush1.bf16.msra.mxu0 0
    %4203 = vmatprep.subr.bf16.mxu0 0
    %4204 = vmatpush1.bf16.msra.mxu0 0
    %4205 = vmatprep.subr.bf16.mxu0 0
    %4206 = vmatpush1.bf16.msra.mxu0 0
    %4207 = vmatprep.subr.bf16.mxu0 0
    %4208 = vmatpush1.bf16.msra.mxu0 0
    %4209 = vmatprep.subr.bf16.mxu0 0
    %4210 = vmatpush1.bf16.msra.mxu0 0
    %4211 = vmatprep.subr.bf16.mxu0 0
    %4212 = vmatpush1.bf16.msra.mxu0 0
    %4213 = vmatprep.subr.bf16.mxu0 0
    %4214 = vmatpush1.bf16.msra.mxu0 0
    %4215 = vmatprep.subr.bf16.mxu0 0
    %4216 = vmatpush1.bf16.msra.mxu0 0
    %4217 = vmatprep.mubr.bf16.mxu0 0
    %4218 = vmatmul.mubr.bf16.gmra.mrb[0].mxu0 %v4183
    %v4219 = vpop.f32.mrb[0].mxu0
    %v4220 = vadd.f32 %v4181, %v4219
    %v4221 = vpop.f32.mrb[0].mxu0
    %v4222 = vpop.f32.mrb[0].mxu0
    %v4223 = vpop.f32.mrb[0].mxu0
    %4224 = vdwg.mxu0
    %v4225 = vadd.f32 %v4220, %v53
    %v4226 = vtanh.pop %v4225
    %v4227 = vpack.c.bf16 %v4226, %v4226
    %v4229 = vsel %vm125, %v4227, 0
    %4231 = vmatprep.subr.bf16.mxu0 0
    %4232 = vmatpush1.bf16.msra.mxu0 %v35
    %4233 = vmatprep.subr.bf16.mxu0 0
    %4234 = vmatpush1.bf16.msra.mxu0 %v36
    %4235 = vmatprep.subr.bf16.mxu0 0
    %4236 = vmatpush1.bf16.msra.mxu0 %v37
    %4237 = vmatprep.subr.bf16.mxu0 0
    %4238 = vmatpush1.bf16.msra.mxu0 %v38
    %4239 = vmatprep.subr.bf16.mxu0 0
    %4240 = vmatpush1.bf16.msra.mxu0 %v39
    %4241 = vmatprep.subr.bf16.mxu0 0
    %4242 = vmatpush1.bf16.msra.mxu0 %v40
    %4243 = vmatprep.subr.bf16.mxu0 0
    %4244 = vmatpush1.bf16.msra.mxu0 0
    %4245 = vmatprep.subr.bf16.mxu0 0
    %4246 = vmatpush1.bf16.msra.mxu0 0
    %4247 = vmatprep.subr.bf16.mxu0 0
    %4248 = vmatpush1.bf16.msra.mxu0 0
    %4249 = vmatprep.subr.bf16.mxu0 0
    %4250 = vmatpush1.bf16.msra.mxu0 0
    %4251 = vmatprep.subr.bf16.mxu0 0
    %4252 = vmatpush1.bf16.msra.mxu0 0
    %4253 = vmatprep.subr.bf16.mxu0 0
    %4254 = vmatpush1.bf16.msra.mxu0 0
    %4255 = vmatprep.subr.bf16.mxu0 0
    %4256 = vmatpush1.bf16.msra.mxu0 0
    %4257 = vmatprep.subr.bf16.mxu0 0
    %4258 = vmatpush1.bf16.msra.mxu0 0
    %4259 = vmatprep.subr.bf16.mxu0 0
    %4260 = vmatpush1.bf16.msra.mxu0 0
    %4261 = vmatprep.subr.bf16.mxu0 0
    %4262 = vmatpush1.bf16.msra.mxu0 0
    %4263 = vmatprep.mubr.bf16.mxu0 0
    %4264 = vmatmul.mubr.bf16.gmra.mrb[0].mxu0 %v4229
    %v4265 = vpop.f32.mrb[0].mxu0
    %v4266 = vadd.f32 0.0, %v4265
    %v4267 = vpop.f32.mrb[0].mxu0
    %v4268 = vpop.f32.mrb[0].mxu0
    %v4269 = vpop.f32.mrb[0].mxu0
    %4270 = vdwg.mxu0
    %v4271 = vmul.f32 %v4079, 2.0
    %v4272 = vadd.f32 %v3984, %v4271
    %v4273 = vmul.f32 %v4171, 2.0
    %v4274 = vadd.f32 %v4272, %v4273
    %v4275 = vadd.f32 %v4274, %v4266
    %v4276 = vmul.f32 %v4275, 0.00925926
    %v4277 = vadd.f32 %v3895, %v4276
    %s4278 = sadd.f32 %s67, 0.61111116
    %v4279 = vpack.c.bf16 %v4277, %v4277
    %v4280 = vstv %s4278
    %v4281 = vmul.f32 %v4280, %v46
    %v4283 = vsel %vm56, %v4279, 0
    %4285 = vmatprep.subr.bf16.mxu0 0
    %4286 = vmatpush1.bf16.msra.mxu0 %v80
    %4287 = vmatprep.subr.bf16.mxu0 0
    %4288 = vmatpush1.bf16.msra.mxu0 0
    %4289 = vmatprep.subr.bf16.mxu0 0
    %4290 = vmatpush1.bf16.msra.mxu0 0
    %4291 = vmatprep.subr.bf16.mxu0 0
    %4292 = vmatpush1.bf16.msra.mxu0 0
    %4293 = vmatprep.subr.bf16.mxu0 0
    %4294 = vmatpush1.bf16.msra.mxu0 0
    %4295 = vmatprep.subr.bf16.mxu0 0
    %4296 = vmatpush1.bf16.msra.mxu0 0
    %4297 = vmatprep.subr.bf16.mxu0 0
    %4298 = vmatpush1.bf16.msra.mxu0 0
    %4299 = vmatprep.subr.bf16.mxu0 0
    %4300 = vmatpush1.bf16.msra.mxu0 0
    %4301 = vmatprep.subr.bf16.mxu0 0
    %4302 = vmatpush1.bf16.msra.mxu0 0
    %4303 = vmatprep.subr.bf16.mxu0 0
    %4304 = vmatpush1.bf16.msra.mxu0 0
    %4305 = vmatprep.subr.bf16.mxu0 0
    %4306 = vmatpush1.bf16.msra.mxu0 0
    %4307 = vmatprep.subr.bf16.mxu0 0
    %4308 = vmatpush1.bf16.msra.mxu0 0
    %4309 = vmatprep.subr.bf16.mxu0 0
    %4310 = vmatpush1.bf16.msra.mxu0 0
    %4311 = vmatprep.subr.bf16.mxu0 0
    %4312 = vmatpush1.bf16.msra.mxu0 0
    %4313 = vmatprep.subr.bf16.mxu0 0
    %4314 = vmatpush1.bf16.msra.mxu0 0
    %4315 = vmatprep.subr.bf16.mxu0 0
    %4316 = vmatpush1.bf16.msra.mxu0 0
    %4317 = vmatprep.mubr.bf16.mxu0 0
    %4318 = vmatmul.mubr.bf16.gmra.mrb[0].mxu0 %v4283
    %v4319 = vpop.f32.mrb[0].mxu0
    %v4320 = vadd.f32 %v4281, %v4319
    %v4321 = vpop.f32.mrb[0].mxu0
    %v4322 = vpop.f32.mrb[0].mxu0
    %v4323 = vpop.f32.mrb[0].mxu0
    %4324 = vdwg.mxu0
    %v4325 = vadd.f32 %v4320, %v53
    %v4326 = vtanh.pop %v4325
    %v4327 = vpack.c.bf16 %v4326, %v4326
    %v4329 = vsel %vm125, %v4327, 0
    %4331 = vmatprep.subr.bf16.mxu0 0
    %4332 = vmatpush1.bf16.msra.mxu0 %v35
    %4333 = vmatprep.subr.bf16.mxu0 0
    %4334 = vmatpush1.bf16.msra.mxu0 %v36
    %4335 = vmatprep.subr.bf16.mxu0 0
    %4336 = vmatpush1.bf16.msra.mxu0 %v37
    %4337 = vmatprep.subr.bf16.mxu0 0
    %4338 = vmatpush1.bf16.msra.mxu0 %v38
    %4339 = vmatprep.subr.bf16.mxu0 0
    %4340 = vmatpush1.bf16.msra.mxu0 %v39
    %4341 = vmatprep.subr.bf16.mxu0 0
    %4342 = vmatpush1.bf16.msra.mxu0 %v40
    %4343 = vmatprep.subr.bf16.mxu0 0
    %4344 = vmatpush1.bf16.msra.mxu0 0
    %4345 = vmatprep.subr.bf16.mxu0 0
    %4346 = vmatpush1.bf16.msra.mxu0 0
    %4347 = vmatprep.subr.bf16.mxu0 0
    %4348 = vmatpush1.bf16.msra.mxu0 0
    %4349 = vmatprep.subr.bf16.mxu0 0
    %4350 = vmatpush1.bf16.msra.mxu0 0
    %4351 = vmatprep.subr.bf16.mxu0 0
    %4352 = vmatpush1.bf16.msra.mxu0 0
    %4353 = vmatprep.subr.bf16.mxu0 0
    %4354 = vmatpush1.bf16.msra.mxu0 0
    %4355 = vmatprep.subr.bf16.mxu0 0
    %4356 = vmatpush1.bf16.msra.mxu0 0
    %4357 = vmatprep.subr.bf16.mxu0 0
    %4358 = vmatpush1.bf16.msra.mxu0 0
    %4359 = vmatprep.subr.bf16.mxu0 0
    %4360 = vmatpush1.bf16.msra.mxu0 0
    %4361 = vmatprep.subr.bf16.mxu0 0
    %4362 = vmatpush1.bf16.msra.mxu0 0
    %4363 = vmatprep.mubr.bf16.mxu0 0
    %4364 = vmatmul.mubr.bf16.gmra.mrb[0].mxu0 %v4329
    %v4365 = vpop.f32.mrb[0].mxu0
    %v4366 = vadd.f32 0.0, %v4365
    %v4367 = vpop.f32.mrb[0].mxu0
    %v4368 = vpop.f32.mrb[0].mxu0
    %v4369 = vpop.f32.mrb[0].mxu0
    %4370 = vdwg.mxu0
    %s4371 = sadd.f32 %s4278, 0.02777778
    %v4372 = vmul.f32 %v4366, 0.02777778
    %v4373 = vadd.f32 %v4277, %v4372
    %v4374 = vpack.c.bf16 %v4373, %v4373
    %v4375 = vstv %s4371
    %v4376 = vmul.f32 %v4375, %v46
    %v4378 = vsel %vm56, %v4374, 0
    %4380 = vmatprep.subr.bf16.mxu0 0
    %4381 = vmatpush1.bf16.msra.mxu0 %v80
    %4382 = vmatprep.subr.bf16.mxu0 0
    %4383 = vmatpush1.bf16.msra.mxu0 0
    %4384 = vmatprep.subr.bf16.mxu0 0
    %4385 = vmatpush1.bf16.msra.mxu0 0
    %4386 = vmatprep.subr.bf16.mxu0 0
    %4387 = vmatpush1.bf16.msra.mxu0 0
    %4388 = vmatprep.subr.bf16.mxu0 0
    %4389 = vmatpush1.bf16.msra.mxu0 0
    %4390 = vmatprep.subr.bf16.mxu0 0
    %4391 = vmatpush1.bf16.msra.mxu0 0
    %4392 = vmatprep.subr.bf16.mxu0 0
    %4393 = vmatpush1.bf16.msra.mxu0 0
    %4394 = vmatprep.subr.bf16.mxu0 0
    %4395 = vmatpush1.bf16.msra.mxu0 0
    %4396 = vmatprep.subr.bf16.mxu0 0
    %4397 = vmatpush1.bf16.msra.mxu0 0
    %4398 = vmatprep.subr.bf16.mxu0 0
    %4399 = vmatpush1.bf16.msra.mxu0 0
    %4400 = vmatprep.subr.bf16.mxu0 0
    %4401 = vmatpush1.bf16.msra.mxu0 0
    %4402 = vmatprep.subr.bf16.mxu0 0
    %4403 = vmatpush1.bf16.msra.mxu0 0
    %4404 = vmatprep.subr.bf16.mxu0 0
    %4405 = vmatpush1.bf16.msra.mxu0 0
    %4406 = vmatprep.subr.bf16.mxu0 0
    %4407 = vmatpush1.bf16.msra.mxu0 0
    %4408 = vmatprep.subr.bf16.mxu0 0
    %4409 = vmatpush1.bf16.msra.mxu0 0
    %4410 = vmatprep.subr.bf16.mxu0 0
    %4411 = vmatpush1.bf16.msra.mxu0 0
    %4412 = vmatprep.mubr.bf16.mxu0 0
    %4413 = vmatmul.mubr.bf16.gmra.mrb[0].mxu0 %v4378
    %v4414 = vpop.f32.mrb[0].mxu0
    %v4415 = vadd.f32 %v4376, %v4414
    %v4416 = vpop.f32.mrb[0].mxu0
    %v4417 = vpop.f32.mrb[0].mxu0
    %v4418 = vpop.f32.mrb[0].mxu0
    %4419 = vdwg.mxu0
    %v4420 = vadd.f32 %v4415, %v53
    %v4421 = vtanh.pop %v4420
    %v4422 = vpack.c.bf16 %v4421, %v4421
    %v4424 = vsel %vm125, %v4422, 0
    %4426 = vmatprep.subr.bf16.mxu0 0
    %4427 = vmatpush1.bf16.msra.mxu0 %v35
    %4428 = vmatprep.subr.bf16.mxu0 0
    %4429 = vmatpush1.bf16.msra.mxu0 %v36
    %4430 = vmatprep.subr.bf16.mxu0 0
    %4431 = vmatpush1.bf16.msra.mxu0 %v37
    %4432 = vmatprep.subr.bf16.mxu0 0
    %4433 = vmatpush1.bf16.msra.mxu0 %v38
    %4434 = vmatprep.subr.bf16.mxu0 0
    %4435 = vmatpush1.bf16.msra.mxu0 %v39
    %4436 = vmatprep.subr.bf16.mxu0 0
    %4437 = vmatpush1.bf16.msra.mxu0 %v40
    %4438 = vmatprep.subr.bf16.mxu0 0
    %4439 = vmatpush1.bf16.msra.mxu0 0
    %4440 = vmatprep.subr.bf16.mxu0 0
    %4441 = vmatpush1.bf16.msra.mxu0 0
    %4442 = vmatprep.subr.bf16.mxu0 0
    %4443 = vmatpush1.bf16.msra.mxu0 0
    %4444 = vmatprep.subr.bf16.mxu0 0
    %4445 = vmatpush1.bf16.msra.mxu0 0
    %4446 = vmatprep.subr.bf16.mxu0 0
    %4447 = vmatpush1.bf16.msra.mxu0 0
    %4448 = vmatprep.subr.bf16.mxu0 0
    %4449 = vmatpush1.bf16.msra.mxu0 0
    %4450 = vmatprep.subr.bf16.mxu0 0
    %4451 = vmatpush1.bf16.msra.mxu0 0
    %4452 = vmatprep.subr.bf16.mxu0 0
    %4453 = vmatpush1.bf16.msra.mxu0 0
    %4454 = vmatprep.subr.bf16.mxu0 0
    %4455 = vmatpush1.bf16.msra.mxu0 0
    %4456 = vmatprep.subr.bf16.mxu0 0
    %4457 = vmatpush1.bf16.msra.mxu0 0
    %4458 = vmatprep.mubr.bf16.mxu0 0
    %4459 = vmatmul.mubr.bf16.gmra.mrb[0].mxu0 %v4424
    %v4460 = vpop.f32.mrb[0].mxu0
    %v4461 = vadd.f32 0.0, %v4460
    %v4462 = vpop.f32.mrb[0].mxu0
    %v4463 = vpop.f32.mrb[0].mxu0
    %v4464 = vpop.f32.mrb[0].mxu0
    %4465 = vdwg.mxu0
    %v4466 = vmul.f32 %v4461, 0.02777778
    %v4467 = vadd.f32 %v4277, %v4466
    %v4468 = vpack.c.bf16 %v4467, %v4467
    %v4470 = vsel %vm56, %v4468, 0
    %4472 = vmatprep.subr.bf16.mxu0 0
    %4473 = vmatpush1.bf16.msra.mxu0 %v80
    %4474 = vmatprep.subr.bf16.mxu0 0
    %4475 = vmatpush1.bf16.msra.mxu0 0
    %4476 = vmatprep.subr.bf16.mxu0 0
    %4477 = vmatpush1.bf16.msra.mxu0 0
    %4478 = vmatprep.subr.bf16.mxu0 0
    %4479 = vmatpush1.bf16.msra.mxu0 0
    %4480 = vmatprep.subr.bf16.mxu0 0
    %4481 = vmatpush1.bf16.msra.mxu0 0
    %4482 = vmatprep.subr.bf16.mxu0 0
    %4483 = vmatpush1.bf16.msra.mxu0 0
    %4484 = vmatprep.subr.bf16.mxu0 0
    %4485 = vmatpush1.bf16.msra.mxu0 0
    %4486 = vmatprep.subr.bf16.mxu0 0
    %4487 = vmatpush1.bf16.msra.mxu0 0
    %4488 = vmatprep.subr.bf16.mxu0 0
    %4489 = vmatpush1.bf16.msra.mxu0 0
    %4490 = vmatprep.subr.bf16.mxu0 0
    %4491 = vmatpush1.bf16.msra.mxu0 0
    %4492 = vmatprep.subr.bf16.mxu0 0
    %4493 = vmatpush1.bf16.msra.mxu0 0
    %4494 = vmatprep.subr.bf16.mxu0 0
    %4495 = vmatpush1.bf16.msra.mxu0 0
    %4496 = vmatprep.subr.bf16.mxu0 0
    %4497 = vmatpush1.bf16.msra.mxu0 0
    %4498 = vmatprep.subr.bf16.mxu0 0
    %4499 = vmatpush1.bf16.msra.mxu0 0
    %4500 = vmatprep.subr.bf16.mxu0 0
    %4501 = vmatpush1.bf16.msra.mxu0 0
    %4502 = vmatprep.subr.bf16.mxu0 0
    %4503 = vmatpush1.bf16.msra.mxu0 0
    %4504 = vmatprep.mubr.bf16.mxu0 0
    %4505 = vmatmul.mubr.bf16.gmra.mrb[0].mxu0 %v4470
    %v4506 = vpop.f32.mrb[0].mxu0
    %v4507 = vadd.f32 %v4376, %v4506
    %v4508 = vpop.f32.mrb[0].mxu0
    %v4509 = vpop.f32.mrb[0].mxu0
    %v4510 = vpop.f32.mrb[0].mxu0
    %4511 = vdwg.mxu0
    %v4512 = vadd.f32 %v4507, %v53
    %v4513 = vtanh.pop %v4512
    %v4514 = vpack.c.bf16 %v4513, %v4513
    %v4516 = vsel %vm125, %v4514, 0
    %4518 = vmatprep.subr.bf16.mxu0 0
    %4519 = vmatpush1.bf16.msra.mxu0 %v35
    %4520 = vmatprep.subr.bf16.mxu0 0
    %4521 = vmatpush1.bf16.msra.mxu0 %v36
    %4522 = vmatprep.subr.bf16.mxu0 0
    %4523 = vmatpush1.bf16.msra.mxu0 %v37
    %4524 = vmatprep.subr.bf16.mxu0 0
    %4525 = vmatpush1.bf16.msra.mxu0 %v38
    %4526 = vmatprep.subr.bf16.mxu0 0
    %4527 = vmatpush1.bf16.msra.mxu0 %v39
    %4528 = vmatprep.subr.bf16.mxu0 0
    %4529 = vmatpush1.bf16.msra.mxu0 %v40
    %4530 = vmatprep.subr.bf16.mxu0 0
    %4531 = vmatpush1.bf16.msra.mxu0 0
    %4532 = vmatprep.subr.bf16.mxu0 0
    %4533 = vmatpush1.bf16.msra.mxu0 0
    %4534 = vmatprep.subr.bf16.mxu0 0
    %4535 = vmatpush1.bf16.msra.mxu0 0
    %4536 = vmatprep.subr.bf16.mxu0 0
    %4537 = vmatpush1.bf16.msra.mxu0 0
    %4538 = vmatprep.subr.bf16.mxu0 0
    %4539 = vmatpush1.bf16.msra.mxu0 0
    %4540 = vmatprep.subr.bf16.mxu0 0
    %4541 = vmatpush1.bf16.msra.mxu0 0
    %4542 = vmatprep.subr.bf16.mxu0 0
    %4543 = vmatpush1.bf16.msra.mxu0 0
    %4544 = vmatprep.subr.bf16.mxu0 0
    %4545 = vmatpush1.bf16.msra.mxu0 0
    %4546 = vmatprep.subr.bf16.mxu0 0
    %4547 = vmatpush1.bf16.msra.mxu0 0
    %4548 = vmatprep.subr.bf16.mxu0 0
    %4549 = vmatpush1.bf16.msra.mxu0 0
    %4550 = vmatprep.mubr.bf16.mxu0 0
    %4551 = vmatmul.mubr.bf16.gmra.mrb[0].mxu0 %v4516
    %v4552 = vpop.f32.mrb[0].mxu0
    %v4553 = vadd.f32 0.0, %v4552
    %v4554 = vpop.f32.mrb[0].mxu0
    %v4555 = vpop.f32.mrb[0].mxu0
    %v4556 = vpop.f32.mrb[0].mxu0
    %4557 = vdwg.mxu0
    %s4558 = sadd.f32 %s4278, 0.05555556
    %v4559 = vmul.f32 %v4553, 0.05555556
    %v4560 = vadd.f32 %v4277, %v4559
    %v4561 = vpack.c.bf16 %v4560, %v4560
    %v4562 = vstv %s4558
    %v4563 = vmul.f32 %v4562, %v46
    %v4565 = vsel %vm56, %v4561, 0
    %4567 = vmatprep.subr.bf16.mxu0 0
    %4568 = vmatpush1.bf16.msra.mxu0 %v80
    %4569 = vmatprep.subr.bf16.mxu0 0
    %4570 = vmatpush1.bf16.msra.mxu0 0
    %4571 = vmatprep.subr.bf16.mxu0 0
    %4572 = vmatpush1.bf16.msra.mxu0 0
    %4573 = vmatprep.subr.bf16.mxu0 0
    %4574 = vmatpush1.bf16.msra.mxu0 0
    %4575 = vmatprep.subr.bf16.mxu0 0
    %4576 = vmatpush1.bf16.msra.mxu0 0
    %4577 = vmatprep.subr.bf16.mxu0 0
    %4578 = vmatpush1.bf16.msra.mxu0 0
    %4579 = vmatprep.subr.bf16.mxu0 0
    %4580 = vmatpush1.bf16.msra.mxu0 0
    %4581 = vmatprep.subr.bf16.mxu0 0
    %4582 = vmatpush1.bf16.msra.mxu0 0
    %4583 = vmatprep.subr.bf16.mxu0 0
    %4584 = vmatpush1.bf16.msra.mxu0 0
    %4585 = vmatprep.subr.bf16.mxu0 0
    %4586 = vmatpush1.bf16.msra.mxu0 0
    %4587 = vmatprep.subr.bf16.mxu0 0
    %4588 = vmatpush1.bf16.msra.mxu0 0
    %4589 = vmatprep.subr.bf16.mxu0 0
    %4590 = vmatpush1.bf16.msra.mxu0 0
    %4591 = vmatprep.subr.bf16.mxu0 0
    %4592 = vmatpush1.bf16.msra.mxu0 0
    %4593 = vmatprep.subr.bf16.mxu0 0
    %4594 = vmatpush1.bf16.msra.mxu0 0
    %4595 = vmatprep.subr.bf16.mxu0 0
    %4596 = vmatpush1.bf16.msra.mxu0 0
    %4597 = vmatprep.subr.bf16.mxu0 0
    %4598 = vmatpush1.bf16.msra.mxu0 0
    %4599 = vmatprep.mubr.bf16.mxu0 0
    %4600 = vmatmul.mubr.bf16.gmra.mrb[0].mxu0 %v4565
    %v4601 = vpop.f32.mrb[0].mxu0
    %v4602 = vadd.f32 %v4563, %v4601
    %v4603 = vpop.f32.mrb[0].mxu0
    %v4604 = vpop.f32.mrb[0].mxu0
    %v4605 = vpop.f32.mrb[0].mxu0
    %4606 = vdwg.mxu0
    %v4607 = vadd.f32 %v4602, %v53
    %v4608 = vtanh.pop %v4607
    %v4609 = vpack.c.bf16 %v4608, %v4608
    %v4611 = vsel %vm125, %v4609, 0
    %4613 = vmatprep.subr.bf16.mxu0 0
    %4614 = vmatpush1.bf16.msra.mxu0 %v35
    %4615 = vmatprep.subr.bf16.mxu0 0
    %4616 = vmatpush1.bf16.msra.mxu0 %v36
    %4617 = vmatprep.subr.bf16.mxu0 0
    %4618 = vmatpush1.bf16.msra.mxu0 %v37
    %4619 = vmatprep.subr.bf16.mxu0 0
    %4620 = vmatpush1.bf16.msra.mxu0 %v38
    %4621 = vmatprep.subr.bf16.mxu0 0
    %4622 = vmatpush1.bf16.msra.mxu0 %v39
    %4623 = vmatprep.subr.bf16.mxu0 0
    %4624 = vmatpush1.bf16.msra.mxu0 %v40
    %4625 = vmatprep.subr.bf16.mxu0 0
    %4626 = vmatpush1.bf16.msra.mxu0 0
    %4627 = vmatprep.subr.bf16.mxu0 0
    %4628 = vmatpush1.bf16.msra.mxu0 0
    %4629 = vmatprep.subr.bf16.mxu0 0
    %4630 = vmatpush1.bf16.msra.mxu0 0
    %4631 = vmatprep.subr.bf16.mxu0 0
    %4632 = vmatpush1.bf16.msra.mxu0 0
    %4633 = vmatprep.subr.bf16.mxu0 0
    %4634 = vmatpush1.bf16.msra.mxu0 0
    %4635 = vmatprep.subr.bf16.mxu0 0
    %4636 = vmatpush1.bf16.msra.mxu0 0
    %4637 = vmatprep.subr.bf16.mxu0 0
    %4638 = vmatpush1.bf16.msra.mxu0 0
    %4639 = vmatprep.subr.bf16.mxu0 0
    %4640 = vmatpush1.bf16.msra.mxu0 0
    %4641 = vmatprep.subr.bf16.mxu0 0
    %4642 = vmatpush1.bf16.msra.mxu0 0
    %4643 = vmatprep.subr.bf16.mxu0 0
    %4644 = vmatpush1.bf16.msra.mxu0 0
    %4645 = vmatprep.mubr.bf16.mxu0 0
    %4646 = vmatmul.mubr.bf16.gmra.mrb[0].mxu0 %v4611
    %v4647 = vpop.f32.mrb[0].mxu0
    %v4648 = vadd.f32 0.0, %v4647
    %v4649 = vpop.f32.mrb[0].mxu0
    %v4650 = vpop.f32.mrb[0].mxu0
    %v4651 = vpop.f32.mrb[0].mxu0
    %4652 = vdwg.mxu0
    %v4653 = vmul.f32 %v4461, 2.0
    %v4654 = vadd.f32 %v4366, %v4653
    %v4655 = vmul.f32 %v4553, 2.0
    %v4656 = vadd.f32 %v4654, %v4655
    %v4657 = vadd.f32 %v4656, %v4648
    %v4658 = vmul.f32 %v4657, 0.00925926
    %v4659 = vadd.f32 %v4277, %v4658
    %s4660 = sadd.f32 %s67, 0.66666675
    %v4661 = vpack.c.bf16 %v4659, %v4659
    %v4662 = vstv %s4660
    %v4663 = vmul.f32 %v4662, %v46
    %v4665 = vsel %vm56, %v4661, 0
    %4667 = vmatprep.subr.bf16.mxu0 0
    %4668 = vmatpush1.bf16.msra.mxu0 %v80
    %4669 = vmatprep.subr.bf16.mxu0 0
    %4670 = vmatpush1.bf16.msra.mxu0 0
    %4671 = vmatprep.subr.bf16.mxu0 0
    %4672 = vmatpush1.bf16.msra.mxu0 0
    %4673 = vmatprep.subr.bf16.mxu0 0
    %4674 = vmatpush1.bf16.msra.mxu0 0
    %4675 = vmatprep.subr.bf16.mxu0 0
    %4676 = vmatpush1.bf16.msra.mxu0 0
    %4677 = vmatprep.subr.bf16.mxu0 0
    %4678 = vmatpush1.bf16.msra.mxu0 0
    %4679 = vmatprep.subr.bf16.mxu0 0
    %4680 = vmatpush1.bf16.msra.mxu0 0
    %4681 = vmatprep.subr.bf16.mxu0 0
    %4682 = vmatpush1.bf16.msra.mxu0 0
    %4683 = vmatprep.subr.bf16.mxu0 0
    %4684 = vmatpush1.bf16.msra.mxu0 0
    %4685 = vmatprep.subr.bf16.mxu0 0
    %4686 = vmatpush1.bf16.msra.mxu0 0
    %4687 = vmatprep.subr.bf16.mxu0 0
    %4688 = vmatpush1.bf16.msra.mxu0 0
    %4689 = vmatprep.subr.bf16.mxu0 0
    %4690 = vmatpush1.bf16.msra.mxu0 0
    %4691 = vmatprep.subr.bf16.mxu0 0
    %4692 = vmatpush1.bf16.msra.mxu0 0
    %4693 = vmatprep.subr.bf16.mxu0 0
    %4694 = vmatpush1.bf16.msra.mxu0 0
    %4695 = vmatprep.subr.bf16.mxu0 0
    %4696 = vmatpush1.bf16.msra.mxu0 0
    %4697 = vmatprep.subr.bf16.mxu0 0
    %4698 = vmatpush1.bf16.msra.mxu0 0
    %4699 = vmatprep.mubr.bf16.mxu0 0
    %4700 = vmatmul.mubr.bf16.gmra.mrb[0].mxu0 %v4665
    %v4701 = vpop.f32.mrb[0].mxu0
    %v4702 = vadd.f32 %v4663, %v4701
    %v4703 = vpop.f32.mrb[0].mxu0
    %v4704 = vpop.f32.mrb[0].mxu0
    %v4705 = vpop.f32.mrb[0].mxu0
    %4706 = vdwg.mxu0
    %v4707 = vadd.f32 %v4702, %v53
    %v4708 = vtanh.pop %v4707
    %v4709 = vpack.c.bf16 %v4708, %v4708
    %v4711 = vsel %vm125, %v4709, 0
    %4713 = vmatprep.subr.bf16.mxu0 0
    %4714 = vmatpush1.bf16.msra.mxu0 %v35
    %4715 = vmatprep.subr.bf16.mxu0 0
    %4716 = vmatpush1.bf16.msra.mxu0 %v36
    %4717 = vmatprep.subr.bf16.mxu0 0
    %4718 = vmatpush1.bf16.msra.mxu0 %v37
    %4719 = vmatprep.subr.bf16.mxu0 0
    %4720 = vmatpush1.bf16.msra.mxu0 %v38
    %4721 = vmatprep.subr.bf16.mxu0 0
    %4722 = vmatpush1.bf16.msra.mxu0 %v39
    %4723 = vmatprep.subr.bf16.mxu0 0
    %4724 = vmatpush1.bf16.msra.mxu0 %v40
    %4725 = vmatprep.subr.bf16.mxu0 0
    %4726 = vmatpush1.bf16.msra.mxu0 0
    %4727 = vmatprep.subr.bf16.mxu0 0
    %4728 = vmatpush1.bf16.msra.mxu0 0
    %4729 = vmatprep.subr.bf16.mxu0 0
    %4730 = vmatpush1.bf16.msra.mxu0 0
    %4731 = vmatprep.subr.bf16.mxu0 0
    %4732 = vmatpush1.bf16.msra.mxu0 0
    %4733 = vmatprep.subr.bf16.mxu0 0
    %4734 = vmatpush1.bf16.msra.mxu0 0
    %4735 = vmatprep.subr.bf16.mxu0 0
    %4736 = vmatpush1.bf16.msra.mxu0 0
    %4737 = vmatprep.subr.bf16.mxu0 0
    %4738 = vmatpush1.bf16.msra.mxu0 0
    %4739 = vmatprep.subr.bf16.mxu0 0
    %4740 = vmatpush1.bf16.msra.mxu0 0
    %4741 = vmatprep.subr.bf16.mxu0 0
    %4742 = vmatpush1.bf16.msra.mxu0 0
    %4743 = vmatprep.subr.bf16.mxu0 0
    %4744 = vmatpush1.bf16.msra.mxu0 0
    %4745 = vmatprep.mubr.bf16.mxu0 0
    %4746 = vmatmul.mubr.bf16.gmra.mrb[0].mxu0 %v4711
    %v4747 = vpop.f32.mrb[0].mxu0
    %v4748 = vadd.f32 0.0, %v4747
    %v4749 = vpop.f32.mrb[0].mxu0
    %v4750 = vpop.f32.mrb[0].mxu0
    %v4751 = vpop.f32.mrb[0].mxu0
    %4752 = vdwg.mxu0
    %s4753 = sadd.f32 %s4660, 0.02777778
    %v4754 = vmul.f32 %v4748, 0.02777778
    %v4755 = vadd.f32 %v4659, %v4754
    %v4756 = vpack.c.bf16 %v4755, %v4755
    %v4757 = vstv %s4753
    %v4758 = vmul.f32 %v4757, %v46
    %v4760 = vsel %vm56, %v4756, 0
    %4762 = vmatprep.subr.bf16.mxu0 0
    %4763 = vmatpush1.bf16.msra.mxu0 %v80
    %4764 = vmatprep.subr.bf16.mxu0 0
    %4765 = vmatpush1.bf16.msra.mxu0 0
    %4766 = vmatprep.subr.bf16.mxu0 0
    %4767 = vmatpush1.bf16.msra.mxu0 0
    %4768 = vmatprep.subr.bf16.mxu0 0
    %4769 = vmatpush1.bf16.msra.mxu0 0
    %4770 = vmatprep.subr.bf16.mxu0 0
    %4771 = vmatpush1.bf16.msra.mxu0 0
    %4772 = vmatprep.subr.bf16.mxu0 0
    %4773 = vmatpush1.bf16.msra.mxu0 0
    %4774 = vmatprep.subr.bf16.mxu0 0
    %4775 = vmatpush1.bf16.msra.mxu0 0
    %4776 = vmatprep.subr.bf16.mxu0 0
    %4777 = vmatpush1.bf16.msra.mxu0 0
    %4778 = vmatprep.subr.bf16.mxu0 0
    %4779 = vmatpush1.bf16.msra.mxu0 0
    %4780 = vmatprep.subr.bf16.mxu0 0
    %4781 = vmatpush1.bf16.msra.mxu0 0
    %4782 = vmatprep.subr.bf16.mxu0 0
    %4783 = vmatpush1.bf16.msra.mxu0 0
    %4784 = vmatprep.subr.bf16.mxu0 0
    %4785 = vmatpush1.bf16.msra.mxu0 0
    %4786 = vmatprep.subr.bf16.mxu0 0
    %4787 = vmatpush1.bf16.msra.mxu0 0
    %4788 = vmatprep.subr.bf16.mxu0 0
    %4789 = vmatpush1.bf16.msra.mxu0 0
    %4790 = vmatprep.subr.bf16.mxu0 0
    %4791 = vmatpush1.bf16.msra.mxu0 0
    %4792 = vmatprep.subr.bf16.mxu0 0
    %4793 = vmatpush1.bf16.msra.mxu0 0
    %4794 = vmatprep.mubr.bf16.mxu0 0
    %4795 = vmatmul.mubr.bf16.gmra.mrb[0].mxu0 %v4760
    %v4796 = vpop.f32.mrb[0].mxu0
    %v4797 = vadd.f32 %v4758, %v4796
    %v4798 = vpop.f32.mrb[0].mxu0
    %v4799 = vpop.f32.mrb[0].mxu0
    %v4800 = vpop.f32.mrb[0].mxu0
    %4801 = vdwg.mxu0
    %v4802 = vadd.f32 %v4797, %v53
    %v4803 = vtanh.pop %v4802
    %v4804 = vpack.c.bf16 %v4803, %v4803
    %v4806 = vsel %vm125, %v4804, 0
    %4808 = vmatprep.subr.bf16.mxu0 0
    %4809 = vmatpush1.bf16.msra.mxu0 %v35
    %4810 = vmatprep.subr.bf16.mxu0 0
    %4811 = vmatpush1.bf16.msra.mxu0 %v36
    %4812 = vmatprep.subr.bf16.mxu0 0
    %4813 = vmatpush1.bf16.msra.mxu0 %v37
    %4814 = vmatprep.subr.bf16.mxu0 0
    %4815 = vmatpush1.bf16.msra.mxu0 %v38
    %4816 = vmatprep.subr.bf16.mxu0 0
    %4817 = vmatpush1.bf16.msra.mxu0 %v39
    %4818 = vmatprep.subr.bf16.mxu0 0
    %4819 = vmatpush1.bf16.msra.mxu0 %v40
    %4820 = vmatprep.subr.bf16.mxu0 0
    %4821 = vmatpush1.bf16.msra.mxu0 0
    %4822 = vmatprep.subr.bf16.mxu0 0
    %4823 = vmatpush1.bf16.msra.mxu0 0
    %4824 = vmatprep.subr.bf16.mxu0 0
    %4825 = vmatpush1.bf16.msra.mxu0 0
    %4826 = vmatprep.subr.bf16.mxu0 0
    %4827 = vmatpush1.bf16.msra.mxu0 0
    %4828 = vmatprep.subr.bf16.mxu0 0
    %4829 = vmatpush1.bf16.msra.mxu0 0
    %4830 = vmatprep.subr.bf16.mxu0 0
    %4831 = vmatpush1.bf16.msra.mxu0 0
    %4832 = vmatprep.subr.bf16.mxu0 0
    %4833 = vmatpush1.bf16.msra.mxu0 0
    %4834 = vmatprep.subr.bf16.mxu0 0
    %4835 = vmatpush1.bf16.msra.mxu0 0
    %4836 = vmatprep.subr.bf16.mxu0 0
    %4837 = vmatpush1.bf16.msra.mxu0 0
    %4838 = vmatprep.subr.bf16.mxu0 0
    %4839 = vmatpush1.bf16.msra.mxu0 0
    %4840 = vmatprep.mubr.bf16.mxu0 0
    %4841 = vmatmul.mubr.bf16.gmra.mrb[0].mxu0 %v4806
    %v4842 = vpop.f32.mrb[0].mxu0
    %v4843 = vadd.f32 0.0, %v4842
    %v4844 = vpop.f32.mrb[0].mxu0
    %v4845 = vpop.f32.mrb[0].mxu0
    %v4846 = vpop.f32.mrb[0].mxu0
    %4847 = vdwg.mxu0
    %v4848 = vmul.f32 %v4843, 0.02777778
    %v4849 = vadd.f32 %v4659, %v4848
    %v4850 = vpack.c.bf16 %v4849, %v4849
    %v4852 = vsel %vm56, %v4850, 0
    %4854 = vmatprep.subr.bf16.mxu0 0
    %4855 = vmatpush1.bf16.msra.mxu0 %v80
    %4856 = vmatprep.subr.bf16.mxu0 0
    %4857 = vmatpush1.bf16.msra.mxu0 0
    %4858 = vmatprep.subr.bf16.mxu0 0
    %4859 = vmatpush1.bf16.msra.mxu0 0
    %4860 = vmatprep.subr.bf16.mxu0 0
    %4861 = vmatpush1.bf16.msra.mxu0 0
    %4862 = vmatprep.subr.bf16.mxu0 0
    %4863 = vmatpush1.bf16.msra.mxu0 0
    %4864 = vmatprep.subr.bf16.mxu0 0
    %4865 = vmatpush1.bf16.msra.mxu0 0
    %4866 = vmatprep.subr.bf16.mxu0 0
    %4867 = vmatpush1.bf16.msra.mxu0 0
    %4868 = vmatprep.subr.bf16.mxu0 0
    %4869 = vmatpush1.bf16.msra.mxu0 0
    %4870 = vmatprep.subr.bf16.mxu0 0
    %4871 = vmatpush1.bf16.msra.mxu0 0
    %4872 = vmatprep.subr.bf16.mxu0 0
    %4873 = vmatpush1.bf16.msra.mxu0 0
    %4874 = vmatprep.subr.bf16.mxu0 0
    %4875 = vmatpush1.bf16.msra.mxu0 0
    %4876 = vmatprep.subr.bf16.mxu0 0
    %4877 = vmatpush1.bf16.msra.mxu0 0
    %4878 = vmatprep.subr.bf16.mxu0 0
    %4879 = vmatpush1.bf16.msra.mxu0 0
    %4880 = vmatprep.subr.bf16.mxu0 0
    %4881 = vmatpush1.bf16.msra.mxu0 0
    %4882 = vmatprep.subr.bf16.mxu0 0
    %4883 = vmatpush1.bf16.msra.mxu0 0
    %4884 = vmatprep.subr.bf16.mxu0 0
    %4885 = vmatpush1.bf16.msra.mxu0 0
    %4886 = vmatprep.mubr.bf16.mxu0 0
    %4887 = vmatmul.mubr.bf16.gmra.mrb[0].mxu0 %v4852
    %v4888 = vpop.f32.mrb[0].mxu0
    %v4889 = vadd.f32 %v4758, %v4888
    %v4890 = vpop.f32.mrb[0].mxu0
    %v4891 = vpop.f32.mrb[0].mxu0
    %v4892 = vpop.f32.mrb[0].mxu0
    %4893 = vdwg.mxu0
    %v4894 = vadd.f32 %v4889, %v53
    %v4895 = vtanh.pop %v4894
    %v4896 = vpack.c.bf16 %v4895, %v4895
    %v4898 = vsel %vm125, %v4896, 0
    %4900 = vmatprep.subr.bf16.mxu0 0
    %4901 = vmatpush1.bf16.msra.mxu0 %v35
    %4902 = vmatprep.subr.bf16.mxu0 0
    %4903 = vmatpush1.bf16.msra.mxu0 %v36
    %4904 = vmatprep.subr.bf16.mxu0 0
    %4905 = vmatpush1.bf16.msra.mxu0 %v37
    %4906 = vmatprep.subr.bf16.mxu0 0
    %4907 = vmatpush1.bf16.msra.mxu0 %v38
    %4908 = vmatprep.subr.bf16.mxu0 0
    %4909 = vmatpush1.bf16.msra.mxu0 %v39
    %4910 = vmatprep.subr.bf16.mxu0 0
    %4911 = vmatpush1.bf16.msra.mxu0 %v40
    %4912 = vmatprep.subr.bf16.mxu0 0
    %4913 = vmatpush1.bf16.msra.mxu0 0
    %4914 = vmatprep.subr.bf16.mxu0 0
    %4915 = vmatpush1.bf16.msra.mxu0 0
    %4916 = vmatprep.subr.bf16.mxu0 0
    %4917 = vmatpush1.bf16.msra.mxu0 0
    %4918 = vmatprep.subr.bf16.mxu0 0
    %4919 = vmatpush1.bf16.msra.mxu0 0
    %4920 = vmatprep.subr.bf16.mxu0 0
    %4921 = vmatpush1.bf16.msra.mxu0 0
    %4922 = vmatprep.subr.bf16.mxu0 0
    %4923 = vmatpush1.bf16.msra.mxu0 0
    %4924 = vmatprep.subr.bf16.mxu0 0
    %4925 = vmatpush1.bf16.msra.mxu0 0
    %4926 = vmatprep.subr.bf16.mxu0 0
    %4927 = vmatpush1.bf16.msra.mxu0 0
    %4928 = vmatprep.subr.bf16.mxu0 0
    %4929 = vmatpush1.bf16.msra.mxu0 0
    %4930 = vmatprep.subr.bf16.mxu0 0
    %4931 = vmatpush1.bf16.msra.mxu0 0
    %4932 = vmatprep.mubr.bf16.mxu0 0
    %4933 = vmatmul.mubr.bf16.gmra.mrb[0].mxu0 %v4898
    %v4934 = vpop.f32.mrb[0].mxu0
    %v4935 = vadd.f32 0.0, %v4934
    %v4936 = vpop.f32.mrb[0].mxu0
    %v4937 = vpop.f32.mrb[0].mxu0
    %v4938 = vpop.f32.mrb[0].mxu0
    %4939 = vdwg.mxu0
    %s4940 = sadd.f32 %s4660, 0.05555556
    %v4941 = vmul.f32 %v4935, 0.05555556
    %v4942 = vadd.f32 %v4659, %v4941
    %v4943 = vpack.c.bf16 %v4942, %v4942
    %v4944 = vstv %s4940
    %v4945 = vmul.f32 %v4944, %v46
    %v4947 = vsel %vm56, %v4943, 0
    %4949 = vmatprep.subr.bf16.mxu0 0
    %4950 = vmatpush1.bf16.msra.mxu0 %v80
    %4951 = vmatprep.subr.bf16.mxu0 0
    %4952 = vmatpush1.bf16.msra.mxu0 0
    %4953 = vmatprep.subr.bf16.mxu0 0
    %4954 = vmatpush1.bf16.msra.mxu0 0
    %4955 = vmatprep.subr.bf16.mxu0 0
    %4956 = vmatpush1.bf16.msra.mxu0 0
    %4957 = vmatprep.subr.bf16.mxu0 0
    %4958 = vmatpush1.bf16.msra.mxu0 0
    %4959 = vmatprep.subr.bf16.mxu0 0
    %4960 = vmatpush1.bf16.msra.mxu0 0
    %4961 = vmatprep.subr.bf16.mxu0 0
    %4962 = vmatpush1.bf16.msra.mxu0 0
    %4963 = vmatprep.subr.bf16.mxu0 0
    %4964 = vmatpush1.bf16.msra.mxu0 0
    %4965 = vmatprep.subr.bf16.mxu0 0
    %4966 = vmatpush1.bf16.msra.mxu0 0
    %4967 = vmatprep.subr.bf16.mxu0 0
    %4968 = vmatpush1.bf16.msra.mxu0 0
    %4969 = vmatprep.subr.bf16.mxu0 0
    %4970 = vmatpush1.bf16.msra.mxu0 0
    %4971 = vmatprep.subr.bf16.mxu0 0
    %4972 = vmatpush1.bf16.msra.mxu0 0
    %4973 = vmatprep.subr.bf16.mxu0 0
    %4974 = vmatpush1.bf16.msra.mxu0 0
    %4975 = vmatprep.subr.bf16.mxu0 0
    %4976 = vmatpush1.bf16.msra.mxu0 0
    %4977 = vmatprep.subr.bf16.mxu0 0
    %4978 = vmatpush1.bf16.msra.mxu0 0
    %4979 = vmatprep.subr.bf16.mxu0 0
    %4980 = vmatpush1.bf16.msra.mxu0 0
    %4981 = vmatprep.mubr.bf16.mxu0 0
    %4982 = vmatmul.mubr.bf16.gmra.mrb[0].mxu0 %v4947
    %v4983 = vpop.f32.mrb[0].mxu0
    %v4984 = vadd.f32 %v4945, %v4983
    %v4985 = vpop.f32.mrb[0].mxu0
    %v4986 = vpop.f32.mrb[0].mxu0
    %v4987 = vpop.f32.mrb[0].mxu0
    %4988 = vdwg.mxu0
    %v4989 = vadd.f32 %v4984, %v53
    %v4990 = vtanh.pop %v4989
    %v4991 = vpack.c.bf16 %v4990, %v4990
    %v4993 = vsel %vm125, %v4991, 0
    %4995 = vmatprep.subr.bf16.mxu0 0
    %4996 = vmatpush1.bf16.msra.mxu0 %v35
    %4997 = vmatprep.subr.bf16.mxu0 0
    %4998 = vmatpush1.bf16.msra.mxu0 %v36
    %4999 = vmatprep.subr.bf16.mxu0 0
    %5000 = vmatpush1.bf16.msra.mxu0 %v37
    %5001 = vmatprep.subr.bf16.mxu0 0
    %5002 = vmatpush1.bf16.msra.mxu0 %v38
    %5003 = vmatprep.subr.bf16.mxu0 0
    %5004 = vmatpush1.bf16.msra.mxu0 %v39
    %5005 = vmatprep.subr.bf16.mxu0 0
    %5006 = vmatpush1.bf16.msra.mxu0 %v40
    %5007 = vmatprep.subr.bf16.mxu0 0
    %5008 = vmatpush1.bf16.msra.mxu0 0
    %5009 = vmatprep.subr.bf16.mxu0 0
    %5010 = vmatpush1.bf16.msra.mxu0 0
    %5011 = vmatprep.subr.bf16.mxu0 0
    %5012 = vmatpush1.bf16.msra.mxu0 0
    %5013 = vmatprep.subr.bf16.mxu0 0
    %5014 = vmatpush1.bf16.msra.mxu0 0
    %5015 = vmatprep.subr.bf16.mxu0 0
    %5016 = vmatpush1.bf16.msra.mxu0 0
    %5017 = vmatprep.subr.bf16.mxu0 0
    %5018 = vmatpush1.bf16.msra.mxu0 0
    %5019 = vmatprep.subr.bf16.mxu0 0
    %5020 = vmatpush1.bf16.msra.mxu0 0
    %5021 = vmatprep.subr.bf16.mxu0 0
    %5022 = vmatpush1.bf16.msra.mxu0 0
    %5023 = vmatprep.subr.bf16.mxu0 0
    %5024 = vmatpush1.bf16.msra.mxu0 0
    %5025 = vmatprep.subr.bf16.mxu0 0
    %5026 = vmatpush1.bf16.msra.mxu0 0
    %5027 = vmatprep.mubr.bf16.mxu0 0
    %5028 = vmatmul.mubr.bf16.gmra.mrb[0].mxu0 %v4993
    %v5029 = vpop.f32.mrb[0].mxu0
    %v5030 = vadd.f32 0.0, %v5029
    %v5031 = vpop.f32.mrb[0].mxu0
    %v5032 = vpop.f32.mrb[0].mxu0
    %v5033 = vpop.f32.mrb[0].mxu0
    %5034 = vdwg.mxu0
    %v5035 = vmul.f32 %v4843, 2.0
    %v5036 = vadd.f32 %v4748, %v5035
    %v5037 = vmul.f32 %v4935, 2.0
    %v5038 = vadd.f32 %v5036, %v5037
    %v5039 = vadd.f32 %v5038, %v5030
    %v5040 = vmul.f32 %v5039, 0.00925926
    %v5041 = vadd.f32 %v4659, %v5040
    %s5042 = sadd.f32 %s67, 0.72222227
    %v5043 = vpack.c.bf16 %v5041, %v5041
    %v5044 = vstv %s5042
    %v5045 = vmul.f32 %v5044, %v46
    %v5047 = vsel %vm56, %v5043, 0
    %5049 = vmatprep.subr.bf16.mxu0 0
    %5050 = vmatpush1.bf16.msra.mxu0 %v80
    %5051 = vmatprep.subr.bf16.mxu0 0
    %5052 = vmatpush1.bf16.msra.mxu0 0
    %5053 = vmatprep.subr.bf16.mxu0 0
    %5054 = vmatpush1.bf16.msra.mxu0 0
    %5055 = vmatprep.subr.bf16.mxu0 0
    %5056 = vmatpush1.bf16.msra.mxu0 0
    %5057 = vmatprep.subr.bf16.mxu0 0
    %5058 = vmatpush1.bf16.msra.mxu0 0
    %5059 = vmatprep.subr.bf16.mxu0 0
    %5060 = vmatpush1.bf16.msra.mxu0 0
    %5061 = vmatprep.subr.bf16.mxu0 0
    %5062 = vmatpush1.bf16.msra.mxu0 0
    %5063 = vmatprep.subr.bf16.mxu0 0
    %5064 = vmatpush1.bf16.msra.mxu0 0
    %5065 = vmatprep.subr.bf16.mxu0 0
    %5066 = vmatpush1.bf16.msra.mxu0 0
    %5067 = vmatprep.subr.bf16.mxu0 0
    %5068 = vmatpush1.bf16.msra.mxu0 0
    %5069 = vmatprep.subr.bf16.mxu0 0
    %5070 = vmatpush1.bf16.msra.mxu0 0
    %5071 = vmatprep.subr.bf16.mxu0 0
    %5072 = vmatpush1.bf16.msra.mxu0 0
    %5073 = vmatprep.subr.bf16.mxu0 0
    %5074 = vmatpush1.bf16.msra.mxu0 0
    %5075 = vmatprep.subr.bf16.mxu0 0
    %5076 = vmatpush1.bf16.msra.mxu0 0
    %5077 = vmatprep.subr.bf16.mxu0 0
    %5078 = vmatpush1.bf16.msra.mxu0 0
    %5079 = vmatprep.subr.bf16.mxu0 0
    %5080 = vmatpush1.bf16.msra.mxu0 0
    %5081 = vmatprep.mubr.bf16.mxu0 0
    %5082 = vmatmul.mubr.bf16.gmra.mrb[0].mxu0 %v5047
    %v5083 = vpop.f32.mrb[0].mxu0
    %v5084 = vadd.f32 %v5045, %v5083
    %v5085 = vpop.f32.mrb[0].mxu0
    %v5086 = vpop.f32.mrb[0].mxu0
    %v5087 = vpop.f32.mrb[0].mxu0
    %5088 = vdwg.mxu0
    %v5089 = vadd.f32 %v5084, %v53
    %v5090 = vtanh.pop %v5089
    %v5091 = vpack.c.bf16 %v5090, %v5090
    %v5093 = vsel %vm125, %v5091, 0
    %5095 = vmatprep.subr.bf16.mxu0 0
    %5096 = vmatpush1.bf16.msra.mxu0 %v35
    %5097 = vmatprep.subr.bf16.mxu0 0
    %5098 = vmatpush1.bf16.msra.mxu0 %v36
    %5099 = vmatprep.subr.bf16.mxu0 0
    %5100 = vmatpush1.bf16.msra.mxu0 %v37
    %5101 = vmatprep.subr.bf16.mxu0 0
    %5102 = vmatpush1.bf16.msra.mxu0 %v38
    %5103 = vmatprep.subr.bf16.mxu0 0
    %5104 = vmatpush1.bf16.msra.mxu0 %v39
    %5105 = vmatprep.subr.bf16.mxu0 0
    %5106 = vmatpush1.bf16.msra.mxu0 %v40
    %5107 = vmatprep.subr.bf16.mxu0 0
    %5108 = vmatpush1.bf16.msra.mxu0 0
    %5109 = vmatprep.subr.bf16.mxu0 0
    %5110 = vmatpush1.bf16.msra.mxu0 0
    %5111 = vmatprep.subr.bf16.mxu0 0
    %5112 = vmatpush1.bf16.msra.mxu0 0
    %5113 = vmatprep.subr.bf16.mxu0 0
    %5114 = vmatpush1.bf16.msra.mxu0 0
    %5115 = vmatprep.subr.bf16.mxu0 0
    %5116 = vmatpush1.bf16.msra.mxu0 0
    %5117 = vmatprep.subr.bf16.mxu0 0
    %5118 = vmatpush1.bf16.msra.mxu0 0
    %5119 = vmatprep.subr.bf16.mxu0 0
    %5120 = vmatpush1.bf16.msra.mxu0 0
    %5121 = vmatprep.subr.bf16.mxu0 0
    %5122 = vmatpush1.bf16.msra.mxu0 0
    %5123 = vmatprep.subr.bf16.mxu0 0
    %5124 = vmatpush1.bf16.msra.mxu0 0
    %5125 = vmatprep.subr.bf16.mxu0 0
    %5126 = vmatpush1.bf16.msra.mxu0 0
    %5127 = vmatprep.mubr.bf16.mxu0 0
    %5128 = vmatmul.mubr.bf16.gmra.mrb[0].mxu0 %v5093
    %v5129 = vpop.f32.mrb[0].mxu0
    %v5130 = vadd.f32 0.0, %v5129
    %v5131 = vpop.f32.mrb[0].mxu0
    %v5132 = vpop.f32.mrb[0].mxu0
    %v5133 = vpop.f32.mrb[0].mxu0
    %5134 = vdwg.mxu0
    %s5135 = sadd.f32 %s5042, 0.02777778
    %v5136 = vmul.f32 %v5130, 0.02777778
    %v5137 = vadd.f32 %v5041, %v5136
    %v5138 = vpack.c.bf16 %v5137, %v5137
    %v5139 = vstv %s5135
    %v5140 = vmul.f32 %v5139, %v46
    %v5142 = vsel %vm56, %v5138, 0
    %5144 = vmatprep.subr.bf16.mxu0 0
    %5145 = vmatpush1.bf16.msra.mxu0 %v80
    %5146 = vmatprep.subr.bf16.mxu0 0
    %5147 = vmatpush1.bf16.msra.mxu0 0
    %5148 = vmatprep.subr.bf16.mxu0 0
    %5149 = vmatpush1.bf16.msra.mxu0 0
    %5150 = vmatprep.subr.bf16.mxu0 0
    %5151 = vmatpush1.bf16.msra.mxu0 0
    %5152 = vmatprep.subr.bf16.mxu0 0
    %5153 = vmatpush1.bf16.msra.mxu0 0
    %5154 = vmatprep.subr.bf16.mxu0 0
    %5155 = vmatpush1.bf16.msra.mxu0 0
    %5156 = vmatprep.subr.bf16.mxu0 0
    %5157 = vmatpush1.bf16.msra.mxu0 0
    %5158 = vmatprep.subr.bf16.mxu0 0
    %5159 = vmatpush1.bf16.msra.mxu0 0
    %5160 = vmatprep.subr.bf16.mxu0 0
    %5161 = vmatpush1.bf16.msra.mxu0 0
    %5162 = vmatprep.subr.bf16.mxu0 0
    %5163 = vmatpush1.bf16.msra.mxu0 0
    %5164 = vmatprep.subr.bf16.mxu0 0
    %5165 = vmatpush1.bf16.msra.mxu0 0
    %5166 = vmatprep.subr.bf16.mxu0 0
    %5167 = vmatpush1.bf16.msra.mxu0 0
    %5168 = vmatprep.subr.bf16.mxu0 0
    %5169 = vmatpush1.bf16.msra.mxu0 0
    %5170 = vmatprep.subr.bf16.mxu0 0
    %5171 = vmatpush1.bf16.msra.mxu0 0
    %5172 = vmatprep.subr.bf16.mxu0 0
    %5173 = vmatpush1.bf16.msra.mxu0 0
    %5174 = vmatprep.subr.bf16.mxu0 0
    %5175 = vmatpush1.bf16.msra.mxu0 0
    %5176 = vmatprep.mubr.bf16.mxu0 0
    %5177 = vmatmul.mubr.bf16.gmra.mrb[0].mxu0 %v5142
    %v5178 = vpop.f32.mrb[0].mxu0
    %v5179 = vadd.f32 %v5140, %v5178
    %v5180 = vpop.f32.mrb[0].mxu0
    %v5181 = vpop.f32.mrb[0].mxu0
    %v5182 = vpop.f32.mrb[0].mxu0
    %5183 = vdwg.mxu0
    %v5184 = vadd.f32 %v5179, %v53
    %v5185 = vtanh.pop %v5184
    %v5186 = vpack.c.bf16 %v5185, %v5185
    %v5188 = vsel %vm125, %v5186, 0
    %5190 = vmatprep.subr.bf16.mxu0 0
    %5191 = vmatpush1.bf16.msra.mxu0 %v35
    %5192 = vmatprep.subr.bf16.mxu0 0
    %5193 = vmatpush1.bf16.msra.mxu0 %v36
    %5194 = vmatprep.subr.bf16.mxu0 0
    %5195 = vmatpush1.bf16.msra.mxu0 %v37
    %5196 = vmatprep.subr.bf16.mxu0 0
    %5197 = vmatpush1.bf16.msra.mxu0 %v38
    %5198 = vmatprep.subr.bf16.mxu0 0
    %5199 = vmatpush1.bf16.msra.mxu0 %v39
    %5200 = vmatprep.subr.bf16.mxu0 0
    %5201 = vmatpush1.bf16.msra.mxu0 %v40
    %5202 = vmatprep.subr.bf16.mxu0 0
    %5203 = vmatpush1.bf16.msra.mxu0 0
    %5204 = vmatprep.subr.bf16.mxu0 0
    %5205 = vmatpush1.bf16.msra.mxu0 0
    %5206 = vmatprep.subr.bf16.mxu0 0
    %5207 = vmatpush1.bf16.msra.mxu0 0
    %5208 = vmatprep.subr.bf16.mxu0 0
    %5209 = vmatpush1.bf16.msra.mxu0 0
    %5210 = vmatprep.subr.bf16.mxu0 0
    %5211 = vmatpush1.bf16.msra.mxu0 0
    %5212 = vmatprep.subr.bf16.mxu0 0
    %5213 = vmatpush1.bf16.msra.mxu0 0
    %5214 = vmatprep.subr.bf16.mxu0 0
    %5215 = vmatpush1.bf16.msra.mxu0 0
    %5216 = vmatprep.subr.bf16.mxu0 0
    %5217 = vmatpush1.bf16.msra.mxu0 0
    %5218 = vmatprep.subr.bf16.mxu0 0
    %5219 = vmatpush1.bf16.msra.mxu0 0
    %5220 = vmatprep.subr.bf16.mxu0 0
    %5221 = vmatpush1.bf16.msra.mxu0 0
    %5222 = vmatprep.mubr.bf16.mxu0 0
    %5223 = vmatmul.mubr.bf16.gmra.mrb[0].mxu0 %v5188
    %v5224 = vpop.f32.mrb[0].mxu0
    %v5225 = vadd.f32 0.0, %v5224
    %v5226 = vpop.f32.mrb[0].mxu0
    %v5227 = vpop.f32.mrb[0].mxu0
    %v5228 = vpop.f32.mrb[0].mxu0
    %5229 = vdwg.mxu0
    %v5230 = vmul.f32 %v5225, 0.02777778
    %v5231 = vadd.f32 %v5041, %v5230
    %v5232 = vpack.c.bf16 %v5231, %v5231
    %v5234 = vsel %vm56, %v5232, 0
    %5236 = vmatprep.subr.bf16.mxu0 0
    %5237 = vmatpush1.bf16.msra.mxu0 %v80
    %5238 = vmatprep.subr.bf16.mxu0 0
    %5239 = vmatpush1.bf16.msra.mxu0 0
    %5240 = vmatprep.subr.bf16.mxu0 0
    %5241 = vmatpush1.bf16.msra.mxu0 0
    %5242 = vmatprep.subr.bf16.mxu0 0
    %5243 = vmatpush1.bf16.msra.mxu0 0
    %5244 = vmatprep.subr.bf16.mxu0 0
    %5245 = vmatpush1.bf16.msra.mxu0 0
    %5246 = vmatprep.subr.bf16.mxu0 0
    %5247 = vmatpush1.bf16.msra.mxu0 0
    %5248 = vmatprep.subr.bf16.mxu0 0
    %5249 = vmatpush1.bf16.msra.mxu0 0
    %5250 = vmatprep.subr.bf16.mxu0 0
    %5251 = vmatpush1.bf16.msra.mxu0 0
    %5252 = vmatprep.subr.bf16.mxu0 0
    %5253 = vmatpush1.bf16.msra.mxu0 0
    %5254 = vmatprep.subr.bf16.mxu0 0
    %5255 = vmatpush1.bf16.msra.mxu0 0
    %5256 = vmatprep.subr.bf16.mxu0 0
    %5257 = vmatpush1.bf16.msra.mxu0 0
    %5258 = vmatprep.subr.bf16.mxu0 0
    %5259 = vmatpush1.bf16.msra.mxu0 0
    %5260 = vmatprep.subr.bf16.mxu0 0
    %5261 = vmatpush1.bf16.msra.mxu0 0
    %5262 = vmatprep.subr.bf16.mxu0 0
    %5263 = vmatpush1.bf16.msra.mxu0 0
    %5264 = vmatprep.subr.bf16.mxu0 0
    %5265 = vmatpush1.bf16.msra.mxu0 0
    %5266 = vmatprep.subr.bf16.mxu0 0
    %5267 = vmatpush1.bf16.msra.mxu0 0
    %5268 = vmatprep.mubr.bf16.mxu0 0
    %5269 = vmatmul.mubr.bf16.gmra.mrb[0].mxu0 %v5234
    %v5270 = vpop.f32.mrb[0].mxu0
    %v5271 = vadd.f32 %v5140, %v5270
    %v5272 = vpop.f32.mrb[0].mxu0
    %v5273 = vpop.f32.mrb[0].mxu0
    %v5274 = vpop.f32.mrb[0].mxu0
    %5275 = vdwg.mxu0
    %v5276 = vadd.f32 %v5271, %v53
    %v5277 = vtanh.pop %v5276
    %v5278 = vpack.c.bf16 %v5277, %v5277
    %v5280 = vsel %vm125, %v5278, 0
    %5282 = vmatprep.subr.bf16.mxu0 0
    %5283 = vmatpush1.bf16.msra.mxu0 %v35
    %5284 = vmatprep.subr.bf16.mxu0 0
    %5285 = vmatpush1.bf16.msra.mxu0 %v36
    %5286 = vmatprep.subr.bf16.mxu0 0
    %5287 = vmatpush1.bf16.msra.mxu0 %v37
    %5288 = vmatprep.subr.bf16.mxu0 0
    %5289 = vmatpush1.bf16.msra.mxu0 %v38
    %5290 = vmatprep.subr.bf16.mxu0 0
    %5291 = vmatpush1.bf16.msra.mxu0 %v39
    %5292 = vmatprep.subr.bf16.mxu0 0
    %5293 = vmatpush1.bf16.msra.mxu0 %v40
    %5294 = vmatprep.subr.bf16.mxu0 0
    %5295 = vmatpush1.bf16.msra.mxu0 0
    %5296 = vmatprep.subr.bf16.mxu0 0
    %5297 = vmatpush1.bf16.msra.mxu0 0
    %5298 = vmatprep.subr.bf16.mxu0 0
    %5299 = vmatpush1.bf16.msra.mxu0 0
    %5300 = vmatprep.subr.bf16.mxu0 0
    %5301 = vmatpush1.bf16.msra.mxu0 0
    %5302 = vmatprep.subr.bf16.mxu0 0
    %5303 = vmatpush1.bf16.msra.mxu0 0
    %5304 = vmatprep.subr.bf16.mxu0 0
    %5305 = vmatpush1.bf16.msra.mxu0 0
    %5306 = vmatprep.subr.bf16.mxu0 0
    %5307 = vmatpush1.bf16.msra.mxu0 0
    %5308 = vmatprep.subr.bf16.mxu0 0
    %5309 = vmatpush1.bf16.msra.mxu0 0
    %5310 = vmatprep.subr.bf16.mxu0 0
    %5311 = vmatpush1.bf16.msra.mxu0 0
    %5312 = vmatprep.subr.bf16.mxu0 0
    %5313 = vmatpush1.bf16.msra.mxu0 0
    %5314 = vmatprep.mubr.bf16.mxu0 0
    %5315 = vmatmul.mubr.bf16.gmra.mrb[0].mxu0 %v5280
    %v5316 = vpop.f32.mrb[0].mxu0
    %v5317 = vadd.f32 0.0, %v5316
    %v5318 = vpop.f32.mrb[0].mxu0
    %v5319 = vpop.f32.mrb[0].mxu0
    %v5320 = vpop.f32.mrb[0].mxu0
    %5321 = vdwg.mxu0
    %s5322 = sadd.f32 %s5042, 0.05555556
    %v5323 = vmul.f32 %v5317, 0.05555556
    %v5324 = vadd.f32 %v5041, %v5323
    %v5325 = vpack.c.bf16 %v5324, %v5324
    %v5326 = vstv %s5322
    %v5327 = vmul.f32 %v5326, %v46
    %v5329 = vsel %vm56, %v5325, 0
    %5331 = vmatprep.subr.bf16.mxu0 0
    %5332 = vmatpush1.bf16.msra.mxu0 %v80
    %5333 = vmatprep.subr.bf16.mxu0 0
    %5334 = vmatpush1.bf16.msra.mxu0 0
    %5335 = vmatprep.subr.bf16.mxu0 0
    %5336 = vmatpush1.bf16.msra.mxu0 0
    %5337 = vmatprep.subr.bf16.mxu0 0
    %5338 = vmatpush1.bf16.msra.mxu0 0
    %5339 = vmatprep.subr.bf16.mxu0 0
    %5340 = vmatpush1.bf16.msra.mxu0 0
    %5341 = vmatprep.subr.bf16.mxu0 0
    %5342 = vmatpush1.bf16.msra.mxu0 0
    %5343 = vmatprep.subr.bf16.mxu0 0
    %5344 = vmatpush1.bf16.msra.mxu0 0
    %5345 = vmatprep.subr.bf16.mxu0 0
    %5346 = vmatpush1.bf16.msra.mxu0 0
    %5347 = vmatprep.subr.bf16.mxu0 0
    %5348 = vmatpush1.bf16.msra.mxu0 0
    %5349 = vmatprep.subr.bf16.mxu0 0
    %5350 = vmatpush1.bf16.msra.mxu0 0
    %5351 = vmatprep.subr.bf16.mxu0 0
    %5352 = vmatpush1.bf16.msra.mxu0 0
    %5353 = vmatprep.subr.bf16.mxu0 0
    %5354 = vmatpush1.bf16.msra.mxu0 0
    %5355 = vmatprep.subr.bf16.mxu0 0
    %5356 = vmatpush1.bf16.msra.mxu0 0
    %5357 = vmatprep.subr.bf16.mxu0 0
    %5358 = vmatpush1.bf16.msra.mxu0 0
    %5359 = vmatprep.subr.bf16.mxu0 0
    %5360 = vmatpush1.bf16.msra.mxu0 0
    %5361 = vmatprep.subr.bf16.mxu0 0
    %5362 = vmatpush1.bf16.msra.mxu0 0
    %5363 = vmatprep.mubr.bf16.mxu0 0
    %5364 = vmatmul.mubr.bf16.gmra.mrb[0].mxu0 %v5329
    %v5365 = vpop.f32.mrb[0].mxu0
    %v5366 = vadd.f32 %v5327, %v5365
    %v5367 = vpop.f32.mrb[0].mxu0
    %v5368 = vpop.f32.mrb[0].mxu0
    %v5369 = vpop.f32.mrb[0].mxu0
    %5370 = vdwg.mxu0
    %v5371 = vadd.f32 %v5366, %v53
    %v5372 = vtanh.pop %v5371
    %v5373 = vpack.c.bf16 %v5372, %v5372
    %v5375 = vsel %vm125, %v5373, 0
    %5377 = vmatprep.subr.bf16.mxu0 0
    %5378 = vmatpush1.bf16.msra.mxu0 %v35
    %5379 = vmatprep.subr.bf16.mxu0 0
    %5380 = vmatpush1.bf16.msra.mxu0 %v36
    %5381 = vmatprep.subr.bf16.mxu0 0
    %5382 = vmatpush1.bf16.msra.mxu0 %v37
    %5383 = vmatprep.subr.bf16.mxu0 0
    %5384 = vmatpush1.bf16.msra.mxu0 %v38
    %5385 = vmatprep.subr.bf16.mxu0 0
    %5386 = vmatpush1.bf16.msra.mxu0 %v39
    %5387 = vmatprep.subr.bf16.mxu0 0
    %5388 = vmatpush1.bf16.msra.mxu0 %v40
    %5389 = vmatprep.subr.bf16.mxu0 0
    %5390 = vmatpush1.bf16.msra.mxu0 0
    %5391 = vmatprep.subr.bf16.mxu0 0
    %5392 = vmatpush1.bf16.msra.mxu0 0
    %5393 = vmatprep.subr.bf16.mxu0 0
    %5394 = vmatpush1.bf16.msra.mxu0 0
    %5395 = vmatprep.subr.bf16.mxu0 0
    %5396 = vmatpush1.bf16.msra.mxu0 0
    %5397 = vmatprep.subr.bf16.mxu0 0
    %5398 = vmatpush1.bf16.msra.mxu0 0
    %5399 = vmatprep.subr.bf16.mxu0 0
    %5400 = vmatpush1.bf16.msra.mxu0 0
    %5401 = vmatprep.subr.bf16.mxu0 0
    %5402 = vmatpush1.bf16.msra.mxu0 0
    %5403 = vmatprep.subr.bf16.mxu0 0
    %5404 = vmatpush1.bf16.msra.mxu0 0
    %5405 = vmatprep.subr.bf16.mxu0 0
    %5406 = vmatpush1.bf16.msra.mxu0 0
    %5407 = vmatprep.subr.bf16.mxu0 0
    %5408 = vmatpush1.bf16.msra.mxu0 0
    %5409 = vmatprep.mubr.bf16.mxu0 0
    %5410 = vmatmul.mubr.bf16.gmra.mrb[0].mxu0 %v5375
    %v5411 = vpop.f32.mrb[0].mxu0
    %v5412 = vadd.f32 0.0, %v5411
    %v5413 = vpop.f32.mrb[0].mxu0
    %v5414 = vpop.f32.mrb[0].mxu0
    %v5415 = vpop.f32.mrb[0].mxu0
    %5416 = vdwg.mxu0
    %v5417 = vmul.f32 %v5225, 2.0
    %v5418 = vadd.f32 %v5130, %v5417
    %v5419 = vmul.f32 %v5317, 2.0
    %v5420 = vadd.f32 %v5418, %v5419
    %v5421 = vadd.f32 %v5420, %v5412
    %v5422 = vmul.f32 %v5421, 0.00925926
    %v5423 = vadd.f32 %v5041, %v5422
    %s5424 = sadd.f32 %s67, 0.77777785
    %v5425 = vpack.c.bf16 %v5423, %v5423
    %v5426 = vstv %s5424
    %v5427 = vmul.f32 %v5426, %v46
    %v5429 = vsel %vm56, %v5425, 0
    %5431 = vmatprep.subr.bf16.mxu0 0
    %5432 = vmatpush1.bf16.msra.mxu0 %v80
    %5433 = vmatprep.subr.bf16.mxu0 0
    %5434 = vmatpush1.bf16.msra.mxu0 0
    %5435 = vmatprep.subr.bf16.mxu0 0
    %5436 = vmatpush1.bf16.msra.mxu0 0
    %5437 = vmatprep.subr.bf16.mxu0 0
    %5438 = vmatpush1.bf16.msra.mxu0 0
    %5439 = vmatprep.subr.bf16.mxu0 0
    %5440 = vmatpush1.bf16.msra.mxu0 0
    %5441 = vmatprep.subr.bf16.mxu0 0
    %5442 = vmatpush1.bf16.msra.mxu0 0
    %5443 = vmatprep.subr.bf16.mxu0 0
    %5444 = vmatpush1.bf16.msra.mxu0 0
    %5445 = vmatprep.subr.bf16.mxu0 0
    %5446 = vmatpush1.bf16.msra.mxu0 0
    %5447 = vmatprep.subr.bf16.mxu0 0
    %5448 = vmatpush1.bf16.msra.mxu0 0
    %5449 = vmatprep.subr.bf16.mxu0 0
    %5450 = vmatpush1.bf16.msra.mxu0 0
    %5451 = vmatprep.subr.bf16.mxu0 0
    %5452 = vmatpush1.bf16.msra.mxu0 0
    %5453 = vmatprep.subr.bf16.mxu0 0
    %5454 = vmatpush1.bf16.msra.mxu0 0
    %5455 = vmatprep.subr.bf16.mxu0 0
    %5456 = vmatpush1.bf16.msra.mxu0 0
    %5457 = vmatprep.subr.bf16.mxu0 0
    %5458 = vmatpush1.bf16.msra.mxu0 0
    %5459 = vmatprep.subr.bf16.mxu0 0
    %5460 = vmatpush1.bf16.msra.mxu0 0
    %5461 = vmatprep.subr.bf16.mxu0 0
    %5462 = vmatpush1.bf16.msra.mxu0 0
    %5463 = vmatprep.mubr.bf16.mxu0 0
    %5464 = vmatmul.mubr.bf16.gmra.mrb[0].mxu0 %v5429
    %v5465 = vpop.f32.mrb[0].mxu0
    %v5466 = vadd.f32 %v5427, %v5465
    %v5467 = vpop.f32.mrb[0].mxu0
    %v5468 = vpop.f32.mrb[0].mxu0
    %v5469 = vpop.f32.mrb[0].mxu0
    %5470 = vdwg.mxu0
    %v5471 = vadd.f32 %v5466, %v53
    %v5472 = vtanh.pop %v5471
    %v5473 = vpack.c.bf16 %v5472, %v5472
    %v5475 = vsel %vm125, %v5473, 0
    %5477 = vmatprep.subr.bf16.mxu0 0
    %5478 = vmatpush1.bf16.msra.mxu0 %v35
    %5479 = vmatprep.subr.bf16.mxu0 0
    %5480 = vmatpush1.bf16.msra.mxu0 %v36
    %5481 = vmatprep.subr.bf16.mxu0 0
    %5482 = vmatpush1.bf16.msra.mxu0 %v37
    %5483 = vmatprep.subr.bf16.mxu0 0
    %5484 = vmatpush1.bf16.msra.mxu0 %v38
    %5485 = vmatprep.subr.bf16.mxu0 0
    %5486 = vmatpush1.bf16.msra.mxu0 %v39
    %5487 = vmatprep.subr.bf16.mxu0 0
    %5488 = vmatpush1.bf16.msra.mxu0 %v40
    %5489 = vmatprep.subr.bf16.mxu0 0
    %5490 = vmatpush1.bf16.msra.mxu0 0
    %5491 = vmatprep.subr.bf16.mxu0 0
    %5492 = vmatpush1.bf16.msra.mxu0 0
    %5493 = vmatprep.subr.bf16.mxu0 0
    %5494 = vmatpush1.bf16.msra.mxu0 0
    %5495 = vmatprep.subr.bf16.mxu0 0
    %5496 = vmatpush1.bf16.msra.mxu0 0
    %5497 = vmatprep.subr.bf16.mxu0 0
    %5498 = vmatpush1.bf16.msra.mxu0 0
    %5499 = vmatprep.subr.bf16.mxu0 0
    %5500 = vmatpush1.bf16.msra.mxu0 0
    %5501 = vmatprep.subr.bf16.mxu0 0
    %5502 = vmatpush1.bf16.msra.mxu0 0
    %5503 = vmatprep.subr.bf16.mxu0 0
    %5504 = vmatpush1.bf16.msra.mxu0 0
    %5505 = vmatprep.subr.bf16.mxu0 0
    %5506 = vmatpush1.bf16.msra.mxu0 0
    %5507 = vmatprep.subr.bf16.mxu0 0
    %5508 = vmatpush1.bf16.msra.mxu0 0
    %5509 = vmatprep.mubr.bf16.mxu0 0
    %5510 = vmatmul.mubr.bf16.gmra.mrb[0].mxu0 %v5475
    %v5511 = vpop.f32.mrb[0].mxu0
    %v5512 = vadd.f32 0.0, %v5511
    %v5513 = vpop.f32.mrb[0].mxu0
    %v5514 = vpop.f32.mrb[0].mxu0
    %v5515 = vpop.f32.mrb[0].mxu0
    %5516 = vdwg.mxu0
    %s5517 = sadd.f32 %s5424, 0.02777778
    %v5518 = vmul.f32 %v5512, 0.02777778
    %v5519 = vadd.f32 %v5423, %v5518
    %v5520 = vpack.c.bf16 %v5519, %v5519
    %v5521 = vstv %s5517
    %v5522 = vmul.f32 %v5521, %v46
    %v5524 = vsel %vm56, %v5520, 0
    %5526 = vmatprep.subr.bf16.mxu0 0
    %5527 = vmatpush1.bf16.msra.mxu0 %v80
    %5528 = vmatprep.subr.bf16.mxu0 0
    %5529 = vmatpush1.bf16.msra.mxu0 0
    %5530 = vmatprep.subr.bf16.mxu0 0
    %5531 = vmatpush1.bf16.msra.mxu0 0
    %5532 = vmatprep.subr.bf16.mxu0 0
    %5533 = vmatpush1.bf16.msra.mxu0 0
    %5534 = vmatprep.subr.bf16.mxu0 0
    %5535 = vmatpush1.bf16.msra.mxu0 0
    %5536 = vmatprep.subr.bf16.mxu0 0
    %5537 = vmatpush1.bf16.msra.mxu0 0
    %5538 = vmatprep.subr.bf16.mxu0 0
    %5539 = vmatpush1.bf16.msra.mxu0 0
    %5540 = vmatprep.subr.bf16.mxu0 0
    %5541 = vmatpush1.bf16.msra.mxu0 0
    %5542 = vmatprep.subr.bf16.mxu0 0
    %5543 = vmatpush1.bf16.msra.mxu0 0
    %5544 = vmatprep.subr.bf16.mxu0 0
    %5545 = vmatpush1.bf16.msra.mxu0 0
    %5546 = vmatprep.subr.bf16.mxu0 0
    %5547 = vmatpush1.bf16.msra.mxu0 0
    %5548 = vmatprep.subr.bf16.mxu0 0
    %5549 = vmatpush1.bf16.msra.mxu0 0
    %5550 = vmatprep.subr.bf16.mxu0 0
    %5551 = vmatpush1.bf16.msra.mxu0 0
    %5552 = vmatprep.subr.bf16.mxu0 0
    %5553 = vmatpush1.bf16.msra.mxu0 0
    %5554 = vmatprep.subr.bf16.mxu0 0
    %5555 = vmatpush1.bf16.msra.mxu0 0
    %5556 = vmatprep.subr.bf16.mxu0 0
    %5557 = vmatpush1.bf16.msra.mxu0 0
    %5558 = vmatprep.mubr.bf16.mxu0 0
    %5559 = vmatmul.mubr.bf16.gmra.mrb[0].mxu0 %v5524
    %v5560 = vpop.f32.mrb[0].mxu0
    %v5561 = vadd.f32 %v5522, %v5560
    %v5562 = vpop.f32.mrb[0].mxu0
    %v5563 = vpop.f32.mrb[0].mxu0
    %v5564 = vpop.f32.mrb[0].mxu0
    %5565 = vdwg.mxu0
    %v5566 = vadd.f32 %v5561, %v53
    %v5567 = vtanh.pop %v5566
    %v5568 = vpack.c.bf16 %v5567, %v5567
    %v5570 = vsel %vm125, %v5568, 0
    %5572 = vmatprep.subr.bf16.mxu0 0
    %5573 = vmatpush1.bf16.msra.mxu0 %v35
    %5574 = vmatprep.subr.bf16.mxu0 0
    %5575 = vmatpush1.bf16.msra.mxu0 %v36
    %5576 = vmatprep.subr.bf16.mxu0 0
    %5577 = vmatpush1.bf16.msra.mxu0 %v37
    %5578 = vmatprep.subr.bf16.mxu0 0
    %5579 = vmatpush1.bf16.msra.mxu0 %v38
    %5580 = vmatprep.subr.bf16.mxu0 0
    %5581 = vmatpush1.bf16.msra.mxu0 %v39
    %5582 = vmatprep.subr.bf16.mxu0 0
    %5583 = vmatpush1.bf16.msra.mxu0 %v40
    %5584 = vmatprep.subr.bf16.mxu0 0
    %5585 = vmatpush1.bf16.msra.mxu0 0
    %5586 = vmatprep.subr.bf16.mxu0 0
    %5587 = vmatpush1.bf16.msra.mxu0 0
    %5588 = vmatprep.subr.bf16.mxu0 0
    %5589 = vmatpush1.bf16.msra.mxu0 0
    %5590 = vmatprep.subr.bf16.mxu0 0
    %5591 = vmatpush1.bf16.msra.mxu0 0
    %5592 = vmatprep.subr.bf16.mxu0 0
    %5593 = vmatpush1.bf16.msra.mxu0 0
    %5594 = vmatprep.subr.bf16.mxu0 0
    %5595 = vmatpush1.bf16.msra.mxu0 0
    %5596 = vmatprep.subr.bf16.mxu0 0
    %5597 = vmatpush1.bf16.msra.mxu0 0
    %5598 = vmatprep.subr.bf16.mxu0 0
    %5599 = vmatpush1.bf16.msra.mxu0 0
    %5600 = vmatprep.subr.bf16.mxu0 0
    %5601 = vmatpush1.bf16.msra.mxu0 0
    %5602 = vmatprep.subr.bf16.mxu0 0
    %5603 = vmatpush1.bf16.msra.mxu0 0
    %5604 = vmatprep.mubr.bf16.mxu0 0
    %5605 = vmatmul.mubr.bf16.gmra.mrb[0].mxu0 %v5570
    %v5606 = vpop.f32.mrb[0].mxu0
    %v5607 = vadd.f32 0.0, %v5606
    %v5608 = vpop.f32.mrb[0].mxu0
    %v5609 = vpop.f32.mrb[0].mxu0
    %v5610 = vpop.f32.mrb[0].mxu0
    %5611 = vdwg.mxu0
    %v5612 = vmul.f32 %v5607, 0.02777778
    %v5613 = vadd.f32 %v5423, %v5612
    %v5614 = vpack.c.bf16 %v5613, %v5613
    %v5616 = vsel %vm56, %v5614, 0
    %5618 = vmatprep.subr.bf16.mxu0 0
    %5619 = vmatpush1.bf16.msra.mxu0 %v80
    %5620 = vmatprep.subr.bf16.mxu0 0
    %5621 = vmatpush1.bf16.msra.mxu0 0
    %5622 = vmatprep.subr.bf16.mxu0 0
    %5623 = vmatpush1.bf16.msra.mxu0 0
    %5624 = vmatprep.subr.bf16.mxu0 0
    %5625 = vmatpush1.bf16.msra.mxu0 0
    %5626 = vmatprep.subr.bf16.mxu0 0
    %5627 = vmatpush1.bf16.msra.mxu0 0
    %5628 = vmatprep.subr.bf16.mxu0 0
    %5629 = vmatpush1.bf16.msra.mxu0 0
    %5630 = vmatprep.subr.bf16.mxu0 0
    %5631 = vmatpush1.bf16.msra.mxu0 0
    %5632 = vmatprep.subr.bf16.mxu0 0
    %5633 = vmatpush1.bf16.msra.mxu0 0
    %5634 = vmatprep.subr.bf16.mxu0 0
    %5635 = vmatpush1.bf16.msra.mxu0 0
    %5636 = vmatprep.subr.bf16.mxu0 0
    %5637 = vmatpush1.bf16.msra.mxu0 0
    %5638 = vmatprep.subr.bf16.mxu0 0
    %5639 = vmatpush1.bf16.msra.mxu0 0
    %5640 = vmatprep.subr.bf16.mxu0 0
    %5641 = vmatpush1.bf16.msra.mxu0 0
    %5642 = vmatprep.subr.bf16.mxu0 0
    %5643 = vmatpush1.bf16.msra.mxu0 0
    %5644 = vmatprep.subr.bf16.mxu0 0
    %5645 = vmatpush1.bf16.msra.mxu0 0
    %5646 = vmatprep.subr.bf16.mxu0 0
    %5647 = vmatpush1.bf16.msra.mxu0 0
    %5648 = vmatprep.subr.bf16.mxu0 0
    %5649 = vmatpush1.bf16.msra.mxu0 0
    %5650 = vmatprep.mubr.bf16.mxu0 0
    %5651 = vmatmul.mubr.bf16.gmra.mrb[0].mxu0 %v5616
    %v5652 = vpop.f32.mrb[0].mxu0
    %v5653 = vadd.f32 %v5522, %v5652
    %v5654 = vpop.f32.mrb[0].mxu0
    %v5655 = vpop.f32.mrb[0].mxu0
    %v5656 = vpop.f32.mrb[0].mxu0
    %5657 = vdwg.mxu0
    %v5658 = vadd.f32 %v5653, %v53
    %v5659 = vtanh.pop %v5658
    %v5660 = vpack.c.bf16 %v5659, %v5659
    %v5662 = vsel %vm125, %v5660, 0
    %5664 = vmatprep.subr.bf16.mxu0 0
    %5665 = vmatpush1.bf16.msra.mxu0 %v35
    %5666 = vmatprep.subr.bf16.mxu0 0
    %5667 = vmatpush1.bf16.msra.mxu0 %v36
    %5668 = vmatprep.subr.bf16.mxu0 0
    %5669 = vmatpush1.bf16.msra.mxu0 %v37
    %5670 = vmatprep.subr.bf16.mxu0 0
    %5671 = vmatpush1.bf16.msra.mxu0 %v38
    %5672 = vmatprep.subr.bf16.mxu0 0
    %5673 = vmatpush1.bf16.msra.mxu0 %v39
    %5674 = vmatprep.subr.bf16.mxu0 0
    %5675 = vmatpush1.bf16.msra.mxu0 %v40
    %5676 = vmatprep.subr.bf16.mxu0 0
    %5677 = vmatpush1.bf16.msra.mxu0 0
    %5678 = vmatprep.subr.bf16.mxu0 0
    %5679 = vmatpush1.bf16.msra.mxu0 0
    %5680 = vmatprep.subr.bf16.mxu0 0
    %5681 = vmatpush1.bf16.msra.mxu0 0
    %5682 = vmatprep.subr.bf16.mxu0 0
    %5683 = vmatpush1.bf16.msra.mxu0 0
    %5684 = vmatprep.subr.bf16.mxu0 0
    %5685 = vmatpush1.bf16.msra.mxu0 0
    %5686 = vmatprep.subr.bf16.mxu0 0
    %5687 = vmatpush1.bf16.msra.mxu0 0
    %5688 = vmatprep.subr.bf16.mxu0 0
    %5689 = vmatpush1.bf16.msra.mxu0 0
    %5690 = vmatprep.subr.bf16.mxu0 0
    %5691 = vmatpush1.bf16.msra.mxu0 0
    %5692 = vmatprep.subr.bf16.mxu0 0
    %5693 = vmatpush1.bf16.msra.mxu0 0
    %5694 = vmatprep.subr.bf16.mxu0 0
    %5695 = vmatpush1.bf16.msra.mxu0 0
    %5696 = vmatprep.mubr.bf16.mxu0 0
    %5697 = vmatmul.mubr.bf16.gmra.mrb[0].mxu0 %v5662
    %v5698 = vpop.f32.mrb[0].mxu0
    %v5699 = vadd.f32 0.0, %v5698
    %v5700 = vpop.f32.mrb[0].mxu0
    %v5701 = vpop.f32.mrb[0].mxu0
    %v5702 = vpop.f32.mrb[0].mxu0
    %5703 = vdwg.mxu0
    %s5704 = sadd.f32 %s5424, 0.05555556
    %v5705 = vmul.f32 %v5699, 0.05555556
    %v5706 = vadd.f32 %v5423, %v5705
    %v5707 = vpack.c.bf16 %v5706, %v5706
    %v5708 = vstv %s5704
    %v5709 = vmul.f32 %v5708, %v46
    %v5711 = vsel %vm56, %v5707, 0
    %5713 = vmatprep.subr.bf16.mxu0 0
    %5714 = vmatpush1.bf16.msra.mxu0 %v80
    %5715 = vmatprep.subr.bf16.mxu0 0
    %5716 = vmatpush1.bf16.msra.mxu0 0
    %5717 = vmatprep.subr.bf16.mxu0 0
    %5718 = vmatpush1.bf16.msra.mxu0 0
    %5719 = vmatprep.subr.bf16.mxu0 0
    %5720 = vmatpush1.bf16.msra.mxu0 0
    %5721 = vmatprep.subr.bf16.mxu0 0
    %5722 = vmatpush1.bf16.msra.mxu0 0
    %5723 = vmatprep.subr.bf16.mxu0 0
    %5724 = vmatpush1.bf16.msra.mxu0 0
    %5725 = vmatprep.subr.bf16.mxu0 0
    %5726 = vmatpush1.bf16.msra.mxu0 0
    %5727 = vmatprep.subr.bf16.mxu0 0
    %5728 = vmatpush1.bf16.msra.mxu0 0
    %5729 = vmatprep.subr.bf16.mxu0 0
    %5730 = vmatpush1.bf16.msra.mxu0 0
    %5731 = vmatprep.subr.bf16.mxu0 0
    %5732 = vmatpush1.bf16.msra.mxu0 0
    %5733 = vmatprep.subr.bf16.mxu0 0
    %5734 = vmatpush1.bf16.msra.mxu0 0
    %5735 = vmatprep.subr.bf16.mxu0 0
    %5736 = vmatpush1.bf16.msra.mxu0 0
    %5737 = vmatprep.subr.bf16.mxu0 0
    %5738 = vmatpush1.bf16.msra.mxu0 0
    %5739 = vmatprep.subr.bf16.mxu0 0
    %5740 = vmatpush1.bf16.msra.mxu0 0
    %5741 = vmatprep.subr.bf16.mxu0 0
    %5742 = vmatpush1.bf16.msra.mxu0 0
    %5743 = vmatprep.subr.bf16.mxu0 0
    %5744 = vmatpush1.bf16.msra.mxu0 0
    %5745 = vmatprep.mubr.bf16.mxu0 0
    %5746 = vmatmul.mubr.bf16.gmra.mrb[0].mxu0 %v5711
    %v5747 = vpop.f32.mrb[0].mxu0
    %v5748 = vadd.f32 %v5709, %v5747
    %v5749 = vpop.f32.mrb[0].mxu0
    %v5750 = vpop.f32.mrb[0].mxu0
    %v5751 = vpop.f32.mrb[0].mxu0
    %5752 = vdwg.mxu0
    %v5753 = vadd.f32 %v5748, %v53
    %v5754 = vtanh.pop %v5753
    %v5755 = vpack.c.bf16 %v5754, %v5754
    %v5757 = vsel %vm125, %v5755, 0
    %5759 = vmatprep.subr.bf16.mxu0 0
    %5760 = vmatpush1.bf16.msra.mxu0 %v35
    %5761 = vmatprep.subr.bf16.mxu0 0
    %5762 = vmatpush1.bf16.msra.mxu0 %v36
    %5763 = vmatprep.subr.bf16.mxu0 0
    %5764 = vmatpush1.bf16.msra.mxu0 %v37
    %5765 = vmatprep.subr.bf16.mxu0 0
    %5766 = vmatpush1.bf16.msra.mxu0 %v38
    %5767 = vmatprep.subr.bf16.mxu0 0
    %5768 = vmatpush1.bf16.msra.mxu0 %v39
    %5769 = vmatprep.subr.bf16.mxu0 0
    %5770 = vmatpush1.bf16.msra.mxu0 %v40
    %5771 = vmatprep.subr.bf16.mxu0 0
    %5772 = vmatpush1.bf16.msra.mxu0 0
    %5773 = vmatprep.subr.bf16.mxu0 0
    %5774 = vmatpush1.bf16.msra.mxu0 0
    %5775 = vmatprep.subr.bf16.mxu0 0
    %5776 = vmatpush1.bf16.msra.mxu0 0
    %5777 = vmatprep.subr.bf16.mxu0 0
    %5778 = vmatpush1.bf16.msra.mxu0 0
    %5779 = vmatprep.subr.bf16.mxu0 0
    %5780 = vmatpush1.bf16.msra.mxu0 0
    %5781 = vmatprep.subr.bf16.mxu0 0
    %5782 = vmatpush1.bf16.msra.mxu0 0
    %5783 = vmatprep.subr.bf16.mxu0 0
    %5784 = vmatpush1.bf16.msra.mxu0 0
    %5785 = vmatprep.subr.bf16.mxu0 0
    %5786 = vmatpush1.bf16.msra.mxu0 0
    %5787 = vmatprep.subr.bf16.mxu0 0
    %5788 = vmatpush1.bf16.msra.mxu0 0
    %5789 = vmatprep.subr.bf16.mxu0 0
    %5790 = vmatpush1.bf16.msra.mxu0 0
    %5791 = vmatprep.mubr.bf16.mxu0 0
    %5792 = vmatmul.mubr.bf16.gmra.mrb[0].mxu0 %v5757
    %v5793 = vpop.f32.mrb[0].mxu0
    %v5794 = vadd.f32 0.0, %v5793
    %v5795 = vpop.f32.mrb[0].mxu0
    %v5796 = vpop.f32.mrb[0].mxu0
    %v5797 = vpop.f32.mrb[0].mxu0
    %5798 = vdwg.mxu0
    %v5799 = vmul.f32 %v5607, 2.0
    %v5800 = vadd.f32 %v5512, %v5799
    %v5801 = vmul.f32 %v5699, 2.0
    %v5802 = vadd.f32 %v5800, %v5801
    %v5803 = vadd.f32 %v5802, %v5794
    %v5804 = vmul.f32 %v5803, 0.00925926
    %v5805 = vadd.f32 %v5423, %v5804
    %s5806 = sadd.f32 %s67, 0.8333334
    %v5807 = vpack.c.bf16 %v5805, %v5805
    %v5808 = vstv %s5806
    %v5809 = vmul.f32 %v5808, %v46
    %v5811 = vsel %vm56, %v5807, 0
    %5813 = vmatprep.subr.bf16.mxu0 0
    %5814 = vmatpush1.bf16.msra.mxu0 %v80
    %5815 = vmatprep.subr.bf16.mxu0 0
    %5816 = vmatpush1.bf16.msra.mxu0 0
    %5817 = vmatprep.subr.bf16.mxu0 0
    %5818 = vmatpush1.bf16.msra.mxu0 0
    %5819 = vmatprep.subr.bf16.mxu0 0
    %5820 = vmatpush1.bf16.msra.mxu0 0
    %5821 = vmatprep.subr.bf16.mxu0 0
    %5822 = vmatpush1.bf16.msra.mxu0 0
    %5823 = vmatprep.subr.bf16.mxu0 0
    %5824 = vmatpush1.bf16.msra.mxu0 0
    %5825 = vmatprep.subr.bf16.mxu0 0
    %5826 = vmatpush1.bf16.msra.mxu0 0
    %5827 = vmatprep.subr.bf16.mxu0 0
    %5828 = vmatpush1.bf16.msra.mxu0 0
    %5829 = vmatprep.subr.bf16.mxu0 0
    %5830 = vmatpush1.bf16.msra.mxu0 0
    %5831 = vmatprep.subr.bf16.mxu0 0
    %5832 = vmatpush1.bf16.msra.mxu0 0
    %5833 = vmatprep.subr.bf16.mxu0 0
    %5834 = vmatpush1.bf16.msra.mxu0 0
    %5835 = vmatprep.subr.bf16.mxu0 0
    %5836 = vmatpush1.bf16.msra.mxu0 0
    %5837 = vmatprep.subr.bf16.mxu0 0
    %5838 = vmatpush1.bf16.msra.mxu0 0
    %5839 = vmatprep.subr.bf16.mxu0 0
    %5840 = vmatpush1.bf16.msra.mxu0 0
    %5841 = vmatprep.subr.bf16.mxu0 0
    %5842 = vmatpush1.bf16.msra.mxu0 0
    %5843 = vmatprep.subr.bf16.mxu0 0
    %5844 = vmatpush1.bf16.msra.mxu0 0
    %5845 = vmatprep.mubr.bf16.mxu0 0
    %5846 = vmatmul.mubr.bf16.gmra.mrb[0].mxu0 %v5811
    %v5847 = vpop.f32.mrb[0].mxu0
    %v5848 = vadd.f32 %v5809, %v5847
    %v5849 = vpop.f32.mrb[0].mxu0
    %v5850 = vpop.f32.mrb[0].mxu0
    %v5851 = vpop.f32.mrb[0].mxu0
    %5852 = vdwg.mxu0
    %v5853 = vadd.f32 %v5848, %v53
    %v5854 = vtanh.pop %v5853
    %v5855 = vpack.c.bf16 %v5854, %v5854
    %v5857 = vsel %vm125, %v5855, 0
    %5859 = vmatprep.subr.bf16.mxu0 0
    %5860 = vmatpush1.bf16.msra.mxu0 %v35
    %5861 = vmatprep.subr.bf16.mxu0 0
    %5862 = vmatpush1.bf16.msra.mxu0 %v36
    %5863 = vmatprep.subr.bf16.mxu0 0
    %5864 = vmatpush1.bf16.msra.mxu0 %v37
    %5865 = vmatprep.subr.bf16.mxu0 0
    %5866 = vmatpush1.bf16.msra.mxu0 %v38
    %5867 = vmatprep.subr.bf16.mxu0 0
    %5868 = vmatpush1.bf16.msra.mxu0 %v39
    %5869 = vmatprep.subr.bf16.mxu0 0
    %5870 = vmatpush1.bf16.msra.mxu0 %v40
    %5871 = vmatprep.subr.bf16.mxu0 0
    %5872 = vmatpush1.bf16.msra.mxu0 0
    %5873 = vmatprep.subr.bf16.mxu0 0
    %5874 = vmatpush1.bf16.msra.mxu0 0
    %5875 = vmatprep.subr.bf16.mxu0 0
    %5876 = vmatpush1.bf16.msra.mxu0 0
    %5877 = vmatprep.subr.bf16.mxu0 0
    %5878 = vmatpush1.bf16.msra.mxu0 0
    %5879 = vmatprep.subr.bf16.mxu0 0
    %5880 = vmatpush1.bf16.msra.mxu0 0
    %5881 = vmatprep.subr.bf16.mxu0 0
    %5882 = vmatpush1.bf16.msra.mxu0 0
    %5883 = vmatprep.subr.bf16.mxu0 0
    %5884 = vmatpush1.bf16.msra.mxu0 0
    %5885 = vmatprep.subr.bf16.mxu0 0
    %5886 = vmatpush1.bf16.msra.mxu0 0
    %5887 = vmatprep.subr.bf16.mxu0 0
    %5888 = vmatpush1.bf16.msra.mxu0 0
    %5889 = vmatprep.subr.bf16.mxu0 0
    %5890 = vmatpush1.bf16.msra.mxu0 0
    %5891 = vmatprep.mubr.bf16.mxu0 0
    %5892 = vmatmul.mubr.bf16.gmra.mrb[0].mxu0 %v5857
    %v5893 = vpop.f32.mrb[0].mxu0
    %v5894 = vadd.f32 0.0, %v5893
    %v5895 = vpop.f32.mrb[0].mxu0
    %v5896 = vpop.f32.mrb[0].mxu0
    %v5897 = vpop.f32.mrb[0].mxu0
    %5898 = vdwg.mxu0
    %s5899 = sadd.f32 %s5806, 0.02777778
    %v5900 = vmul.f32 %v5894, 0.02777778
    %v5901 = vadd.f32 %v5805, %v5900
    %v5902 = vpack.c.bf16 %v5901, %v5901
    %v5903 = vstv %s5899
    %v5904 = vmul.f32 %v5903, %v46
    %v5906 = vsel %vm56, %v5902, 0
    %5908 = vmatprep.subr.bf16.mxu0 0
    %5909 = vmatpush1.bf16.msra.mxu0 %v80
    %5910 = vmatprep.subr.bf16.mxu0 0
    %5911 = vmatpush1.bf16.msra.mxu0 0
    %5912 = vmatprep.subr.bf16.mxu0 0
    %5913 = vmatpush1.bf16.msra.mxu0 0
    %5914 = vmatprep.subr.bf16.mxu0 0
    %5915 = vmatpush1.bf16.msra.mxu0 0
    %5916 = vmatprep.subr.bf16.mxu0 0
    %5917 = vmatpush1.bf16.msra.mxu0 0
    %5918 = vmatprep.subr.bf16.mxu0 0
    %5919 = vmatpush1.bf16.msra.mxu0 0
    %5920 = vmatprep.subr.bf16.mxu0 0
    %5921 = vmatpush1.bf16.msra.mxu0 0
    %5922 = vmatprep.subr.bf16.mxu0 0
    %5923 = vmatpush1.bf16.msra.mxu0 0
    %5924 = vmatprep.subr.bf16.mxu0 0
    %5925 = vmatpush1.bf16.msra.mxu0 0
    %5926 = vmatprep.subr.bf16.mxu0 0
    %5927 = vmatpush1.bf16.msra.mxu0 0
    %5928 = vmatprep.subr.bf16.mxu0 0
    %5929 = vmatpush1.bf16.msra.mxu0 0
    %5930 = vmatprep.subr.bf16.mxu0 0
    %5931 = vmatpush1.bf16.msra.mxu0 0
    %5932 = vmatprep.subr.bf16.mxu0 0
    %5933 = vmatpush1.bf16.msra.mxu0 0
    %5934 = vmatprep.subr.bf16.mxu0 0
    %5935 = vmatpush1.bf16.msra.mxu0 0
    %5936 = vmatprep.subr.bf16.mxu0 0
    %5937 = vmatpush1.bf16.msra.mxu0 0
    %5938 = vmatprep.subr.bf16.mxu0 0
    %5939 = vmatpush1.bf16.msra.mxu0 0
    %5940 = vmatprep.mubr.bf16.mxu0 0
    %5941 = vmatmul.mubr.bf16.gmra.mrb[0].mxu0 %v5906
    %v5942 = vpop.f32.mrb[0].mxu0
    %v5943 = vadd.f32 %v5904, %v5942
    %v5944 = vpop.f32.mrb[0].mxu0
    %v5945 = vpop.f32.mrb[0].mxu0
    %v5946 = vpop.f32.mrb[0].mxu0
    %5947 = vdwg.mxu0
    %v5948 = vadd.f32 %v5943, %v53
    %v5949 = vtanh.pop %v5948
    %v5950 = vpack.c.bf16 %v5949, %v5949
    %v5952 = vsel %vm125, %v5950, 0
    %5954 = vmatprep.subr.bf16.mxu0 0
    %5955 = vmatpush1.bf16.msra.mxu0 %v35
    %5956 = vmatprep.subr.bf16.mxu0 0
    %5957 = vmatpush1.bf16.msra.mxu0 %v36
    %5958 = vmatprep.subr.bf16.mxu0 0
    %5959 = vmatpush1.bf16.msra.mxu0 %v37
    %5960 = vmatprep.subr.bf16.mxu0 0
    %5961 = vmatpush1.bf16.msra.mxu0 %v38
    %5962 = vmatprep.subr.bf16.mxu0 0
    %5963 = vmatpush1.bf16.msra.mxu0 %v39
    %5964 = vmatprep.subr.bf16.mxu0 0
    %5965 = vmatpush1.bf16.msra.mxu0 %v40
    %5966 = vmatprep.subr.bf16.mxu0 0
    %5967 = vmatpush1.bf16.msra.mxu0 0
    %5968 = vmatprep.subr.bf16.mxu0 0
    %5969 = vmatpush1.bf16.msra.mxu0 0
    %5970 = vmatprep.subr.bf16.mxu0 0
    %5971 = vmatpush1.bf16.msra.mxu0 0
    %5972 = vmatprep.subr.bf16.mxu0 0
    %5973 = vmatpush1.bf16.msra.mxu0 0
    %5974 = vmatprep.subr.bf16.mxu0 0
    %5975 = vmatpush1.bf16.msra.mxu0 0
    %5976 = vmatprep.subr.bf16.mxu0 0
    %5977 = vmatpush1.bf16.msra.mxu0 0
    %5978 = vmatprep.subr.bf16.mxu0 0
    %5979 = vmatpush1.bf16.msra.mxu0 0
    %5980 = vmatprep.subr.bf16.mxu0 0
    %5981 = vmatpush1.bf16.msra.mxu0 0
    %5982 = vmatprep.subr.bf16.mxu0 0
    %5983 = vmatpush1.bf16.msra.mxu0 0
    %5984 = vmatprep.subr.bf16.mxu0 0
    %5985 = vmatpush1.bf16.msra.mxu0 0
    %5986 = vmatprep.mubr.bf16.mxu0 0
    %5987 = vmatmul.mubr.bf16.gmra.mrb[0].mxu0 %v5952
    %v5988 = vpop.f32.mrb[0].mxu0
    %v5989 = vadd.f32 0.0, %v5988
    %v5990 = vpop.f32.mrb[0].mxu0
    %v5991 = vpop.f32.mrb[0].mxu0
    %v5992 = vpop.f32.mrb[0].mxu0
    %5993 = vdwg.mxu0
    %v5994 = vmul.f32 %v5989, 0.02777778
    %v5995 = vadd.f32 %v5805, %v5994
    %v5996 = vpack.c.bf16 %v5995, %v5995
    %v5998 = vsel %vm56, %v5996, 0
    %6000 = vmatprep.subr.bf16.mxu0 0
    %6001 = vmatpush1.bf16.msra.mxu0 %v80
    %6002 = vmatprep.subr.bf16.mxu0 0
    %6003 = vmatpush1.bf16.msra.mxu0 0
    %6004 = vmatprep.subr.bf16.mxu0 0
    %6005 = vmatpush1.bf16.msra.mxu0 0
    %6006 = vmatprep.subr.bf16.mxu0 0
    %6007 = vmatpush1.bf16.msra.mxu0 0
    %6008 = vmatprep.subr.bf16.mxu0 0
    %6009 = vmatpush1.bf16.msra.mxu0 0
    %6010 = vmatprep.subr.bf16.mxu0 0
    %6011 = vmatpush1.bf16.msra.mxu0 0
    %6012 = vmatprep.subr.bf16.mxu0 0
    %6013 = vmatpush1.bf16.msra.mxu0 0
    %6014 = vmatprep.subr.bf16.mxu0 0
    %6015 = vmatpush1.bf16.msra.mxu0 0
    %6016 = vmatprep.subr.bf16.mxu0 0
    %6017 = vmatpush1.bf16.msra.mxu0 0
    %6018 = vmatprep.subr.bf16.mxu0 0
    %6019 = vmatpush1.bf16.msra.mxu0 0
    %6020 = vmatprep.subr.bf16.mxu0 0
    %6021 = vmatpush1.bf16.msra.mxu0 0
    %6022 = vmatprep.subr.bf16.mxu0 0
    %6023 = vmatpush1.bf16.msra.mxu0 0
    %6024 = vmatprep.subr.bf16.mxu0 0
    %6025 = vmatpush1.bf16.msra.mxu0 0
    %6026 = vmatprep.subr.bf16.mxu0 0
    %6027 = vmatpush1.bf16.msra.mxu0 0
    %6028 = vmatprep.subr.bf16.mxu0 0
    %6029 = vmatpush1.bf16.msra.mxu0 0
    %6030 = vmatprep.subr.bf16.mxu0 0
    %6031 = vmatpush1.bf16.msra.mxu0 0
    %6032 = vmatprep.mubr.bf16.mxu0 0
    %6033 = vmatmul.mubr.bf16.gmra.mrb[0].mxu0 %v5998
    %v6034 = vpop.f32.mrb[0].mxu0
    %v6035 = vadd.f32 %v5904, %v6034
    %v6036 = vpop.f32.mrb[0].mxu0
    %v6037 = vpop.f32.mrb[0].mxu0
    %v6038 = vpop.f32.mrb[0].mxu0
    %6039 = vdwg.mxu0
    %v6040 = vadd.f32 %v6035, %v53
    %v6041 = vtanh.pop %v6040
    %v6042 = vpack.c.bf16 %v6041, %v6041
    %v6044 = vsel %vm125, %v6042, 0
    %6046 = vmatprep.subr.bf16.mxu0 0
    %6047 = vmatpush1.bf16.msra.mxu0 %v35
    %6048 = vmatprep.subr.bf16.mxu0 0
    %6049 = vmatpush1.bf16.msra.mxu0 %v36
    %6050 = vmatprep.subr.bf16.mxu0 0
    %6051 = vmatpush1.bf16.msra.mxu0 %v37
    %6052 = vmatprep.subr.bf16.mxu0 0
    %6053 = vmatpush1.bf16.msra.mxu0 %v38
    %6054 = vmatprep.subr.bf16.mxu0 0
    %6055 = vmatpush1.bf16.msra.mxu0 %v39
    %6056 = vmatprep.subr.bf16.mxu0 0
    %6057 = vmatpush1.bf16.msra.mxu0 %v40
    %6058 = vmatprep.subr.bf16.mxu0 0
    %6059 = vmatpush1.bf16.msra.mxu0 0
    %6060 = vmatprep.subr.bf16.mxu0 0
    %6061 = vmatpush1.bf16.msra.mxu0 0
    %6062 = vmatprep.subr.bf16.mxu0 0
    %6063 = vmatpush1.bf16.msra.mxu0 0
    %6064 = vmatprep.subr.bf16.mxu0 0
    %6065 = vmatpush1.bf16.msra.mxu0 0
    %6066 = vmatprep.subr.bf16.mxu0 0
    %6067 = vmatpush1.bf16.msra.mxu0 0
    %6068 = vmatprep.subr.bf16.mxu0 0
    %6069 = vmatpush1.bf16.msra.mxu0 0
    %6070 = vmatprep.subr.bf16.mxu0 0
    %6071 = vmatpush1.bf16.msra.mxu0 0
    %6072 = vmatprep.subr.bf16.mxu0 0
    %6073 = vmatpush1.bf16.msra.mxu0 0
    %6074 = vmatprep.subr.bf16.mxu0 0
    %6075 = vmatpush1.bf16.msra.mxu0 0
    %6076 = vmatprep.subr.bf16.mxu0 0
    %6077 = vmatpush1.bf16.msra.mxu0 0
    %6078 = vmatprep.mubr.bf16.mxu0 0
    %6079 = vmatmul.mubr.bf16.gmra.mrb[0].mxu0 %v6044
    %v6080 = vpop.f32.mrb[0].mxu0
    %v6081 = vadd.f32 0.0, %v6080
    %v6082 = vpop.f32.mrb[0].mxu0
    %v6083 = vpop.f32.mrb[0].mxu0
    %v6084 = vpop.f32.mrb[0].mxu0
    %6085 = vdwg.mxu0
    %s6086 = sadd.f32 %s5806, 0.05555556
    %v6087 = vmul.f32 %v6081, 0.05555556
    %v6088 = vadd.f32 %v5805, %v6087
    %v6089 = vpack.c.bf16 %v6088, %v6088
    %v6090 = vstv %s6086
    %v6091 = vmul.f32 %v6090, %v46
    %v6093 = vsel %vm56, %v6089, 0
    %6095 = vmatprep.subr.bf16.mxu0 0
    %6096 = vmatpush1.bf16.msra.mxu0 %v80
    %6097 = vmatprep.subr.bf16.mxu0 0
    %6098 = vmatpush1.bf16.msra.mxu0 0
    %6099 = vmatprep.subr.bf16.mxu0 0
    %6100 = vmatpush1.bf16.msra.mxu0 0
    %6101 = vmatprep.subr.bf16.mxu0 0
    %6102 = vmatpush1.bf16.msra.mxu0 0
    %6103 = vmatprep.subr.bf16.mxu0 0
    %6104 = vmatpush1.bf16.msra.mxu0 0
    %6105 = vmatprep.subr.bf16.mxu0 0
    %6106 = vmatpush1.bf16.msra.mxu0 0
    %6107 = vmatprep.subr.bf16.mxu0 0
    %6108 = vmatpush1.bf16.msra.mxu0 0
    %6109 = vmatprep.subr.bf16.mxu0 0
    %6110 = vmatpush1.bf16.msra.mxu0 0
    %6111 = vmatprep.subr.bf16.mxu0 0
    %6112 = vmatpush1.bf16.msra.mxu0 0
    %6113 = vmatprep.subr.bf16.mxu0 0
    %6114 = vmatpush1.bf16.msra.mxu0 0
    %6115 = vmatprep.subr.bf16.mxu0 0
    %6116 = vmatpush1.bf16.msra.mxu0 0
    %6117 = vmatprep.subr.bf16.mxu0 0
    %6118 = vmatpush1.bf16.msra.mxu0 0
    %6119 = vmatprep.subr.bf16.mxu0 0
    %6120 = vmatpush1.bf16.msra.mxu0 0
    %6121 = vmatprep.subr.bf16.mxu0 0
    %6122 = vmatpush1.bf16.msra.mxu0 0
    %6123 = vmatprep.subr.bf16.mxu0 0
    %6124 = vmatpush1.bf16.msra.mxu0 0
    %6125 = vmatprep.subr.bf16.mxu0 0
    %6126 = vmatpush1.bf16.msra.mxu0 0
    %6127 = vmatprep.mubr.bf16.mxu0 0
    %6128 = vmatmul.mubr.bf16.gmra.mrb[0].mxu0 %v6093
    %v6129 = vpop.f32.mrb[0].mxu0
    %v6130 = vadd.f32 %v6091, %v6129
    %v6131 = vpop.f32.mrb[0].mxu0
    %v6132 = vpop.f32.mrb[0].mxu0
    %v6133 = vpop.f32.mrb[0].mxu0
    %6134 = vdwg.mxu0
    %v6135 = vadd.f32 %v6130, %v53
    %v6136 = vtanh.pop %v6135
    %v6137 = vpack.c.bf16 %v6136, %v6136
    %v6139 = vsel %vm125, %v6137, 0
    %6141 = vmatprep.subr.bf16.mxu0 0
    %6142 = vmatpush1.bf16.msra.mxu0 %v35
    %6143 = vmatprep.subr.bf16.mxu0 0
    %6144 = vmatpush1.bf16.msra.mxu0 %v36
    %6145 = vmatprep.subr.bf16.mxu0 0
    %6146 = vmatpush1.bf16.msra.mxu0 %v37
    %6147 = vmatprep.subr.bf16.mxu0 0
    %6148 = vmatpush1.bf16.msra.mxu0 %v38
    %6149 = vmatprep.subr.bf16.mxu0 0
    %6150 = vmatpush1.bf16.msra.mxu0 %v39
    %6151 = vmatprep.subr.bf16.mxu0 0
    %6152 = vmatpush1.bf16.msra.mxu0 %v40
    %6153 = vmatprep.subr.bf16.mxu0 0
    %6154 = vmatpush1.bf16.msra.mxu0 0
    %6155 = vmatprep.subr.bf16.mxu0 0
    %6156 = vmatpush1.bf16.msra.mxu0 0
    %6157 = vmatprep.subr.bf16.mxu0 0
    %6158 = vmatpush1.bf16.msra.mxu0 0
    %6159 = vmatprep.subr.bf16.mxu0 0
    %6160 = vmatpush1.bf16.msra.mxu0 0
    %6161 = vmatprep.subr.bf16.mxu0 0
    %6162 = vmatpush1.bf16.msra.mxu0 0
    %6163 = vmatprep.subr.bf16.mxu0 0
    %6164 = vmatpush1.bf16.msra.mxu0 0
    %6165 = vmatprep.subr.bf16.mxu0 0
    %6166 = vmatpush1.bf16.msra.mxu0 0
    %6167 = vmatprep.subr.bf16.mxu0 0
    %6168 = vmatpush1.bf16.msra.mxu0 0
    %6169 = vmatprep.subr.bf16.mxu0 0
    %6170 = vmatpush1.bf16.msra.mxu0 0
    %6171 = vmatprep.subr.bf16.mxu0 0
    %6172 = vmatpush1.bf16.msra.mxu0 0
    %6173 = vmatprep.mubr.bf16.mxu0 0
    %6174 = vmatmul.mubr.bf16.gmra.mrb[0].mxu0 %v6139
    %v6175 = vpop.f32.mrb[0].mxu0
    %v6176 = vadd.f32 0.0, %v6175
    %v6177 = vpop.f32.mrb[0].mxu0
    %v6178 = vpop.f32.mrb[0].mxu0
    %v6179 = vpop.f32.mrb[0].mxu0
    %6180 = vdwg.mxu0
    %v6181 = vmul.f32 %v5989, 2.0
    %v6182 = vadd.f32 %v5894, %v6181
    %v6183 = vmul.f32 %v6081, 2.0
    %v6184 = vadd.f32 %v6182, %v6183
    %v6185 = vadd.f32 %v6184, %v6176
    %v6186 = vmul.f32 %v6185, 0.00925926
    %v6187 = vadd.f32 %v5805, %v6186
    %s6188 = sadd.f32 %s67, 0.88888896
    %v6189 = vpack.c.bf16 %v6187, %v6187
    %v6190 = vstv %s6188
    %v6191 = vmul.f32 %v6190, %v46
    %v6193 = vsel %vm56, %v6189, 0
    %6195 = vmatprep.subr.bf16.mxu0 0
    %6196 = vmatpush1.bf16.msra.mxu0 %v80
    %6197 = vmatprep.subr.bf16.mxu0 0
    %6198 = vmatpush1.bf16.msra.mxu0 0
    %6199 = vmatprep.subr.bf16.mxu0 0
    %6200 = vmatpush1.bf16.msra.mxu0 0
    %6201 = vmatprep.subr.bf16.mxu0 0
    %6202 = vmatpush1.bf16.msra.mxu0 0
    %6203 = vmatprep.subr.bf16.mxu0 0
    %6204 = vmatpush1.bf16.msra.mxu0 0
    %6205 = vmatprep.subr.bf16.mxu0 0
    %6206 = vmatpush1.bf16.msra.mxu0 0
    %6207 = vmatprep.subr.bf16.mxu0 0
    %6208 = vmatpush1.bf16.msra.mxu0 0
    %6209 = vmatprep.subr.bf16.mxu0 0
    %6210 = vmatpush1.bf16.msra.mxu0 0
    %6211 = vmatprep.subr.bf16.mxu0 0
    %6212 = vmatpush1.bf16.msra.mxu0 0
    %6213 = vmatprep.subr.bf16.mxu0 0
    %6214 = vmatpush1.bf16.msra.mxu0 0
    %6215 = vmatprep.subr.bf16.mxu0 0
    %6216 = vmatpush1.bf16.msra.mxu0 0
    %6217 = vmatprep.subr.bf16.mxu0 0
    %6218 = vmatpush1.bf16.msra.mxu0 0
    %6219 = vmatprep.subr.bf16.mxu0 0
    %6220 = vmatpush1.bf16.msra.mxu0 0
    %6221 = vmatprep.subr.bf16.mxu0 0
    %6222 = vmatpush1.bf16.msra.mxu0 0
    %6223 = vmatprep.subr.bf16.mxu0 0
    %6224 = vmatpush1.bf16.msra.mxu0 0
    %6225 = vmatprep.subr.bf16.mxu0 0
    %6226 = vmatpush1.bf16.msra.mxu0 0
    %6227 = vmatprep.mubr.bf16.mxu0 0
    %6228 = vmatmul.mubr.bf16.gmra.mrb[0].mxu0 %v6193
    %v6229 = vpop.f32.mrb[0].mxu0
    %v6230 = vadd.f32 %v6191, %v6229
    %v6231 = vpop.f32.mrb[0].mxu0
    %v6232 = vpop.f32.mrb[0].mxu0
    %v6233 = vpop.f32.mrb[0].mxu0
    %6234 = vdwg.mxu0
    %v6235 = vadd.f32 %v6230, %v53
    %v6236 = vtanh.pop %v6235
    %v6237 = vpack.c.bf16 %v6236, %v6236
    %v6239 = vsel %vm125, %v6237, 0
    %6241 = vmatprep.subr.bf16.mxu0 0
    %6242 = vmatpush1.bf16.msra.mxu0 %v35
    %6243 = vmatprep.subr.bf16.mxu0 0
    %6244 = vmatpush1.bf16.msra.mxu0 %v36
    %6245 = vmatprep.subr.bf16.mxu0 0
    %6246 = vmatpush1.bf16.msra.mxu0 %v37
    %6247 = vmatprep.subr.bf16.mxu0 0
    %6248 = vmatpush1.bf16.msra.mxu0 %v38
    %6249 = vmatprep.subr.bf16.mxu0 0
    %6250 = vmatpush1.bf16.msra.mxu0 %v39
    %6251 = vmatprep.subr.bf16.mxu0 0
    %6252 = vmatpush1.bf16.msra.mxu0 %v40
    %6253 = vmatprep.subr.bf16.mxu0 0
    %6254 = vmatpush1.bf16.msra.mxu0 0
    %6255 = vmatprep.subr.bf16.mxu0 0
    %6256 = vmatpush1.bf16.msra.mxu0 0
    %6257 = vmatprep.subr.bf16.mxu0 0
    %6258 = vmatpush1.bf16.msra.mxu0 0
    %6259 = vmatprep.subr.bf16.mxu0 0
    %6260 = vmatpush1.bf16.msra.mxu0 0
    %6261 = vmatprep.subr.bf16.mxu0 0
    %6262 = vmatpush1.bf16.msra.mxu0 0
    %6263 = vmatprep.subr.bf16.mxu0 0
    %6264 = vmatpush1.bf16.msra.mxu0 0
    %6265 = vmatprep.subr.bf16.mxu0 0
    %6266 = vmatpush1.bf16.msra.mxu0 0
    %6267 = vmatprep.subr.bf16.mxu0 0
    %6268 = vmatpush1.bf16.msra.mxu0 0
    %6269 = vmatprep.subr.bf16.mxu0 0
    %6270 = vmatpush1.bf16.msra.mxu0 0
    %6271 = vmatprep.subr.bf16.mxu0 0
    %6272 = vmatpush1.bf16.msra.mxu0 0
    %6273 = vmatprep.mubr.bf16.mxu0 0
    %6274 = vmatmul.mubr.bf16.gmra.mrb[0].mxu0 %v6239
    %v6275 = vpop.f32.mrb[0].mxu0
    %v6276 = vadd.f32 0.0, %v6275
    %v6277 = vpop.f32.mrb[0].mxu0
    %v6278 = vpop.f32.mrb[0].mxu0
    %v6279 = vpop.f32.mrb[0].mxu0
    %6280 = vdwg.mxu0
    %s6281 = sadd.f32 %s6188, 0.02777778
    %v6282 = vmul.f32 %v6276, 0.02777778
    %v6283 = vadd.f32 %v6187, %v6282
    %v6284 = vpack.c.bf16 %v6283, %v6283
    %v6285 = vstv %s6281
    %v6286 = vmul.f32 %v6285, %v46
    %v6288 = vsel %vm56, %v6284, 0
    %6290 = vmatprep.subr.bf16.mxu0 0
    %6291 = vmatpush1.bf16.msra.mxu0 %v80
    %6292 = vmatprep.subr.bf16.mxu0 0
    %6293 = vmatpush1.bf16.msra.mxu0 0
    %6294 = vmatprep.subr.bf16.mxu0 0
    %6295 = vmatpush1.bf16.msra.mxu0 0
    %6296 = vmatprep.subr.bf16.mxu0 0
    %6297 = vmatpush1.bf16.msra.mxu0 0
    %6298 = vmatprep.subr.bf16.mxu0 0
    %6299 = vmatpush1.bf16.msra.mxu0 0
    %6300 = vmatprep.subr.bf16.mxu0 0
    %6301 = vmatpush1.bf16.msra.mxu0 0
    %6302 = vmatprep.subr.bf16.mxu0 0
    %6303 = vmatpush1.bf16.msra.mxu0 0
    %6304 = vmatprep.subr.bf16.mxu0 0
    %6305 = vmatpush1.bf16.msra.mxu0 0
    %6306 = vmatprep.subr.bf16.mxu0 0
    %6307 = vmatpush1.bf16.msra.mxu0 0
    %6308 = vmatprep.subr.bf16.mxu0 0
    %6309 = vmatpush1.bf16.msra.mxu0 0
    %6310 = vmatprep.subr.bf16.mxu0 0
    %6311 = vmatpush1.bf16.msra.mxu0 0
    %6312 = vmatprep.subr.bf16.mxu0 0
    %6313 = vmatpush1.bf16.msra.mxu0 0
    %6314 = vmatprep.subr.bf16.mxu0 0
    %6315 = vmatpush1.bf16.msra.mxu0 0
    %6316 = vmatprep.subr.bf16.mxu0 0
    %6317 = vmatpush1.bf16.msra.mxu0 0
    %6318 = vmatprep.subr.bf16.mxu0 0
    %6319 = vmatpush1.bf16.msra.mxu0 0
    %6320 = vmatprep.subr.bf16.mxu0 0
    %6321 = vmatpush1.bf16.msra.mxu0 0
    %6322 = vmatprep.mubr.bf16.mxu0 0
    %6323 = vmatmul.mubr.bf16.gmra.mrb[0].mxu0 %v6288
    %v6324 = vpop.f32.mrb[0].mxu0
    %v6325 = vadd.f32 %v6286, %v6324
    %v6326 = vpop.f32.mrb[0].mxu0
    %v6327 = vpop.f32.mrb[0].mxu0
    %v6328 = vpop.f32.mrb[0].mxu0
    %6329 = vdwg.mxu0
    %v6330 = vadd.f32 %v6325, %v53
    %v6331 = vtanh.pop %v6330
    %v6332 = vpack.c.bf16 %v6331, %v6331
    %v6334 = vsel %vm125, %v6332, 0
    %6336 = vmatprep.subr.bf16.mxu0 0
    %6337 = vmatpush1.bf16.msra.mxu0 %v35
    %6338 = vmatprep.subr.bf16.mxu0 0
    %6339 = vmatpush1.bf16.msra.mxu0 %v36
    %6340 = vmatprep.subr.bf16.mxu0 0
    %6341 = vmatpush1.bf16.msra.mxu0 %v37
    %6342 = vmatprep.subr.bf16.mxu0 0
    %6343 = vmatpush1.bf16.msra.mxu0 %v38
    %6344 = vmatprep.subr.bf16.mxu0 0
    %6345 = vmatpush1.bf16.msra.mxu0 %v39
    %6346 = vmatprep.subr.bf16.mxu0 0
    %6347 = vmatpush1.bf16.msra.mxu0 %v40
    %6348 = vmatprep.subr.bf16.mxu0 0
    %6349 = vmatpush1.bf16.msra.mxu0 0
    %6350 = vmatprep.subr.bf16.mxu0 0
    %6351 = vmatpush1.bf16.msra.mxu0 0
    %6352 = vmatprep.subr.bf16.mxu0 0
    %6353 = vmatpush1.bf16.msra.mxu0 0
    %6354 = vmatprep.subr.bf16.mxu0 0
    %6355 = vmatpush1.bf16.msra.mxu0 0
    %6356 = vmatprep.subr.bf16.mxu0 0
    %6357 = vmatpush1.bf16.msra.mxu0 0
    %6358 = vmatprep.subr.bf16.mxu0 0
    %6359 = vmatpush1.bf16.msra.mxu0 0
    %6360 = vmatprep.subr.bf16.mxu0 0
    %6361 = vmatpush1.bf16.msra.mxu0 0
    %6362 = vmatprep.subr.bf16.mxu0 0
    %6363 = vmatpush1.bf16.msra.mxu0 0
    %6364 = vmatprep.subr.bf16.mxu0 0
    %6365 = vmatpush1.bf16.msra.mxu0 0
    %6366 = vmatprep.subr.bf16.mxu0 0
    %6367 = vmatpush1.bf16.msra.mxu0 0
    %6368 = vmatprep.mubr.bf16.mxu0 0
    %6369 = vmatmul.mubr.bf16.gmra.mrb[0].mxu0 %v6334
    %v6370 = vpop.f32.mrb[0].mxu0
    %v6371 = vadd.f32 0.0, %v6370
    %v6372 = vpop.f32.mrb[0].mxu0
    %v6373 = vpop.f32.mrb[0].mxu0
    %v6374 = vpop.f32.mrb[0].mxu0
    %6375 = vdwg.mxu0
    %v6376 = vmul.f32 %v6371, 0.02777778
    %v6377 = vadd.f32 %v6187, %v6376
    %v6378 = vpack.c.bf16 %v6377, %v6377
    %v6380 = vsel %vm56, %v6378, 0
    %6382 = vmatprep.subr.bf16.mxu0 0
    %6383 = vmatpush1.bf16.msra.mxu0 %v80
    %6384 = vmatprep.subr.bf16.mxu0 0
    %6385 = vmatpush1.bf16.msra.mxu0 0
    %6386 = vmatprep.subr.bf16.mxu0 0
    %6387 = vmatpush1.bf16.msra.mxu0 0
    %6388 = vmatprep.subr.bf16.mxu0 0
    %6389 = vmatpush1.bf16.msra.mxu0 0
    %6390 = vmatprep.subr.bf16.mxu0 0
    %6391 = vmatpush1.bf16.msra.mxu0 0
    %6392 = vmatprep.subr.bf16.mxu0 0
    %6393 = vmatpush1.bf16.msra.mxu0 0
    %6394 = vmatprep.subr.bf16.mxu0 0
    %6395 = vmatpush1.bf16.msra.mxu0 0
    %6396 = vmatprep.subr.bf16.mxu0 0
    %6397 = vmatpush1.bf16.msra.mxu0 0
    %6398 = vmatprep.subr.bf16.mxu0 0
    %6399 = vmatpush1.bf16.msra.mxu0 0
    %6400 = vmatprep.subr.bf16.mxu0 0
    %6401 = vmatpush1.bf16.msra.mxu0 0
    %6402 = vmatprep.subr.bf16.mxu0 0
    %6403 = vmatpush1.bf16.msra.mxu0 0
    %6404 = vmatprep.subr.bf16.mxu0 0
    %6405 = vmatpush1.bf16.msra.mxu0 0
    %6406 = vmatprep.subr.bf16.mxu0 0
    %6407 = vmatpush1.bf16.msra.mxu0 0
    %6408 = vmatprep.subr.bf16.mxu0 0
    %6409 = vmatpush1.bf16.msra.mxu0 0
    %6410 = vmatprep.subr.bf16.mxu0 0
    %6411 = vmatpush1.bf16.msra.mxu0 0
    %6412 = vmatprep.subr.bf16.mxu0 0
    %6413 = vmatpush1.bf16.msra.mxu0 0
    %6414 = vmatprep.mubr.bf16.mxu0 0
    %6415 = vmatmul.mubr.bf16.gmra.mrb[0].mxu0 %v6380
    %v6416 = vpop.f32.mrb[0].mxu0
    %v6417 = vadd.f32 %v6286, %v6416
    %v6418 = vpop.f32.mrb[0].mxu0
    %v6419 = vpop.f32.mrb[0].mxu0
    %v6420 = vpop.f32.mrb[0].mxu0
    %6421 = vdwg.mxu0
    %v6422 = vadd.f32 %v6417, %v53
    %v6423 = vtanh.pop %v6422
    %v6424 = vpack.c.bf16 %v6423, %v6423
    %v6426 = vsel %vm125, %v6424, 0
    %6428 = vmatprep.subr.bf16.mxu0 0
    %6429 = vmatpush1.bf16.msra.mxu0 %v35
    %6430 = vmatprep.subr.bf16.mxu0 0
    %6431 = vmatpush1.bf16.msra.mxu0 %v36
    %6432 = vmatprep.subr.bf16.mxu0 0
    %6433 = vmatpush1.bf16.msra.mxu0 %v37
    %6434 = vmatprep.subr.bf16.mxu0 0
    %6435 = vmatpush1.bf16.msra.mxu0 %v38
    %6436 = vmatprep.subr.bf16.mxu0 0
    %6437 = vmatpush1.bf16.msra.mxu0 %v39
    %6438 = vmatprep.subr.bf16.mxu0 0
    %6439 = vmatpush1.bf16.msra.mxu0 %v40
    %6440 = vmatprep.subr.bf16.mxu0 0
    %6441 = vmatpush1.bf16.msra.mxu0 0
    %6442 = vmatprep.subr.bf16.mxu0 0
    %6443 = vmatpush1.bf16.msra.mxu0 0
    %6444 = vmatprep.subr.bf16.mxu0 0
    %6445 = vmatpush1.bf16.msra.mxu0 0
    %6446 = vmatprep.subr.bf16.mxu0 0
    %6447 = vmatpush1.bf16.msra.mxu0 0
    %6448 = vmatprep.subr.bf16.mxu0 0
    %6449 = vmatpush1.bf16.msra.mxu0 0
    %6450 = vmatprep.subr.bf16.mxu0 0
    %6451 = vmatpush1.bf16.msra.mxu0 0
    %6452 = vmatprep.subr.bf16.mxu0 0
    %6453 = vmatpush1.bf16.msra.mxu0 0
    %6454 = vmatprep.subr.bf16.mxu0 0
    %6455 = vmatpush1.bf16.msra.mxu0 0
    %6456 = vmatprep.subr.bf16.mxu0 0
    %6457 = vmatpush1.bf16.msra.mxu0 0
    %6458 = vmatprep.subr.bf16.mxu0 0
    %6459 = vmatpush1.bf16.msra.mxu0 0
    %6460 = vmatprep.mubr.bf16.mxu0 0
    %6461 = vmatmul.mubr.bf16.gmra.mrb[0].mxu0 %v6426
    %v6462 = vpop.f32.mrb[0].mxu0
    %v6463 = vadd.f32 0.0, %v6462
    %v6464 = vpop.f32.mrb[0].mxu0
    %v6465 = vpop.f32.mrb[0].mxu0
    %v6466 = vpop.f32.mrb[0].mxu0
    %6467 = vdwg.mxu0
    %s6468 = sadd.f32 %s6188, 0.05555556
    %v6469 = vmul.f32 %v6463, 0.05555556
    %v6470 = vadd.f32 %v6187, %v6469
    %v6471 = vpack.c.bf16 %v6470, %v6470
    %v6472 = vstv %s6468
    %v6473 = vmul.f32 %v6472, %v46
    %v6475 = vsel %vm56, %v6471, 0
    %6477 = vmatprep.subr.bf16.mxu0 0
    %6478 = vmatpush1.bf16.msra.mxu0 %v80
    %6479 = vmatprep.subr.bf16.mxu0 0
    %6480 = vmatpush1.bf16.msra.mxu0 0
    %6481 = vmatprep.subr.bf16.mxu0 0
    %6482 = vmatpush1.bf16.msra.mxu0 0
    %6483 = vmatprep.subr.bf16.mxu0 0
    %6484 = vmatpush1.bf16.msra.mxu0 0
    %6485 = vmatprep.subr.bf16.mxu0 0
    %6486 = vmatpush1.bf16.msra.mxu0 0
    %6487 = vmatprep.subr.bf16.mxu0 0
    %6488 = vmatpush1.bf16.msra.mxu0 0
    %6489 = vmatprep.subr.bf16.mxu0 0
    %6490 = vmatpush1.bf16.msra.mxu0 0
    %6491 = vmatprep.subr.bf16.mxu0 0
    %6492 = vmatpush1.bf16.msra.mxu0 0
    %6493 = vmatprep.subr.bf16.mxu0 0
    %6494 = vmatpush1.bf16.msra.mxu0 0
    %6495 = vmatprep.subr.bf16.mxu0 0
    %6496 = vmatpush1.bf16.msra.mxu0 0
    %6497 = vmatprep.subr.bf16.mxu0 0
    %6498 = vmatpush1.bf16.msra.mxu0 0
    %6499 = vmatprep.subr.bf16.mxu0 0
    %6500 = vmatpush1.bf16.msra.mxu0 0
    %6501 = vmatprep.subr.bf16.mxu0 0
    %6502 = vmatpush1.bf16.msra.mxu0 0
    %6503 = vmatprep.subr.bf16.mxu0 0
    %6504 = vmatpush1.bf16.msra.mxu0 0
    %6505 = vmatprep.subr.bf16.mxu0 0
    %6506 = vmatpush1.bf16.msra.mxu0 0
    %6507 = vmatprep.subr.bf16.mxu0 0
    %6508 = vmatpush1.bf16.msra.mxu0 0
    %6509 = vmatprep.mubr.bf16.mxu0 0
    %6510 = vmatmul.mubr.bf16.gmra.mrb[0].mxu0 %v6475
    %v6511 = vpop.f32.mrb[0].mxu0
    %v6512 = vadd.f32 %v6473, %v6511
    %v6513 = vpop.f32.mrb[0].mxu0
    %v6514 = vpop.f32.mrb[0].mxu0
    %v6515 = vpop.f32.mrb[0].mxu0
    %6516 = vdwg.mxu0
    %v6517 = vadd.f32 %v6512, %v53
    %v6518 = vtanh.pop %v6517
    %v6519 = vpack.c.bf16 %v6518, %v6518
    %v6521 = vsel %vm125, %v6519, 0
    %6523 = vmatprep.subr.bf16.mxu0 0
    %6524 = vmatpush1.bf16.msra.mxu0 %v35
    %6525 = vmatprep.subr.bf16.mxu0 0
    %6526 = vmatpush1.bf16.msra.mxu0 %v36
    %6527 = vmatprep.subr.bf16.mxu0 0
    %6528 = vmatpush1.bf16.msra.mxu0 %v37
    %6529 = vmatprep.subr.bf16.mxu0 0
    %6530 = vmatpush1.bf16.msra.mxu0 %v38
    %6531 = vmatprep.subr.bf16.mxu0 0
    %6532 = vmatpush1.bf16.msra.mxu0 %v39
    %6533 = vmatprep.subr.bf16.mxu0 0
    %6534 = vmatpush1.bf16.msra.mxu0 %v40
    %6535 = vmatprep.subr.bf16.mxu0 0
    %6536 = vmatpush1.bf16.msra.mxu0 0
    %6537 = vmatprep.subr.bf16.mxu0 0
    %6538 = vmatpush1.bf16.msra.mxu0 0
    %6539 = vmatprep.subr.bf16.mxu0 0
    %6540 = vmatpush1.bf16.msra.mxu0 0
    %6541 = vmatprep.subr.bf16.mxu0 0
    %6542 = vmatpush1.bf16.msra.mxu0 0
    %6543 = vmatprep.subr.bf16.mxu0 0
    %6544 = vmatpush1.bf16.msra.mxu0 0
    %6545 = vmatprep.subr.bf16.mxu0 0
    %6546 = vmatpush1.bf16.msra.mxu0 0
    %6547 = vmatprep.subr.bf16.mxu0 0
    %6548 = vmatpush1.bf16.msra.mxu0 0
    %6549 = vmatprep.subr.bf16.mxu0 0
    %6550 = vmatpush1.bf16.msra.mxu0 0
    %6551 = vmatprep.subr.bf16.mxu0 0
    %6552 = vmatpush1.bf16.msra.mxu0 0
    %6553 = vmatprep.subr.bf16.mxu0 0
    %6554 = vmatpush1.bf16.msra.mxu0 0
    %6555 = vmatprep.mubr.bf16.mxu0 0
    %6556 = vmatmul.mubr.bf16.gmra.mrb[0].mxu0 %v6521
    %v6557 = vpop.f32.mrb[0].mxu0
    %v6558 = vadd.f32 0.0, %v6557
    %v6559 = vpop.f32.mrb[0].mxu0
    %v6560 = vpop.f32.mrb[0].mxu0
    %v6561 = vpop.f32.mrb[0].mxu0
    %6562 = vdwg.mxu0
    %v6563 = vmul.f32 %v6371, 2.0
    %v6564 = vadd.f32 %v6276, %v6563
    %v6565 = vmul.f32 %v6463, 2.0
    %v6566 = vadd.f32 %v6564, %v6565
    %v6567 = vadd.f32 %v6566, %v6558
    %v6568 = vmul.f32 %v6567, 0.00925926
    %v6569 = vadd.f32 %v6187, %v6568
    %s6570 = sadd.f32 %s67, 0.94444454
    %v6571 = vpack.c.bf16 %v6569, %v6569
    %v6572 = vstv %s6570
    %v6573 = vmul.f32 %v6572, %v46
    %v6575 = vsel %vm56, %v6571, 0
    %6577 = vmatprep.subr.bf16.mxu0 0
    %6578 = vmatpush1.bf16.msra.mxu0 %v80
    %6579 = vmatprep.subr.bf16.mxu0 0
    %6580 = vmatpush1.bf16.msra.mxu0 0
    %6581 = vmatprep.subr.bf16.mxu0 0
    %6582 = vmatpush1.bf16.msra.mxu0 0
    %6583 = vmatprep.subr.bf16.mxu0 0
    %6584 = vmatpush1.bf16.msra.mxu0 0
    %6585 = vmatprep.subr.bf16.mxu0 0
    %6586 = vmatpush1.bf16.msra.mxu0 0
    %6587 = vmatprep.subr.bf16.mxu0 0
    %6588 = vmatpush1.bf16.msra.mxu0 0
    %6589 = vmatprep.subr.bf16.mxu0 0
    %6590 = vmatpush1.bf16.msra.mxu0 0
    %6591 = vmatprep.subr.bf16.mxu0 0
    %6592 = vmatpush1.bf16.msra.mxu0 0
    %6593 = vmatprep.subr.bf16.mxu0 0
    %6594 = vmatpush1.bf16.msra.mxu0 0
    %6595 = vmatprep.subr.bf16.mxu0 0
    %6596 = vmatpush1.bf16.msra.mxu0 0
    %6597 = vmatprep.subr.bf16.mxu0 0
    %6598 = vmatpush1.bf16.msra.mxu0 0
    %6599 = vmatprep.subr.bf16.mxu0 0
    %6600 = vmatpush1.bf16.msra.mxu0 0
    %6601 = vmatprep.subr.bf16.mxu0 0
    %6602 = vmatpush1.bf16.msra.mxu0 0
    %6603 = vmatprep.subr.bf16.mxu0 0
    %6604 = vmatpush1.bf16.msra.mxu0 0
    %6605 = vmatprep.subr.bf16.mxu0 0
    %6606 = vmatpush1.bf16.msra.mxu0 0
    %6607 = vmatprep.subr.bf16.mxu0 0
    %6608 = vmatpush1.bf16.msra.mxu0 0
    %6609 = vmatprep.mubr.bf16.mxu0 0
    %6610 = vmatmul.mubr.bf16.gmra.mrb[0].mxu0 %v6575
    %v6611 = vpop.f32.mrb[0].mxu0
    %v6612 = vadd.f32 %v6573, %v6611
    %v6613 = vpop.f32.mrb[0].mxu0
    %v6614 = vpop.f32.mrb[0].mxu0
    %v6615 = vpop.f32.mrb[0].mxu0
    %6616 = vdwg.mxu0
    %v6617 = vadd.f32 %v6612, %v53
    %v6618 = vtanh.pop %v6617
    %v6619 = vpack.c.bf16 %v6618, %v6618
    %v6621 = vsel %vm125, %v6619, 0
    %6623 = vmatprep.subr.bf16.mxu0 0
    %6624 = vmatpush1.bf16.msra.mxu0 %v35
    %6625 = vmatprep.subr.bf16.mxu0 0
    %6626 = vmatpush1.bf16.msra.mxu0 %v36
    %6627 = vmatprep.subr.bf16.mxu0 0
    %6628 = vmatpush1.bf16.msra.mxu0 %v37
    %6629 = vmatprep.subr.bf16.mxu0 0
    %6630 = vmatpush1.bf16.msra.mxu0 %v38
    %6631 = vmatprep.subr.bf16.mxu0 0
    %6632 = vmatpush1.bf16.msra.mxu0 %v39
    %6633 = vmatprep.subr.bf16.mxu0 0
    %6634 = vmatpush1.bf16.msra.mxu0 %v40
    %6635 = vmatprep.subr.bf16.mxu0 0
    %6636 = vmatpush1.bf16.msra.mxu0 0
    %6637 = vmatprep.subr.bf16.mxu0 0
    %6638 = vmatpush1.bf16.msra.mxu0 0
    %6639 = vmatprep.subr.bf16.mxu0 0
    %6640 = vmatpush1.bf16.msra.mxu0 0
    %6641 = vmatprep.subr.bf16.mxu0 0
    %6642 = vmatpush1.bf16.msra.mxu0 0
    %6643 = vmatprep.subr.bf16.mxu0 0
    %6644 = vmatpush1.bf16.msra.mxu0 0
    %6645 = vmatprep.subr.bf16.mxu0 0
    %6646 = vmatpush1.bf16.msra.mxu0 0
    %6647 = vmatprep.subr.bf16.mxu0 0
    %6648 = vmatpush1.bf16.msra.mxu0 0
    %6649 = vmatprep.subr.bf16.mxu0 0
    %6650 = vmatpush1.bf16.msra.mxu0 0
    %6651 = vmatprep.subr.bf16.mxu0 0
    %6652 = vmatpush1.bf16.msra.mxu0 0
    %6653 = vmatprep.subr.bf16.mxu0 0
    %6654 = vmatpush1.bf16.msra.mxu0 0
    %6655 = vmatprep.mubr.bf16.mxu0 0
    %6656 = vmatmul.mubr.bf16.gmra.mrb[0].mxu0 %v6621
    %v6657 = vpop.f32.mrb[0].mxu0
    %v6658 = vadd.f32 0.0, %v6657
    %v6659 = vpop.f32.mrb[0].mxu0
    %v6660 = vpop.f32.mrb[0].mxu0
    %v6661 = vpop.f32.mrb[0].mxu0
    %6662 = vdwg.mxu0
    %s6663 = sadd.f32 %s6570, 0.02777778
    %v6664 = vmul.f32 %v6658, 0.02777778
    %v6665 = vadd.f32 %v6569, %v6664
    %v6666 = vpack.c.bf16 %v6665, %v6665
    %v6667 = vstv %s6663
    %v6668 = vmul.f32 %v6667, %v46
    %v6670 = vsel %vm56, %v6666, 0
    %6672 = vmatprep.subr.bf16.mxu0 0
    %6673 = vmatpush1.bf16.msra.mxu0 %v80
    %6674 = vmatprep.subr.bf16.mxu0 0
    %6675 = vmatpush1.bf16.msra.mxu0 0
    %6676 = vmatprep.subr.bf16.mxu0 0
    %6677 = vmatpush1.bf16.msra.mxu0 0
    %6678 = vmatprep.subr.bf16.mxu0 0
    %6679 = vmatpush1.bf16.msra.mxu0 0
    %6680 = vmatprep.subr.bf16.mxu0 0
    %6681 = vmatpush1.bf16.msra.mxu0 0
    %6682 = vmatprep.subr.bf16.mxu0 0
    %6683 = vmatpush1.bf16.msra.mxu0 0
    %6684 = vmatprep.subr.bf16.mxu0 0
    %6685 = vmatpush1.bf16.msra.mxu0 0
    %6686 = vmatprep.subr.bf16.mxu0 0
    %6687 = vmatpush1.bf16.msra.mxu0 0
    %6688 = vmatprep.subr.bf16.mxu0 0
    %6689 = vmatpush1.bf16.msra.mxu0 0
    %6690 = vmatprep.subr.bf16.mxu0 0
    %6691 = vmatpush1.bf16.msra.mxu0 0
    %6692 = vmatprep.subr.bf16.mxu0 0
    %6693 = vmatpush1.bf16.msra.mxu0 0
    %6694 = vmatprep.subr.bf16.mxu0 0
    %6695 = vmatpush1.bf16.msra.mxu0 0
    %6696 = vmatprep.subr.bf16.mxu0 0
    %6697 = vmatpush1.bf16.msra.mxu0 0
    %6698 = vmatprep.subr.bf16.mxu0 0
    %6699 = vmatpush1.bf16.msra.mxu0 0
    %6700 = vmatprep.subr.bf16.mxu0 0
    %6701 = vmatpush1.bf16.msra.mxu0 0
    %6702 = vmatprep.subr.bf16.mxu0 0
    %6703 = vmatpush1.bf16.msra.mxu0 0
    %6704 = vmatprep.mubr.bf16.mxu0 0
    %6705 = vmatmul.mubr.bf16.gmra.mrb[0].mxu0 %v6670
    %v6706 = vpop.f32.mrb[0].mxu0
    %v6707 = vadd.f32 %v6668, %v6706
    %v6708 = vpop.f32.mrb[0].mxu0
    %v6709 = vpop.f32.mrb[0].mxu0
    %v6710 = vpop.f32.mrb[0].mxu0
    %6711 = vdwg.mxu0
    %v6712 = vadd.f32 %v6707, %v53
    %v6713 = vtanh.pop %v6712
    %v6714 = vpack.c.bf16 %v6713, %v6713
    %v6716 = vsel %vm125, %v6714, 0
    %6718 = vmatprep.subr.bf16.mxu0 0
    %6719 = vmatpush1.bf16.msra.mxu0 %v35
    %6720 = vmatprep.subr.bf16.mxu0 0
    %6721 = vmatpush1.bf16.msra.mxu0 %v36
    %6722 = vmatprep.subr.bf16.mxu0 0
    %6723 = vmatpush1.bf16.msra.mxu0 %v37
    %6724 = vmatprep.subr.bf16.mxu0 0
    %6725 = vmatpush1.bf16.msra.mxu0 %v38
    %6726 = vmatprep.subr.bf16.mxu0 0
    %6727 = vmatpush1.bf16.msra.mxu0 %v39
    %6728 = vmatprep.subr.bf16.mxu0 0
    %6729 = vmatpush1.bf16.msra.mxu0 %v40
    %6730 = vmatprep.subr.bf16.mxu0 0
    %6731 = vmatpush1.bf16.msra.mxu0 0
    %6732 = vmatprep.subr.bf16.mxu0 0
    %6733 = vmatpush1.bf16.msra.mxu0 0
    %6734 = vmatprep.subr.bf16.mxu0 0
    %6735 = vmatpush1.bf16.msra.mxu0 0
    %6736 = vmatprep.subr.bf16.mxu0 0
    %6737 = vmatpush1.bf16.msra.mxu0 0
    %6738 = vmatprep.subr.bf16.mxu0 0
    %6739 = vmatpush1.bf16.msra.mxu0 0
    %6740 = vmatprep.subr.bf16.mxu0 0
    %6741 = vmatpush1.bf16.msra.mxu0 0
    %6742 = vmatprep.subr.bf16.mxu0 0
    %6743 = vmatpush1.bf16.msra.mxu0 0
    %6744 = vmatprep.subr.bf16.mxu0 0
    %6745 = vmatpush1.bf16.msra.mxu0 0
    %6746 = vmatprep.subr.bf16.mxu0 0
    %6747 = vmatpush1.bf16.msra.mxu0 0
    %6748 = vmatprep.subr.bf16.mxu0 0
    %6749 = vmatpush1.bf16.msra.mxu0 0
    %6750 = vmatprep.mubr.bf16.mxu0 0
    %6751 = vmatmul.mubr.bf16.gmra.mrb[0].mxu0 %v6716
    %v6752 = vpop.f32.mrb[0].mxu0
    %v6753 = vadd.f32 0.0, %v6752
    %v6754 = vpop.f32.mrb[0].mxu0
    %v6755 = vpop.f32.mrb[0].mxu0
    %v6756 = vpop.f32.mrb[0].mxu0
    %6757 = vdwg.mxu0
    %v6758 = vmul.f32 %v6753, 0.02777778
    %v6759 = vadd.f32 %v6569, %v6758
    %v6760 = vpack.c.bf16 %v6759, %v6759
    %v6762 = vsel %vm56, %v6760, 0
    %6764 = vmatprep.subr.bf16.mxu0 0
    %6765 = vmatpush1.bf16.msra.mxu0 %v80
    %6766 = vmatprep.subr.bf16.mxu0 0
    %6767 = vmatpush1.bf16.msra.mxu0 0
    %6768 = vmatprep.subr.bf16.mxu0 0
    %6769 = vmatpush1.bf16.msra.mxu0 0
    %6770 = vmatprep.subr.bf16.mxu0 0
    %6771 = vmatpush1.bf16.msra.mxu0 0
    %6772 = vmatprep.subr.bf16.mxu0 0
    %6773 = vmatpush1.bf16.msra.mxu0 0
    %6774 = vmatprep.subr.bf16.mxu0 0
    %6775 = vmatpush1.bf16.msra.mxu0 0
    %6776 = vmatprep.subr.bf16.mxu0 0
    %6777 = vmatpush1.bf16.msra.mxu0 0
    %6778 = vmatprep.subr.bf16.mxu0 0
    %6779 = vmatpush1.bf16.msra.mxu0 0
    %6780 = vmatprep.subr.bf16.mxu0 0
    %6781 = vmatpush1.bf16.msra.mxu0 0
    %6782 = vmatprep.subr.bf16.mxu0 0
    %6783 = vmatpush1.bf16.msra.mxu0 0
    %6784 = vmatprep.subr.bf16.mxu0 0
    %6785 = vmatpush1.bf16.msra.mxu0 0
    %6786 = vmatprep.subr.bf16.mxu0 0
    %6787 = vmatpush1.bf16.msra.mxu0 0
    %6788 = vmatprep.subr.bf16.mxu0 0
    %6789 = vmatpush1.bf16.msra.mxu0 0
    %6790 = vmatprep.subr.bf16.mxu0 0
    %6791 = vmatpush1.bf16.msra.mxu0 0
    %6792 = vmatprep.subr.bf16.mxu0 0
    %6793 = vmatpush1.bf16.msra.mxu0 0
    %6794 = vmatprep.subr.bf16.mxu0 0
    %6795 = vmatpush1.bf16.msra.mxu0 0
    %6796 = vmatprep.mubr.bf16.mxu0 0
    %6797 = vmatmul.mubr.bf16.gmra.mrb[0].mxu0 %v6762
    %v6798 = vpop.f32.mrb[0].mxu0
    %v6799 = vadd.f32 %v6668, %v6798
    %v6800 = vpop.f32.mrb[0].mxu0
    %v6801 = vpop.f32.mrb[0].mxu0
    %v6802 = vpop.f32.mrb[0].mxu0
    %6803 = vdwg.mxu0
    %v6804 = vadd.f32 %v6799, %v53
    %v6805 = vtanh.pop %v6804
    %v6806 = vpack.c.bf16 %v6805, %v6805
    %v6808 = vsel %vm125, %v6806, 0
    %6810 = vmatprep.subr.bf16.mxu0 0
    %6811 = vmatpush1.bf16.msra.mxu0 %v35
    %6812 = vmatprep.subr.bf16.mxu0 0
    %6813 = vmatpush1.bf16.msra.mxu0 %v36
    %6814 = vmatprep.subr.bf16.mxu0 0
    %6815 = vmatpush1.bf16.msra.mxu0 %v37
    %6816 = vmatprep.subr.bf16.mxu0 0
    %6817 = vmatpush1.bf16.msra.mxu0 %v38
    %6818 = vmatprep.subr.bf16.mxu0 0
    %6819 = vmatpush1.bf16.msra.mxu0 %v39
    %6820 = vmatprep.subr.bf16.mxu0 0
    %6821 = vmatpush1.bf16.msra.mxu0 %v40
    %6822 = vmatprep.subr.bf16.mxu0 0
    %6823 = vmatpush1.bf16.msra.mxu0 0
    %6824 = vmatprep.subr.bf16.mxu0 0
    %6825 = vmatpush1.bf16.msra.mxu0 0
    %6826 = vmatprep.subr.bf16.mxu0 0
    %6827 = vmatpush1.bf16.msra.mxu0 0
    %6828 = vmatprep.subr.bf16.mxu0 0
    %6829 = vmatpush1.bf16.msra.mxu0 0
    %6830 = vmatprep.subr.bf16.mxu0 0
    %6831 = vmatpush1.bf16.msra.mxu0 0
    %6832 = vmatprep.subr.bf16.mxu0 0
    %6833 = vmatpush1.bf16.msra.mxu0 0
    %6834 = vmatprep.subr.bf16.mxu0 0
    %6835 = vmatpush1.bf16.msra.mxu0 0
    %6836 = vmatprep.subr.bf16.mxu0 0
    %6837 = vmatpush1.bf16.msra.mxu0 0
    %6838 = vmatprep.subr.bf16.mxu0 0
    %6839 = vmatpush1.bf16.msra.mxu0 0
    %6840 = vmatprep.subr.bf16.mxu0 0
    %6841 = vmatpush1.bf16.msra.mxu0 0
    %6842 = vmatprep.mubr.bf16.mxu0 0
    %6843 = vmatmul.mubr.bf16.gmra.mrb[0].mxu0 %v6808
    %v6844 = vpop.f32.mrb[0].mxu0
    %v6845 = vadd.f32 0.0, %v6844
    %v6846 = vpop.f32.mrb[0].mxu0
    %v6847 = vpop.f32.mrb[0].mxu0
    %v6848 = vpop.f32.mrb[0].mxu0
    %6849 = vdwg.mxu0
    %s6850 = sadd.f32 %s6570, 0.05555556
    %v6851 = vmul.f32 %v6845, 0.05555556
    %v6852 = vadd.f32 %v6569, %v6851
    %v6853 = vpack.c.bf16 %v6852, %v6852
    %v6854 = vstv %s6850
    %v6855 = vmul.f32 %v6854, %v46
    %v6857 = vsel %vm56, %v6853, 0
    %6859 = vmatprep.subr.bf16.mxu0 0
    %6860 = vmatpush1.bf16.msra.mxu0 %v80
    %6861 = vmatprep.subr.bf16.mxu0 0
    %6862 = vmatpush1.bf16.msra.mxu0 0
    %6863 = vmatprep.subr.bf16.mxu0 0
    %6864 = vmatpush1.bf16.msra.mxu0 0
    %6865 = vmatprep.subr.bf16.mxu0 0
    %6866 = vmatpush1.bf16.msra.mxu0 0
    %6867 = vmatprep.subr.bf16.mxu0 0
    %6868 = vmatpush1.bf16.msra.mxu0 0
    %6869 = vmatprep.subr.bf16.mxu0 0
    %6870 = vmatpush1.bf16.msra.mxu0 0
    %6871 = vmatprep.subr.bf16.mxu0 0
    %6872 = vmatpush1.bf16.msra.mxu0 0
    %6873 = vmatprep.subr.bf16.mxu0 0
    %6874 = vmatpush1.bf16.msra.mxu0 0
    %6875 = vmatprep.subr.bf16.mxu0 0
    %6876 = vmatpush1.bf16.msra.mxu0 0
    %6877 = vmatprep.subr.bf16.mxu0 0
    %6878 = vmatpush1.bf16.msra.mxu0 0
    %6879 = vmatprep.subr.bf16.mxu0 0
    %6880 = vmatpush1.bf16.msra.mxu0 0
    %6881 = vmatprep.subr.bf16.mxu0 0
    %6882 = vmatpush1.bf16.msra.mxu0 0
    %6883 = vmatprep.subr.bf16.mxu0 0
    %6884 = vmatpush1.bf16.msra.mxu0 0
    %6885 = vmatprep.subr.bf16.mxu0 0
    %6886 = vmatpush1.bf16.msra.mxu0 0
    %6887 = vmatprep.subr.bf16.mxu0 0
    %6888 = vmatpush1.bf16.msra.mxu0 0
    %6889 = vmatprep.subr.bf16.mxu0 0
    %6890 = vmatpush1.bf16.msra.mxu0 0
    %6891 = vmatprep.mubr.bf16.mxu0 0
    %6892 = vmatmul.mubr.bf16.gmra.mrb[0].mxu0 %v6857
    %v6893 = vpop.f32.mrb[0].mxu0
    %v6894 = vadd.f32 %v6855, %v6893
    %v6895 = vpop.f32.mrb[0].mxu0
    %v6896 = vpop.f32.mrb[0].mxu0
    %v6897 = vpop.f32.mrb[0].mxu0
    %6898 = vdwg.mxu0
    %v6899 = vadd.f32 %v6894, %v53
    %v6900 = vtanh.pop %v6899
    %v6901 = vpack.c.bf16 %v6900, %v6900
    %v6903 = vsel %vm125, %v6901, 0
    %6905 = vmatprep.subr.bf16.mxu0 0
    %6906 = vmatpush1.bf16.msra.mxu0 %v35
    %6907 = vmatprep.subr.bf16.mxu0 0
    %6908 = vmatpush1.bf16.msra.mxu0 %v36
    %6909 = vmatprep.subr.bf16.mxu0 0
    %6910 = vmatpush1.bf16.msra.mxu0 %v37
    %6911 = vmatprep.subr.bf16.mxu0 0
    %6912 = vmatpush1.bf16.msra.mxu0 %v38
    %6913 = vmatprep.subr.bf16.mxu0 0
    %6914 = vmatpush1.bf16.msra.mxu0 %v39
    %6915 = vmatprep.subr.bf16.mxu0 0
    %6916 = vmatpush1.bf16.msra.mxu0 %v40
    %6917 = vmatprep.subr.bf16.mxu0 0
    %6918 = vmatpush1.bf16.msra.mxu0 0
    %6919 = vmatprep.subr.bf16.mxu0 0
    %6920 = vmatpush1.bf16.msra.mxu0 0
    %6921 = vmatprep.subr.bf16.mxu0 0
    %6922 = vmatpush1.bf16.msra.mxu0 0
    %6923 = vmatprep.subr.bf16.mxu0 0
    %6924 = vmatpush1.bf16.msra.mxu0 0
    %6925 = vmatprep.subr.bf16.mxu0 0
    %6926 = vmatpush1.bf16.msra.mxu0 0
    %6927 = vmatprep.subr.bf16.mxu0 0
    %6928 = vmatpush1.bf16.msra.mxu0 0
    %6929 = vmatprep.subr.bf16.mxu0 0
    %6930 = vmatpush1.bf16.msra.mxu0 0
    %6931 = vmatprep.subr.bf16.mxu0 0
    %6932 = vmatpush1.bf16.msra.mxu0 0
    %6933 = vmatprep.subr.bf16.mxu0 0
    %6934 = vmatpush1.bf16.msra.mxu0 0
    %6935 = vmatprep.subr.bf16.mxu0 0
    %6936 = vmatpush1.bf16.msra.mxu0 0
    %6937 = vmatprep.mubr.bf16.mxu0 0
    %6938 = vmatmul.mubr.bf16.gmra.mrb[0].mxu0 %v6903
    %v6939 = vpop.f32.mrb[0].mxu0
    %v6940 = vadd.f32 0.0, %v6939
    %v6941 = vpop.f32.mrb[0].mxu0
    %v6942 = vpop.f32.mrb[0].mxu0
    %v6943 = vpop.f32.mrb[0].mxu0
    %6944 = vdwg.mxu0
    %v6945 = vmul.f32 %v6753, 2.0
    %v6946 = vadd.f32 %v6658, %v6945
    %v6947 = vmul.f32 %v6845, 2.0
    %v6948 = vadd.f32 %v6946, %v6947
    %v6949 = vadd.f32 %v6948, %v6940
    %v6950 = vmul.f32 %v6949, 0.00925926
    %v6951 = vadd.f32 %v6569, %v6950
    %s6952 = sadd.f32 %s67, 1.0000001
    %v6953 = vpack.c.bf16 %v6951, %v6951
    %v6954 = vstv %s6952
    %v6955 = vmul.f32 %v6954, %v46
    %v6957 = vsel %vm56, %v6953, 0
    %6959 = vmatprep.subr.bf16.mxu0 0
    %6960 = vmatpush1.bf16.msra.mxu0 %v80
    %6961 = vmatprep.subr.bf16.mxu0 0
    %6962 = vmatpush1.bf16.msra.mxu0 0
    %6963 = vmatprep.subr.bf16.mxu0 0
    %6964 = vmatpush1.bf16.msra.mxu0 0
    %6965 = vmatprep.subr.bf16.mxu0 0
    %6966 = vmatpush1.bf16.msra.mxu0 0
    %6967 = vmatprep.subr.bf16.mxu0 0
    %6968 = vmatpush1.bf16.msra.mxu0 0
    %6969 = vmatprep.subr.bf16.mxu0 0
    %6970 = vmatpush1.bf16.msra.mxu0 0
    %6971 = vmatprep.subr.bf16.mxu0 0
    %6972 = vmatpush1.bf16.msra.mxu0 0
    %6973 = vmatprep.subr.bf16.mxu0 0
    %6974 = vmatpush1.bf16.msra.mxu0 0
    %6975 = vmatprep.subr.bf16.mxu0 0
    %6976 = vmatpush1.bf16.msra.mxu0 0
    %6977 = vmatprep.subr.bf16.mxu0 0
    %6978 = vmatpush1.bf16.msra.mxu0 0
    %6979 = vmatprep.subr.bf16.mxu0 0
    %6980 = vmatpush1.bf16.msra.mxu0 0
    %6981 = vmatprep.subr.bf16.mxu0 0
    %6982 = vmatpush1.bf16.msra.mxu0 0
    %6983 = vmatprep.subr.bf16.mxu0 0
    %6984 = vmatpush1.bf16.msra.mxu0 0
    %6985 = vmatprep.subr.bf16.mxu0 0
    %6986 = vmatpush1.bf16.msra.mxu0 0
    %6987 = vmatprep.subr.bf16.mxu0 0
    %6988 = vmatpush1.bf16.msra.mxu0 0
    %6989 = vmatprep.subr.bf16.mxu0 0
    %6990 = vmatpush1.bf16.msra.mxu0 0
    %6991 = vmatprep.mubr.bf16.mxu0 0
    %6992 = vmatmul.mubr.bf16.gmra.mrb[0].mxu0 %v6957
    %v6993 = vpop.f32.mrb[0].mxu0
    %v6994 = vadd.f32 %v6955, %v6993
    %v6995 = vpop.f32.mrb[0].mxu0
    %v6996 = vpop.f32.mrb[0].mxu0
    %v6997 = vpop.f32.mrb[0].mxu0
    %6998 = vdwg.mxu0
    %v6999 = vadd.f32 %v6994, %v53
    %v7000 = vtanh.pop %v6999
    %v7001 = vpack.c.bf16 %v7000, %v7000
    %v7003 = vsel %vm125, %v7001, 0
    %7005 = vmatprep.subr.bf16.mxu0 0
    %7006 = vmatpush1.bf16.msra.mxu0 %v35
    %7007 = vmatprep.subr.bf16.mxu0 0
    %7008 = vmatpush1.bf16.msra.mxu0 %v36
    %7009 = vmatprep.subr.bf16.mxu0 0
    %7010 = vmatpush1.bf16.msra.mxu0 %v37
    %7011 = vmatprep.subr.bf16.mxu0 0
    %7012 = vmatpush1.bf16.msra.mxu0 %v38
    %7013 = vmatprep.subr.bf16.mxu0 0
    %7014 = vmatpush1.bf16.msra.mxu0 %v39
    %7015 = vmatprep.subr.bf16.mxu0 0
    %7016 = vmatpush1.bf16.msra.mxu0 %v40
    %7017 = vmatprep.subr.bf16.mxu0 0
    %7018 = vmatpush1.bf16.msra.mxu0 0
    %7019 = vmatprep.subr.bf16.mxu0 0
    %7020 = vmatpush1.bf16.msra.mxu0 0
    %7021 = vmatprep.subr.bf16.mxu0 0
    %7022 = vmatpush1.bf16.msra.mxu0 0
    %7023 = vmatprep.subr.bf16.mxu0 0
    %7024 = vmatpush1.bf16.msra.mxu0 0
    %7025 = vmatprep.subr.bf16.mxu0 0
    %7026 = vmatpush1.bf16.msra.mxu0 0
    %7027 = vmatprep.subr.bf16.mxu0 0
    %7028 = vmatpush1.bf16.msra.mxu0 0
    %7029 = vmatprep.subr.bf16.mxu0 0
    %7030 = vmatpush1.bf16.msra.mxu0 0
    %7031 = vmatprep.subr.bf16.mxu0 0
    %7032 = vmatpush1.bf16.msra.mxu0 0
    %7033 = vmatprep.subr.bf16.mxu0 0
    %7034 = vmatpush1.bf16.msra.mxu0 0
    %7035 = vmatprep.subr.bf16.mxu0 0
    %7036 = vmatpush1.bf16.msra.mxu0 0
    %7037 = vmatprep.mubr.bf16.mxu0 0
    %7038 = vmatmul.mubr.bf16.gmra.mrb[0].mxu0 %v7003
    %v7039 = vpop.f32.mrb[0].mxu0
    %v7040 = vadd.f32 0.0, %v7039
    %v7041 = vpop.f32.mrb[0].mxu0
    %v7042 = vpop.f32.mrb[0].mxu0
    %v7043 = vpop.f32.mrb[0].mxu0
    %7044 = vdwg.mxu0
    %s7045 = sadd.f32 %s6952, 0.02777778
    %v7046 = vmul.f32 %v7040, 0.02777778
    %v7047 = vadd.f32 %v6951, %v7046
    %v7048 = vpack.c.bf16 %v7047, %v7047
    %v7049 = vstv %s7045
    %v7050 = vmul.f32 %v7049, %v46
    %v7052 = vsel %vm56, %v7048, 0
    %7054 = vmatprep.subr.bf16.mxu0 0
    %7055 = vmatpush1.bf16.msra.mxu0 %v80
    %7056 = vmatprep.subr.bf16.mxu0 0
    %7057 = vmatpush1.bf16.msra.mxu0 0
    %7058 = vmatprep.subr.bf16.mxu0 0
    %7059 = vmatpush1.bf16.msra.mxu0 0
    %7060 = vmatprep.subr.bf16.mxu0 0
    %7061 = vmatpush1.bf16.msra.mxu0 0
    %7062 = vmatprep.subr.bf16.mxu0 0
    %7063 = vmatpush1.bf16.msra.mxu0 0
    %7064 = vmatprep.subr.bf16.mxu0 0
    %7065 = vmatpush1.bf16.msra.mxu0 0
    %7066 = vmatprep.subr.bf16.mxu0 0
    %7067 = vmatpush1.bf16.msra.mxu0 0
    %7068 = vmatprep.subr.bf16.mxu0 0
    %7069 = vmatpush1.bf16.msra.mxu0 0
    %7070 = vmatprep.subr.bf16.mxu0 0
    %7071 = vmatpush1.bf16.msra.mxu0 0
    %7072 = vmatprep.subr.bf16.mxu0 0
    %7073 = vmatpush1.bf16.msra.mxu0 0
    %7074 = vmatprep.subr.bf16.mxu0 0
    %7075 = vmatpush1.bf16.msra.mxu0 0
    %7076 = vmatprep.subr.bf16.mxu0 0
    %7077 = vmatpush1.bf16.msra.mxu0 0
    %7078 = vmatprep.subr.bf16.mxu0 0
    %7079 = vmatpush1.bf16.msra.mxu0 0
    %7080 = vmatprep.subr.bf16.mxu0 0
    %7081 = vmatpush1.bf16.msra.mxu0 0
    %7082 = vmatprep.subr.bf16.mxu0 0
    %7083 = vmatpush1.bf16.msra.mxu0 0
    %7084 = vmatprep.subr.bf16.mxu0 0
    %7085 = vmatpush1.bf16.msra.mxu0 0
    %7086 = vmatprep.mubr.bf16.mxu0 0
    %7087 = vmatmul.mubr.bf16.gmra.mrb[0].mxu0 %v7052
    %v7088 = vpop.f32.mrb[0].mxu0
    %v7089 = vadd.f32 %v7050, %v7088
    %v7090 = vpop.f32.mrb[0].mxu0
    %v7091 = vpop.f32.mrb[0].mxu0
    %v7092 = vpop.f32.mrb[0].mxu0
    %7093 = vdwg.mxu0
    %v7094 = vadd.f32 %v7089, %v53
    %v7095 = vtanh.pop %v7094
    %v7096 = vpack.c.bf16 %v7095, %v7095
    %v7098 = vsel %vm125, %v7096, 0
    %7100 = vmatprep.subr.bf16.mxu0 0
    %7101 = vmatpush1.bf16.msra.mxu0 %v35
    %7102 = vmatprep.subr.bf16.mxu0 0
    %7103 = vmatpush1.bf16.msra.mxu0 %v36
    %7104 = vmatprep.subr.bf16.mxu0 0
    %7105 = vmatpush1.bf16.msra.mxu0 %v37
    %7106 = vmatprep.subr.bf16.mxu0 0
    %7107 = vmatpush1.bf16.msra.mxu0 %v38
    %7108 = vmatprep.subr.bf16.mxu0 0
    %7109 = vmatpush1.bf16.msra.mxu0 %v39
    %7110 = vmatprep.subr.bf16.mxu0 0
    %7111 = vmatpush1.bf16.msra.mxu0 %v40
    %7112 = vmatprep.subr.bf16.mxu0 0
    %7113 = vmatpush1.bf16.msra.mxu0 0
    %7114 = vmatprep.subr.bf16.mxu0 0
    %7115 = vmatpush1.bf16.msra.mxu0 0
    %7116 = vmatprep.subr.bf16.mxu0 0
    %7117 = vmatpush1.bf16.msra.mxu0 0
    %7118 = vmatprep.subr.bf16.mxu0 0
    %7119 = vmatpush1.bf16.msra.mxu0 0
    %7120 = vmatprep.subr.bf16.mxu0 0
    %7121 = vmatpush1.bf16.msra.mxu0 0
    %7122 = vmatprep.subr.bf16.mxu0 0
    %7123 = vmatpush1.bf16.msra.mxu0 0
    %7124 = vmatprep.subr.bf16.mxu0 0
    %7125 = vmatpush1.bf16.msra.mxu0 0
    %7126 = vmatprep.subr.bf16.mxu0 0
    %7127 = vmatpush1.bf16.msra.mxu0 0
    %7128 = vmatprep.subr.bf16.mxu0 0
    %7129 = vmatpush1.bf16.msra.mxu0 0
    %7130 = vmatprep.subr.bf16.mxu0 0
    %7131 = vmatpush1.bf16.msra.mxu0 0
    %7132 = vmatprep.mubr.bf16.mxu0 0
    %7133 = vmatmul.mubr.bf16.gmra.mrb[0].mxu0 %v7098
    %v7134 = vpop.f32.mrb[0].mxu0
    %v7135 = vadd.f32 0.0, %v7134
    %v7136 = vpop.f32.mrb[0].mxu0
    %v7137 = vpop.f32.mrb[0].mxu0
    %v7138 = vpop.f32.mrb[0].mxu0
    %7139 = vdwg.mxu0
    %v7140 = vmul.f32 %v7135, 0.02777778
    %v7141 = vadd.f32 %v6951, %v7140
    %v7142 = vpack.c.bf16 %v7141, %v7141
    %v7144 = vsel %vm56, %v7142, 0
    %7146 = vmatprep.subr.bf16.mxu0 0
    %7147 = vmatpush1.bf16.msra.mxu0 %v80
    %7148 = vmatprep.subr.bf16.mxu0 0
    %7149 = vmatpush1.bf16.msra.mxu0 0
    %7150 = vmatprep.subr.bf16.mxu0 0
    %7151 = vmatpush1.bf16.msra.mxu0 0
    %7152 = vmatprep.subr.bf16.mxu0 0
    %7153 = vmatpush1.bf16.msra.mxu0 0
    %7154 = vmatprep.subr.bf16.mxu0 0
    %7155 = vmatpush1.bf16.msra.mxu0 0
    %7156 = vmatprep.subr.bf16.mxu0 0
    %7157 = vmatpush1.bf16.msra.mxu0 0
    %7158 = vmatprep.subr.bf16.mxu0 0
    %7159 = vmatpush1.bf16.msra.mxu0 0
    %7160 = vmatprep.subr.bf16.mxu0 0
    %7161 = vmatpush1.bf16.msra.mxu0 0
    %7162 = vmatprep.subr.bf16.mxu0 0
    %7163 = vmatpush1.bf16.msra.mxu0 0
    %7164 = vmatprep.subr.bf16.mxu0 0
    %7165 = vmatpush1.bf16.msra.mxu0 0
    %7166 = vmatprep.subr.bf16.mxu0 0
    %7167 = vmatpush1.bf16.msra.mxu0 0
    %7168 = vmatprep.subr.bf16.mxu0 0
    %7169 = vmatpush1.bf16.msra.mxu0 0
    %7170 = vmatprep.subr.bf16.mxu0 0
    %7171 = vmatpush1.bf16.msra.mxu0 0
    %7172 = vmatprep.subr.bf16.mxu0 0
    %7173 = vmatpush1.bf16.msra.mxu0 0
    %7174 = vmatprep.subr.bf16.mxu0 0
    %7175 = vmatpush1.bf16.msra.mxu0 0
    %7176 = vmatprep.subr.bf16.mxu0 0
    %7177 = vmatpush1.bf16.msra.mxu0 0
    %7178 = vmatprep.mubr.bf16.mxu0 0
    %7179 = vmatmul.mubr.bf16.gmra.mrb[0].mxu0 %v7144
    %v7180 = vpop.f32.mrb[0].mxu0
    %v7181 = vadd.f32 %v7050, %v7180
    %v7182 = vpop.f32.mrb[0].mxu0
    %v7183 = vpop.f32.mrb[0].mxu0
    %v7184 = vpop.f32.mrb[0].mxu0
    %7185 = vdwg.mxu0
    %v7186 = vadd.f32 %v7181, %v53
    %v7187 = vtanh.pop %v7186
    %v7188 = vpack.c.bf16 %v7187, %v7187
    %v7190 = vsel %vm125, %v7188, 0
    %7192 = vmatprep.subr.bf16.mxu0 0
    %7193 = vmatpush1.bf16.msra.mxu0 %v35
    %7194 = vmatprep.subr.bf16.mxu0 0
    %7195 = vmatpush1.bf16.msra.mxu0 %v36
    %7196 = vmatprep.subr.bf16.mxu0 0
    %7197 = vmatpush1.bf16.msra.mxu0 %v37
    %7198 = vmatprep.subr.bf16.mxu0 0
    %7199 = vmatpush1.bf16.msra.mxu0 %v38
    %7200 = vmatprep.subr.bf16.mxu0 0
    %7201 = vmatpush1.bf16.msra.mxu0 %v39
    %7202 = vmatprep.subr.bf16.mxu0 0
    %7203 = vmatpush1.bf16.msra.mxu0 %v40
    %7204 = vmatprep.subr.bf16.mxu0 0
    %7205 = vmatpush1.bf16.msra.mxu0 0
    %7206 = vmatprep.subr.bf16.mxu0 0
    %7207 = vmatpush1.bf16.msra.mxu0 0
    %7208 = vmatprep.subr.bf16.mxu0 0
    %7209 = vmatpush1.bf16.msra.mxu0 0
    %7210 = vmatprep.subr.bf16.mxu0 0
    %7211 = vmatpush1.bf16.msra.mxu0 0
    %7212 = vmatprep.subr.bf16.mxu0 0
    %7213 = vmatpush1.bf16.msra.mxu0 0
    %7214 = vmatprep.subr.bf16.mxu0 0
    %7215 = vmatpush1.bf16.msra.mxu0 0
    %7216 = vmatprep.subr.bf16.mxu0 0
    %7217 = vmatpush1.bf16.msra.mxu0 0
    %7218 = vmatprep.subr.bf16.mxu0 0
    %7219 = vmatpush1.bf16.msra.mxu0 0
    %7220 = vmatprep.subr.bf16.mxu0 0
    %7221 = vmatpush1.bf16.msra.mxu0 0
    %7222 = vmatprep.subr.bf16.mxu0 0
    %7223 = vmatpush1.bf16.msra.mxu0 0
    %7224 = vmatprep.mubr.bf16.mxu0 0
    %7225 = vmatmul.mubr.bf16.gmra.mrb[0].mxu0 %v7190
    %v7226 = vpop.f32.mrb[0].mxu0
    %v7227 = vadd.f32 0.0, %v7226
    %v7228 = vpop.f32.mrb[0].mxu0
    %v7229 = vpop.f32.mrb[0].mxu0
    %v7230 = vpop.f32.mrb[0].mxu0
    %7231 = vdwg.mxu0
    %s7232 = sadd.f32 %s6952, 0.05555556
    %v7233 = vmul.f32 %v7227, 0.05555556
    %v7234 = vadd.f32 %v6951, %v7233
    %v7235 = vpack.c.bf16 %v7234, %v7234
    %v7236 = vstv %s7232
    %v7237 = vmul.f32 %v7236, %v46
    %v7239 = vsel %vm56, %v7235, 0
    %7241 = vmatprep.subr.bf16.mxu0 0
    %7242 = vmatpush1.bf16.msra.mxu0 %v80
    %7243 = vmatprep.subr.bf16.mxu0 0
    %7244 = vmatpush1.bf16.msra.mxu0 0
    %7245 = vmatprep.subr.bf16.mxu0 0
    %7246 = vmatpush1.bf16.msra.mxu0 0
    %7247 = vmatprep.subr.bf16.mxu0 0
    %7248 = vmatpush1.bf16.msra.mxu0 0
    %7249 = vmatprep.subr.bf16.mxu0 0
    %7250 = vmatpush1.bf16.msra.mxu0 0
    %7251 = vmatprep.subr.bf16.mxu0 0
    %7252 = vmatpush1.bf16.msra.mxu0 0
    %7253 = vmatprep.subr.bf16.mxu0 0
    %7254 = vmatpush1.bf16.msra.mxu0 0
    %7255 = vmatprep.subr.bf16.mxu0 0
    %7256 = vmatpush1.bf16.msra.mxu0 0
    %7257 = vmatprep.subr.bf16.mxu0 0
    %7258 = vmatpush1.bf16.msra.mxu0 0
    %7259 = vmatprep.subr.bf16.mxu0 0
    %7260 = vmatpush1.bf16.msra.mxu0 0
    %7261 = vmatprep.subr.bf16.mxu0 0
    %7262 = vmatpush1.bf16.msra.mxu0 0
    %7263 = vmatprep.subr.bf16.mxu0 0
    %7264 = vmatpush1.bf16.msra.mxu0 0
    %7265 = vmatprep.subr.bf16.mxu0 0
    %7266 = vmatpush1.bf16.msra.mxu0 0
    %7267 = vmatprep.subr.bf16.mxu0 0
    %7268 = vmatpush1.bf16.msra.mxu0 0
    %7269 = vmatprep.subr.bf16.mxu0 0
    %7270 = vmatpush1.bf16.msra.mxu0 0
    %7271 = vmatprep.subr.bf16.mxu0 0
    %7272 = vmatpush1.bf16.msra.mxu0 0
    %7273 = vmatprep.mubr.bf16.mxu0 0
    %7274 = vmatmul.mubr.bf16.gmra.mrb[0].mxu0 %v7239
    %v7275 = vpop.f32.mrb[0].mxu0
    %v7276 = vadd.f32 %v7237, %v7275
    %v7277 = vpop.f32.mrb[0].mxu0
    %v7278 = vpop.f32.mrb[0].mxu0
    %v7279 = vpop.f32.mrb[0].mxu0
    %7280 = vdwg.mxu0
    %v7281 = vadd.f32 %v7276, %v53
    %v7282 = vtanh.pop %v7281
    %v7283 = vpack.c.bf16 %v7282, %v7282
    %v7285 = vsel %vm125, %v7283, 0
    %7287 = vmatprep.subr.bf16.mxu0 0
    %7288 = vmatpush1.bf16.msra.mxu0 %v35
    %7289 = vmatprep.subr.bf16.mxu0 0
    %7290 = vmatpush1.bf16.msra.mxu0 %v36
    %7291 = vmatprep.subr.bf16.mxu0 0
    %7292 = vmatpush1.bf16.msra.mxu0 %v37
    %7293 = vmatprep.subr.bf16.mxu0 0
    %7294 = vmatpush1.bf16.msra.mxu0 %v38
    %7295 = vmatprep.subr.bf16.mxu0 0
    %7296 = vmatpush1.bf16.msra.mxu0 %v39
    %7297 = vmatprep.subr.bf16.mxu0 0
    %7298 = vmatpush1.bf16.msra.mxu0 %v40
    %7299 = vmatprep.subr.bf16.mxu0 0
    %7300 = vmatpush1.bf16.msra.mxu0 0
    %7301 = vmatprep.subr.bf16.mxu0 0
    %7302 = vmatpush1.bf16.msra.mxu0 0
    %7303 = vmatprep.subr.bf16.mxu0 0
    %7304 = vmatpush1.bf16.msra.mxu0 0
    %7305 = vmatprep.subr.bf16.mxu0 0
    %7306 = vmatpush1.bf16.msra.mxu0 0
    %7307 = vmatprep.subr.bf16.mxu0 0
    %7308 = vmatpush1.bf16.msra.mxu0 0
    %7309 = vmatprep.subr.bf16.mxu0 0
    %7310 = vmatpush1.bf16.msra.mxu0 0
    %7311 = vmatprep.subr.bf16.mxu0 0
    %7312 = vmatpush1.bf16.msra.mxu0 0
    %7313 = vmatprep.subr.bf16.mxu0 0
    %7314 = vmatpush1.bf16.msra.mxu0 0
    %7315 = vmatprep.subr.bf16.mxu0 0
    %7316 = vmatpush1.bf16.msra.mxu0 0
    %7317 = vmatprep.subr.bf16.mxu0 0
    %7318 = vmatpush1.bf16.msra.mxu0 0
    %7319 = vmatprep.mubr.bf16.mxu0 0
    %7320 = vmatmul.mubr.bf16.gmra.mrb[0].mxu0 %v7285
    %v7321 = vpop.f32.mrb[0].mxu0
    %v7322 = vadd.f32 0.0, %v7321
    %v7323 = vpop.f32.mrb[0].mxu0
    %v7324 = vpop.f32.mrb[0].mxu0
    %v7325 = vpop.f32.mrb[0].mxu0
    %7326 = vdwg.mxu0
    %v7327 = vmul.f32 %v7135, 2.0
    %v7328 = vadd.f32 %v7040, %v7327
    %v7329 = vmul.f32 %v7227, 2.0
    %v7330 = vadd.f32 %v7328, %v7329
    %v7331 = vadd.f32 %v7330, %v7322
    %v7332 = vmul.f32 %v7331, 0.00925926
    %v7333 = vadd.f32 %v6951, %v7332
    %s7334 = sadd.f32 %s67, 1.0555556
    %v7335 = vpack.c.bf16 %v7333, %v7333
    %v7336 = vstv %s7334
    %v7337 = vmul.f32 %v7336, %v46
    %v7339 = vsel %vm56, %v7335, 0
    %7341 = vmatprep.subr.bf16.mxu0 0
    %7342 = vmatpush1.bf16.msra.mxu0 %v80
    %7343 = vmatprep.subr.bf16.mxu0 0
    %7344 = vmatpush1.bf16.msra.mxu0 0
    %7345 = vmatprep.subr.bf16.mxu0 0
    %7346 = vmatpush1.bf16.msra.mxu0 0
    %7347 = vmatprep.subr.bf16.mxu0 0
    %7348 = vmatpush1.bf16.msra.mxu0 0
    %7349 = vmatprep.subr.bf16.mxu0 0
    %7350 = vmatpush1.bf16.msra.mxu0 0
    %7351 = vmatprep.subr.bf16.mxu0 0
    %7352 = vmatpush1.bf16.msra.mxu0 0
    %7353 = vmatprep.subr.bf16.mxu0 0
    %7354 = vmatpush1.bf16.msra.mxu0 0
    %7355 = vmatprep.subr.bf16.mxu0 0
    %7356 = vmatpush1.bf16.msra.mxu0 0
    %7357 = vmatprep.subr.bf16.mxu0 0
    %7358 = vmatpush1.bf16.msra.mxu0 0
    %7359 = vmatprep.subr.bf16.mxu0 0
    %7360 = vmatpush1.bf16.msra.mxu0 0
    %7361 = vmatprep.subr.bf16.mxu0 0
    %7362 = vmatpush1.bf16.msra.mxu0 0
    %7363 = vmatprep.subr.bf16.mxu0 0
    %7364 = vmatpush1.bf16.msra.mxu0 0
    %7365 = vmatprep.subr.bf16.mxu0 0
    %7366 = vmatpush1.bf16.msra.mxu0 0
    %7367 = vmatprep.subr.bf16.mxu0 0
    %7368 = vmatpush1.bf16.msra.mxu0 0
    %7369 = vmatprep.subr.bf16.mxu0 0
    %7370 = vmatpush1.bf16.msra.mxu0 0
    %7371 = vmatprep.subr.bf16.mxu0 0
    %7372 = vmatpush1.bf16.msra.mxu0 0
    %7373 = vmatprep.mubr.bf16.mxu0 0
    %7374 = vmatmul.mubr.bf16.gmra.mrb[0].mxu0 %v7339
    %v7375 = vpop.f32.mrb[0].mxu0
    %v7376 = vadd.f32 %v7337, %v7375
    %v7377 = vpop.f32.mrb[0].mxu0
    %v7378 = vpop.f32.mrb[0].mxu0
    %v7379 = vpop.f32.mrb[0].mxu0
    %7380 = vdwg.mxu0
    %v7381 = vadd.f32 %v7376, %v53
    %v7382 = vtanh.pop %v7381
    %v7383 = vpack.c.bf16 %v7382, %v7382
    %v7385 = vsel %vm125, %v7383, 0
    %7387 = vmatprep.subr.bf16.mxu0 0
    %7388 = vmatpush1.bf16.msra.mxu0 %v35
    %7389 = vmatprep.subr.bf16.mxu0 0
    %7390 = vmatpush1.bf16.msra.mxu0 %v36
    %7391 = vmatprep.subr.bf16.mxu0 0
    %7392 = vmatpush1.bf16.msra.mxu0 %v37
    %7393 = vmatprep.subr.bf16.mxu0 0
    %7394 = vmatpush1.bf16.msra.mxu0 %v38
    %7395 = vmatprep.subr.bf16.mxu0 0
    %7396 = vmatpush1.bf16.msra.mxu0 %v39
    %7397 = vmatprep.subr.bf16.mxu0 0
    %7398 = vmatpush1.bf16.msra.mxu0 %v40
    %7399 = vmatprep.subr.bf16.mxu0 0
    %7400 = vmatpush1.bf16.msra.mxu0 0
    %7401 = vmatprep.subr.bf16.mxu0 0
    %7402 = vmatpush1.bf16.msra.mxu0 0
    %7403 = vmatprep.subr.bf16.mxu0 0
    %7404 = vmatpush1.bf16.msra.mxu0 0
    %7405 = vmatprep.subr.bf16.mxu0 0
    %7406 = vmatpush1.bf16.msra.mxu0 0
    %7407 = vmatprep.subr.bf16.mxu0 0
    %7408 = vmatpush1.bf16.msra.mxu0 0
    %7409 = vmatprep.subr.bf16.mxu0 0
    %7410 = vmatpush1.bf16.msra.mxu0 0
    %7411 = vmatprep.subr.bf16.mxu0 0
    %7412 = vmatpush1.bf16.msra.mxu0 0
    %7413 = vmatprep.subr.bf16.mxu0 0
    %7414 = vmatpush1.bf16.msra.mxu0 0
    %7415 = vmatprep.subr.bf16.mxu0 0
    %7416 = vmatpush1.bf16.msra.mxu0 0
    %7417 = vmatprep.subr.bf16.mxu0 0
    %7418 = vmatpush1.bf16.msra.mxu0 0
    %7419 = vmatprep.mubr.bf16.mxu0 0
    %7420 = vmatmul.mubr.bf16.gmra.mrb[0].mxu0 %v7385
    %v7421 = vpop.f32.mrb[0].mxu0
    %v7422 = vadd.f32 0.0, %v7421
    %v7423 = vpop.f32.mrb[0].mxu0
    %v7424 = vpop.f32.mrb[0].mxu0
    %v7425 = vpop.f32.mrb[0].mxu0
    %7426 = vdwg.mxu0
    %s7427 = sadd.f32 %s7334, 0.02777778
    %v7428 = vmul.f32 %v7422, 0.02777778
    %v7429 = vadd.f32 %v7333, %v7428
    %v7430 = vpack.c.bf16 %v7429, %v7429
    %v7431 = vstv %s7427
    %v7432 = vmul.f32 %v7431, %v46
    %v7434 = vsel %vm56, %v7430, 0
    %7436 = vmatprep.subr.bf16.mxu0 0
    %7437 = vmatpush1.bf16.msra.mxu0 %v80
    %7438 = vmatprep.subr.bf16.mxu0 0
    %7439 = vmatpush1.bf16.msra.mxu0 0
    %7440 = vmatprep.subr.bf16.mxu0 0
    %7441 = vmatpush1.bf16.msra.mxu0 0
    %7442 = vmatprep.subr.bf16.mxu0 0
    %7443 = vmatpush1.bf16.msra.mxu0 0
    %7444 = vmatprep.subr.bf16.mxu0 0
    %7445 = vmatpush1.bf16.msra.mxu0 0
    %7446 = vmatprep.subr.bf16.mxu0 0
    %7447 = vmatpush1.bf16.msra.mxu0 0
    %7448 = vmatprep.subr.bf16.mxu0 0
    %7449 = vmatpush1.bf16.msra.mxu0 0
    %7450 = vmatprep.subr.bf16.mxu0 0
    %7451 = vmatpush1.bf16.msra.mxu0 0
    %7452 = vmatprep.subr.bf16.mxu0 0
    %7453 = vmatpush1.bf16.msra.mxu0 0
    %7454 = vmatprep.subr.bf16.mxu0 0
    %7455 = vmatpush1.bf16.msra.mxu0 0
    %7456 = vmatprep.subr.bf16.mxu0 0
    %7457 = vmatpush1.bf16.msra.mxu0 0
    %7458 = vmatprep.subr.bf16.mxu0 0
    %7459 = vmatpush1.bf16.msra.mxu0 0
    %7460 = vmatprep.subr.bf16.mxu0 0
    %7461 = vmatpush1.bf16.msra.mxu0 0
    %7462 = vmatprep.subr.bf16.mxu0 0
    %7463 = vmatpush1.bf16.msra.mxu0 0
    %7464 = vmatprep.subr.bf16.mxu0 0
    %7465 = vmatpush1.bf16.msra.mxu0 0
    %7466 = vmatprep.subr.bf16.mxu0 0
    %7467 = vmatpush1.bf16.msra.mxu0 0
    %7468 = vmatprep.mubr.bf16.mxu0 0
    %7469 = vmatmul.mubr.bf16.gmra.mrb[0].mxu0 %v7434
    %v7470 = vpop.f32.mrb[0].mxu0
    %v7471 = vadd.f32 %v7432, %v7470
    %v7472 = vpop.f32.mrb[0].mxu0
    %v7473 = vpop.f32.mrb[0].mxu0
    %v7474 = vpop.f32.mrb[0].mxu0
    %7475 = vdwg.mxu0
    %v7476 = vadd.f32 %v7471, %v53
    %v7477 = vtanh.pop %v7476
    %v7478 = vpack.c.bf16 %v7477, %v7477
    %v7480 = vsel %vm125, %v7478, 0
    %7482 = vmatprep.subr.bf16.mxu0 0
    %7483 = vmatpush1.bf16.msra.mxu0 %v35
    %7484 = vmatprep.subr.bf16.mxu0 0
    %7485 = vmatpush1.bf16.msra.mxu0 %v36
    %7486 = vmatprep.subr.bf16.mxu0 0
    %7487 = vmatpush1.bf16.msra.mxu0 %v37
    %7488 = vmatprep.subr.bf16.mxu0 0
    %7489 = vmatpush1.bf16.msra.mxu0 %v38
    %7490 = vmatprep.subr.bf16.mxu0 0
    %7491 = vmatpush1.bf16.msra.mxu0 %v39
    %7492 = vmatprep.subr.bf16.mxu0 0
    %7493 = vmatpush1.bf16.msra.mxu0 %v40
    %7494 = vmatprep.subr.bf16.mxu0 0
    %7495 = vmatpush1.bf16.msra.mxu0 0
    %7496 = vmatprep.subr.bf16.mxu0 0
    %7497 = vmatpush1.bf16.msra.mxu0 0
    %7498 = vmatprep.subr.bf16.mxu0 0
    %7499 = vmatpush1.bf16.msra.mxu0 0
    %7500 = vmatprep.subr.bf16.mxu0 0
    %7501 = vmatpush1.bf16.msra.mxu0 0
    %7502 = vmatprep.subr.bf16.mxu0 0
    %7503 = vmatpush1.bf16.msra.mxu0 0
    %7504 = vmatprep.subr.bf16.mxu0 0
    %7505 = vmatpush1.bf16.msra.mxu0 0
    %7506 = vmatprep.subr.bf16.mxu0 0
    %7507 = vmatpush1.bf16.msra.mxu0 0
    %7508 = vmatprep.subr.bf16.mxu0 0
    %7509 = vmatpush1.bf16.msra.mxu0 0
    %7510 = vmatprep.subr.bf16.mxu0 0
    %7511 = vmatpush1.bf16.msra.mxu0 0
    %7512 = vmatprep.subr.bf16.mxu0 0
    %7513 = vmatpush1.bf16.msra.mxu0 0
    %7514 = vmatprep.mubr.bf16.mxu0 0
    %7515 = vmatmul.mubr.bf16.gmra.mrb[0].mxu0 %v7480
    %v7516 = vpop.f32.mrb[0].mxu0
    %v7517 = vadd.f32 0.0, %v7516
    %v7518 = vpop.f32.mrb[0].mxu0
    %v7519 = vpop.f32.mrb[0].mxu0
    %v7520 = vpop.f32.mrb[0].mxu0
    %7521 = vdwg.mxu0
    %v7522 = vmul.f32 %v7517, 0.02777778
    %v7523 = vadd.f32 %v7333, %v7522
    %v7524 = vpack.c.bf16 %v7523, %v7523
    %v7526 = vsel %vm56, %v7524, 0
    %7528 = vmatprep.subr.bf16.mxu0 0
    %7529 = vmatpush1.bf16.msra.mxu0 %v80
    %7530 = vmatprep.subr.bf16.mxu0 0
    %7531 = vmatpush1.bf16.msra.mxu0 0
    %7532 = vmatprep.subr.bf16.mxu0 0
    %7533 = vmatpush1.bf16.msra.mxu0 0
    %7534 = vmatprep.subr.bf16.mxu0 0
    %7535 = vmatpush1.bf16.msra.mxu0 0
    %7536 = vmatprep.subr.bf16.mxu0 0
    %7537 = vmatpush1.bf16.msra.mxu0 0
    %7538 = vmatprep.subr.bf16.mxu0 0
    %7539 = vmatpush1.bf16.msra.mxu0 0
    %7540 = vmatprep.subr.bf16.mxu0 0
    %7541 = vmatpush1.bf16.msra.mxu0 0
    %7542 = vmatprep.subr.bf16.mxu0 0
    %7543 = vmatpush1.bf16.msra.mxu0 0
    %7544 = vmatprep.subr.bf16.mxu0 0
    %7545 = vmatpush1.bf16.msra.mxu0 0
    %7546 = vmatprep.subr.bf16.mxu0 0
    %7547 = vmatpush1.bf16.msra.mxu0 0
    %7548 = vmatprep.subr.bf16.mxu0 0
    %7549 = vmatpush1.bf16.msra.mxu0 0
    %7550 = vmatprep.subr.bf16.mxu0 0
    %7551 = vmatpush1.bf16.msra.mxu0 0
    %7552 = vmatprep.subr.bf16.mxu0 0
    %7553 = vmatpush1.bf16.msra.mxu0 0
    %7554 = vmatprep.subr.bf16.mxu0 0
    %7555 = vmatpush1.bf16.msra.mxu0 0
    %7556 = vmatprep.subr.bf16.mxu0 0
    %7557 = vmatpush1.bf16.msra.mxu0 0
    %7558 = vmatprep.subr.bf16.mxu0 0
    %7559 = vmatpush1.bf16.msra.mxu0 0
    %7560 = vmatprep.mubr.bf16.mxu0 0
    %7561 = vmatmul.mubr.bf16.gmra.mrb[0].mxu0 %v7526
    %v7562 = vpop.f32.mrb[0].mxu0
    %v7563 = vadd.f32 %v7432, %v7562
    %v7564 = vpop.f32.mrb[0].mxu0
    %v7565 = vpop.f32.mrb[0].mxu0
    %v7566 = vpop.f32.mrb[0].mxu0
    %7567 = vdwg.mxu0
    %v7568 = vadd.f32 %v7563, %v53
    %v7569 = vtanh.pop %v7568
    %v7570 = vpack.c.bf16 %v7569, %v7569
    %v7572 = vsel %vm125, %v7570, 0
    %7574 = vmatprep.subr.bf16.mxu0 0
    %7575 = vmatpush1.bf16.msra.mxu0 %v35
    %7576 = vmatprep.subr.bf16.mxu0 0
    %7577 = vmatpush1.bf16.msra.mxu0 %v36
    %7578 = vmatprep.subr.bf16.mxu0 0
    %7579 = vmatpush1.bf16.msra.mxu0 %v37
    %7580 = vmatprep.subr.bf16.mxu0 0
    %7581 = vmatpush1.bf16.msra.mxu0 %v38
    %7582 = vmatprep.subr.bf16.mxu0 0
    %7583 = vmatpush1.bf16.msra.mxu0 %v39
    %7584 = vmatprep.subr.bf16.mxu0 0
    %7585 = vmatpush1.bf16.msra.mxu0 %v40
    %7586 = vmatprep.subr.bf16.mxu0 0
    %7587 = vmatpush1.bf16.msra.mxu0 0
    %7588 = vmatprep.subr.bf16.mxu0 0
    %7589 = vmatpush1.bf16.msra.mxu0 0
    %7590 = vmatprep.subr.bf16.mxu0 0
    %7591 = vmatpush1.bf16.msra.mxu0 0
    %7592 = vmatprep.subr.bf16.mxu0 0
    %7593 = vmatpush1.bf16.msra.mxu0 0
    %7594 = vmatprep.subr.bf16.mxu0 0
    %7595 = vmatpush1.bf16.msra.mxu0 0
    %7596 = vmatprep.subr.bf16.mxu0 0
    %7597 = vmatpush1.bf16.msra.mxu0 0
    %7598 = vmatprep.subr.bf16.mxu0 0
    %7599 = vmatpush1.bf16.msra.mxu0 0
    %7600 = vmatprep.subr.bf16.mxu0 0
    %7601 = vmatpush1.bf16.msra.mxu0 0
    %7602 = vmatprep.subr.bf16.mxu0 0
    %7603 = vmatpush1.bf16.msra.mxu0 0
    %7604 = vmatprep.subr.bf16.mxu0 0
    %7605 = vmatpush1.bf16.msra.mxu0 0
    %7606 = vmatprep.mubr.bf16.mxu0 0
    %7607 = vmatmul.mubr.bf16.gmra.mrb[0].mxu0 %v7572
    %v7608 = vpop.f32.mrb[0].mxu0
    %v7609 = vadd.f32 0.0, %v7608
    %v7610 = vpop.f32.mrb[0].mxu0
    %v7611 = vpop.f32.mrb[0].mxu0
    %v7612 = vpop.f32.mrb[0].mxu0
    %7613 = vdwg.mxu0
    %s7614 = sadd.f32 %s7334, 0.05555556
    %v7615 = vmul.f32 %v7609, 0.05555556
    %v7616 = vadd.f32 %v7333, %v7615
    %v7617 = vpack.c.bf16 %v7616, %v7616
    %v7618 = vstv %s7614
    %v7619 = vmul.f32 %v7618, %v46
    %v7621 = vsel %vm56, %v7617, 0
    %7623 = vmatprep.subr.bf16.mxu0 0
    %7624 = vmatpush1.bf16.msra.mxu0 %v80
    %7625 = vmatprep.subr.bf16.mxu0 0
    %7626 = vmatpush1.bf16.msra.mxu0 0
    %7627 = vmatprep.subr.bf16.mxu0 0
    %7628 = vmatpush1.bf16.msra.mxu0 0
    %7629 = vmatprep.subr.bf16.mxu0 0
    %7630 = vmatpush1.bf16.msra.mxu0 0
    %7631 = vmatprep.subr.bf16.mxu0 0
    %7632 = vmatpush1.bf16.msra.mxu0 0
    %7633 = vmatprep.subr.bf16.mxu0 0
    %7634 = vmatpush1.bf16.msra.mxu0 0
    %7635 = vmatprep.subr.bf16.mxu0 0
    %7636 = vmatpush1.bf16.msra.mxu0 0
    %7637 = vmatprep.subr.bf16.mxu0 0
    %7638 = vmatpush1.bf16.msra.mxu0 0
    %7639 = vmatprep.subr.bf16.mxu0 0
    %7640 = vmatpush1.bf16.msra.mxu0 0
    %7641 = vmatprep.subr.bf16.mxu0 0
    %7642 = vmatpush1.bf16.msra.mxu0 0
    %7643 = vmatprep.subr.bf16.mxu0 0
    %7644 = vmatpush1.bf16.msra.mxu0 0
    %7645 = vmatprep.subr.bf16.mxu0 0
    %7646 = vmatpush1.bf16.msra.mxu0 0
    %7647 = vmatprep.subr.bf16.mxu0 0
    %7648 = vmatpush1.bf16.msra.mxu0 0
    %7649 = vmatprep.subr.bf16.mxu0 0
    %7650 = vmatpush1.bf16.msra.mxu0 0
    %7651 = vmatprep.subr.bf16.mxu0 0
    %7652 = vmatpush1.bf16.msra.mxu0 0
    %7653 = vmatprep.subr.bf16.mxu0 0
    %7654 = vmatpush1.bf16.msra.mxu0 0
    %7655 = vmatprep.mubr.bf16.mxu0 0
    %7656 = vmatmul.mubr.bf16.gmra.mrb[0].mxu0 %v7621
    %v7657 = vpop.f32.mrb[0].mxu0
    %v7658 = vadd.f32 %v7619, %v7657
    %v7659 = vpop.f32.mrb[0].mxu0
    %v7660 = vpop.f32.mrb[0].mxu0
    %v7661 = vpop.f32.mrb[0].mxu0
    %7662 = vdwg.mxu0
    %v7663 = vadd.f32 %v7658, %v53
    %v7664 = vtanh.pop %v7663
    %v7665 = vpack.c.bf16 %v7664, %v7664
    %v7667 = vsel %vm125, %v7665, 0
    %7669 = vmatprep.subr.bf16.mxu0 0
    %7670 = vmatpush1.bf16.msra.mxu0 %v35
    %7671 = vmatprep.subr.bf16.mxu0 0
    %7672 = vmatpush1.bf16.msra.mxu0 %v36
    %7673 = vmatprep.subr.bf16.mxu0 0
    %7674 = vmatpush1.bf16.msra.mxu0 %v37
    %7675 = vmatprep.subr.bf16.mxu0 0
    %7676 = vmatpush1.bf16.msra.mxu0 %v38
    %7677 = vmatprep.subr.bf16.mxu0 0
    %7678 = vmatpush1.bf16.msra.mxu0 %v39
    %7679 = vmatprep.subr.bf16.mxu0 0
    %7680 = vmatpush1.bf16.msra.mxu0 %v40
    %7681 = vmatprep.subr.bf16.mxu0 0
    %7682 = vmatpush1.bf16.msra.mxu0 0
    %7683 = vmatprep.subr.bf16.mxu0 0
    %7684 = vmatpush1.bf16.msra.mxu0 0
    %7685 = vmatprep.subr.bf16.mxu0 0
    %7686 = vmatpush1.bf16.msra.mxu0 0
    %7687 = vmatprep.subr.bf16.mxu0 0
    %7688 = vmatpush1.bf16.msra.mxu0 0
    %7689 = vmatprep.subr.bf16.mxu0 0
    %7690 = vmatpush1.bf16.msra.mxu0 0
    %7691 = vmatprep.subr.bf16.mxu0 0
    %7692 = vmatpush1.bf16.msra.mxu0 0
    %7693 = vmatprep.subr.bf16.mxu0 0
    %7694 = vmatpush1.bf16.msra.mxu0 0
    %7695 = vmatprep.subr.bf16.mxu0 0
    %7696 = vmatpush1.bf16.msra.mxu0 0
    %7697 = vmatprep.subr.bf16.mxu0 0
    %7698 = vmatpush1.bf16.msra.mxu0 0
    %7699 = vmatprep.subr.bf16.mxu0 0
    %7700 = vmatpush1.bf16.msra.mxu0 0
    %7701 = vmatprep.mubr.bf16.mxu0 0
    %7702 = vmatmul.mubr.bf16.gmra.mrb[0].mxu0 %v7667
    %v7703 = vpop.f32.mrb[0].mxu0
    %v7704 = vadd.f32 0.0, %v7703
    %v7705 = vpop.f32.mrb[0].mxu0
    %v7706 = vpop.f32.mrb[0].mxu0
    %v7707 = vpop.f32.mrb[0].mxu0
    %7708 = vdwg.mxu0
    %v7709 = vmul.f32 %v7517, 2.0
    %v7710 = vadd.f32 %v7422, %v7709
    %v7711 = vmul.f32 %v7609, 2.0
    %v7712 = vadd.f32 %v7710, %v7711
    %v7713 = vadd.f32 %v7712, %v7704
    %v7714 = vmul.f32 %v7713, 0.00925926
    %v7715 = vadd.f32 %v7333, %v7714
    %s7716 = smul.u32 %s59, 8
    %s7717 = scalar_lea.vmem %s5, %s7716
    %7718 = vst.msk [vmem:[%s7717] sm:$0xff] %vm56, %v7715
  $region26: #{tpu_custom_call.1} parent=0 // loop_footer
    %s63 = sadd.s32 1, %s59
  $region27: #{tpu_custom_call.1} parent=0 // loop_footer_branch
    %58 = sbr.rel target = $region23
  $region28: #{tpu_custom_call.1} parent=0 // loop_exit
    _
  // Predicated region
  $region29: #{tpu_custom_call.1} parent=0 // pred_check
    _
  $region30: #{tpu_custom_call.1} parent=0 // pred_check_branch
    %7720 = sbr.rel (0) target = $region32
  $region31: #{tpu_custom_call.1} parent=0 // pred_region
    _
  $region32: #{tpu_custom_call.1} parent=0 // pred_fallthru
    _
  // Predicated region
  $region33: #{tpu_custom_call.1} parent=0 // pred_check
    _
  $region34: #{tpu_custom_call.1} parent=0 // pred_check_branch
    %7722 = sbr.rel (0) target = $region36
  $region35: #{tpu_custom_call.1} parent=0 // pred_region
    _
  $region36: #{tpu_custom_call.1} parent=0 // pred_fallthru
    _

</llo_original>
